<compile_context>
chip_gen: v5e
topology: v5e:2x2
jax: 0.10.0
libtpu: 0.0.40
codegen_flags: <defaults>
</compile_context>

<pallas_src>
import jax
import jax.numpy as jnp
from jax.experimental import pallas as pl
from jax.experimental.pallas import tpu as pltpu


# ---------------------------------------------------------------------------
# Kernel 1: fused convBlock (dense-matmul chain) + LSTM layer-1 input proj.
# ---------------------------------------------------------------------------
def _conv_gates_kernel(x_ref, a1_ref, b1_ref, a2a_ref, b2a_ref, a2b_ref, b2b_ref,
                       a3a_ref, b3a_ref, a3b_ref, b3b_ref, a3c_ref, b3c_ref,
                       wx_ref, wp1_ref, wp2_ref, wp3_ref, bg_ref, gx_ref):
    def mm(a, b):
        return jnp.dot(a, b, preferred_element_type=jnp.float32)

    x = x_ref[...]                                              # (M, U*F)
    # p1: Conv2d(1->2,(5,9)) + relu
    p1 = jnp.maximum(mm(x, a1_ref[...]) + b1_ref[...], 0.0)
    # p2: Conv1d(1->2,6)+relu  ->  Conv2d(2->2,(5,7))+relu
    h2 = jnp.maximum(mm(x, a2a_ref[...]) + b2a_ref[...], 0.0)
    p2 = jnp.maximum(mm(h2, a2b_ref[...]) + b2b_ref[...], 0.0)
    # p3: Conv1d(1->3,6) -> Conv1d(3->3,6) -> relu -> Conv2d(3->3,(5,2))+relu
    h3 = mm(x, a3a_ref[...]) + b3a_ref[...]                     # no relu inside Sequential
    h3 = jnp.maximum(mm(h3, a3b_ref[...]) + b3b_ref[...], 0.0)
    p3 = jnp.maximum(mm(h3, a3c_ref[...]) + b3c_ref[...], 0.0)
    # LSTM layer-1 input projection of feats = [x, p1, p2, p3]; biases folded in.
    gx_ref[...] = (mm(x, wx_ref[...]) + mm(p1, wp1_ref[...])
                   + mm(p2, wp2_ref[...]) + mm(p3, wp3_ref[...]) + bg_ref[...])


def conv_gates(x_flat, p):
    M = x_flat.shape[0]
    GH = p["Bg"].shape[1]
    # Single block: everything (inputs + conv matrices + W_ih1) is ~7 MB of VMEM.
    # For much larger batch*seqlen, add a grid over M marked "parallel" so the
    # work shards across v7x's two TensorCores.
    return pl.pallas_call(
        _conv_gates_kernel,
        out_shape=jax.ShapeDtypeStruct((M, GH), jnp.float32),
    )(x_flat, p["A1"], p["B1"], p["A2a"], p["B2a"], p["A2b"], p["B2b"],
      p["A3a"], p["B3a"], p["A3b"], p["B3b"], p["A3c"], p["B3c"],
      p["Wx"], p["Wp1"], p["Wp2"], p["Wp3"], p["Bg"])


# ---------------------------------------------------------------------------
# Kernel 2: fused 3-layer LSTM (PyTorch gate order i, f, g, o)
# ---------------------------------------------------------------------------
def _lstm3_kernel(gx_ref, whh1_ref, wih2_ref, whh2_ref, b2_ref,
                  wih3_ref, whh3_ref, b3_ref,
                  y_ref, hn_ref, cn_ref, h_sc, c_sc):
    t = pl.program_id(0)
    S = pl.num_programs(0)
    H = h_sc.shape[2]

    @pl.when(t == 0)
    def _():
        h_sc[...] = jnp.zeros_like(h_sc)
        c_sc[...] = jnp.zeros_like(c_sc)

    def mm(a, b):
        return jnp.dot(a, b, preferred_element_type=jnp.float32)

    def cell(gates, c_prev):
        # With H a multiple of 128 each gate slice sits on a 128-lane boundary.
        i = jax.nn.sigmoid(gates[:, 0 * H:1 * H])
        f = jax.nn.sigmoid(gates[:, 1 * H:2 * H])
        g = jnp.tanh(gates[:, 2 * H:3 * H])
        o = jax.nn.sigmoid(gates[:, 3 * H:4 * H])
        c = f * c_prev + i * g
        h = o * jnp.tanh(c)
        return h, c

    # layer 1: x-projection (+ b_ih1 + b_hh1) was hoisted into gx_ref
    g1 = gx_ref[0] + mm(h_sc[0], whh1_ref[...])
    h1, c1 = cell(g1, c_sc[0])
    h_sc[0] = h1
    c_sc[0] = c1

    # layer 2
    g2 = mm(h1, wih2_ref[...]) + mm(h_sc[1], whh2_ref[...]) + b2_ref[...]
    h2, c2 = cell(g2, c_sc[1])
    h_sc[1] = h2
    c_sc[1] = c2

    # layer 3
    g3 = mm(h2, wih3_ref[...]) + mm(h_sc[2], whh3_ref[...]) + b3_ref[...]
    h3, c3 = cell(g3, c_sc[2])
    h_sc[2] = h3
    c_sc[2] = c3

    y_ref[0] = h3

    @pl.when(t == S - 1)
    def _():
        hn_ref[...] = h_sc[...]
        cn_ref[...] = c_sc[...]


def lstm3(gx_sbh, p):
    S, B, GH = gx_sbh.shape
    H = GH // 4
    wspec = pl.BlockSpec((H, 4 * H), lambda t: (0, 0))
    bspec = pl.BlockSpec((1, 4 * H), lambda t: (0, 0))
    y, h_n, c_n = pl.pallas_call(
        _lstm3_kernel,
        out_shape=(jax.ShapeDtypeStruct((S, B, H), jnp.float32),
                   jax.ShapeDtypeStruct((3, B, H), jnp.float32),
                   jax.ShapeDtypeStruct((3, B, H), jnp.float32)),
        grid_spec=pltpu.PrefetchScalarGridSpec(
            num_scalar_prefetch=0,
            grid=(S,),
            in_specs=[
                pl.BlockSpec((1, B, 4 * H), lambda t: (t, 0, 0)),  # gates_x layer 1
                wspec,                    # W_hh layer 1
                wspec, wspec, bspec,      # layer 2: W_ih, W_hh, bias
                wspec, wspec, bspec,      # layer 3: W_ih, W_hh, bias
            ],
            out_specs=[
                pl.BlockSpec((1, B, H), lambda t: (t, 0, 0)),       # output sequence
                pl.BlockSpec((3, B, H), lambda t: (0, 0, 0)),       # h_n (resident)
                pl.BlockSpec((3, B, H), lambda t: (0, 0, 0)),       # c_n (resident)
            ],
            scratch_shapes=[pltpu.VMEM((3, B, H), jnp.float32),
                            pltpu.VMEM((3, B, H), jnp.float32)],
        ),
        # time axis MUST stay sequential ("arbitrary") for the resident h/c state
        compiler_params=pltpu.CompilerParams(dimension_semantics=("arbitrary",)),
    )(gx_sbh, p["Whh1"], p["Wih2"], p["Whh2"], p["B2"],
      p["Wih3"], p["Whh3"], p["B3"])
    return y, h_n, c_n


# ---------------------------------------------------------------------------
# Trace-time weight preparation: convs -> exact dense matrices (plain JAX glue)
# ---------------------------------------------------------------------------
def _shift_eyes(n_out, n_in, k_size):
    # E[k, o, i] = 1  iff  i == o + k
    return jnp.stack([jnp.eye(n_out, n_in, k=k, dtype=jnp.float32)
                      for k in range(k_size)])


def prepare_params(params, U, F):
    cB = params["cB"]
    lstm = params["lstm"]
    eyeU = jnp.eye(U, dtype=jnp.float32)

    # p1: Conv2d(1->OC1,(KH,KW)) on (U,F); rows (u,f), cols (oc,oh,ow)
    w1, b1 = cB["p1_w"], cB["p1_b"]
    OC1, _, KH1, KW1 = w1.shape
    OH1, OW1 = U - KH1 + 1, F - KW1 + 1
    A1 = jnp.einsum('oab,aqh,bpw->hwoqp', w1[:, 0],
                    _shift_eyes(OH1, U, KH1), _shift_eyes(OW1, F, KW1)
                    ).reshape(U * F, OC1 * OH1 * OW1)
    B1 = jnp.broadcast_to(b1[:, None, None], (OC1, OH1, OW1)).reshape(1, -1)

    # p2 stage 1: Conv1d(1->OC2a,K) per uav row; rows (u,f), cols (oc,u,l)
    w2a, b2a = cB["p2c1_w"], cB["p2c1_b"]
    OC2a, _, K2a = w2a.shape
    L2a = F - K2a + 1
    A2a = jnp.einsum('ok,klf,vu->vfoul', w2a[:, 0],
                     _shift_eyes(L2a, F, K2a), eyeU).reshape(U * F, OC2a * U * L2a)
    B2a = jnp.broadcast_to(b2a[:, None, None], (OC2a, U, L2a)).reshape(1, -1)

    # p2 stage 2: Conv2d(OC2a->OC2b,(KH,KW)) on (OC2a,U,L2a); cols (oc,oh,ow)
    w2b, b2b = cB["p2c2_w"], cB["p2c2_b"]
    OC2b, _, KH2, KW2 = w2b.shape
    OH2, OW2 = U - KH2 + 1, L2a - KW2 + 1
    A2b = jnp.einsum('ocab,aqh,bpw->chwoqp', w2b,
                     _shift_eyes(OH2, U, KH2), _shift_eyes(OW2, L2a, KW2)
                     ).reshape(OC2a * U * L2a, OC2b * OH2 * OW2)
    B2b = jnp.broadcast_to(b2b[:, None, None], (OC2b, OH2, OW2)).reshape(1, -1)

    # p3 stage 1: Conv1d(1->OC3a,K) per uav row (NO relu); rows (u,f), cols (u,c,l)
    w3a, b3a = cB["p3c1_w"], cB["p3c1_b"]
    OC3a, _, K3a = w3a.shape
    L3a = F - K3a + 1
    A3a = jnp.einsum('ck,klf,vu->vfucl', w3a[:, 0],
                     _shift_eyes(L3a, F, K3a), eyeU).reshape(U * F, U * OC3a * L3a)
    B3a = jnp.broadcast_to(b3a[None, :, None], (U, OC3a, L3a)).reshape(1, -1)

    # p3 stage 2: Conv1d(OC3a->OC3b,K) per uav row; rows (u,c,l1), cols (oc,u,l2)
    w3b, b3b = cB["p3c2_w"], cB["p3c2_b"]
    OC3b, C3b, K3b = w3b.shape
    L3b = L3a - K3b + 1
    A3b = jnp.einsum('ock,kml,vu->vcloum', w3b,
                     _shift_eyes(L3b, L3a, K3b), eyeU
                     ).reshape(U * C3b * L3a, OC3b * U * L3b)
    B3b = jnp.broadcast_to(b3b[:, None, None], (OC3b, U, L3b)).reshape(1, -1)

    # p3 stage 3: Conv2d(OC3b->OC3c,(KH,KW)) on (OC3b,U,L3b); cols (oc,oh,ow)
    w3c, b3c = cB["p3c3_w"], cB["p3c3_b"]
    OC3c, _, KH3, KW3 = w3c.shape
    OH3, OW3 = U - KH3 + 1, L3b - KW3 + 1
    A3c = jnp.einsum('ocab,aqh,bpw->chwoqp', w3c,
                     _shift_eyes(OH3, U, KH3), _shift_eyes(OW3, L3b, KW3)
                     ).reshape(OC3b * U * L3b, OC3c * OH3 * OW3)
    B3c = jnp.broadcast_to(b3c[:, None, None], (OC3c, OH3, OW3)).reshape(1, -1)

    # LSTM layer-1 input projection, split along the feature concat
    # feats = [x_flat, p1, p2, p3]  (matches torch.concat order)
    n_x, n_p1, n_p2 = U * F, A1.shape[1], A2b.shape[1]
    w_ih1 = lstm[0]["w_ih"]                                    # (4H, 1089)
    Wx = w_ih1[:, :n_x].T
    Wp1 = w_ih1[:, n_x:n_x + n_p1].T
    Wp2 = w_ih1[:, n_x + n_p1:n_x + n_p1 + n_p2].T
    Wp3 = w_ih1[:, n_x + n_p1 + n_p2:].T
    Bg = (lstm[0]["b_ih"] + lstm[0]["b_hh"]).reshape(1, -1)

    return dict(A1=A1, B1=B1, A2a=A2a, B2a=B2a, A2b=A2b, B2b=B2b,
                A3a=A3a, B3a=B3a, A3b=A3b, B3b=B3b, A3c=A3c, B3c=B3c,
                Wx=Wx, Wp1=Wp1, Wp2=Wp2, Wp3=Wp3, Bg=Bg,
                Whh1=lstm[0]["w_hh"].T,
                Wih2=lstm[1]["w_ih"].T, Whh2=lstm[1]["w_hh"].T,
                B2=(lstm[1]["b_ih"] + lstm[1]["b_hh"]).reshape(1, -1),
                Wih3=lstm[2]["w_ih"].T, Whh3=lstm[2]["w_hh"].T,
                B3=(lstm[2]["b_ih"] + lstm[2]["b_hh"]).reshape(1, -1))


# ---------------------------------------------------------------------------
# FeatureMining forward
# ---------------------------------------------------------------------------
def feature_mining_forward(x, params):
    # x: (batch, seqlen, uav_num, feature_num)
    batch, seqlen, U, F = x.shape
    assert len(params["lstm"]) == 3, "fused LSTM kernel assumes num_layers == 3"
    prep = prepare_params(params, U, F)

    # time-major row order so the gate kernel output reshapes directly to (S,B,4H)
    x_flat = jnp.transpose(x, (1, 0, 2, 3)).reshape(seqlen * batch, U * F)
    gx = conv_gates(x_flat, prep)                        # (S*B, 4H)
    H = gx.shape[1] // 4
    gx = gx.reshape(seqlen, batch, 4 * H)

    y, h_n, c_n = lstm3(gx, prep)                        # (S,B,H), (3,B,H), (3,B,H)
    output = jnp.transpose(y, (1, 0, 2))                 # batch_first
    return output, (h_n, c_n)


# ---------------------------------------------------------------------------
# Deterministic parameter init (shapes from the module's __init__)
# ---------------------------------------------------------------------------
def init_params(key, hidden_size=128, layers=3, input_size=1089):
    keys = iter(jax.random.split(key, 64))

    def w(shape, scale=0.1):
        return jax.random.normal(next(keys), shape, jnp.float32) * scale

    cB = dict(
        p1_w=w((2, 1, 5, 9)), p1_b=w((2,)),
        p2c1_w=w((2, 1, 6)), p2c1_b=w((2,)),
        p2c2_w=w((2, 2, 5, 7)), p2c2_b=w((2,)),
        p3c1_w=w((3, 1, 6)), p3c1_b=w((3,)),
        p3c2_w=w((3, 3, 6)), p3c2_b=w((3,)),
        p3c3_w=w((3, 3, 5, 2)), p3c3_b=w((3,)),
    )
    lstm = []
    for l in range(layers):
        I = input_size if l == 0 else hidden_size
        lstm.append(dict(
            w_ih=w((4 * hidden_size, I)),
            w_hh=w((4 * hidden_size, hidden_size)),
            b_ih=w((4 * hidden_size,)),
            b_hh=w((4 * hidden_size,)),
        ))
    return dict(cB=cB, lstm=lstm)


if __name__ == "__main__":
    key = jax.random.PRNGKey(0)
    k_x, k_p = jax.random.split(key)

    # uav_num=25, feature_num=15 reproduces the module's LSTM input_size of 1089.
    batch, seqlen, uav, feat = 2, 4, 25, 15
    # hidden kept a multiple of 128 so every LSTM gate slice is lane-aligned
    # (module default is 256; 128 is the "small" setting for this demo).
    hidden_size, layers = 128, 3

    x = jax.random.normal(k_x, (batch, seqlen, uav, feat), jnp.float32)
    params = init_params(k_p, hidden_size=hidden_size, layers=layers)

    fwd = jax.jit(feature_mining_forward)
    output, (h_n, c_n) = fwd(x, params)
    jax.block_until_ready(output)
    jax.block_until_ready(h_n)
    jax.block_until_ready(c_n)

    assert output.shape == (batch, seqlen, hidden_size)
    assert h_n.shape == (layers, batch, hidden_size)
    assert c_n.shape == (layers, batch, hidden_size)
    print("KERNEL_OK")
</pallas_src>

<mosaic_0001>
module attributes {stable_mosaic.version = 11 : i64} {
  func.func @_conv_gates_kernel(%arg0: memref<8x375xf32, #tpu.memory_space<vmem>>, %arg1: memref<375x294xf32, #tpu.memory_space<vmem>>, %arg2: memref<1x294xf32, #tpu.memory_space<vmem>>, %arg3: memref<375x500xf32, #tpu.memory_space<vmem>>, %arg4: memref<1x500xf32, #tpu.memory_space<vmem>>, %arg5: memref<500x168xf32, #tpu.memory_space<vmem>>, %arg6: memref<1x168xf32, #tpu.memory_space<vmem>>, %arg7: memref<375x750xf32, #tpu.memory_space<vmem>>, %arg8: memref<1x750xf32, #tpu.memory_space<vmem>>, %arg9: memref<750x375xf32, #tpu.memory_space<vmem>>, %arg10: memref<1x375xf32, #tpu.memory_space<vmem>>, %arg11: memref<375x252xf32, #tpu.memory_space<vmem>>, %arg12: memref<1x252xf32, #tpu.memory_space<vmem>>, %arg13: memref<375x512xf32, #tpu.memory_space<vmem>>, %arg14: memref<294x512xf32, #tpu.memory_space<vmem>>, %arg15: memref<168x512xf32, #tpu.memory_space<vmem>>, %arg16: memref<252x512xf32, #tpu.memory_space<vmem>>, %arg17: memref<1x512xf32, #tpu.memory_space<vmem>>, %arg18: memref<8x512xf32, #tpu.memory_space<vmem>>) attributes {dimension_semantics = [], scalar_prefetch = 0 : i64, scratch_operands = 0 : i64, tpu.core_type = #tpu.core_type<tc>} {
    %c0 = arith.constant 0 : index
    %c0_0 = arith.constant 0 : index
    %0 = vector.load %arg0[%c0, %c0_0] : memref<8x375xf32, #tpu.memory_space<vmem>>, vector<8x375xf32>
    %c0_1 = arith.constant 0 : index
    %c0_2 = arith.constant 0 : index
    %1 = vector.load %arg1[%c0_1, %c0_2] : memref<375x294xf32, #tpu.memory_space<vmem>>, vector<375x294xf32>
    %cst = arith.constant dense<0.000000e+00> : vector<8x294xf32>
    %2 = tpu.matmul %0, %1, %cst {dimension_numbers = #tpu.dot_dimension_numbers<[1], [0], [0], [1], [0, 0, 1, 1], [], []>} : vector<8x375xf32>, vector<375x294xf32>, vector<8x294xf32> -> vector<8x294xf32>
    %c0_3 = arith.constant 0 : index
    %c0_4 = arith.constant 0 : index
    %3 = vector.load %arg2[%c0_3, %c0_4] : memref<1x294xf32, #tpu.memory_space<vmem>>, vector<1x294xf32>
    %4 = vector.broadcast %3 : vector<1x294xf32> to vector<8x294xf32>
    %5 = arith.addf %2, %4 : vector<8x294xf32>
    %cst_5 = arith.constant 0.000000e+00 : f32
    %6 = vector.broadcast %cst_5 : f32 to vector<8x294xf32>
    %7 = arith.maximumf %5, %6 : vector<8x294xf32>
    %c0_6 = arith.constant 0 : index
    %c0_7 = arith.constant 0 : index
    %8 = vector.load %arg3[%c0_6, %c0_7] : memref<375x500xf32, #tpu.memory_space<vmem>>, vector<375x500xf32>
    %cst_8 = arith.constant dense<0.000000e+00> : vector<8x500xf32>
    %9 = tpu.matmul %0, %8, %cst_8 {dimension_numbers = #tpu.dot_dimension_numbers<[1], [0], [0], [1], [0, 0, 1, 1], [], []>} : vector<8x375xf32>, vector<375x500xf32>, vector<8x500xf32> -> vector<8x500xf32>
    %c0_9 = arith.constant 0 : index
    %c0_10 = arith.constant 0 : index
    %10 = vector.load %arg4[%c0_9, %c0_10] : memref<1x500xf32, #tpu.memory_space<vmem>>, vector<1x500xf32>
    %11 = vector.broadcast %10 : vector<1x500xf32> to vector<8x500xf32>
    %12 = arith.addf %9, %11 : vector<8x500xf32>
    %cst_11 = arith.constant 0.000000e+00 : f32
    %13 = vector.broadcast %cst_11 : f32 to vector<8x500xf32>
    %14 = arith.maximumf %12, %13 : vector<8x500xf32>
    %c0_12 = arith.constant 0 : index
    %c0_13 = arith.constant 0 : index
    %15 = vector.load %arg5[%c0_12, %c0_13] : memref<500x168xf32, #tpu.memory_space<vmem>>, vector<500x168xf32>
    %cst_14 = arith.constant dense<0.000000e+00> : vector<8x168xf32>
    %16 = tpu.matmul %14, %15, %cst_14 {dimension_numbers = #tpu.dot_dimension_numbers<[1], [0], [0], [1], [0, 0, 1, 1], [], []>} : vector<8x500xf32>, vector<500x168xf32>, vector<8x168xf32> -> vector<8x168xf32>
    %c0_15 = arith.constant 0 : index
    %c0_16 = arith.constant 0 : index
    %17 = vector.load %arg6[%c0_15, %c0_16] : memref<1x168xf32, #tpu.memory_space<vmem>>, vector<1x168xf32>
    %18 = vector.broadcast %17 : vector<1x168xf32> to vector<8x168xf32>
    %19 = arith.addf %16, %18 : vector<8x168xf32>
    %cst_17 = arith.constant 0.000000e+00 : f32
    %20 = vector.broadcast %cst_17 : f32 to vector<8x168xf32>
    %21 = arith.maximumf %19, %20 : vector<8x168xf32>
    %c0_18 = arith.constant 0 : index
    %c0_19 = arith.constant 0 : index
    %22 = vector.load %arg7[%c0_18, %c0_19] : memref<375x750xf32, #tpu.memory_space<vmem>>, vector<375x750xf32>
    %cst_20 = arith.constant dense<0.000000e+00> : vector<8x750xf32>
    %23 = tpu.matmul %0, %22, %cst_20 {dimension_numbers = #tpu.dot_dimension_numbers<[1], [0], [0], [1], [0, 0, 1, 1], [], []>} : vector<8x375xf32>, vector<375x750xf32>, vector<8x750xf32> -> vector<8x750xf32>
    %c0_21 = arith.constant 0 : index
    %c0_22 = arith.constant 0 : index
    %24 = vector.load %arg8[%c0_21, %c0_22] : memref<1x750xf32, #tpu.memory_space<vmem>>, vector<1x750xf32>
    %25 = vector.broadcast %24 : vector<1x750xf32> to vector<8x750xf32>
    %26 = arith.addf %23, %25 : vector<8x750xf32>
    %c0_23 = arith.constant 0 : index
    %c0_24 = arith.constant 0 : index
    %27 = vector.load %arg9[%c0_23, %c0_24] : memref<750x375xf32, #tpu.memory_space<vmem>>, vector<750x375xf32>
    %cst_25 = arith.constant dense<0.000000e+00> : vector<8x375xf32>
    %28 = tpu.matmul %26, %27, %cst_25 {dimension_numbers = #tpu.dot_dimension_numbers<[1], [0], [0], [1], [0, 0, 1, 1], [], []>} : vector<8x750xf32>, vector<750x375xf32>, vector<8x375xf32> -> vector<8x375xf32>
    %c0_26 = arith.constant 0 : index
    %c0_27 = arith.constant 0 : index
    %29 = vector.load %arg10[%c0_26, %c0_27] : memref<1x375xf32, #tpu.memory_space<vmem>>, vector<1x375xf32>
    %30 = vector.broadcast %29 : vector<1x375xf32> to vector<8x375xf32>
    %31 = arith.addf %28, %30 : vector<8x375xf32>
    %cst_28 = arith.constant 0.000000e+00 : f32
    %32 = vector.broadcast %cst_28 : f32 to vector<8x375xf32>
    %33 = arith.maximumf %31, %32 : vector<8x375xf32>
    %c0_29 = arith.constant 0 : index
    %c0_30 = arith.constant 0 : index
    %34 = vector.load %arg11[%c0_29, %c0_30] : memref<375x252xf32, #tpu.memory_space<vmem>>, vector<375x252xf32>
    %cst_31 = arith.constant dense<0.000000e+00> : vector<8x252xf32>
    %35 = tpu.matmul %33, %34, %cst_31 {dimension_numbers = #tpu.dot_dimension_numbers<[1], [0], [0], [1], [0, 0, 1, 1], [], []>} : vector<8x375xf32>, vector<375x252xf32>, vector<8x252xf32> -> vector<8x252xf32>
    %c0_32 = arith.constant 0 : index
    %c0_33 = arith.constant 0 : index
    %36 = vector.load %arg12[%c0_32, %c0_33] : memref<1x252xf32, #tpu.memory_space<vmem>>, vector<1x252xf32>
    %37 = vector.broadcast %36 : vector<1x252xf32> to vector<8x252xf32>
    %38 = arith.addf %35, %37 : vector<8x252xf32>
    %cst_34 = arith.constant 0.000000e+00 : f32
    %39 = vector.broadcast %cst_34 : f32 to vector<8x252xf32>
    %40 = arith.maximumf %38, %39 : vector<8x252xf32>
    %c0_35 = arith.constant 0 : index
    %c0_36 = arith.constant 0 : index
    %41 = vector.load %arg13[%c0_35, %c0_36] : memref<375x512xf32, #tpu.memory_space<vmem>>, vector<375x512xf32>
    %cst_37 = arith.constant dense<0.000000e+00> : vector<8x512xf32>
    %42 = tpu.matmul %0, %41, %cst_37 {dimension_numbers = #tpu.dot_dimension_numbers<[1], [0], [0], [1], [0, 0, 1, 1], [], []>} : vector<8x375xf32>, vector<375x512xf32>, vector<8x512xf32> -> vector<8x512xf32>
    %c0_38 = arith.constant 0 : index
    %c0_39 = arith.constant 0 : index
    %43 = vector.load %arg14[%c0_38, %c0_39] : memref<294x512xf32, #tpu.memory_space<vmem>>, vector<294x512xf32>
    %cst_40 = arith.constant dense<0.000000e+00> : vector<8x512xf32>
    %44 = tpu.matmul %7, %43, %cst_40 {dimension_numbers = #tpu.dot_dimension_numbers<[1], [0], [0], [1], [0, 0, 1, 1], [], []>} : vector<8x294xf32>, vector<294x512xf32>, vector<8x512xf32> -> vector<8x512xf32>
    %45 = arith.addf %42, %44 : vector<8x512xf32>
    %c0_41 = arith.constant 0 : index
    %c0_42 = arith.constant 0 : index
    %46 = vector.load %arg15[%c0_41, %c0_42] : memref<168x512xf32, #tpu.memory_space<vmem>>, vector<168x512xf32>
    %cst_43 = arith.constant dense<0.000000e+00> : vector<8x512xf32>
    %47 = tpu.matmul %21, %46, %cst_43 {dimension_numbers = #tpu.dot_dimension_numbers<[1], [0], [0], [1], [0, 0, 1, 1], [], []>} : vector<8x168xf32>, vector<168x512xf32>, vector<8x512xf32> -> vector<8x512xf32>
    %48 = arith.addf %45, %47 : vector<8x512xf32>
    %c0_44 = arith.constant 0 : index
    %c0_45 = arith.constant 0 : index
    %49 = vector.load %arg16[%c0_44, %c0_45] : memref<252x512xf32, #tpu.memory_space<vmem>>, vector<252x512xf32>
    %cst_46 = arith.constant dense<0.000000e+00> : vector<8x512xf32>
    %50 = tpu.matmul %40, %49, %cst_46 {dimension_numbers = #tpu.dot_dimension_numbers<[1], [0], [0], [1], [0, 0, 1, 1], [], []>} : vector<8x252xf32>, vector<252x512xf32>, vector<8x512xf32> -> vector<8x512xf32>
    %51 = arith.addf %48, %50 : vector<8x512xf32>
    %c0_47 = arith.constant 0 : index
    %c0_48 = arith.constant 0 : index
    %52 = vector.load %arg17[%c0_47, %c0_48] : memref<1x512xf32, #tpu.memory_space<vmem>>, vector<1x512xf32>
    %53 = vector.broadcast %52 : vector<1x512xf32> to vector<8x512xf32>
    %54 = arith.addf %51, %53 : vector<8x512xf32>
    %c0_49 = arith.constant 0 : index
    %c0_50 = arith.constant 0 : index
    %55 = vector.load %arg18[%c0_49, %c0_50] : memref<8x512xf32, #tpu.memory_space<vmem>>, vector<8x512xf32>
    tpu.vector_store %arg18[%c0_49, %c0_50], %54 {strides = array<i32>} : memref<8x512xf32, #tpu.memory_space<vmem>>, vector<8x512xf32>,
    return
  }
}

module attributes {stable_mosaic.version = 11 : i64} {
  func.func @_lstm3_kernel(%arg0: i32, %arg1: memref<1x2x512xf32, #tpu.memory_space<vmem>>, %arg2: memref<128x512xf32, #tpu.memory_space<vmem>>, %arg3: memref<128x512xf32, #tpu.memory_space<vmem>>, %arg4: memref<128x512xf32, #tpu.memory_space<vmem>>, %arg5: memref<1x512xf32, #tpu.memory_space<vmem>>, %arg6: memref<128x512xf32, #tpu.memory_space<vmem>>, %arg7: memref<128x512xf32, #tpu.memory_space<vmem>>, %arg8: memref<1x512xf32, #tpu.memory_space<vmem>>, %arg9: memref<1x2x128xf32, #tpu.memory_space<vmem>>, %arg10: memref<3x2x128xf32, #tpu.memory_space<vmem>>, %arg11: memref<3x2x128xf32, #tpu.memory_space<vmem>>, %arg12: memref<3x2x128xf32, #tpu.memory_space<vmem>>, %arg13: memref<3x2x128xf32, #tpu.memory_space<vmem>>) attributes {dimension_semantics = [#tpu.dimension_semantics<arbitrary>], iteration_bounds = array<i64: 4>, scalar_prefetch = 0 : i64, scratch_operands = 2 : i64, tpu.core_type = #tpu.core_type<tc>, window_params = [{transform_indices = @transform_0, window_bounds = array<i64: 1, 2, 512>}, {pipeline_mode = #tpu.pipeline_mode<synchronous>, transform_indices = @transform_1, window_bounds = array<i64: 128, 512>}, {pipeline_mode = #tpu.pipeline_mode<synchronous>, transform_indices = @transform_2, window_bounds = array<i64: 128, 512>}, {pipeline_mode = #tpu.pipeline_mode<synchronous>, transform_indices = @transform_3, window_bounds = array<i64: 128, 512>}, {pipeline_mode = #tpu.pipeline_mode<synchronous>, transform_indices = @transform_4, window_bounds = array<i64: 1, 512>}, {pipeline_mode = #tpu.pipeline_mode<synchronous>, transform_indices = @transform_5, window_bounds = array<i64: 128, 512>}, {pipeline_mode = #tpu.pipeline_mode<synchronous>, transform_indices = @transform_6, window_bounds = array<i64: 128, 512>}, {pipeline_mode = #tpu.pipeline_mode<synchronous>, transform_indices = @transform_7, window_bounds = array<i64: 1, 512>}, {transform_indices = @transform_8, window_bounds = array<i64: 1, 2, 128>}, {pipeline_mode = #tpu.pipeline_mode<synchronous>, transform_indices = @transform_9, window_bounds = array<i64: 3, 2, 128>}, {pipeline_mode = #tpu.pipeline_mode<synchronous>, transform_indices = @transform_10, window_bounds = array<i64: 3, 2, 128>}]} {
    %c0_i32 = arith.constant 0 : i32
    %0 = arith.cmpi eq, %arg0, %c0_i32 : i32
    %1 = arith.extui %0 : i1 to i32
    %c0_i32_0 = arith.constant 0 : i32
    %2 = arith.cmpi ne, %1, %c0_i32_0 : i32
    scf.if %2 {
      %cst_68 = arith.constant 0.000000e+00 : f32
      %135 = vector.broadcast %cst_68 : f32 to vector<3x2x128xf32>
      %c0_69 = arith.constant 0 : index
      %c0_70 = arith.constant 0 : index
      %c0_71 = arith.constant 0 : index
      %136 = vector.load %arg12[%c0_69, %c0_70, %c0_71] : memref<3x2x128xf32, #tpu.memory_space<vmem>>, vector<3x2x128xf32>
      tpu.vector_store %arg12[%c0_69, %c0_70, %c0_71], %135 {strides = array<i32>} : memref<3x2x128xf32, #tpu.memory_space<vmem>>, vector<3x2x128xf32>,
      %cst_72 = arith.constant 0.000000e+00 : f32
      %137 = vector.broadcast %cst_72 : f32 to vector<3x2x128xf32>
      %c0_73 = arith.constant 0 : index
      %c0_74 = arith.constant 0 : index
      %c0_75 = arith.constant 0 : index
      %138 = vector.load %arg13[%c0_73, %c0_74, %c0_75] : memref<3x2x128xf32, #tpu.memory_space<vmem>>, vector<3x2x128xf32>
      tpu.vector_store %arg13[%c0_73, %c0_74, %c0_75], %137 {strides = array<i32>} : memref<3x2x128xf32, #tpu.memory_space<vmem>>, vector<3x2x128xf32>,
    } else {
    }
    %c0 = arith.constant 0 : index
    %c0_1 = arith.constant 0 : index
    %c0_2 = arith.constant 0 : index
    %3 = vector.load %arg1[%c0, %c0_1, %c0_2] : memref<1x2x512xf32, #tpu.memory_space<vmem>>, vector<1x2x512xf32>
    %4 = vector.shape_cast %3 : vector<1x2x512xf32> to vector<2x512xf32>
    %c0_3 = arith.constant 0 : index
    %c0_4 = arith.constant 0 : index
    %c0_5 = arith.constant 0 : index
    %5 = vector.load %arg12[%c0_3, %c0_4, %c0_5] : memref<3x2x128xf32, #tpu.memory_space<vmem>>, vector<1x2x128xf32>
    %6 = vector.shape_cast %5 : vector<1x2x128xf32> to vector<2x128xf32>
    %c0_6 = arith.constant 0 : index
    %c0_7 = arith.constant 0 : index
    %7 = vector.load %arg2[%c0_6, %c0_7] : memref<128x512xf32, #tpu.memory_space<vmem>>, vector<128x512xf32>
    %cst = arith.constant dense<0.000000e+00> : vector<2x512xf32>
    %8 = tpu.matmul %6, %7, %cst {dimension_numbers = #tpu.dot_dimension_numbers<[1], [0], [0], [1], [0, 0, 1, 1], [], []>} : vector<2x128xf32>, vector<128x512xf32>, vector<2x512xf32> -> vector<2x512xf32>
    %9 = arith.addf %4, %8 : vector<2x512xf32>
    %c0_8 = arith.constant 0 : index
    %c0_9 = arith.constant 0 : index
    %c0_10 = arith.constant 0 : index
    %10 = vector.load %arg13[%c0_8, %c0_9, %c0_10] : memref<3x2x128xf32, #tpu.memory_space<vmem>>, vector<1x2x128xf32>
    %11 = vector.shape_cast %10 : vector<1x2x128xf32> to vector<2x128xf32>
    %12 = vector.extract_strided_slice %9 {offsets = [0, 0], sizes = [2, 128], strides = [1, 1]} : vector<2x512xf32> to vector<2x128xf32>
    %13 = arith.negf %12 : vector<2x128xf32>
    %14 = math.exp %13 : vector<2x128xf32>
    %cst_11 = arith.constant 1.000000e+00 : f32
    %15 = vector.broadcast %cst_11 : f32 to vector<2x128xf32>
    %16 = arith.addf %15, %14 : vector<2x128xf32>
    %17 = arith.divf %15, %16 : vector<2x128xf32>
    %18 = vector.extract_strided_slice %9 {offsets = [0, 128], sizes = [2, 128], strides = [1, 1]} : vector<2x512xf32> to vector<2x128xf32>
    %19 = arith.negf %18 : vector<2x128xf32>
    %20 = math.exp %19 : vector<2x128xf32>
    %cst_12 = arith.constant 1.000000e+00 : f32
    %21 = vector.broadcast %cst_12 : f32 to vector<2x128xf32>
    %22 = arith.addf %21, %20 : vector<2x128xf32>
    %23 = arith.divf %21, %22 : vector<2x128xf32>
    %24 = vector.extract_strided_slice %9 {offsets = [0, 256], sizes = [2, 128], strides = [1, 1]} : vector<2x512xf32> to vector<2x128xf32>
    %25 = math.tanh %24 : vector<2x128xf32>
    %26 = vector.extract_strided_slice %9 {offsets = [0, 384], sizes = [2, 128], strides = [1, 1]} : vector<2x512xf32> to vector<2x128xf32>
    %27 = arith.negf %26 : vector<2x128xf32>
    %28 = math.exp %27 : vector<2x128xf32>
    %cst_13 = arith.constant 1.000000e+00 : f32
    %29 = vector.broadcast %cst_13 : f32 to vector<2x128xf32>
    %30 = arith.addf %29, %28 : vector<2x128xf32>
    %31 = arith.divf %29, %30 : vector<2x128xf32>
    %32 = arith.mulf %23, %11 : vector<2x128xf32>
    %33 = arith.mulf %17, %25 : vector<2x128xf32>
    %34 = arith.addf %32, %33 : vector<2x128xf32>
    %35 = math.tanh %34 : vector<2x128xf32>
    %36 = arith.mulf %31, %35 : vector<2x128xf32>
    %c0_14 = arith.constant 0 : index
    %c0_15 = arith.constant 0 : index
    %c0_16 = arith.constant 0 : index
    %37 = vector.load %arg12[%c0_14, %c0_15, %c0_16] : memref<3x2x128xf32, #tpu.memory_space<vmem>>, vector<1x2x128xf32>
    %38 = vector.shape_cast %37 : vector<1x2x128xf32> to vector<2x128xf32>
    %39 = vector.shape_cast %36 : vector<2x128xf32> to vector<1x2x128xf32>
    tpu.vector_store %arg12[%c0_14, %c0_15, %c0_16], %39 {strides = array<i32>} : memref<3x2x128xf32, #tpu.memory_space<vmem>>, vector<1x2x128xf32>,
    %c0_17 = arith.constant 0 : index
    %c0_18 = arith.constant 0 : index
    %c0_19 = arith.constant 0 : index
    %40 = vector.load %arg13[%c0_17, %c0_18, %c0_19] : memref<3x2x128xf32, #tpu.memory_space<vmem>>, vector<1x2x128xf32>
    %41 = vector.shape_cast %40 : vector<1x2x128xf32> to vector<2x128xf32>
    %42 = vector.shape_cast %34 : vector<2x128xf32> to vector<1x2x128xf32>
    tpu.vector_store %arg13[%c0_17, %c0_18, %c0_19], %42 {strides = array<i32>} : memref<3x2x128xf32, #tpu.memory_space<vmem>>, vector<1x2x128xf32>,
    %c0_20 = arith.constant 0 : index
    %c0_21 = arith.constant 0 : index
    %43 = vector.load %arg3[%c0_20, %c0_21] : memref<128x512xf32, #tpu.memory_space<vmem>>, vector<128x512xf32>
    %cst_22 = arith.constant dense<0.000000e+00> : vector<2x512xf32>
    %44 = tpu.matmul %36, %43, %cst_22 {dimension_numbers = #tpu.dot_dimension_numbers<[1], [0], [0], [1], [0, 0, 1, 1], [], []>} : vector<2x128xf32>, vector<128x512xf32>, vector<2x512xf32> -> vector<2x512xf32>
    %c1 = arith.constant 1 : index
    %c0_23 = arith.constant 0 : index
    %c0_24 = arith.constant 0 : index
    %45 = vector.load %arg12[%c1, %c0_23, %c0_24] : memref<3x2x128xf32, #tpu.memory_space<vmem>>, vector<1x2x128xf32>
    %46 = vector.shape_cast %45 : vector<1x2x128xf32> to vector<2x128xf32>
    %c0_25 = arith.constant 0 : index
    %c0_26 = arith.constant 0 : index
    %47 = vector.load %arg4[%c0_25, %c0_26] : memref<128x512xf32, #tpu.memory_space<vmem>>, vector<128x512xf32>
    %cst_27 = arith.constant dense<0.000000e+00> : vector<2x512xf32>
    %48 = tpu.matmul %46, %47, %cst_27 {dimension_numbers = #tpu.dot_dimension_numbers<[1], [0], [0], [1], [0, 0, 1, 1], [], []>} : vector<2x128xf32>, vector<128x512xf32>, vector<2x512xf32> -> vector<2x512xf32>
    %49 = arith.addf %44, %48 : vector<2x512xf32>
    %c0_28 = arith.constant 0 : index
    %c0_29 = arith.constant 0 : index
    %50 = vector.load %arg5[%c0_28, %c0_29] : memref<1x512xf32, #tpu.memory_space<vmem>>, vector<1x512xf32>
    %51 = vector.broadcast %50 : vector<1x512xf32> to vector<2x512xf32>
    %52 = arith.addf %49, %51 : vector<2x512xf32>
    %c1_30 = arith.constant 1 : index
    %c0_31 = arith.constant 0 : index
    %c0_32 = arith.constant 0 : index
    %53 = vector.load %arg13[%c1_30, %c0_31, %c0_32] : memref<3x2x128xf32, #tpu.memory_space<vmem>>, vector<1x2x128xf32>
    %54 = vector.shape_cast %53 : vector<1x2x128xf32> to vector<2x128xf32>
    %55 = vector.extract_strided_slice %52 {offsets = [0, 0], sizes = [2, 128], strides = [1, 1]} : vector<2x512xf32> to vector<2x128xf32>
    %56 = arith.negf %55 : vector<2x128xf32>
    %57 = math.exp %56 : vector<2x128xf32>
    %cst_33 = arith.constant 1.000000e+00 : f32
    %58 = vector.broadcast %cst_33 : f32 to vector<2x128xf32>
    %59 = arith.addf %58, %57 : vector<2x128xf32>
    %60 = arith.divf %58, %59 : vector<2x128xf32>
    %61 = vector.extract_strided_slice %52 {offsets = [0, 128], sizes = [2, 128], strides = [1, 1]} : vector<2x512xf32> to vector<2x128xf32>
    %62 = arith.negf %61 : vector<2x128xf32>
    %63 = math.exp %62 : vector<2x128xf32>
    %cst_34 = arith.constant 1.000000e+00 : f32
    %64 = vector.broadcast %cst_34 : f32 to vector<2x128xf32>
    %65 = arith.addf %64, %63 : vector<2x128xf32>
    %66 = arith.divf %64, %65 : vector<2x128xf32>
    %67 = vector.extract_strided_slice %52 {offsets = [0, 256], sizes = [2, 128], strides = [1, 1]} : vector<2x512xf32> to vector<2x128xf32>
    %68 = math.tanh %67 : vector<2x128xf32>
    %69 = vector.extract_strided_slice %52 {offsets = [0, 384], sizes = [2, 128], strides = [1, 1]} : vector<2x512xf32> to vector<2x128xf32>
    %70 = arith.negf %69 : vector<2x128xf32>
    %71 = math.exp %70 : vector<2x128xf32>
    %cst_35 = arith.constant 1.000000e+00 : f32
    %72 = vector.broadcast %cst_35 : f32 to vector<2x128xf32>
    %73 = arith.addf %72, %71 : vector<2x128xf32>
    %74 = arith.divf %72, %73 : vector<2x128xf32>
    %75 = arith.mulf %66, %54 : vector<2x128xf32>
    %76 = arith.mulf %60, %68 : vector<2x128xf32>
    %77 = arith.addf %75, %76 : vector<2x128xf32>
    %78 = math.tanh %77 : vector<2x128xf32>
    %79 = arith.mulf %74, %78 : vector<2x128xf32>
    %c1_36 = arith.constant 1 : index
    %c0_37 = arith.constant 0 : index
    %c0_38 = arith.constant 0 : index
    %80 = vector.load %arg12[%c1_36, %c0_37, %c0_38] : memref<3x2x128xf32, #tpu.memory_space<vmem>>, vector<1x2x128xf32>
    %81 = vector.shape_cast %80 : vector<1x2x128xf32> to vector<2x128xf32>
    %82 = vector.shape_cast %79 : vector<2x128xf32> to vector<1x2x128xf32>
    tpu.vector_store %arg12[%c1_36, %c0_37, %c0_38], %82 {strides = array<i32>} : memref<3x2x128xf32, #tpu.memory_space<vmem>>, vector<1x2x128xf32>,
    %c1_39 = arith.constant 1 : index
    %c0_40 = arith.constant 0 : index
    %c0_41 = arith.constant 0 : index
    %83 = vector.load %arg13[%c1_39, %c0_40, %c0_41] : memref<3x2x128xf32, #tpu.memory_space<vmem>>, vector<1x2x128xf32>
    %84 = vector.shape_cast %83 : vector<1x2x128xf32> to vector<2x128xf32>
    %85 = vector.shape_cast %77 : vector<2x128xf32> to vector<1x2x128xf32>
    tpu.vector_store %arg13[%c1_39, %c0_40, %c0_41], %85 {strides = array<i32>} : memref<3x2x128xf32, #tpu.memory_space<vmem>>, vector<1x2x128xf32>,
    %c0_42 = arith.constant 0 : index
    %c0_43 = arith.constant 0 : index
    %86 = vector.load %arg6[%c0_42, %c0_43] : memref<128x512xf32, #tpu.memory_space<vmem>>, vector<128x512xf32>
    %cst_44 = arith.constant dense<0.000000e+00> : vector<2x512xf32>
    %87 = tpu.matmul %79, %86, %cst_44 {dimension_numbers = #tpu.dot_dimension_numbers<[1], [0], [0], [1], [0, 0, 1, 1], [], []>} : vector<2x128xf32>, vector<128x512xf32>, vector<2x512xf32> -> vector<2x512xf32>
    %c2 = arith.constant 2 : index
    %c0_45 = arith.constant 0 : index
    %c0_46 = arith.constant 0 : index
    %88 = vector.load %arg12[%c2, %c0_45, %c0_46] : memref<3x2x128xf32, #tpu.memory_space<vmem>>, vector<1x2x128xf32>
    %89 = vector.shape_cast %88 : vector<1x2x128xf32> to vector<2x128xf32>
    %c0_47 = arith.constant 0 : index
    %c0_48 = arith.constant 0 : index
    %90 = vector.load %arg7[%c0_47, %c0_48] : memref<128x512xf32, #tpu.memory_space<vmem>>, vector<128x512xf32>
    %cst_49 = arith.constant dense<0.000000e+00> : vector<2x512xf32>
    %91 = tpu.matmul %89, %90, %cst_49 {dimension_numbers = #tpu.dot_dimension_numbers<[1], [0], [0], [1], [0, 0, 1, 1], [], []>} : vector<2x128xf32>, vector<128x512xf32>, vector<2x512xf32> -> vector<2x512xf32>
    %92 = arith.addf %87, %91 : vector<2x512xf32>
    %c0_50 = arith.constant 0 : index
    %c0_51 = arith.constant 0 : index
    %93 = vector.load %arg8[%c0_50, %c0_51] : memref<1x512xf32, #tpu.memory_space<vmem>>, vector<1x512xf32>
    %94 = vector.broadcast %93 : vector<1x512xf32> to vector<2x512xf32>
    %95 = arith.addf %92, %94 : vector<2x512xf32>
    %c2_52 = arith.constant 2 : index
    %c0_53 = arith.constant 0 : index
    %c0_54 = arith.constant 0 : index
    %96 = vector.load %arg13[%c2_52, %c0_53, %c0_54] : memref<3x2x128xf32, #tpu.memory_space<vmem>>, vector<1x2x128xf32>
    %97 = vector.shape_cast %96 : vector<1x2x128xf32> to vector<2x128xf32>
    %98 = vector.extract_strided_slice %95 {offsets = [0, 0], sizes = [2, 128], strides = [1, 1]} : vector<2x512xf32> to vector<2x128xf32>
    %99 = arith.negf %98 : vector<2x128xf32>
    %100 = math.exp %99 : vector<2x128xf32>
    %cst_55 = arith.constant 1.000000e+00 : f32
    %101 = vector.broadcast %cst_55 : f32 to vector<2x128xf32>
    %102 = arith.addf %101, %100 : vector<2x128xf32>
    %103 = arith.divf %101, %102 : vector<2x128xf32>
    %104 = vector.extract_strided_slice %95 {offsets = [0, 128], sizes = [2, 128], strides = [1, 1]} : vector<2x512xf32> to vector<2x128xf32>
    %105 = arith.negf %104 : vector<2x128xf32>
    %106 = math.exp %105 : vector<2x128xf32>
    %cst_56 = arith.constant 1.000000e+00 : f32
    %107 = vector.broadcast %cst_56 : f32 to vector<2x128xf32>
    %108 = arith.addf %107, %106 : vector<2x128xf32>
    %109 = arith.divf %107, %108 : vector<2x128xf32>
    %110 = vector.extract_strided_slice %95 {offsets = [0, 256], sizes = [2, 128], strides = [1, 1]} : vector<2x512xf32> to vector<2x128xf32>
    %111 = math.tanh %110 : vector<2x128xf32>
    %112 = vector.extract_strided_slice %95 {offsets = [0, 384], sizes = [2, 128], strides = [1, 1]} : vector<2x512xf32> to vector<2x128xf32>
    %113 = arith.negf %112 : vector<2x128xf32>
    %114 = math.exp %113 : vector<2x128xf32>
    %cst_57 = arith.constant 1.000000e+00 : f32
    %115 = vector.broadcast %cst_57 : f32 to vector<2x128xf32>
    %116 = arith.addf %115, %114 : vector<2x128xf32>
    %117 = arith.divf %115, %116 : vector<2x128xf32>
    %118 = arith.mulf %109, %97 : vector<2x128xf32>
    %119 = arith.mulf %103, %111 : vector<2x128xf32>
    %120 = arith.addf %118, %119 : vector<2x128xf32>
    %121 = math.tanh %120 : vector<2x128xf32>
    %122 = arith.mulf %117, %121 : vector<2x128xf32>
    %c2_58 = arith.constant 2 : index
    %c0_59 = arith.constant 0 : index
    %c0_60 = arith.constant 0 : index
    %123 = vector.load %arg12[%c2_58, %c0_59, %c0_60] : memref<3x2x128xf32, #tpu.memory_space<vmem>>, vector<1x2x128xf32>
    %124 = vector.shape_cast %123 : vector<1x2x128xf32> to vector<2x128xf32>
    %125 = vector.shape_cast %122 : vector<2x128xf32> to vector<1x2x128xf32>
    tpu.vector_store %arg12[%c2_58, %c0_59, %c0_60], %125 {strides = array<i32>} : memref<3x2x128xf32, #tpu.memory_space<vmem>>, vector<1x2x128xf32>,
    %c2_61 = arith.constant 2 : index
    %c0_62 = arith.constant 0 : index
    %c0_63 = arith.constant 0 : index
    %126 = vector.load %arg13[%c2_61, %c0_62, %c0_63] : memref<3x2x128xf32, #tpu.memory_space<vmem>>, vector<1x2x128xf32>
    %127 = vector.shape_cast %126 : vector<1x2x128xf32> to vector<2x128xf32>
    %128 = vector.shape_cast %120 : vector<2x128xf32> to vector<1x2x128xf32>
    tpu.vector_store %arg13[%c2_61, %c0_62, %c0_63], %128 {strides = array<i32>} : memref<3x2x128xf32, #tpu.memory_space<vmem>>, vector<1x2x128xf32>,
    %c0_64 = arith.constant 0 : index
    %c0_65 = arith.constant 0 : index
    %c0_66 = arith.constant 0 : index
    %129 = vector.load %arg9[%c0_64, %c0_65, %c0_66] : memref<1x2x128xf32, #tpu.memory_space<vmem>>, vector<1x2x128xf32>
    %130 = vector.shape_cast %129 : vector<1x2x128xf32> to vector<2x128xf32>
    %131 = vector.shape_cast %122 : vector<2x128xf32> to vector<1x2x128xf32>
    tpu.vector_store %arg9[%c0_64, %c0_65, %c0_66], %131 {strides = array<i32>} : memref<1x2x128xf32, #tpu.memory_space<vmem>>, vector<1x2x128xf32>,
    %c3_i32 = arith.constant 3 : i32
    %132 = arith.cmpi eq, %arg0, %c3_i32 : i32
    %133 = arith.extui %132 : i1 to i32
    %c0_i32_67 = arith.constant 0 : i32
    %134 = arith.cmpi ne, %133, %c0_i32_67 : i32
    scf.if %134 {
      %c0_68 = arith.constant 0 : index
      %c0_69 = arith.constant 0 : index
      %c0_70 = arith.constant 0 : index
      %135 = vector.load %arg12[%c0_68, %c0_69, %c0_70] : memref<3x2x128xf32, #tpu.memory_space<vmem>>, vector<3x2x128xf32>
      %c0_71 = arith.constant 0 : index
      %c0_72 = arith.constant 0 : index
      %c0_73 = arith.constant 0 : index
      %136 = vector.load %arg10[%c0_71, %c0_72, %c0_73] : memref<3x2x128xf32, #tpu.memory_space<vmem>>, vector<3x2x128xf32>
      tpu.vector_store %arg10[%c0_71, %c0_72, %c0_73], %135 {strides = array<i32>} : memref<3x2x128xf32, #tpu.memory_space<vmem>>, vector<3x2x128xf32>,
      %c0_74 = arith.constant 0 : index
      %c0_75 = arith.constant 0 : index
      %c0_76 = arith.constant 0 : index
      %137 = vector.load %arg13[%c0_74, %c0_75, %c0_76] : memref<3x2x128xf32, #tpu.memory_space<vmem>>, vector<3x2x128xf32>
      %c0_77 = arith.constant 0 : index
      %c0_78 = arith.constant 0 : index
      %c0_79 = arith.constant 0 : index
      %138 = vector.load %arg11[%c0_77, %c0_78, %c0_79] : memref<3x2x128xf32, #tpu.memory_space<vmem>>, vector<3x2x128xf32>
      tpu.vector_store %arg11[%c0_77, %c0_78, %c0_79], %137 {strides = array<i32>} : memref<3x2x128xf32, #tpu.memory_space<vmem>>, vector<3x2x128xf32>,
    } else {
    }
    return
  }
  func.func @transform_0(%arg0: i32) -> (i32, i32, i32) {
    %c0_i32 = arith.constant 0 : i32
    %c0_i32_0 = arith.constant 0 : i32
    %c0_i32_1 = arith.constant 0 : i32
    return %arg0, %c0_i32, %c0_i32_0 : i32, i32, i32
  }
  func.func @transform_1(%arg0: i32) -> (i32, i32) {
    %c0_i32 = arith.constant 0 : i32
    %c0_i32_0 = arith.constant 0 : i32
    %c0_i32_1 = arith.constant 0 : i32
    return %c0_i32, %c0_i32_0 : i32, i32
  }
  func.func @transform_2(%arg0: i32) -> (i32, i32) {
    %c0_i32 = arith.constant 0 : i32
    %c0_i32_0 = arith.constant 0 : i32
    %c0_i32_1 = arith.constant 0 : i32
    return %c0_i32, %c0_i32_0 : i32, i32
  }
  func.func @transform_3(%arg0: i32) -> (i32, i32) {
    %c0_i32 = arith.constant 0 : i32
    %c0_i32_0 = arith.constant 0 : i32
    %c0_i32_1 = arith.constant 0 : i32
    return %c0_i32, %c0_i32_0 : i32, i32
  }
  func.func @transform_4(%arg0: i32) -> (i32, i32) {
    %c0_i32 = arith.constant 0 : i32
    %c0_i32_0 = arith.constant 0 : i32
    %c0_i32_1 = arith.constant 0 : i32
    return %c0_i32, %c0_i32_0 : i32, i32
  }
  func.func @transform_5(%arg0: i32) -> (i32, i32) {
    %c0_i32 = arith.constant 0 : i32
    %c0_i32_0 = arith.constant 0 : i32
    %c0_i32_1 = arith.constant 0 : i32
    return %c0_i32, %c0_i32_0 : i32, i32
  }
  func.func @transform_6(%arg0: i32) -> (i32, i32) {
    %c0_i32 = arith.constant 0 : i32
    %c0_i32_0 = arith.constant 0 : i32
    %c0_i32_1 = arith.constant 0 : i32
    return %c0_i32, %c0_i32_0 : i32, i32
  }
  func.func @transform_7(%arg0: i32) -> (i32, i32) {
    %c0_i32 = arith.constant 0 : i32
    %c0_i32_0 = arith.constant 0 : i32
    %c0_i32_1 = arith.constant 0 : i32
    return %c0_i32, %c0_i32_0 : i32, i32
  }
  func.func @transform_8(%arg0: i32) -> (i32, i32, i32) {
    %c0_i32 = arith.constant 0 : i32
    %c0_i32_0 = arith.constant 0 : i32
    %c0_i32_1 = arith.constant 0 : i32
    return %arg0, %c0_i32, %c0_i32_0 : i32, i32, i32
  }
  func.func @transform_9(%arg0: i32) -> (i32, i32, i32) {
    %c0_i32 = arith.constant 0 : i32
    %c0_i32_0 = arith.constant 0 : i32
    %c0_i32_1 = arith.constant 0 : i32
    %c0_i32_2 = arith.constant 0 : i32
    return %c0_i32, %c0_i32_0, %c0_i32_1 : i32, i32, i32
  }
  func.func @transform_10(%arg0: i32) -> (i32, i32, i32) {
    %c0_i32 = arith.constant 0 : i32
    %c0_i32_0 = arith.constant 0 : i32
    %c0_i32_1 = arith.constant 0 : i32
    %c0_i32_2 = arith.constant 0 : i32
    return %c0_i32, %c0_i32_0, %c0_i32_1 : i32, i32, i32
  }
}

</mosaic_0001>

<llo_original>
// kernel: feature_mining_forward.2
$region0: #{feature_mining_forward.2}
  #allocation0 [shape = 'u32[]', space=smem, size = 0x4, offset = 0x4, fixed_abs, tag = 'smem constant byte address 0x4 - core index']
  #allocation1 [shape = 'u32[72,128]{1,0:T(1,128)}', space=vmem, size = 0x9000, scoped, tag = 'internal scratch']
  %s0 = inlined_call_operand.vmem [shape: f32[8,375], index: 0, kind: input, shape index: {}]
  %s1 = inlined_call_operand.vmem [shape: f32[375,294], index: 1, kind: input, shape index: {}]
  %s2 = inlined_call_operand.vmem [shape: f32[1,294], index: 2, kind: input, shape index: {}]
  %s3 = inlined_call_operand.vmem [shape: f32[375,500], index: 3, kind: input, shape index: {}]
  %s4 = inlined_call_operand.vmem [shape: f32[1,500], index: 4, kind: input, shape index: {}]
  %s5 = inlined_call_operand.vmem [shape: f32[500,168], index: 5, kind: input, shape index: {}]
  %s6 = inlined_call_operand.vmem [shape: f32[1,168], index: 6, kind: input, shape index: {}]
  %s7 = inlined_call_operand.vmem [shape: f32[375,750], index: 7, kind: input, shape index: {}]
  %s8 = inlined_call_operand.vmem [shape: f32[1,750], index: 8, kind: input, shape index: {}]
  %s9 = inlined_call_operand.vmem [shape: f32[750,375], index: 9, kind: input, shape index: {}]
  %s10 = inlined_call_operand.vmem [shape: f32[1,375], index: 10, kind: input, shape index: {}]
  %s11 = inlined_call_operand.vmem [shape: f32[375,252], index: 11, kind: input, shape index: {}]
  %s12 = inlined_call_operand.vmem [shape: f32[1,252], index: 12, kind: input, shape index: {}]
  %s13 = inlined_call_operand.vmem [shape: f32[375,512], index: 13, kind: input, shape index: {}]
  %s14 = inlined_call_operand.vmem [shape: f32[294,512], index: 14, kind: input, shape index: {}]
  %s15 = inlined_call_operand.vmem [shape: f32[168,512], index: 15, kind: input, shape index: {}]
  %s16 = inlined_call_operand.vmem [shape: f32[252,512], index: 16, kind: input, shape index: {}]
  %s17 = inlined_call_operand.vmem [shape: f32[1,512], index: 17, kind: input, shape index: {}]
  %s18 = inlined_call_operand.vmem [shape: f32[8,512], index: 18, kind: output, shape index: {}]
  %s19 = sld [smem:[#allocation0]]
  $region82: #{feature_mining_forward.2} parent=0
    _
  %s21 = ssub.s32 1, %s19
  %s22 = scalar_select 0, %s21, %s19
  // Predicated region
  $region2: #{feature_mining_forward.2} parent=0 // pred_check
    _
  $region3: #{feature_mining_forward.2} parent=0 // pred_check_branch
    %24 = sbr.rel (0) target = $region5
  $region4: #{feature_mining_forward.2} parent=0 // pred_region
    _
  $region5: #{feature_mining_forward.2} parent=0 // pred_fallthru
    _
  // Predicated region
  $region6: #{feature_mining_forward.2} parent=0 // pred_check
    _
  $region7: #{feature_mining_forward.2} parent=0 // pred_check_branch
    %26 = sbr.rel (0) target = $region9
  $region8: #{feature_mining_forward.2} parent=0 // pred_region
    _
  $region9: #{feature_mining_forward.2} parent=0 // pred_fallthru
    _
  // Predicated region
  $region10: #{feature_mining_forward.2} parent=0 // pred_check
    _
  $region11: #{feature_mining_forward.2} parent=0 // pred_check_branch
    %28 = sbr.rel (0) target = $region13
  $region12: #{feature_mining_forward.2} parent=0 // pred_region
    _
  $region13: #{feature_mining_forward.2} parent=0 // pred_fallthru
    _
  // Predicated region
  $region14: #{feature_mining_forward.2} parent=0 // pred_check
    _
  $region15: #{feature_mining_forward.2} parent=0 // pred_check_branch
    %30 = sbr.rel (0) target = $region17
  $region16: #{feature_mining_forward.2} parent=0 // pred_region
    _
  $region17: #{feature_mining_forward.2} parent=0 // pred_fallthru
    _
  // Predicated region
  $region18: #{feature_mining_forward.2} parent=0 // pred_check
    _
  $region19: #{feature_mining_forward.2} parent=0 // pred_check_branch
    %32 = sbr.rel (0) target = $region21
  $region20: #{feature_mining_forward.2} parent=0 // pred_region
    _
  $region21: #{feature_mining_forward.2} parent=0 // pred_fallthru
    _
  // Predicated region
  $region22: #{feature_mining_forward.2} parent=0 // pred_check
    _
  $region23: #{feature_mining_forward.2} parent=0 // pred_check_branch
    %34 = sbr.rel (0) target = $region25
  $region24: #{feature_mining_forward.2} parent=0 // pred_region
    _
  $region25: #{feature_mining_forward.2} parent=0 // pred_fallthru
    _
  // Predicated region
  $region26: #{feature_mining_forward.2} parent=0 // pred_check
    _
  $region27: #{feature_mining_forward.2} parent=0 // pred_check_branch
    %36 = sbr.rel (0) target = $region29
  $region28: #{feature_mining_forward.2} parent=0 // pred_region
    _
  $region29: #{feature_mining_forward.2} parent=0 // pred_fallthru
    _
  // Predicated region
  $region30: #{feature_mining_forward.2} parent=0 // pred_check
    _
  $region31: #{feature_mining_forward.2} parent=0 // pred_check_branch
    %38 = sbr.rel (0) target = $region33
  $region32: #{feature_mining_forward.2} parent=0 // pred_region
    _
  $region33: #{feature_mining_forward.2} parent=0 // pred_fallthru
    _
  // Predicated region
  $region34: #{feature_mining_forward.2} parent=0 // pred_check
    _
  $region35: #{feature_mining_forward.2} parent=0 // pred_check_branch
    %40 = sbr.rel (0) target = $region37
  $region36: #{feature_mining_forward.2} parent=0 // pred_region
    _
  $region37: #{feature_mining_forward.2} parent=0 // pred_fallthru
    _
  // Predicated region
  $region38: #{feature_mining_forward.2} parent=0 // pred_check
    _
  $region39: #{feature_mining_forward.2} parent=0 // pred_check_branch
    %42 = sbr.rel (0) target = $region41
  $region40: #{feature_mining_forward.2} parent=0 // pred_region
    _
  $region41: #{feature_mining_forward.2} parent=0 // pred_fallthru
    _
  // Predicated region
  $region42: #{feature_mining_forward.2} parent=0 // pred_check
    _
  $region43: #{feature_mining_forward.2} parent=0 // pred_check_branch
    %44 = sbr.rel (0) target = $region45
  $region44: #{feature_mining_forward.2} parent=0 // pred_region
    _
  $region45: #{feature_mining_forward.2} parent=0 // pred_fallthru
    _
  // Predicated region
  $region46: #{feature_mining_forward.2} parent=0 // pred_check
    _
  $region47: #{feature_mining_forward.2} parent=0 // pred_check_branch
    %46 = sbr.rel (0) target = $region49
  $region48: #{feature_mining_forward.2} parent=0 // pred_region
    _
  $region49: #{feature_mining_forward.2} parent=0 // pred_fallthru
    _
  // Predicated region
  $region50: #{feature_mining_forward.2} parent=0 // pred_check
    _
  $region51: #{feature_mining_forward.2} parent=0 // pred_check_branch
    %48 = sbr.rel (0) target = $region53
  $region52: #{feature_mining_forward.2} parent=0 // pred_region
    _
  $region53: #{feature_mining_forward.2} parent=0 // pred_fallthru
    _
  // Predicated region
  $region54: #{feature_mining_forward.2} parent=0 // pred_check
    _
  $region55: #{feature_mining_forward.2} parent=0 // pred_check_branch
    %50 = sbr.rel (0) target = $region57
  $region56: #{feature_mining_forward.2} parent=0 // pred_region
    _
  $region57: #{feature_mining_forward.2} parent=0 // pred_fallthru
    _
  // Predicated region
  $region58: #{feature_mining_forward.2} parent=0 // pred_check
    _
  $region59: #{feature_mining_forward.2} parent=0 // pred_check_branch
    %52 = sbr.rel (0) target = $region61
  $region60: #{feature_mining_forward.2} parent=0 // pred_region
    _
  $region61: #{feature_mining_forward.2} parent=0 // pred_fallthru
    _
  // Predicated region
  $region62: #{feature_mining_forward.2} parent=0 // pred_check
    _
  $region63: #{feature_mining_forward.2} parent=0 // pred_check_branch
    %54 = sbr.rel (0) target = $region65
  $region64: #{feature_mining_forward.2} parent=0 // pred_region
    _
  $region65: #{feature_mining_forward.2} parent=0 // pred_fallthru
    _
  // Predicated region
  $region66: #{feature_mining_forward.2} parent=0 // pred_check
    _
  $region67: #{feature_mining_forward.2} parent=0 // pred_check_branch
    %56 = sbr.rel (0) target = $region69
  $region68: #{feature_mining_forward.2} parent=0 // pred_region
    _
  $region69: #{feature_mining_forward.2} parent=0 // pred_fallthru
    _
  // Predicated region
  $region70: #{feature_mining_forward.2} parent=0 // pred_check
    _
  $region71: #{feature_mining_forward.2} parent=0 // pred_check_branch
    %58 = sbr.rel (0) target = $region73
  $region72: #{feature_mining_forward.2} parent=0 // pred_region
    _
  $region73: #{feature_mining_forward.2} parent=0 // pred_fallthru
    _
  %v59 = vld [vmem:[%s0] sm:$0xff]
  %v60 = vld [vmem:[%s0 + $0x8] sm:$0xff]
  %v61 = vld [vmem:[%s0 + $0x10] sm:$0xff]
  %v62 = vld [vmem:[%s1] sm:$0xff]
  %v63 = vld [vmem:[%s1 + $0x8] sm:$0xff]
  %v64 = vld [vmem:[%s1 + $0x10] sm:$0xff]
  %v65 = vld [vmem:[%s1 + $0x18] sm:$0xff]
  %v66 = vld [vmem:[%s1 + $0x20] sm:$0xff]
  %v67 = vld [vmem:[%s1 + $0x28] sm:$0xff]
  %v68 = vld [vmem:[%s1 + $0x30] sm:$0xff]
  %v69 = vld [vmem:[%s1 + $0x38] sm:$0xff]
  %v70 = vld [vmem:[%s1 + $0x40] sm:$0xff]
  %v71 = vld [vmem:[%s1 + $0x48] sm:$0xff]
  %v72 = vld [vmem:[%s1 + $0x50] sm:$0xff]
  %v73 = vld [vmem:[%s1 + $0x58] sm:$0xff]
  %v74 = vld [vmem:[%s1 + $0x60] sm:$0xff]
  %v75 = vld [vmem:[%s1 + $0x68] sm:$0xff]
  %v76 = vld [vmem:[%s1 + $0x70] sm:$0xff]
  %v77 = vld [vmem:[%s1 + $0x78] sm:$0xff]
  %v78 = vld [vmem:[%s1 + $0x80] sm:$0xff]
  %v79 = vld [vmem:[%s1 + $0x88] sm:$0xff]
  %v80 = vld [vmem:[%s1 + $0x90] sm:$0xff]
  %v81 = vld [vmem:[%s1 + $0x98] sm:$0xff]
  %v82 = vld [vmem:[%s1 + $0xa0] sm:$0xff]
  %v83 = vld [vmem:[%s1 + $0xa8] sm:$0xff]
  %v84 = vld [vmem:[%s1 + $0xb0] sm:$0xff]
  %v85 = vld [vmem:[%s1 + $0xb8] sm:$0xff]
  %v86 = vld [vmem:[%s1 + $0xc0] sm:$0xff]
  %v87 = vld [vmem:[%s1 + $0xc8] sm:$0xff]
  %v88 = vld [vmem:[%s1 + $0xd0] sm:$0xff]
  %v89 = vld [vmem:[%s1 + $0xd8] sm:$0xff]
  %v90 = vld [vmem:[%s1 + $0xe0] sm:$0xff]
  %v91 = vld [vmem:[%s1 + $0xe8] sm:$0xff]
  %v92 = vld [vmem:[%s1 + $0xf0] sm:$0xff]
  %v93 = vld [vmem:[%s1 + $0xf8] sm:$0xff]
  %v94 = vld [vmem:[%s1 + $0x100] sm:$0xff]
  %v95 = vld [vmem:[%s1 + $0x108] sm:$0xff]
  %v96 = vld [vmem:[%s1 + $0x110] sm:$0xff]
  %v97 = vld [vmem:[%s1 + $0x118] sm:$0xff]
  %v98 = vld [vmem:[%s1 + $0x120] sm:$0xff]
  %v99 = vld [vmem:[%s1 + $0x128] sm:$0xff]
  %v100 = vld [vmem:[%s1 + $0x130] sm:$0xff]
  %v101 = vld [vmem:[%s1 + $0x138] sm:$0xff]
  %v102 = vld [vmem:[%s1 + $0x140] sm:$0xff]
  %v103 = vld [vmem:[%s1 + $0x148] sm:$0xff]
  %v104 = vld [vmem:[%s1 + $0x150] sm:$0xff]
  %v105 = vld [vmem:[%s1 + $0x158] sm:$0xff]
  %v106 = vld [vmem:[%s1 + $0x160] sm:$0xff]
  %v107 = vld [vmem:[%s1 + $0x168] sm:$0xff]
  %v108 = vld [vmem:[%s1 + $0x170] sm:$0xff]
  %v109 = vld [vmem:[%s1 + $0x178] sm:$0xff]
  %v110 = vld [vmem:[%s1 + $0x180] sm:$0xff]
  %v111 = vld [vmem:[%s1 + $0x188] sm:$0xff]
  %v112 = vld [vmem:[%s1 + $0x190] sm:$0xff]
  %v113 = vld [vmem:[%s1 + $0x198] sm:$0xff]
  %v114 = vld [vmem:[%s1 + $0x1a0] sm:$0xff]
  %v115 = vld [vmem:[%s1 + $0x1a8] sm:$0xff]
  %v116 = vld [vmem:[%s1 + $0x1b0] sm:$0xff]
  %v117 = vld [vmem:[%s1 + $0x1b8] sm:$0xff]
  %v118 = vld [vmem:[%s1 + $0x1c0] sm:$0xff]
  %v119 = vld [vmem:[%s1 + $0x1c8] sm:$0xff]
  %v120 = vld [vmem:[%s1 + $0x1d0] sm:$0xff]
  %v121 = vld [vmem:[%s1 + $0x1d8] sm:$0xff]
  %v122 = vld [vmem:[%s1 + $0x1e0] sm:$0xff]
  %v123 = vld [vmem:[%s1 + $0x1e8] sm:$0xff]
  %v124 = vld [vmem:[%s1 + $0x1f0] sm:$0xff]
  %v125 = vld [vmem:[%s1 + $0x1f8] sm:$0xff]
  %v126 = vld [vmem:[%s1 + $0x200] sm:$0xff]
  %v127 = vld [vmem:[%s1 + $0x208] sm:$0xff]
  %v128 = vld [vmem:[%s1 + $0x210] sm:$0xff]
  %v129 = vld [vmem:[%s1 + $0x218] sm:$0xff]
  %v130 = vld [vmem:[%s1 + $0x220] sm:$0xff]
  %v131 = vld [vmem:[%s1 + $0x228] sm:$0xff]
  %v132 = vld [vmem:[%s1 + $0x230] sm:$0xff]
  %v133 = vld [vmem:[%s1 + $0x238] sm:$0xff]
  %v134 = vld [vmem:[%s1 + $0x240] sm:$0xff]
  %v135 = vld [vmem:[%s1 + $0x248] sm:$0xff]
  %v136 = vld [vmem:[%s1 + $0x250] sm:$0xff]
  %v137 = vld [vmem:[%s1 + $0x258] sm:$0xff]
  %v138 = vld [vmem:[%s1 + $0x260] sm:$0xff]
  %v139 = vld [vmem:[%s1 + $0x268] sm:$0xff]
  %v140 = vld [vmem:[%s1 + $0x270] sm:$0xff]
  %v141 = vld [vmem:[%s1 + $0x278] sm:$0xff]
  %v142 = vld [vmem:[%s1 + $0x280] sm:$0xff]
  %v143 = vld [vmem:[%s1 + $0x288] sm:$0xff]
  %v144 = vld [vmem:[%s1 + $0x290] sm:$0xff]
  %v145 = vld [vmem:[%s1 + $0x298] sm:$0xff]
  %v146 = vld [vmem:[%s1 + $0x2a0] sm:$0xff]
  %v147 = vld [vmem:[%s1 + $0x2a8] sm:$0xff]
  %v148 = vld [vmem:[%s1 + $0x2b0] sm:$0xff]
  %v149 = vld [vmem:[%s1 + $0x2b8] sm:$0xff]
  %v150 = vld [vmem:[%s1 + $0x2c0] sm:$0xff]
  %v151 = vld [vmem:[%s1 + $0x2c8] sm:$0xff]
  %v152 = vld [vmem:[%s1 + $0x2d0] sm:$0xff]
  %v153 = vld [vmem:[%s1 + $0x2d8] sm:$0xff]
  %v154 = vld [vmem:[%s1 + $0x2e0] sm:$0xff]
  %v155 = vld [vmem:[%s1 + $0x2e8] sm:$0xff]
  %v156 = vld [vmem:[%s1 + $0x2f0] sm:$0xff]
  %v157 = vld [vmem:[%s1 + $0x2f8] sm:$0xff]
  %v158 = vld [vmem:[%s1 + $0x300] sm:$0xff]
  %v159 = vld [vmem:[%s1 + $0x308] sm:$0xff]
  %v160 = vld [vmem:[%s1 + $0x310] sm:$0xff]
  %v161 = vld [vmem:[%s1 + $0x318] sm:$0xff]
  %v162 = vld [vmem:[%s1 + $0x320] sm:$0xff]
  %v163 = vld [vmem:[%s1 + $0x328] sm:$0xff]
  %v164 = vld [vmem:[%s1 + $0x330] sm:$0xff]
  %v165 = vld [vmem:[%s1 + $0x338] sm:$0xff]
  %v166 = vld [vmem:[%s1 + $0x340] sm:$0xff]
  %v167 = vld [vmem:[%s1 + $0x348] sm:$0xff]
  %v168 = vld [vmem:[%s1 + $0x350] sm:$0xff]
  %v169 = vld [vmem:[%s1 + $0x358] sm:$0xff]
  %v170 = vld [vmem:[%s1 + $0x360] sm:$0xff]
  %v171 = vld [vmem:[%s1 + $0x368] sm:$0xff]
  %v172 = vld [vmem:[%s1 + $0x370] sm:$0xff]
  %v173 = vld [vmem:[%s1 + $0x378] sm:$0xff]
  %v174 = vld [vmem:[%s1 + $0x380] sm:$0xff]
  %v175 = vld [vmem:[%s1 + $0x388] sm:$0xff]
  %v176 = vld [vmem:[%s1 + $0x390] sm:$0xff]
  %v177 = vld [vmem:[%s1 + $0x398] sm:$0xff]
  %v178 = vld [vmem:[%s1 + $0x3a0] sm:$0xff]
  %v179 = vld [vmem:[%s1 + $0x3a8] sm:$0xff]
  %v180 = vld [vmem:[%s1 + $0x3b0] sm:$0xff]
  %v181 = vld [vmem:[%s1 + $0x3b8] sm:$0xff]
  %v182 = vld [vmem:[%s1 + $0x3c0] sm:$0xff]
  %v183 = vld [vmem:[%s1 + $0x3c8] sm:$0xff]
  %v184 = vld [vmem:[%s1 + $0x3d0] sm:$0xff]
  %v185 = vld [vmem:[%s1 + $0x3d8] sm:$0xff]
  %v186 = vld [vmem:[%s1 + $0x3e0] sm:$0xff]
  %v187 = vld [vmem:[%s1 + $0x3e8] sm:$0xff]
  %v188 = vld [vmem:[%s1 + $0x3f0] sm:$0xff]
  %v189 = vld [vmem:[%s1 + $0x3f8] sm:$0xff]
  %v190 = vld [vmem:[%s1 + $0x400] sm:$0xff]
  %v191 = vld [vmem:[%s1 + $0x408] sm:$0xff]
  %v192 = vld [vmem:[%s1 + $0x410] sm:$0xff]
  %v193 = vld [vmem:[%s1 + $0x418] sm:$0xff]
  %v194 = vld [vmem:[%s1 + $0x420] sm:$0xff]
  %v195 = vld [vmem:[%s1 + $0x428] sm:$0xff]
  %v196 = vld [vmem:[%s1 + $0x430] sm:$0xff]
  %v197 = vld [vmem:[%s1 + $0x438] sm:$0xff]
  %v198 = vld [vmem:[%s1 + $0x440] sm:$0xff]
  %v199 = vld [vmem:[%s1 + $0x448] sm:$0xff]
  %v200 = vld [vmem:[%s1 + $0x450] sm:$0x7f]
  %v201 = vld [vmem:[%s1 + $0x458] sm:$0x7f]
  %v202 = vld [vmem:[%s1 + $0x460] sm:$0x7f]
  %v203 = vld [vmem:[%s2] sm:$0x7]
  %v205 = vperm.slane %v203, 0
  %v206 = vperm.slane %v203, 1
  %v207 = vperm.slane %v203, 2
  %vm211 = vcmask 973824
  %v213 = vsel %vm211, %v61, 0
  %vm215 = vcmask 1046528
  %v217 = vsel %vm215, %v200, 0
  %v220 = vsel %vm215, %v201, 0
  %v223 = vsel %vm215, %v202, 0
  %225 = vmatpush.msra.mxu0 %v107
  %226 = vmatpush.msra.mxu0 %v104
  %227 = vmatpush.msra.mxu0 %v101
  %228 = vmatpush.msra.mxu0 %v98
  %229 = vmatpush.msra.mxu0 %v95
  %230 = vmatpush.msra.mxu0 %v92
  %231 = vmatpush.msra.mxu0 %v89
  %232 = vmatpush.msra.mxu0 %v86
  %233 = vmatpush.msra.mxu0 %v83
  %234 = vmatpush.msra.mxu0 %v80
  %235 = vmatpush.msra.mxu0 %v77
  %236 = vmatpush.msra.mxu0 %v74
  %237 = vmatpush.msra.mxu0 %v71
  %238 = vmatpush.msra.mxu0 %v68
  %239 = vmatpush.msra.mxu0 %v65
  %240 = vmatpush.msra.mxu0 %v62
  %241 = vmatmul.f32.gmra.mxu0 %v59
  %v242 = vpop.f32.mrf.mxu0
  %v243 = vadd.f32 %v205, %v242
  %244 = vdwg.mxu0
  %245 = vmatpush.msra.mxu0 %v155
  %246 = vmatpush.msra.mxu0 %v152
  %247 = vmatpush.msra.mxu0 %v149
  %248 = vmatpush.msra.mxu0 %v146
  %249 = vmatpush.msra.mxu0 %v143
  %250 = vmatpush.msra.mxu0 %v140
  %251 = vmatpush.msra.mxu0 %v137
  %252 = vmatpush.msra.mxu0 %v134
  %253 = vmatpush.msra.mxu0 %v131
  %254 = vmatpush.msra.mxu0 %v128
  %255 = vmatpush.msra.mxu0 %v125
  %256 = vmatpush.msra.mxu0 %v122
  %257 = vmatpush.msra.mxu0 %v119
  %258 = vmatpush.msra.mxu0 %v116
  %259 = vmatpush.msra.mxu0 %v113
  %260 = vmatpush.msra.mxu0 %v110
  %261 = vmatmul.f32.gmra.mxu0 %v60
  %v262 = vpop.f32.mrf.mxu0
  %v263 = vadd.f32 %v243, %v262
  %264 = vdwg.mxu0
  %265 = vmatpush.msra.mxu0 0.0
  %266 = vmatpush.msra.mxu0 %v217
  %267 = vmatpush.msra.mxu0 %v197
  %268 = vmatpush.msra.mxu0 %v194
  %269 = vmatpush.msra.mxu0 %v191
  %270 = vmatpush.msra.mxu0 %v188
  %271 = vmatpush.msra.mxu0 %v185
  %272 = vmatpush.msra.mxu0 %v182
  %273 = vmatpush.msra.mxu0 %v179
  %274 = vmatpush.msra.mxu0 %v176
  %275 = vmatpush.msra.mxu0 %v173
  %276 = vmatpush.msra.mxu0 %v170
  %277 = vmatpush.msra.mxu0 %v167
  %278 = vmatpush.msra.mxu0 %v164
  %279 = vmatpush.msra.mxu0 %v161
  %280 = vmatpush.msra.mxu0 %v158
  %281 = vmatmul.f32.gmra.mxu0 %v213
  %v282 = vpop.f32.mrf.mxu0
  %v283 = vadd.f32 %v263, %v282
  %284 = vdwg.mxu0
  %285 = vmatpush.msra.mxu0 %v108
  %286 = vmatpush.msra.mxu0 %v105
  %287 = vmatpush.msra.mxu0 %v102
  %288 = vmatpush.msra.mxu0 %v99
  %289 = vmatpush.msra.mxu0 %v96
  %290 = vmatpush.msra.mxu0 %v93
  %291 = vmatpush.msra.mxu0 %v90
  %292 = vmatpush.msra.mxu0 %v87
  %293 = vmatpush.msra.mxu0 %v84
  %294 = vmatpush.msra.mxu0 %v81
  %295 = vmatpush.msra.mxu0 %v78
  %296 = vmatpush.msra.mxu0 %v75
  %297 = vmatpush.msra.mxu0 %v72
  %298 = vmatpush.msra.mxu0 %v69
  %299 = vmatpush.msra.mxu0 %v66
  %300 = vmatpush.msra.mxu0 %v63
  %301 = vmatmul.f32.gmra.mxu0 %v59
  %v302 = vpop.f32.mrf.mxu0
  %v303 = vadd.f32 %v206, %v302
  %304 = vdwg.mxu0
  %305 = vmatpush.msra.mxu0 %v156
  %306 = vmatpush.msra.mxu0 %v153
  %307 = vmatpush.msra.mxu0 %v150
  %308 = vmatpush.msra.mxu0 %v147
  %309 = vmatpush.msra.mxu0 %v144
  %310 = vmatpush.msra.mxu0 %v141
  %311 = vmatpush.msra.mxu0 %v138
  %312 = vmatpush.msra.mxu0 %v135
  %313 = vmatpush.msra.mxu0 %v132
  %314 = vmatpush.msra.mxu0 %v129
  %315 = vmatpush.msra.mxu0 %v126
  %316 = vmatpush.msra.mxu0 %v123
  %317 = vmatpush.msra.mxu0 %v120
  %318 = vmatpush.msra.mxu0 %v117
  %319 = vmatpush.msra.mxu0 %v114
  %320 = vmatpush.msra.mxu0 %v111
  %321 = vmatmul.f32.gmra.mxu0 %v60
  %v322 = vpop.f32.mrf.mxu0
  %v323 = vadd.f32 %v303, %v322
  %324 = vdwg.mxu0
  %325 = vmatpush.msra.mxu0 0.0
  %326 = vmatpush.msra.mxu0 %v220
  %327 = vmatpush.msra.mxu0 %v198
  %328 = vmatpush.msra.mxu0 %v195
  %329 = vmatpush.msra.mxu0 %v192
  %330 = vmatpush.msra.mxu0 %v189
  %331 = vmatpush.msra.mxu0 %v186
  %332 = vmatpush.msra.mxu0 %v183
  %333 = vmatpush.msra.mxu0 %v180
  %334 = vmatpush.msra.mxu0 %v177
  %335 = vmatpush.msra.mxu0 %v174
  %336 = vmatpush.msra.mxu0 %v171
  %337 = vmatpush.msra.mxu0 %v168
  %338 = vmatpush.msra.mxu0 %v165
  %339 = vmatpush.msra.mxu0 %v162
  %340 = vmatpush.msra.mxu0 %v159
  %341 = vmatmul.f32.gmra.mxu0 %v213
  %v342 = vpop.f32.mrf.mxu0
  %v343 = vadd.f32 %v323, %v342
  %344 = vdwg.mxu0
  %345 = vmatpush.msra.mxu0 %v109
  %346 = vmatpush.msra.mxu0 %v106
  %347 = vmatpush.msra.mxu0 %v103
  %348 = vmatpush.msra.mxu0 %v100
  %349 = vmatpush.msra.mxu0 %v97
  %350 = vmatpush.msra.mxu0 %v94
  %351 = vmatpush.msra.mxu0 %v91
  %352 = vmatpush.msra.mxu0 %v88
  %353 = vmatpush.msra.mxu0 %v85
  %354 = vmatpush.msra.mxu0 %v82
  %355 = vmatpush.msra.mxu0 %v79
  %356 = vmatpush.msra.mxu0 %v76
  %357 = vmatpush.msra.mxu0 %v73
  %358 = vmatpush.msra.mxu0 %v70
  %359 = vmatpush.msra.mxu0 %v67
  %360 = vmatpush.msra.mxu0 %v64
  %361 = vmatmul.f32.gmra.mxu0 %v59
  %v362 = vpop.f32.mrf.mxu0
  %v363 = vadd.f32 %v207, %v362
  %364 = vdwg.mxu0
  %365 = vmatpush.msra.mxu0 %v157
  %366 = vmatpush.msra.mxu0 %v154
  %367 = vmatpush.msra.mxu0 %v151
  %368 = vmatpush.msra.mxu0 %v148
  %369 = vmatpush.msra.mxu0 %v145
  %370 = vmatpush.msra.mxu0 %v142
  %371 = vmatpush.msra.mxu0 %v139
  %372 = vmatpush.msra.mxu0 %v136
  %373 = vmatpush.msra.mxu0 %v133
  %374 = vmatpush.msra.mxu0 %v130
  %375 = vmatpush.msra.mxu0 %v127
  %376 = vmatpush.msra.mxu0 %v124
  %377 = vmatpush.msra.mxu0 %v121
  %378 = vmatpush.msra.mxu0 %v118
  %379 = vmatpush.msra.mxu0 %v115
  %380 = vmatpush.msra.mxu0 %v112
  %381 = vmatmul.f32.gmra.mxu0 %v60
  %v382 = vpop.f32.mrf.mxu0
  %v383 = vadd.f32 %v363, %v382
  %384 = vdwg.mxu0
  %385 = vmatpush.msra.mxu0 0.0
  %386 = vmatpush.msra.mxu0 %v223
  %387 = vmatpush.msra.mxu0 %v199
  %388 = vmatpush.msra.mxu0 %v196
  %389 = vmatpush.msra.mxu0 %v193
  %390 = vmatpush.msra.mxu0 %v190
  %391 = vmatpush.msra.mxu0 %v187
  %392 = vmatpush.msra.mxu0 %v184
  %393 = vmatpush.msra.mxu0 %v181
  %394 = vmatpush.msra.mxu0 %v178
  %395 = vmatpush.msra.mxu0 %v175
  %396 = vmatpush.msra.mxu0 %v172
  %397 = vmatpush.msra.mxu0 %v169
  %398 = vmatpush.msra.mxu0 %v166
  %399 = vmatpush.msra.mxu0 %v163
  %400 = vmatpush.msra.mxu0 %v160
  %401 = vmatmul.f32.gmra.mxu0 %v213
  %v402 = vpop.f32.mrf.mxu0
  %v403 = vadd.f32 %v383, %v402
  %404 = vdwg.mxu0
  %v405 = vmax.f32 %v283, 0.0
  %v406 = vmax.f32 %v343, 0.0
  %v407 = vmax.f32 %v403, 0.0
  %v408 = vld [vmem:[%s3] sm:$0xff]
  %v409 = vld [vmem:[%s3 + $0x8] sm:$0xff]
  %v410 = vld [vmem:[%s3 + $0x10] sm:$0xff]
  %v411 = vld [vmem:[%s3 + $0x18] sm:$0xff]
  %v412 = vld [vmem:[%s3 + $0x20] sm:$0xff]
  %v413 = vld [vmem:[%s3 + $0x28] sm:$0xff]
  %v414 = vld [vmem:[%s3 + $0x30] sm:$0xff]
  %v415 = vld [vmem:[%s3 + $0x38] sm:$0xff]
  %v416 = vld [vmem:[%s3 + $0x40] sm:$0xff]
  %v417 = vld [vmem:[%s3 + $0x48] sm:$0xff]
  %v418 = vld [vmem:[%s3 + $0x50] sm:$0xff]
  %v419 = vld [vmem:[%s3 + $0x58] sm:$0xff]
  %v420 = vld [vmem:[%s3 + $0x60] sm:$0xff]
  %v421 = vld [vmem:[%s3 + $0x68] sm:$0xff]
  %v422 = vld [vmem:[%s3 + $0x70] sm:$0xff]
  %v423 = vld [vmem:[%s3 + $0x78] sm:$0xff]
  %v424 = vld [vmem:[%s3 + $0x80] sm:$0xff]
  %v425 = vld [vmem:[%s3 + $0x88] sm:$0xff]
  %v426 = vld [vmem:[%s3 + $0x90] sm:$0xff]
  %v427 = vld [vmem:[%s3 + $0x98] sm:$0xff]
  %v428 = vld [vmem:[%s3 + $0xa0] sm:$0xff]
  %v429 = vld [vmem:[%s3 + $0xa8] sm:$0xff]
  %v430 = vld [vmem:[%s3 + $0xb0] sm:$0xff]
  %v431 = vld [vmem:[%s3 + $0xb8] sm:$0xff]
  %v432 = vld [vmem:[%s3 + $0xc0] sm:$0xff]
  %v433 = vld [vmem:[%s3 + $0xc8] sm:$0xff]
  %v434 = vld [vmem:[%s3 + $0xd0] sm:$0xff]
  %v435 = vld [vmem:[%s3 + $0xd8] sm:$0xff]
  %v436 = vld [vmem:[%s3 + $0xe0] sm:$0xff]
  %v437 = vld [vmem:[%s3 + $0xe8] sm:$0xff]
  %v438 = vld [vmem:[%s3 + $0xf0] sm:$0xff]
  %v439 = vld [vmem:[%s3 + $0xf8] sm:$0xff]
  %v440 = vld [vmem:[%s3 + $0x100] sm:$0xff]
  %v441 = vld [vmem:[%s3 + $0x108] sm:$0xff]
  %v442 = vld [vmem:[%s3 + $0x110] sm:$0xff]
  %v443 = vld [vmem:[%s3 + $0x118] sm:$0xff]
  %v444 = vld [vmem:[%s3 + $0x120] sm:$0xff]
  %v445 = vld [vmem:[%s3 + $0x128] sm:$0xff]
  %v446 = vld [vmem:[%s3 + $0x130] sm:$0xff]
  %v447 = vld [vmem:[%s3 + $0x138] sm:$0xff]
  %v448 = vld [vmem:[%s3 + $0x140] sm:$0xff]
  %v449 = vld [vmem:[%s3 + $0x148] sm:$0xff]
  %v450 = vld [vmem:[%s3 + $0x150] sm:$0xff]
  %v451 = vld [vmem:[%s3 + $0x158] sm:$0xff]
  %v452 = vld [vmem:[%s3 + $0x160] sm:$0xff]
  %v453 = vld [vmem:[%s3 + $0x168] sm:$0xff]
  %v454 = vld [vmem:[%s3 + $0x170] sm:$0xff]
  %v455 = vld [vmem:[%s3 + $0x178] sm:$0xff]
  %v456 = vld [vmem:[%s3 + $0x180] sm:$0xff]
  %v457 = vld [vmem:[%s3 + $0x188] sm:$0xff]
  %v458 = vld [vmem:[%s3 + $0x190] sm:$0xff]
  %v459 = vld [vmem:[%s3 + $0x198] sm:$0xff]
  %v460 = vld [vmem:[%s3 + $0x1a0] sm:$0xff]
  %v461 = vld [vmem:[%s3 + $0x1a8] sm:$0xff]
  %v462 = vld [vmem:[%s3 + $0x1b0] sm:$0xff]
  %v463 = vld [vmem:[%s3 + $0x1b8] sm:$0xff]
  %v464 = vld [vmem:[%s3 + $0x1c0] sm:$0xff]
  %v465 = vld [vmem:[%s3 + $0x1c8] sm:$0xff]
  %v466 = vld [vmem:[%s3 + $0x1d0] sm:$0xff]
  %v467 = vld [vmem:[%s3 + $0x1d8] sm:$0xff]
  %v468 = vld [vmem:[%s3 + $0x1e0] sm:$0xff]
  %v469 = vld [vmem:[%s3 + $0x1e8] sm:$0xff]
  %v470 = vld [vmem:[%s3 + $0x1f0] sm:$0xff]
  %v471 = vld [vmem:[%s3 + $0x1f8] sm:$0xff]
  %v472 = vld [vmem:[%s3 + $0x200] sm:$0xff]
  %v473 = vld [vmem:[%s3 + $0x208] sm:$0xff]
  %v474 = vld [vmem:[%s3 + $0x210] sm:$0xff]
  %v475 = vld [vmem:[%s3 + $0x218] sm:$0xff]
  %v476 = vld [vmem:[%s3 + $0x220] sm:$0xff]
  %v477 = vld [vmem:[%s3 + $0x228] sm:$0xff]
  %v478 = vld [vmem:[%s3 + $0x230] sm:$0xff]
  %v479 = vld [vmem:[%s3 + $0x238] sm:$0xff]
  %v480 = vld [vmem:[%s3 + $0x240] sm:$0xff]
  %v481 = vld [vmem:[%s3 + $0x248] sm:$0xff]
  %v482 = vld [vmem:[%s3 + $0x250] sm:$0xff]
  %v483 = vld [vmem:[%s3 + $0x258] sm:$0xff]
  %v484 = vld [vmem:[%s3 + $0x260] sm:$0xff]
  %v485 = vld [vmem:[%s3 + $0x268] sm:$0xff]
  %v486 = vld [vmem:[%s3 + $0x270] sm:$0xff]
  %v487 = vld [vmem:[%s3 + $0x278] sm:$0xff]
  %v488 = vld [vmem:[%s3 + $0x280] sm:$0xff]
  %v489 = vld [vmem:[%s3 + $0x288] sm:$0xff]
  %v490 = vld [vmem:[%s3 + $0x290] sm:$0xff]
  %v491 = vld [vmem:[%s3 + $0x298] sm:$0xff]
  %v492 = vld [vmem:[%s3 + $0x2a0] sm:$0xff]
  %v493 = vld [vmem:[%s3 + $0x2a8] sm:$0xff]
  %v494 = vld [vmem:[%s3 + $0x2b0] sm:$0xff]
  %v495 = vld [vmem:[%s3 + $0x2b8] sm:$0xff]
  %v496 = vld [vmem:[%s3 + $0x2c0] sm:$0xff]
  %v497 = vld [vmem:[%s3 + $0x2c8] sm:$0xff]
  %v498 = vld [vmem:[%s3 + $0x2d0] sm:$0xff]
  %v499 = vld [vmem:[%s3 + $0x2d8] sm:$0xff]
  %v500 = vld [vmem:[%s3 + $0x2e0] sm:$0xff]
  %v501 = vld [vmem:[%s3 + $0x2e8] sm:$0xff]
  %v502 = vld [vmem:[%s3 + $0x2f0] sm:$0xff]
  %v503 = vld [vmem:[%s3 + $0x2f8] sm:$0xff]
  %v504 = vld [vmem:[%s3 + $0x300] sm:$0xff]
  %v505 = vld [vmem:[%s3 + $0x308] sm:$0xff]
  %v506 = vld [vmem:[%s3 + $0x310] sm:$0xff]
  %v507 = vld [vmem:[%s3 + $0x318] sm:$0xff]
  %v508 = vld [vmem:[%s3 + $0x320] sm:$0xff]
  %v509 = vld [vmem:[%s3 + $0x328] sm:$0xff]
  %v510 = vld [vmem:[%s3 + $0x330] sm:$0xff]
  %v511 = vld [vmem:[%s3 + $0x338] sm:$0xff]
  %v512 = vld [vmem:[%s3 + $0x340] sm:$0xff]
  %v513 = vld [vmem:[%s3 + $0x348] sm:$0xff]
  %v514 = vld [vmem:[%s3 + $0x350] sm:$0xff]
  %v515 = vld [vmem:[%s3 + $0x358] sm:$0xff]
  %v516 = vld [vmem:[%s3 + $0x360] sm:$0xff]
  %v517 = vld [vmem:[%s3 + $0x368] sm:$0xff]
  %v518 = vld [vmem:[%s3 + $0x370] sm:$0xff]
  %v519 = vld [vmem:[%s3 + $0x378] sm:$0xff]
  %v520 = vld [vmem:[%s3 + $0x380] sm:$0xff]
  %v521 = vld [vmem:[%s3 + $0x388] sm:$0xff]
  %v522 = vld [vmem:[%s3 + $0x390] sm:$0xff]
  %v523 = vld [vmem:[%s3 + $0x398] sm:$0xff]
  %v524 = vld [vmem:[%s3 + $0x3a0] sm:$0xff]
  %v525 = vld [vmem:[%s3 + $0x3a8] sm:$0xff]
  %v526 = vld [vmem:[%s3 + $0x3b0] sm:$0xff]
  %v527 = vld [vmem:[%s3 + $0x3b8] sm:$0xff]
  %v528 = vld [vmem:[%s3 + $0x3c0] sm:$0xff]
  %v529 = vld [vmem:[%s3 + $0x3c8] sm:$0xff]
  %v530 = vld [vmem:[%s3 + $0x3d0] sm:$0xff]
  %v531 = vld [vmem:[%s3 + $0x3d8] sm:$0xff]
  %v532 = vld [vmem:[%s3 + $0x3e0] sm:$0xff]
  %v533 = vld [vmem:[%s3 + $0x3e8] sm:$0xff]
  %v534 = vld [vmem:[%s3 + $0x3f0] sm:$0xff]
  %v535 = vld [vmem:[%s3 + $0x3f8] sm:$0xff]
  %v536 = vld [vmem:[%s3 + $0x400] sm:$0xff]
  %v537 = vld [vmem:[%s3 + $0x408] sm:$0xff]
  %v538 = vld [vmem:[%s3 + $0x410] sm:$0xff]
  %v539 = vld [vmem:[%s3 + $0x418] sm:$0xff]
  %v540 = vld [vmem:[%s3 + $0x420] sm:$0xff]
  %v541 = vld [vmem:[%s3 + $0x428] sm:$0xff]
  %v542 = vld [vmem:[%s3 + $0x430] sm:$0xff]
  %v543 = vld [vmem:[%s3 + $0x438] sm:$0xff]
  %v544 = vld [vmem:[%s3 + $0x440] sm:$0xff]
  %v545 = vld [vmem:[%s3 + $0x448] sm:$0xff]
  %v546 = vld [vmem:[%s3 + $0x450] sm:$0xff]
  %v547 = vld [vmem:[%s3 + $0x458] sm:$0xff]
  %v548 = vld [vmem:[%s3 + $0x460] sm:$0xff]
  %v549 = vld [vmem:[%s3 + $0x468] sm:$0xff]
  %v550 = vld [vmem:[%s3 + $0x470] sm:$0xff]
  %v551 = vld [vmem:[%s3 + $0x478] sm:$0xff]
  %v552 = vld [vmem:[%s3 + $0x480] sm:$0xff]
  %v553 = vld [vmem:[%s3 + $0x488] sm:$0xff]
  %v554 = vld [vmem:[%s3 + $0x490] sm:$0xff]
  %v555 = vld [vmem:[%s3 + $0x498] sm:$0xff]
  %v556 = vld [vmem:[%s3 + $0x4a0] sm:$0xff]
  %v557 = vld [vmem:[%s3 + $0x4a8] sm:$0xff]
  %v558 = vld [vmem:[%s3 + $0x4b0] sm:$0xff]
  %v559 = vld [vmem:[%s3 + $0x4b8] sm:$0xff]
  %v560 = vld [vmem:[%s3 + $0x4c0] sm:$0xff]
  %v561 = vld [vmem:[%s3 + $0x4c8] sm:$0xff]
  %v562 = vld [vmem:[%s3 + $0x4d0] sm:$0xff]
  %v563 = vld [vmem:[%s3 + $0x4d8] sm:$0xff]
  %v564 = vld [vmem:[%s3 + $0x4e0] sm:$0xff]
  %v565 = vld [vmem:[%s3 + $0x4e8] sm:$0xff]
  %v566 = vld [vmem:[%s3 + $0x4f0] sm:$0xff]
  %v567 = vld [vmem:[%s3 + $0x4f8] sm:$0xff]
  %v568 = vld [vmem:[%s3 + $0x500] sm:$0xff]
  %v569 = vld [vmem:[%s3 + $0x508] sm:$0xff]
  %v570 = vld [vmem:[%s3 + $0x510] sm:$0xff]
  %v571 = vld [vmem:[%s3 + $0x518] sm:$0xff]
  %v572 = vld [vmem:[%s3 + $0x520] sm:$0xff]
  %v573 = vld [vmem:[%s3 + $0x528] sm:$0xff]
  %v574 = vld [vmem:[%s3 + $0x530] sm:$0xff]
  %v575 = vld [vmem:[%s3 + $0x538] sm:$0xff]
  %v576 = vld [vmem:[%s3 + $0x540] sm:$0xff]
  %v577 = vld [vmem:[%s3 + $0x548] sm:$0xff]
  %v578 = vld [vmem:[%s3 + $0x550] sm:$0xff]
  %v579 = vld [vmem:[%s3 + $0x558] sm:$0xff]
  %v580 = vld [vmem:[%s3 + $0x560] sm:$0xff]
  %v581 = vld [vmem:[%s3 + $0x568] sm:$0xff]
  %v582 = vld [vmem:[%s3 + $0x570] sm:$0xff]
  %v583 = vld [vmem:[%s3 + $0x578] sm:$0xff]
  %v584 = vld [vmem:[%s3 + $0x580] sm:$0xff]
  %v585 = vld [vmem:[%s3 + $0x588] sm:$0xff]
  %v586 = vld [vmem:[%s3 + $0x590] sm:$0xff]
  %v587 = vld [vmem:[%s3 + $0x598] sm:$0xff]
  %v588 = vld [vmem:[%s3 + $0x5a0] sm:$0xff]
  %v589 = vld [vmem:[%s3 + $0x5a8] sm:$0xff]
  %v590 = vld [vmem:[%s3 + $0x5b0] sm:$0xff]
  %v591 = vld [vmem:[%s3 + $0x5b8] sm:$0xff]
  %v592 = vld [vmem:[%s3 + $0x5c0] sm:$0x7f]
  %v593 = vld [vmem:[%s3 + $0x5c8] sm:$0x7f]
  %v594 = vld [vmem:[%s3 + $0x5d0] sm:$0x7f]
  %v595 = vld [vmem:[%s3 + $0x5d8] sm:$0x7f]
  %v596 = vld [vmem:[%s4] sm:$0xf]
  %v598 = vperm.slane %v596, 0
  %v599 = vperm.slane %v596, 1
  %v600 = vperm.slane %v596, 2
  %v601 = vperm.slane %v596, 3
  %v607 = vsel %vm215, %v592, 0
  %v610 = vsel %vm215, %v593, 0
  %v613 = vsel %vm215, %v594, 0
  %v616 = vsel %vm215, %v595, 0
  %618 = vmatpush.msra.mxu0 %v468
  %619 = vmatpush.msra.mxu0 %v464
  %620 = vmatpush.msra.mxu0 %v460
  %621 = vmatpush.msra.mxu0 %v456
  %622 = vmatpush.msra.mxu0 %v452
  %623 = vmatpush.msra.mxu0 %v448
  %624 = vmatpush.msra.mxu0 %v444
  %625 = vmatpush.msra.mxu0 %v440
  %626 = vmatpush.msra.mxu0 %v436
  %627 = vmatpush.msra.mxu0 %v432
  %628 = vmatpush.msra.mxu0 %v428
  %629 = vmatpush.msra.mxu0 %v424
  %630 = vmatpush.msra.mxu0 %v420
  %631 = vmatpush.msra.mxu0 %v416
  %632 = vmatpush.msra.mxu0 %v412
  %633 = vmatpush.msra.mxu0 %v408
  %634 = vmatmul.f32.gmra.mxu0 %v59
  %v635 = vpop.f32.mrf.mxu0
  %v636 = vadd.f32 %v598, %v635
  %637 = vdwg.mxu0
  %638 = vmatpush.msra.mxu0 %v532
  %639 = vmatpush.msra.mxu0 %v528
  %640 = vmatpush.msra.mxu0 %v524
  %641 = vmatpush.msra.mxu0 %v520
  %642 = vmatpush.msra.mxu0 %v516
  %643 = vmatpush.msra.mxu0 %v512
  %644 = vmatpush.msra.mxu0 %v508
  %645 = vmatpush.msra.mxu0 %v504
  %646 = vmatpush.msra.mxu0 %v500
  %647 = vmatpush.msra.mxu0 %v496
  %648 = vmatpush.msra.mxu0 %v492
  %649 = vmatpush.msra.mxu0 %v488
  %650 = vmatpush.msra.mxu0 %v484
  %651 = vmatpush.msra.mxu0 %v480
  %652 = vmatpush.msra.mxu0 %v476
  %653 = vmatpush.msra.mxu0 %v472
  %654 = vmatmul.f32.gmra.mxu0 %v60
  %v655 = vpop.f32.mrf.mxu0
  %v656 = vadd.f32 %v636, %v655
  %657 = vdwg.mxu0
  %658 = vmatpush.msra.mxu0 0.0
  %659 = vmatpush.msra.mxu0 %v607
  %660 = vmatpush.msra.mxu0 %v588
  %661 = vmatpush.msra.mxu0 %v584
  %662 = vmatpush.msra.mxu0 %v580
  %663 = vmatpush.msra.mxu0 %v576
  %664 = vmatpush.msra.mxu0 %v572
  %665 = vmatpush.msra.mxu0 %v568
  %666 = vmatpush.msra.mxu0 %v564
  %667 = vmatpush.msra.mxu0 %v560
  %668 = vmatpush.msra.mxu0 %v556
  %669 = vmatpush.msra.mxu0 %v552
  %670 = vmatpush.msra.mxu0 %v548
  %671 = vmatpush.msra.mxu0 %v544
  %672 = vmatpush.msra.mxu0 %v540
  %673 = vmatpush.msra.mxu0 %v536
  %674 = vmatmul.f32.gmra.mxu0 %v213
  %v675 = vpop.f32.mrf.mxu0
  %v676 = vadd.f32 %v656, %v675
  %677 = vdwg.mxu0
  %678 = vmatpush.msra.mxu0 %v469
  %679 = vmatpush.msra.mxu0 %v465
  %680 = vmatpush.msra.mxu0 %v461
  %681 = vmatpush.msra.mxu0 %v457
  %682 = vmatpush.msra.mxu0 %v453
  %683 = vmatpush.msra.mxu0 %v449
  %684 = vmatpush.msra.mxu0 %v445
  %685 = vmatpush.msra.mxu0 %v441
  %686 = vmatpush.msra.mxu0 %v437
  %687 = vmatpush.msra.mxu0 %v433
  %688 = vmatpush.msra.mxu0 %v429
  %689 = vmatpush.msra.mxu0 %v425
  %690 = vmatpush.msra.mxu0 %v421
  %691 = vmatpush.msra.mxu0 %v417
  %692 = vmatpush.msra.mxu0 %v413
  %693 = vmatpush.msra.mxu0 %v409
  %694 = vmatmul.f32.gmra.mxu0 %v59
  %v695 = vpop.f32.mrf.mxu0
  %v696 = vadd.f32 %v599, %v695
  %697 = vdwg.mxu0
  %698 = vmatpush.msra.mxu0 %v533
  %699 = vmatpush.msra.mxu0 %v529
  %700 = vmatpush.msra.mxu0 %v525
  %701 = vmatpush.msra.mxu0 %v521
  %702 = vmatpush.msra.mxu0 %v517
  %703 = vmatpush.msra.mxu0 %v513
  %704 = vmatpush.msra.mxu0 %v509
  %705 = vmatpush.msra.mxu0 %v505
  %706 = vmatpush.msra.mxu0 %v501
  %707 = vmatpush.msra.mxu0 %v497
  %708 = vmatpush.msra.mxu0 %v493
  %709 = vmatpush.msra.mxu0 %v489
  %710 = vmatpush.msra.mxu0 %v485
  %711 = vmatpush.msra.mxu0 %v481
  %712 = vmatpush.msra.mxu0 %v477
  %713 = vmatpush.msra.mxu0 %v473
  %714 = vmatmul.f32.gmra.mxu0 %v60
  %v715 = vpop.f32.mrf.mxu0
  %v716 = vadd.f32 %v696, %v715
  %717 = vdwg.mxu0
  %718 = vmatpush.msra.mxu0 0.0
  %719 = vmatpush.msra.mxu0 %v610
  %720 = vmatpush.msra.mxu0 %v589
  %721 = vmatpush.msra.mxu0 %v585
  %722 = vmatpush.msra.mxu0 %v581
  %723 = vmatpush.msra.mxu0 %v577
  %724 = vmatpush.msra.mxu0 %v573
  %725 = vmatpush.msra.mxu0 %v569
  %726 = vmatpush.msra.mxu0 %v565
  %727 = vmatpush.msra.mxu0 %v561
  %728 = vmatpush.msra.mxu0 %v557
  %729 = vmatpush.msra.mxu0 %v553
  %730 = vmatpush.msra.mxu0 %v549
  %731 = vmatpush.msra.mxu0 %v545
  %732 = vmatpush.msra.mxu0 %v541
  %733 = vmatpush.msra.mxu0 %v537
  %734 = vmatmul.f32.gmra.mxu0 %v213
  %v735 = vpop.f32.mrf.mxu0
  %v736 = vadd.f32 %v716, %v735
  %737 = vdwg.mxu0
  %738 = vmatpush.msra.mxu0 %v470
  %739 = vmatpush.msra.mxu0 %v466
  %740 = vmatpush.msra.mxu0 %v462
  %741 = vmatpush.msra.mxu0 %v458
  %742 = vmatpush.msra.mxu0 %v454
  %743 = vmatpush.msra.mxu0 %v450
  %744 = vmatpush.msra.mxu0 %v446
  %745 = vmatpush.msra.mxu0 %v442
  %746 = vmatpush.msra.mxu0 %v438
  %747 = vmatpush.msra.mxu0 %v434
  %748 = vmatpush.msra.mxu0 %v430
  %749 = vmatpush.msra.mxu0 %v426
  %750 = vmatpush.msra.mxu0 %v422
  %751 = vmatpush.msra.mxu0 %v418
  %752 = vmatpush.msra.mxu0 %v414
  %753 = vmatpush.msra.mxu0 %v410
  %754 = vmatmul.f32.gmra.mxu0 %v59
  %v755 = vpop.f32.mrf.mxu0
  %v756 = vadd.f32 %v600, %v755
  %757 = vdwg.mxu0
  %758 = vmatpush.msra.mxu0 %v534
  %759 = vmatpush.msra.mxu0 %v530
  %760 = vmatpush.msra.mxu0 %v526
  %761 = vmatpush.msra.mxu0 %v522
  %762 = vmatpush.msra.mxu0 %v518
  %763 = vmatpush.msra.mxu0 %v514
  %764 = vmatpush.msra.mxu0 %v510
  %765 = vmatpush.msra.mxu0 %v506
  %766 = vmatpush.msra.mxu0 %v502
  %767 = vmatpush.msra.mxu0 %v498
  %768 = vmatpush.msra.mxu0 %v494
  %769 = vmatpush.msra.mxu0 %v490
  %770 = vmatpush.msra.mxu0 %v486
  %771 = vmatpush.msra.mxu0 %v482
  %772 = vmatpush.msra.mxu0 %v478
  %773 = vmatpush.msra.mxu0 %v474
  %774 = vmatmul.f32.gmra.mxu0 %v60
  %v775 = vpop.f32.mrf.mxu0
  %v776 = vadd.f32 %v756, %v775
  %777 = vdwg.mxu0
  %778 = vmatpush.msra.mxu0 0.0
  %779 = vmatpush.msra.mxu0 %v613
  %780 = vmatpush.msra.mxu0 %v590
  %781 = vmatpush.msra.mxu0 %v586
  %782 = vmatpush.msra.mxu0 %v582
  %783 = vmatpush.msra.mxu0 %v578
  %784 = vmatpush.msra.mxu0 %v574
  %785 = vmatpush.msra.mxu0 %v570
  %786 = vmatpush.msra.mxu0 %v566
  %787 = vmatpush.msra.mxu0 %v562
  %788 = vmatpush.msra.mxu0 %v558
  %789 = vmatpush.msra.mxu0 %v554
  %790 = vmatpush.msra.mxu0 %v550
  %791 = vmatpush.msra.mxu0 %v546
  %792 = vmatpush.msra.mxu0 %v542
  %793 = vmatpush.msra.mxu0 %v538
  %794 = vmatmul.f32.gmra.mxu0 %v213
  %v795 = vpop.f32.mrf.mxu0
  %v796 = vadd.f32 %v776, %v795
  %797 = vdwg.mxu0
  %798 = vmatpush.msra.mxu0 %v471
  %799 = vmatpush.msra.mxu0 %v467
  %800 = vmatpush.msra.mxu0 %v463
  %801 = vmatpush.msra.mxu0 %v459
  %802 = vmatpush.msra.mxu0 %v455
  %803 = vmatpush.msra.mxu0 %v451
  %804 = vmatpush.msra.mxu0 %v447
  %805 = vmatpush.msra.mxu0 %v443
  %806 = vmatpush.msra.mxu0 %v439
  %807 = vmatpush.msra.mxu0 %v435
  %808 = vmatpush.msra.mxu0 %v431
  %809 = vmatpush.msra.mxu0 %v427
  %810 = vmatpush.msra.mxu0 %v423
  %811 = vmatpush.msra.mxu0 %v419
  %812 = vmatpush.msra.mxu0 %v415
  %813 = vmatpush.msra.mxu0 %v411
  %814 = vmatmul.f32.gmra.mxu0 %v59
  %v815 = vpop.f32.mrf.mxu0
  %v816 = vadd.f32 %v601, %v815
  %817 = vdwg.mxu0
  %818 = vmatpush.msra.mxu0 %v535
  %819 = vmatpush.msra.mxu0 %v531
  %820 = vmatpush.msra.mxu0 %v527
  %821 = vmatpush.msra.mxu0 %v523
  %822 = vmatpush.msra.mxu0 %v519
  %823 = vmatpush.msra.mxu0 %v515
  %824 = vmatpush.msra.mxu0 %v511
  %825 = vmatpush.msra.mxu0 %v507
  %826 = vmatpush.msra.mxu0 %v503
  %827 = vmatpush.msra.mxu0 %v499
  %828 = vmatpush.msra.mxu0 %v495
  %829 = vmatpush.msra.mxu0 %v491
  %830 = vmatpush.msra.mxu0 %v487
  %831 = vmatpush.msra.mxu0 %v483
  %832 = vmatpush.msra.mxu0 %v479
  %833 = vmatpush.msra.mxu0 %v475
  %834 = vmatmul.f32.gmra.mxu0 %v60
  %v835 = vpop.f32.mrf.mxu0
  %v836 = vadd.f32 %v816, %v835
  %837 = vdwg.mxu0
  %838 = vmatpush.msra.mxu0 0.0
  %839 = vmatpush.msra.mxu0 %v616
  %840 = vmatpush.msra.mxu0 %v591
  %841 = vmatpush.msra.mxu0 %v587
  %842 = vmatpush.msra.mxu0 %v583
  %843 = vmatpush.msra.mxu0 %v579
  %844 = vmatpush.msra.mxu0 %v575
  %845 = vmatpush.msra.mxu0 %v571
  %846 = vmatpush.msra.mxu0 %v567
  %847 = vmatpush.msra.mxu0 %v563
  %848 = vmatpush.msra.mxu0 %v559
  %849 = vmatpush.msra.mxu0 %v555
  %850 = vmatpush.msra.mxu0 %v551
  %851 = vmatpush.msra.mxu0 %v547
  %852 = vmatpush.msra.mxu0 %v543
  %853 = vmatpush.msra.mxu0 %v539
  %854 = vmatmul.f32.gmra.mxu0 %v213
  %v855 = vpop.f32.mrf.mxu0
  %v856 = vadd.f32 %v836, %v855
  %857 = vdwg.mxu0
  %v858 = vmax.f32 %v676, 0.0
  %v859 = vmax.f32 %v736, 0.0
  %v860 = vmax.f32 %v796, 0.0
  %v861 = vmax.f32 %v856, 0.0
  %v862 = vld [vmem:[%s5] sm:$0xff]
  %v863 = vld [vmem:[%s5 + $0x8] sm:$0xff]
  %v864 = vld [vmem:[%s5 + $0x10] sm:$0xff]
  %v865 = vld [vmem:[%s5 + $0x18] sm:$0xff]
  %v866 = vld [vmem:[%s5 + $0x20] sm:$0xff]
  %v867 = vld [vmem:[%s5 + $0x28] sm:$0xff]
  %v868 = vld [vmem:[%s5 + $0x30] sm:$0xff]
  %v869 = vld [vmem:[%s5 + $0x38] sm:$0xff]
  %v870 = vld [vmem:[%s5 + $0x40] sm:$0xff]
  %v871 = vld [vmem:[%s5 + $0x48] sm:$0xff]
  %v872 = vld [vmem:[%s5 + $0x50] sm:$0xff]
  %v873 = vld [vmem:[%s5 + $0x58] sm:$0xff]
  %v874 = vld [vmem:[%s5 + $0x60] sm:$0xff]
  %v875 = vld [vmem:[%s5 + $0x68] sm:$0xff]
  %v876 = vld [vmem:[%s5 + $0x70] sm:$0xff]
  %v877 = vld [vmem:[%s5 + $0x78] sm:$0xff]
  %v878 = vld [vmem:[%s5 + $0x80] sm:$0xff]
  %v879 = vld [vmem:[%s5 + $0x88] sm:$0xff]
  %v880 = vld [vmem:[%s5 + $0x90] sm:$0xff]
  %v881 = vld [vmem:[%s5 + $0x98] sm:$0xff]
  %v882 = vld [vmem:[%s5 + $0xa0] sm:$0xff]
  %v883 = vld [vmem:[%s5 + $0xa8] sm:$0xff]
  %v884 = vld [vmem:[%s5 + $0xb0] sm:$0xff]
  %v885 = vld [vmem:[%s5 + $0xb8] sm:$0xff]
  %v886 = vld [vmem:[%s5 + $0xc0] sm:$0xff]
  %v887 = vld [vmem:[%s5 + $0xc8] sm:$0xff]
  %v888 = vld [vmem:[%s5 + $0xd0] sm:$0xff]
  %v889 = vld [vmem:[%s5 + $0xd8] sm:$0xff]
  %v890 = vld [vmem:[%s5 + $0xe0] sm:$0xff]
  %v891 = vld [vmem:[%s5 + $0xe8] sm:$0xff]
  %v892 = vld [vmem:[%s5 + $0xf0] sm:$0xff]
  %v893 = vld [vmem:[%s5 + $0xf8] sm:$0xff]
  %v894 = vld [vmem:[%s5 + $0x100] sm:$0xff]
  %v895 = vld [vmem:[%s5 + $0x108] sm:$0xff]
  %v896 = vld [vmem:[%s5 + $0x110] sm:$0xff]
  %v897 = vld [vmem:[%s5 + $0x118] sm:$0xff]
  %v898 = vld [vmem:[%s5 + $0x120] sm:$0xff]
  %v899 = vld [vmem:[%s5 + $0x128] sm:$0xff]
  %v900 = vld [vmem:[%s5 + $0x130] sm:$0xff]
  %v901 = vld [vmem:[%s5 + $0x138] sm:$0xff]
  %v902 = vld [vmem:[%s5 + $0x140] sm:$0xff]
  %v903 = vld [vmem:[%s5 + $0x148] sm:$0xff]
  %v904 = vld [vmem:[%s5 + $0x150] sm:$0xff]
  %v905 = vld [vmem:[%s5 + $0x158] sm:$0xff]
  %v906 = vld [vmem:[%s5 + $0x160] sm:$0xff]
  %v907 = vld [vmem:[%s5 + $0x168] sm:$0xff]
  %v908 = vld [vmem:[%s5 + $0x170] sm:$0xff]
  %v909 = vld [vmem:[%s5 + $0x178] sm:$0xff]
  %v910 = vld [vmem:[%s5 + $0x180] sm:$0xff]
  %v911 = vld [vmem:[%s5 + $0x188] sm:$0xff]
  %v912 = vld [vmem:[%s5 + $0x190] sm:$0xff]
  %v913 = vld [vmem:[%s5 + $0x198] sm:$0xff]
  %v914 = vld [vmem:[%s5 + $0x1a0] sm:$0xff]
  %v915 = vld [vmem:[%s5 + $0x1a8] sm:$0xff]
  %v916 = vld [vmem:[%s5 + $0x1b0] sm:$0xff]
  %v917 = vld [vmem:[%s5 + $0x1b8] sm:$0xff]
  %v918 = vld [vmem:[%s5 + $0x1c0] sm:$0xff]
  %v919 = vld [vmem:[%s5 + $0x1c8] sm:$0xff]
  %v920 = vld [vmem:[%s5 + $0x1d0] sm:$0xff]
  %v921 = vld [vmem:[%s5 + $0x1d8] sm:$0xff]
  %v922 = vld [vmem:[%s5 + $0x1e0] sm:$0xff]
  %v923 = vld [vmem:[%s5 + $0x1e8] sm:$0xff]
  %v924 = vld [vmem:[%s5 + $0x1f0] sm:$0xff]
  %v925 = vld [vmem:[%s5 + $0x1f8] sm:$0xff]
  %v926 = vld [vmem:[%s5 + $0x200] sm:$0xff]
  %v927 = vld [vmem:[%s5 + $0x208] sm:$0xff]
  %v928 = vld [vmem:[%s5 + $0x210] sm:$0xff]
  %v929 = vld [vmem:[%s5 + $0x218] sm:$0xff]
  %v930 = vld [vmem:[%s5 + $0x220] sm:$0xff]
  %v931 = vld [vmem:[%s5 + $0x228] sm:$0xff]
  %v932 = vld [vmem:[%s5 + $0x230] sm:$0xff]
  %v933 = vld [vmem:[%s5 + $0x238] sm:$0xff]
  %v934 = vld [vmem:[%s5 + $0x240] sm:$0xff]
  %v935 = vld [vmem:[%s5 + $0x248] sm:$0xff]
  %v936 = vld [vmem:[%s5 + $0x250] sm:$0xff]
  %v937 = vld [vmem:[%s5 + $0x258] sm:$0xff]
  %v938 = vld [vmem:[%s5 + $0x260] sm:$0xff]
  %v939 = vld [vmem:[%s5 + $0x268] sm:$0xff]
  %v940 = vld [vmem:[%s5 + $0x270] sm:$0xff]
  %v941 = vld [vmem:[%s5 + $0x278] sm:$0xff]
  %v942 = vld [vmem:[%s5 + $0x280] sm:$0xff]
  %v943 = vld [vmem:[%s5 + $0x288] sm:$0xff]
  %v944 = vld [vmem:[%s5 + $0x290] sm:$0xff]
  %v945 = vld [vmem:[%s5 + $0x298] sm:$0xff]
  %v946 = vld [vmem:[%s5 + $0x2a0] sm:$0xff]
  %v947 = vld [vmem:[%s5 + $0x2a8] sm:$0xff]
  %v948 = vld [vmem:[%s5 + $0x2b0] sm:$0xff]
  %v949 = vld [vmem:[%s5 + $0x2b8] sm:$0xff]
  %v950 = vld [vmem:[%s5 + $0x2c0] sm:$0xff]
  %v951 = vld [vmem:[%s5 + $0x2c8] sm:$0xff]
  %v952 = vld [vmem:[%s5 + $0x2d0] sm:$0xff]
  %v953 = vld [vmem:[%s5 + $0x2d8] sm:$0xff]
  %v954 = vld [vmem:[%s5 + $0x2e0] sm:$0xff]
  %v955 = vld [vmem:[%s5 + $0x2e8] sm:$0xff]
  %v956 = vld [vmem:[%s5 + $0x2f0] sm:$0xff]
  %v957 = vld [vmem:[%s5 + $0x2f8] sm:$0xff]
  %v958 = vld [vmem:[%s5 + $0x300] sm:$0xff]
  %v959 = vld [vmem:[%s5 + $0x308] sm:$0xff]
  %v960 = vld [vmem:[%s5 + $0x310] sm:$0xff]
  %v961 = vld [vmem:[%s5 + $0x318] sm:$0xff]
  %v962 = vld [vmem:[%s5 + $0x320] sm:$0xff]
  %v963 = vld [vmem:[%s5 + $0x328] sm:$0xff]
  %v964 = vld [vmem:[%s5 + $0x330] sm:$0xff]
  %v965 = vld [vmem:[%s5 + $0x338] sm:$0xff]
  %v966 = vld [vmem:[%s5 + $0x340] sm:$0xff]
  %v967 = vld [vmem:[%s5 + $0x348] sm:$0xff]
  %v968 = vld [vmem:[%s5 + $0x350] sm:$0xff]
  %v969 = vld [vmem:[%s5 + $0x358] sm:$0xff]
  %v970 = vld [vmem:[%s5 + $0x360] sm:$0xff]
  %v971 = vld [vmem:[%s5 + $0x368] sm:$0xff]
  %v972 = vld [vmem:[%s5 + $0x370] sm:$0xff]
  %v973 = vld [vmem:[%s5 + $0x378] sm:$0xff]
  %v974 = vld [vmem:[%s5 + $0x380] sm:$0xff]
  %v975 = vld [vmem:[%s5 + $0x388] sm:$0xff]
  %v976 = vld [vmem:[%s5 + $0x390] sm:$0xff]
  %v977 = vld [vmem:[%s5 + $0x398] sm:$0xff]
  %v978 = vld [vmem:[%s5 + $0x3a0] sm:$0xff]
  %v979 = vld [vmem:[%s5 + $0x3a8] sm:$0xff]
  %v980 = vld [vmem:[%s5 + $0x3b0] sm:$0xff]
  %v981 = vld [vmem:[%s5 + $0x3b8] sm:$0xff]
  %v982 = vld [vmem:[%s5 + $0x3c0] sm:$0xff]
  %v983 = vld [vmem:[%s5 + $0x3c8] sm:$0xff]
  %v984 = vld [vmem:[%s5 + $0x3d0] sm:$0xff]
  %v985 = vld [vmem:[%s5 + $0x3d8] sm:$0xff]
  %v986 = vld [vmem:[%s5 + $0x3e0] sm:$0xf]
  %v987 = vld [vmem:[%s5 + $0x3e8] sm:$0xf]
  %v988 = vld [vmem:[%s6] sm:$0x3]
  %v990 = vperm.slane %v988, 0
  %v991 = vperm.slane %v988, 1
  %vm994 = vcmask 949248
  %v996 = vsel %vm994, %v861, 0
  %vm998 = vcmask 1043456
  %v1000 = vsel %vm998, %v986, 0
  %v1003 = vsel %vm998, %v987, 0
  %1005 = vmatpush.msra.mxu0 %v892
  %1006 = vmatpush.msra.mxu0 %v890
  %1007 = vmatpush.msra.mxu0 %v888
  %1008 = vmatpush.msra.mxu0 %v886
  %1009 = vmatpush.msra.mxu0 %v884
  %1010 = vmatpush.msra.mxu0 %v882
  %1011 = vmatpush.msra.mxu0 %v880
  %1012 = vmatpush.msra.mxu0 %v878
  %1013 = vmatpush.msra.mxu0 %v876
  %1014 = vmatpush.msra.mxu0 %v874
  %1015 = vmatpush.msra.mxu0 %v872
  %1016 = vmatpush.msra.mxu0 %v870
  %1017 = vmatpush.msra.mxu0 %v868
  %1018 = vmatpush.msra.mxu0 %v866
  %1019 = vmatpush.msra.mxu0 %v864
  %1020 = vmatpush.msra.mxu0 %v862
  %1021 = vmatmul.f32.gmra.mxu0 %v858
  %v1022 = vpop.f32.mrf.mxu0
  %v1023 = vadd.f32 %v990, %v1022
  %1024 = vdwg.mxu0
  %1025 = vmatpush.msra.mxu0 %v924
  %1026 = vmatpush.msra.mxu0 %v922
  %1027 = vmatpush.msra.mxu0 %v920
  %1028 = vmatpush.msra.mxu0 %v918
  %1029 = vmatpush.msra.mxu0 %v916
  %1030 = vmatpush.msra.mxu0 %v914
  %1031 = vmatpush.msra.mxu0 %v912
  %1032 = vmatpush.msra.mxu0 %v910
  %1033 = vmatpush.msra.mxu0 %v908
  %1034 = vmatpush.msra.mxu0 %v906
  %1035 = vmatpush.msra.mxu0 %v904
  %1036 = vmatpush.msra.mxu0 %v902
  %1037 = vmatpush.msra.mxu0 %v900
  %1038 = vmatpush.msra.mxu0 %v898
  %1039 = vmatpush.msra.mxu0 %v896
  %1040 = vmatpush.msra.mxu0 %v894
  %1041 = vmatmul.f32.gmra.mxu0 %v859
  %v1042 = vpop.f32.mrf.mxu0
  %v1043 = vadd.f32 %v1023, %v1042
  %1044 = vdwg.mxu0
  %1045 = vmatpush.msra.mxu0 %v956
  %1046 = vmatpush.msra.mxu0 %v954
  %1047 = vmatpush.msra.mxu0 %v952
  %1048 = vmatpush.msra.mxu0 %v950
  %1049 = vmatpush.msra.mxu0 %v948
  %1050 = vmatpush.msra.mxu0 %v946
  %1051 = vmatpush.msra.mxu0 %v944
  %1052 = vmatpush.msra.mxu0 %v942
  %1053 = vmatpush.msra.mxu0 %v940
  %1054 = vmatpush.msra.mxu0 %v938
  %1055 = vmatpush.msra.mxu0 %v936
  %1056 = vmatpush.msra.mxu0 %v934
  %1057 = vmatpush.msra.mxu0 %v932
  %1058 = vmatpush.msra.mxu0 %v930
  %1059 = vmatpush.msra.mxu0 %v928
  %1060 = vmatpush.msra.mxu0 %v926
  %1061 = vmatmul.f32.gmra.mxu0 %v860
  %v1062 = vpop.f32.mrf.mxu0
  %v1063 = vadd.f32 %v1043, %v1062
  %1064 = vdwg.mxu0
  %1065 = vmatpush.msra.mxu0 0.0
  %1066 = vmatpush.msra.mxu0 %v1000
  %1067 = vmatpush.msra.mxu0 %v984
  %1068 = vmatpush.msra.mxu0 %v982
  %1069 = vmatpush.msra.mxu0 %v980
  %1070 = vmatpush.msra.mxu0 %v978
  %1071 = vmatpush.msra.mxu0 %v976
  %1072 = vmatpush.msra.mxu0 %v974
  %1073 = vmatpush.msra.mxu0 %v972
  %1074 = vmatpush.msra.mxu0 %v970
  %1075 = vmatpush.msra.mxu0 %v968
  %1076 = vmatpush.msra.mxu0 %v966
  %1077 = vmatpush.msra.mxu0 %v964
  %1078 = vmatpush.msra.mxu0 %v962
  %1079 = vmatpush.msra.mxu0 %v960
  %1080 = vmatpush.msra.mxu0 %v958
  %1081 = vmatmul.f32.gmra.mxu0 %v996
  %v1082 = vpop.f32.mrf.mxu0
  %v1083 = vadd.f32 %v1063, %v1082
  %1084 = vdwg.mxu0
  %1085 = vmatpush.msra.mxu0 %v893
  %1086 = vmatpush.msra.mxu0 %v891
  %1087 = vmatpush.msra.mxu0 %v889
  %1088 = vmatpush.msra.mxu0 %v887
  %1089 = vmatpush.msra.mxu0 %v885
  %1090 = vmatpush.msra.mxu0 %v883
  %1091 = vmatpush.msra.mxu0 %v881
  %1092 = vmatpush.msra.mxu0 %v879
  %1093 = vmatpush.msra.mxu0 %v877
  %1094 = vmatpush.msra.mxu0 %v875
  %1095 = vmatpush.msra.mxu0 %v873
  %1096 = vmatpush.msra.mxu0 %v871
  %1097 = vmatpush.msra.mxu0 %v869
  %1098 = vmatpush.msra.mxu0 %v867
  %1099 = vmatpush.msra.mxu0 %v865
  %1100 = vmatpush.msra.mxu0 %v863
  %1101 = vmatmul.f32.gmra.mxu0 %v858
  %v1102 = vpop.f32.mrf.mxu0
  %v1103 = vadd.f32 %v991, %v1102
  %1104 = vdwg.mxu0
  %1105 = vmatpush.msra.mxu0 %v925
  %1106 = vmatpush.msra.mxu0 %v923
  %1107 = vmatpush.msra.mxu0 %v921
  %1108 = vmatpush.msra.mxu0 %v919
  %1109 = vmatpush.msra.mxu0 %v917
  %1110 = vmatpush.msra.mxu0 %v915
  %1111 = vmatpush.msra.mxu0 %v913
  %1112 = vmatpush.msra.mxu0 %v911
  %1113 = vmatpush.msra.mxu0 %v909
  %1114 = vmatpush.msra.mxu0 %v907
  %1115 = vmatpush.msra.mxu0 %v905
  %1116 = vmatpush.msra.mxu0 %v903
  %1117 = vmatpush.msra.mxu0 %v901
  %1118 = vmatpush.msra.mxu0 %v899
  %1119 = vmatpush.msra.mxu0 %v897
  %1120 = vmatpush.msra.mxu0 %v895
  %1121 = vmatmul.f32.gmra.mxu0 %v859
  %v1122 = vpop.f32.mrf.mxu0
  %v1123 = vadd.f32 %v1103, %v1122
  %1124 = vdwg.mxu0
  %1125 = vmatpush.msra.mxu0 %v957
  %1126 = vmatpush.msra.mxu0 %v955
  %1127 = vmatpush.msra.mxu0 %v953
  %1128 = vmatpush.msra.mxu0 %v951
  %1129 = vmatpush.msra.mxu0 %v949
  %1130 = vmatpush.msra.mxu0 %v947
  %1131 = vmatpush.msra.mxu0 %v945
  %1132 = vmatpush.msra.mxu0 %v943
  %1133 = vmatpush.msra.mxu0 %v941
  %1134 = vmatpush.msra.mxu0 %v939
  %1135 = vmatpush.msra.mxu0 %v937
  %1136 = vmatpush.msra.mxu0 %v935
  %1137 = vmatpush.msra.mxu0 %v933
  %1138 = vmatpush.msra.mxu0 %v931
  %1139 = vmatpush.msra.mxu0 %v929
  %1140 = vmatpush.msra.mxu0 %v927
  %1141 = vmatmul.f32.gmra.mxu0 %v860
  %v1142 = vpop.f32.mrf.mxu0
  %v1143 = vadd.f32 %v1123, %v1142
  %1144 = vdwg.mxu0
  %1145 = vmatpush.msra.mxu0 0.0
  %1146 = vmatpush.msra.mxu0 %v1003
  %1147 = vmatpush.msra.mxu0 %v985
  %1148 = vmatpush.msra.mxu0 %v983
  %1149 = vmatpush.msra.mxu0 %v981
  %1150 = vmatpush.msra.mxu0 %v979
  %1151 = vmatpush.msra.mxu0 %v977
  %1152 = vmatpush.msra.mxu0 %v975
  %1153 = vmatpush.msra.mxu0 %v973
  %1154 = vmatpush.msra.mxu0 %v971
  %1155 = vmatpush.msra.mxu0 %v969
  %1156 = vmatpush.msra.mxu0 %v967
  %1157 = vmatpush.msra.mxu0 %v965
  %1158 = vmatpush.msra.mxu0 %v963
  %1159 = vmatpush.msra.mxu0 %v961
  %1160 = vmatpush.msra.mxu0 %v959
  %1161 = vmatmul.f32.gmra.mxu0 %v996
  %v1162 = vpop.f32.mrf.mxu0
  %v1163 = vadd.f32 %v1143, %v1162
  %1164 = vdwg.mxu0
  %v1165 = vmax.f32 %v1083, 0.0
  %v1166 = vmax.f32 %v1163, 0.0
  %v1167 = vld [vmem:[%s7] sm:$0xff]
  %v1168 = vld [vmem:[%s7 + $0x8] sm:$0xff]
  %v1169 = vld [vmem:[%s7 + $0x10] sm:$0xff]
  %v1170 = vld [vmem:[%s7 + $0x18] sm:$0xff]
  %v1171 = vld [vmem:[%s7 + $0x20] sm:$0xff]
  %v1172 = vld [vmem:[%s7 + $0x28] sm:$0xff]
  %v1173 = vld [vmem:[%s7 + $0x30] sm:$0xff]
  %v1174 = vld [vmem:[%s7 + $0x38] sm:$0xff]
  %v1175 = vld [vmem:[%s7 + $0x40] sm:$0xff]
  %v1176 = vld [vmem:[%s7 + $0x48] sm:$0xff]
  %v1177 = vld [vmem:[%s7 + $0x50] sm:$0xff]
  %v1178 = vld [vmem:[%s7 + $0x58] sm:$0xff]
  %v1179 = vld [vmem:[%s7 + $0x60] sm:$0xff]
  %v1180 = vld [vmem:[%s7 + $0x68] sm:$0xff]
  %v1181 = vld [vmem:[%s7 + $0x70] sm:$0xff]
  %v1182 = vld [vmem:[%s7 + $0x78] sm:$0xff]
  %v1183 = vld [vmem:[%s7 + $0x80] sm:$0xff]
  %v1184 = vld [vmem:[%s7 + $0x88] sm:$0xff]
  %v1185 = vld [vmem:[%s7 + $0x90] sm:$0xff]
  %v1186 = vld [vmem:[%s7 + $0x98] sm:$0xff]
  %v1187 = vld [vmem:[%s7 + $0xa0] sm:$0xff]
  %v1188 = vld [vmem:[%s7 + $0xa8] sm:$0xff]
  %v1189 = vld [vmem:[%s7 + $0xb0] sm:$0xff]
  %v1190 = vld [vmem:[%s7 + $0xb8] sm:$0xff]
  %v1191 = vld [vmem:[%s7 + $0xc0] sm:$0xff]
  %v1192 = vld [vmem:[%s7 + $0xc8] sm:$0xff]
  %v1193 = vld [vmem:[%s7 + $0xd0] sm:$0xff]
  %v1194 = vld [vmem:[%s7 + $0xd8] sm:$0xff]
  %v1195 = vld [vmem:[%s7 + $0xe0] sm:$0xff]
  %v1196 = vld [vmem:[%s7 + $0xe8] sm:$0xff]
  %v1197 = vld [vmem:[%s7 + $0xf0] sm:$0xff]
  %v1198 = vld [vmem:[%s7 + $0xf8] sm:$0xff]
  %v1199 = vld [vmem:[%s7 + $0x100] sm:$0xff]
  %v1200 = vld [vmem:[%s7 + $0x108] sm:$0xff]
  %v1201 = vld [vmem:[%s7 + $0x110] sm:$0xff]
  %v1202 = vld [vmem:[%s7 + $0x118] sm:$0xff]
  %v1203 = vld [vmem:[%s7 + $0x120] sm:$0xff]
  %v1204 = vld [vmem:[%s7 + $0x128] sm:$0xff]
  %v1205 = vld [vmem:[%s7 + $0x130] sm:$0xff]
  %v1206 = vld [vmem:[%s7 + $0x138] sm:$0xff]
  %v1207 = vld [vmem:[%s7 + $0x140] sm:$0xff]
  %v1208 = vld [vmem:[%s7 + $0x148] sm:$0xff]
  %v1209 = vld [vmem:[%s7 + $0x150] sm:$0xff]
  %v1210 = vld [vmem:[%s7 + $0x158] sm:$0xff]
  %v1211 = vld [vmem:[%s7 + $0x160] sm:$0xff]
  %v1212 = vld [vmem:[%s7 + $0x168] sm:$0xff]
  %v1213 = vld [vmem:[%s7 + $0x170] sm:$0xff]
  %v1214 = vld [vmem:[%s7 + $0x178] sm:$0xff]
  %v1215 = vld [vmem:[%s7 + $0x180] sm:$0xff]
  %v1216 = vld [vmem:[%s7 + $0x188] sm:$0xff]
  %v1217 = vld [vmem:[%s7 + $0x190] sm:$0xff]
  %v1218 = vld [vmem:[%s7 + $0x198] sm:$0xff]
  %v1219 = vld [vmem:[%s7 + $0x1a0] sm:$0xff]
  %v1220 = vld [vmem:[%s7 + $0x1a8] sm:$0xff]
  %v1221 = vld [vmem:[%s7 + $0x1b0] sm:$0xff]
  %v1222 = vld [vmem:[%s7 + $0x1b8] sm:$0xff]
  %v1223 = vld [vmem:[%s7 + $0x1c0] sm:$0xff]
  %v1224 = vld [vmem:[%s7 + $0x1c8] sm:$0xff]
  %v1225 = vld [vmem:[%s7 + $0x1d0] sm:$0xff]
  %v1226 = vld [vmem:[%s7 + $0x1d8] sm:$0xff]
  %v1227 = vld [vmem:[%s7 + $0x1e0] sm:$0xff]
  %v1228 = vld [vmem:[%s7 + $0x1e8] sm:$0xff]
  %v1229 = vld [vmem:[%s7 + $0x1f0] sm:$0xff]
  %v1230 = vld [vmem:[%s7 + $0x1f8] sm:$0xff]
  %v1231 = vld [vmem:[%s7 + $0x200] sm:$0xff]
  %v1232 = vld [vmem:[%s7 + $0x208] sm:$0xff]
  %v1233 = vld [vmem:[%s7 + $0x210] sm:$0xff]
  %v1234 = vld [vmem:[%s7 + $0x218] sm:$0xff]
  %v1235 = vld [vmem:[%s7 + $0x220] sm:$0xff]
  %v1236 = vld [vmem:[%s7 + $0x228] sm:$0xff]
  %v1237 = vld [vmem:[%s7 + $0x230] sm:$0xff]
  %v1238 = vld [vmem:[%s7 + $0x238] sm:$0xff]
  %v1239 = vld [vmem:[%s7 + $0x240] sm:$0xff]
  %v1240 = vld [vmem:[%s7 + $0x248] sm:$0xff]
  %v1241 = vld [vmem:[%s7 + $0x250] sm:$0xff]
  %v1242 = vld [vmem:[%s7 + $0x258] sm:$0xff]
  %v1243 = vld [vmem:[%s7 + $0x260] sm:$0xff]
  %v1244 = vld [vmem:[%s7 + $0x268] sm:$0xff]
  %v1245 = vld [vmem:[%s7 + $0x270] sm:$0xff]
  %v1246 = vld [vmem:[%s7 + $0x278] sm:$0xff]
  %v1247 = vld [vmem:[%s7 + $0x280] sm:$0xff]
  %v1248 = vld [vmem:[%s7 + $0x288] sm:$0xff]
  %v1249 = vld [vmem:[%s7 + $0x290] sm:$0xff]
  %v1250 = vld [vmem:[%s7 + $0x298] sm:$0xff]
  %v1251 = vld [vmem:[%s7 + $0x2a0] sm:$0xff]
  %v1252 = vld [vmem:[%s7 + $0x2a8] sm:$0xff]
  %v1253 = vld [vmem:[%s7 + $0x2b0] sm:$0xff]
  %v1254 = vld [vmem:[%s7 + $0x2b8] sm:$0xff]
  %v1255 = vld [vmem:[%s7 + $0x2c0] sm:$0xff]
  %v1256 = vld [vmem:[%s7 + $0x2c8] sm:$0xff]
  %v1257 = vld [vmem:[%s7 + $0x2d0] sm:$0xff]
  %v1258 = vld [vmem:[%s7 + $0x2d8] sm:$0xff]
  %v1259 = vld [vmem:[%s7 + $0x2e0] sm:$0xff]
  %v1260 = vld [vmem:[%s7 + $0x2e8] sm:$0xff]
  %v1261 = vld [vmem:[%s7 + $0x2f0] sm:$0xff]
  %v1262 = vld [vmem:[%s7 + $0x2f8] sm:$0xff]
  %v1263 = vld [vmem:[%s7 + $0x300] sm:$0xff]
  %v1264 = vld [vmem:[%s7 + $0x308] sm:$0xff]
  %v1265 = vld [vmem:[%s7 + $0x310] sm:$0xff]
  %v1266 = vld [vmem:[%s7 + $0x318] sm:$0xff]
  %v1267 = vld [vmem:[%s7 + $0x320] sm:$0xff]
  %v1268 = vld [vmem:[%s7 + $0x328] sm:$0xff]
  %v1269 = vld [vmem:[%s7 + $0x330] sm:$0xff]
  %v1270 = vld [vmem:[%s7 + $0x338] sm:$0xff]
  %v1271 = vld [vmem:[%s7 + $0x340] sm:$0xff]
  %v1272 = vld [vmem:[%s7 + $0x348] sm:$0xff]
  %v1273 = vld [vmem:[%s7 + $0x350] sm:$0xff]
  %v1274 = vld [vmem:[%s7 + $0x358] sm:$0xff]
  %v1275 = vld [vmem:[%s7 + $0x360] sm:$0xff]
  %v1276 = vld [vmem:[%s7 + $0x368] sm:$0xff]
  %v1277 = vld [vmem:[%s7 + $0x370] sm:$0xff]
  %v1278 = vld [vmem:[%s7 + $0x378] sm:$0xff]
  %v1279 = vld [vmem:[%s7 + $0x380] sm:$0xff]
  %v1280 = vld [vmem:[%s7 + $0x388] sm:$0xff]
  %v1281 = vld [vmem:[%s7 + $0x390] sm:$0xff]
  %v1282 = vld [vmem:[%s7 + $0x398] sm:$0xff]
  %v1283 = vld [vmem:[%s7 + $0x3a0] sm:$0xff]
  %v1284 = vld [vmem:[%s7 + $0x3a8] sm:$0xff]
  %v1285 = vld [vmem:[%s7 + $0x3b0] sm:$0xff]
  %v1286 = vld [vmem:[%s7 + $0x3b8] sm:$0xff]
  %v1287 = vld [vmem:[%s7 + $0x3c0] sm:$0xff]
  %v1288 = vld [vmem:[%s7 + $0x3c8] sm:$0xff]
  %v1289 = vld [vmem:[%s7 + $0x3d0] sm:$0xff]
  %v1290 = vld [vmem:[%s7 + $0x3d8] sm:$0xff]
  %v1291 = vld [vmem:[%s7 + $0x3e0] sm:$0xff]
  %v1292 = vld [vmem:[%s7 + $0x3e8] sm:$0xff]
  %v1293 = vld [vmem:[%s7 + $0x3f0] sm:$0xff]
  %v1294 = vld [vmem:[%s7 + $0x3f8] sm:$0xff]
  %v1295 = vld [vmem:[%s7 + $0x400] sm:$0xff]
  %v1296 = vld [vmem:[%s7 + $0x408] sm:$0xff]
  %v1297 = vld [vmem:[%s7 + $0x410] sm:$0xff]
  %v1298 = vld [vmem:[%s7 + $0x418] sm:$0xff]
  %v1299 = vld [vmem:[%s7 + $0x420] sm:$0xff]
  %v1300 = vld [vmem:[%s7 + $0x428] sm:$0xff]
  %v1301 = vld [vmem:[%s7 + $0x430] sm:$0xff]
  %v1302 = vld [vmem:[%s7 + $0x438] sm:$0xff]
  %v1303 = vld [vmem:[%s7 + $0x440] sm:$0xff]
  %v1304 = vld [vmem:[%s7 + $0x448] sm:$0xff]
  %v1305 = vld [vmem:[%s7 + $0x450] sm:$0xff]
  %v1306 = vld [vmem:[%s7 + $0x458] sm:$0xff]
  %v1307 = vld [vmem:[%s7 + $0x460] sm:$0xff]
  %v1308 = vld [vmem:[%s7 + $0x468] sm:$0xff]
  %v1309 = vld [vmem:[%s7 + $0x470] sm:$0xff]
  %v1310 = vld [vmem:[%s7 + $0x478] sm:$0xff]
  %v1311 = vld [vmem:[%s7 + $0x480] sm:$0xff]
  %v1312 = vld [vmem:[%s7 + $0x488] sm:$0xff]
  %v1313 = vld [vmem:[%s7 + $0x490] sm:$0xff]
  %v1314 = vld [vmem:[%s7 + $0x498] sm:$0xff]
  %v1315 = vld [vmem:[%s7 + $0x4a0] sm:$0xff]
  %v1316 = vld [vmem:[%s7 + $0x4a8] sm:$0xff]
  %v1317 = vld [vmem:[%s7 + $0x4b0] sm:$0xff]
  %v1318 = vld [vmem:[%s7 + $0x4b8] sm:$0xff]
  %v1319 = vld [vmem:[%s7 + $0x4c0] sm:$0xff]
  %v1320 = vld [vmem:[%s7 + $0x4c8] sm:$0xff]
  %v1321 = vld [vmem:[%s7 + $0x4d0] sm:$0xff]
  %v1322 = vld [vmem:[%s7 + $0x4d8] sm:$0xff]
  %v1323 = vld [vmem:[%s7 + $0x4e0] sm:$0xff]
  %v1324 = vld [vmem:[%s7 + $0x4e8] sm:$0xff]
  %v1325 = vld [vmem:[%s7 + $0x4f0] sm:$0xff]
  %v1326 = vld [vmem:[%s7 + $0x4f8] sm:$0xff]
  %v1327 = vld [vmem:[%s7 + $0x500] sm:$0xff]
  %v1328 = vld [vmem:[%s7 + $0x508] sm:$0xff]
  %v1329 = vld [vmem:[%s7 + $0x510] sm:$0xff]
  %v1330 = vld [vmem:[%s7 + $0x518] sm:$0xff]
  %v1331 = vld [vmem:[%s7 + $0x520] sm:$0xff]
  %v1332 = vld [vmem:[%s7 + $0x528] sm:$0xff]
  %v1333 = vld [vmem:[%s7 + $0x530] sm:$0xff]
  %v1334 = vld [vmem:[%s7 + $0x538] sm:$0xff]
  %v1335 = vld [vmem:[%s7 + $0x540] sm:$0xff]
  %v1336 = vld [vmem:[%s7 + $0x548] sm:$0xff]
  %v1337 = vld [vmem:[%s7 + $0x550] sm:$0xff]
  %v1338 = vld [vmem:[%s7 + $0x558] sm:$0xff]
  %v1339 = vld [vmem:[%s7 + $0x560] sm:$0xff]
  %v1340 = vld [vmem:[%s7 + $0x568] sm:$0xff]
  %v1341 = vld [vmem:[%s7 + $0x570] sm:$0xff]
  %v1342 = vld [vmem:[%s7 + $0x578] sm:$0xff]
  %v1343 = vld [vmem:[%s7 + $0x580] sm:$0xff]
  %v1344 = vld [vmem:[%s7 + $0x588] sm:$0xff]
  %v1345 = vld [vmem:[%s7 + $0x590] sm:$0xff]
  %v1346 = vld [vmem:[%s7 + $0x598] sm:$0xff]
  %v1347 = vld [vmem:[%s7 + $0x5a0] sm:$0xff]
  %v1348 = vld [vmem:[%s7 + $0x5a8] sm:$0xff]
  %v1349 = vld [vmem:[%s7 + $0x5b0] sm:$0xff]
  %v1350 = vld [vmem:[%s7 + $0x5b8] sm:$0xff]
  %v1351 = vld [vmem:[%s7 + $0x5c0] sm:$0xff]
  %v1352 = vld [vmem:[%s7 + $0x5c8] sm:$0xff]
  %v1353 = vld [vmem:[%s7 + $0x5d0] sm:$0xff]
  %v1354 = vld [vmem:[%s7 + $0x5d8] sm:$0xff]
  %v1355 = vld [vmem:[%s7 + $0x5e0] sm:$0xff]
  %v1356 = vld [vmem:[%s7 + $0x5e8] sm:$0xff]
  %v1357 = vld [vmem:[%s7 + $0x5f0] sm:$0xff]
  %v1358 = vld [vmem:[%s7 + $0x5f8] sm:$0xff]
  %v1359 = vld [vmem:[%s7 + $0x600] sm:$0xff]
  %v1360 = vld [vmem:[%s7 + $0x608] sm:$0xff]
  %v1361 = vld [vmem:[%s7 + $0x610] sm:$0xff]
  %v1362 = vld [vmem:[%s7 + $0x618] sm:$0xff]
  %v1363 = vld [vmem:[%s7 + $0x620] sm:$0xff]
  %v1364 = vld [vmem:[%s7 + $0x628] sm:$0xff]
  %v1365 = vld [vmem:[%s7 + $0x630] sm:$0xff]
  %v1366 = vld [vmem:[%s7 + $0x638] sm:$0xff]
  %v1367 = vld [vmem:[%s7 + $0x640] sm:$0xff]
  %v1368 = vld [vmem:[%s7 + $0x648] sm:$0xff]
  %v1369 = vld [vmem:[%s7 + $0x650] sm:$0xff]
  %v1370 = vld [vmem:[%s7 + $0x658] sm:$0xff]
  %v1371 = vld [vmem:[%s7 + $0x660] sm:$0xff]
  %v1372 = vld [vmem:[%s7 + $0x668] sm:$0xff]
  %v1373 = vld [vmem:[%s7 + $0x670] sm:$0xff]
  %v1374 = vld [vmem:[%s7 + $0x678] sm:$0xff]
  %v1375 = vld [vmem:[%s7 + $0x680] sm:$0xff]
  %v1376 = vld [vmem:[%s7 + $0x688] sm:$0xff]
  %v1377 = vld [vmem:[%s7 + $0x690] sm:$0xff]
  %v1378 = vld [vmem:[%s7 + $0x698] sm:$0xff]
  %v1379 = vld [vmem:[%s7 + $0x6a0] sm:$0xff]
  %v1380 = vld [vmem:[%s7 + $0x6a8] sm:$0xff]
  %v1381 = vld [vmem:[%s7 + $0x6b0] sm:$0xff]
  %v1382 = vld [vmem:[%s7 + $0x6b8] sm:$0xff]
  %v1383 = vld [vmem:[%s7 + $0x6c0] sm:$0xff]
  %v1384 = vld [vmem:[%s7 + $0x6c8] sm:$0xff]
  %v1385 = vld [vmem:[%s7 + $0x6d0] sm:$0xff]
  %v1386 = vld [vmem:[%s7 + $0x6d8] sm:$0xff]
  %v1387 = vld [vmem:[%s7 + $0x6e0] sm:$0xff]
  %v1388 = vld [vmem:[%s7 + $0x6e8] sm:$0xff]
  %v1389 = vld [vmem:[%s7 + $0x6f0] sm:$0xff]
  %v1390 = vld [vmem:[%s7 + $0x6f8] sm:$0xff]
  %v1391 = vld [vmem:[%s7 + $0x700] sm:$0xff]
  %v1392 = vld [vmem:[%s7 + $0x708] sm:$0xff]
  %v1393 = vld [vmem:[%s7 + $0x710] sm:$0xff]
  %v1394 = vld [vmem:[%s7 + $0x718] sm:$0xff]
  %v1395 = vld [vmem:[%s7 + $0x720] sm:$0xff]
  %v1396 = vld [vmem:[%s7 + $0x728] sm:$0xff]
  %v1397 = vld [vmem:[%s7 + $0x730] sm:$0xff]
  %v1398 = vld [vmem:[%s7 + $0x738] sm:$0xff]
  %v1399 = vld [vmem:[%s7 + $0x740] sm:$0xff]
  %v1400 = vld [vmem:[%s7 + $0x748] sm:$0xff]
  %v1401 = vld [vmem:[%s7 + $0x750] sm:$0xff]
  %v1402 = vld [vmem:[%s7 + $0x758] sm:$0xff]
  %v1403 = vld [vmem:[%s7 + $0x760] sm:$0xff]
  %v1404 = vld [vmem:[%s7 + $0x768] sm:$0xff]
  %v1405 = vld [vmem:[%s7 + $0x770] sm:$0xff]
  %v1406 = vld [vmem:[%s7 + $0x778] sm:$0xff]
  %v1407 = vld [vmem:[%s7 + $0x780] sm:$0xff]
  %v1408 = vld [vmem:[%s7 + $0x788] sm:$0xff]
  %v1409 = vld [vmem:[%s7 + $0x790] sm:$0xff]
  %v1410 = vld [vmem:[%s7 + $0x798] sm:$0xff]
  %v1411 = vld [vmem:[%s7 + $0x7a0] sm:$0xff]
  %v1412 = vld [vmem:[%s7 + $0x7a8] sm:$0xff]
  %v1413 = vld [vmem:[%s7 + $0x7b0] sm:$0xff]
  %v1414 = vld [vmem:[%s7 + $0x7b8] sm:$0xff]
  %v1415 = vld [vmem:[%s7 + $0x7c0] sm:$0xff]
  %v1416 = vld [vmem:[%s7 + $0x7c8] sm:$0xff]
  %v1417 = vld [vmem:[%s7 + $0x7d0] sm:$0xff]
  %v1418 = vld [vmem:[%s7 + $0x7d8] sm:$0xff]
  %v1419 = vld [vmem:[%s7 + $0x7e0] sm:$0xff]
  %v1420 = vld [vmem:[%s7 + $0x7e8] sm:$0xff]
  %v1421 = vld [vmem:[%s7 + $0x7f0] sm:$0xff]
  %v1422 = vld [vmem:[%s7 + $0x7f8] sm:$0xff]
  %v1423 = vld [vmem:[%s7 + $0x800] sm:$0xff]
  %v1424 = vld [vmem:[%s7 + $0x808] sm:$0xff]
  %v1425 = vld [vmem:[%s7 + $0x810] sm:$0xff]
  %v1426 = vld [vmem:[%s7 + $0x818] sm:$0xff]
  %v1427 = vld [vmem:[%s7 + $0x820] sm:$0xff]
  %v1428 = vld [vmem:[%s7 + $0x828] sm:$0xff]
  %v1429 = vld [vmem:[%s7 + $0x830] sm:$0xff]
  %v1430 = vld [vmem:[%s7 + $0x838] sm:$0xff]
  %v1431 = vld [vmem:[%s7 + $0x840] sm:$0xff]
  %v1432 = vld [vmem:[%s7 + $0x848] sm:$0xff]
  %v1433 = vld [vmem:[%s7 + $0x850] sm:$0xff]
  %v1434 = vld [vmem:[%s7 + $0x858] sm:$0xff]
  %v1435 = vld [vmem:[%s7 + $0x860] sm:$0xff]
  %v1436 = vld [vmem:[%s7 + $0x868] sm:$0xff]
  %v1437 = vld [vmem:[%s7 + $0x870] sm:$0xff]
  %v1438 = vld [vmem:[%s7 + $0x878] sm:$0xff]
  %v1439 = vld [vmem:[%s7 + $0x880] sm:$0xff]
  %v1440 = vld [vmem:[%s7 + $0x888] sm:$0xff]
  %v1441 = vld [vmem:[%s7 + $0x890] sm:$0xff]
  %v1442 = vld [vmem:[%s7 + $0x898] sm:$0xff]
  %v1443 = vld [vmem:[%s7 + $0x8a0] sm:$0x7f]
  %v1444 = vld [vmem:[%s7 + $0x8a8] sm:$0x7f]
  %v1445 = vld [vmem:[%s7 + $0x8b0] sm:$0x7f]
  %v1446 = vld [vmem:[%s7 + $0x8b8] sm:$0x7f]
  %v1447 = vld [vmem:[%s7 + $0x8c0] sm:$0x7f]
  %v1448 = vld [vmem:[%s7 + $0x8c8] sm:$0x7f]
  %v1449 = vld [vmem:[%s8] sm:$0x3f]
  %v1451 = vperm.slane %v1449, 0
  %v1452 = vperm.slane %v1449, 1
  %v1453 = vperm.slane %v1449, 2
  %v1454 = vperm.slane %v1449, 3
  %v1455 = vperm.slane %v1449, 4
  %v1456 = vperm.slane %v1449, 5
  %v1464 = vsel %vm215, %v1443, 0
  %v1467 = vsel %vm215, %v1444, 0
  %v1470 = vsel %vm215, %v1445, 0
  %v1473 = vsel %vm215, %v1446, 0
  %v1476 = vsel %vm215, %v1447, 0
  %v1479 = vsel %vm215, %v1448, 0
  %1481 = vmatpush.msra.mxu0 %v1257
  %1482 = vmatpush.msra.mxu0 %v1251
  %1483 = vmatpush.msra.mxu0 %v1245
  %1484 = vmatpush.msra.mxu0 %v1239
  %1485 = vmatpush.msra.mxu0 %v1233
  %1486 = vmatpush.msra.mxu0 %v1227
  %1487 = vmatpush.msra.mxu0 %v1221
  %1488 = vmatpush.msra.mxu0 %v1215
  %1489 = vmatpush.msra.mxu0 %v1209
  %1490 = vmatpush.msra.mxu0 %v1203
  %1491 = vmatpush.msra.mxu0 %v1197
  %1492 = vmatpush.msra.mxu0 %v1191
  %1493 = vmatpush.msra.mxu0 %v1185
  %1494 = vmatpush.msra.mxu0 %v1179
  %1495 = vmatpush.msra.mxu0 %v1173
  %1496 = vmatpush.msra.mxu0 %v1167
  %1497 = vmatmul.f32.gmra.mxu0 %v59
  %v1498 = vpop.f32.mrf.mxu0
  %v1499 = vadd.f32 %v1451, %v1498
  %1500 = vdwg.mxu0
  %1501 = vmatpush.msra.mxu0 %v1353
  %1502 = vmatpush.msra.mxu0 %v1347
  %1503 = vmatpush.msra.mxu0 %v1341
  %1504 = vmatpush.msra.mxu0 %v1335
  %1505 = vmatpush.msra.mxu0 %v1329
  %1506 = vmatpush.msra.mxu0 %v1323
  %1507 = vmatpush.msra.mxu0 %v1317
  %1508 = vmatpush.msra.mxu0 %v1311
  %1509 = vmatpush.msra.mxu0 %v1305
  %1510 = vmatpush.msra.mxu0 %v1299
  %1511 = vmatpush.msra.mxu0 %v1293
  %1512 = vmatpush.msra.mxu0 %v1287
  %1513 = vmatpush.msra.mxu0 %v1281
  %1514 = vmatpush.msra.mxu0 %v1275
  %1515 = vmatpush.msra.mxu0 %v1269
  %1516 = vmatpush.msra.mxu0 %v1263
  %1517 = vmatmul.f32.gmra.mxu0 %v60
  %v1518 = vpop.f32.mrf.mxu0
  %v1519 = vadd.f32 %v1499, %v1518
  %1520 = vdwg.mxu0
  %1521 = vmatpush.msra.mxu0 0.0
  %1522 = vmatpush.msra.mxu0 %v1464
  %1523 = vmatpush.msra.mxu0 %v1437
  %1524 = vmatpush.msra.mxu0 %v1431
  %1525 = vmatpush.msra.mxu0 %v1425
  %1526 = vmatpush.msra.mxu0 %v1419
  %1527 = vmatpush.msra.mxu0 %v1413
  %1528 = vmatpush.msra.mxu0 %v1407
  %1529 = vmatpush.msra.mxu0 %v1401
  %1530 = vmatpush.msra.mxu0 %v1395
  %1531 = vmatpush.msra.mxu0 %v1389
  %1532 = vmatpush.msra.mxu0 %v1383
  %1533 = vmatpush.msra.mxu0 %v1377
  %1534 = vmatpush.msra.mxu0 %v1371
  %1535 = vmatpush.msra.mxu0 %v1365
  %1536 = vmatpush.msra.mxu0 %v1359
  %1537 = vmatmul.f32.gmra.mxu0 %v213
  %v1538 = vpop.f32.mrf.mxu0
  %v1539 = vadd.f32 %v1519, %v1538
  %1540 = vdwg.mxu0
  %1541 = vmatpush.msra.mxu0 %v1258
  %1542 = vmatpush.msra.mxu0 %v1252
  %1543 = vmatpush.msra.mxu0 %v1246
  %1544 = vmatpush.msra.mxu0 %v1240
  %1545 = vmatpush.msra.mxu0 %v1234
  %1546 = vmatpush.msra.mxu0 %v1228
  %1547 = vmatpush.msra.mxu0 %v1222
  %1548 = vmatpush.msra.mxu0 %v1216
  %1549 = vmatpush.msra.mxu0 %v1210
  %1550 = vmatpush.msra.mxu0 %v1204
  %1551 = vmatpush.msra.mxu0 %v1198
  %1552 = vmatpush.msra.mxu0 %v1192
  %1553 = vmatpush.msra.mxu0 %v1186
  %1554 = vmatpush.msra.mxu0 %v1180
  %1555 = vmatpush.msra.mxu0 %v1174
  %1556 = vmatpush.msra.mxu0 %v1168
  %1557 = vmatmul.f32.gmra.mxu0 %v59
  %v1558 = vpop.f32.mrf.mxu0
  %v1559 = vadd.f32 %v1452, %v1558
  %1560 = vdwg.mxu0
  %1561 = vmatpush.msra.mxu0 %v1354
  %1562 = vmatpush.msra.mxu0 %v1348
  %1563 = vmatpush.msra.mxu0 %v1342
  %1564 = vmatpush.msra.mxu0 %v1336
  %1565 = vmatpush.msra.mxu0 %v1330
  %1566 = vmatpush.msra.mxu0 %v1324
  %1567 = vmatpush.msra.mxu0 %v1318
  %1568 = vmatpush.msra.mxu0 %v1312
  %1569 = vmatpush.msra.mxu0 %v1306
  %1570 = vmatpush.msra.mxu0 %v1300
  %1571 = vmatpush.msra.mxu0 %v1294
  %1572 = vmatpush.msra.mxu0 %v1288
  %1573 = vmatpush.msra.mxu0 %v1282
  %1574 = vmatpush.msra.mxu0 %v1276
  %1575 = vmatpush.msra.mxu0 %v1270
  %1576 = vmatpush.msra.mxu0 %v1264
  %1577 = vmatmul.f32.gmra.mxu0 %v60
  %v1578 = vpop.f32.mrf.mxu0
  %v1579 = vadd.f32 %v1559, %v1578
  %1580 = vdwg.mxu0
  %1581 = vmatpush.msra.mxu0 0.0
  %1582 = vmatpush.msra.mxu0 %v1467
  %1583 = vmatpush.msra.mxu0 %v1438
  %1584 = vmatpush.msra.mxu0 %v1432
  %1585 = vmatpush.msra.mxu0 %v1426
  %1586 = vmatpush.msra.mxu0 %v1420
  %1587 = vmatpush.msra.mxu0 %v1414
  %1588 = vmatpush.msra.mxu0 %v1408
  %1589 = vmatpush.msra.mxu0 %v1402
  %1590 = vmatpush.msra.mxu0 %v1396
  %1591 = vmatpush.msra.mxu0 %v1390
  %1592 = vmatpush.msra.mxu0 %v1384
  %1593 = vmatpush.msra.mxu0 %v1378
  %1594 = vmatpush.msra.mxu0 %v1372
  %1595 = vmatpush.msra.mxu0 %v1366
  %1596 = vmatpush.msra.mxu0 %v1360
  %1597 = vmatmul.f32.gmra.mxu0 %v213
  %v1598 = vpop.f32.mrf.mxu0
  %v1599 = vadd.f32 %v1579, %v1598
  %1600 = vdwg.mxu0
  %1601 = vmatpush.msra.mxu0 %v1259
  %1602 = vmatpush.msra.mxu0 %v1253
  %1603 = vmatpush.msra.mxu0 %v1247
  %1604 = vmatpush.msra.mxu0 %v1241
  %1605 = vmatpush.msra.mxu0 %v1235
  %1606 = vmatpush.msra.mxu0 %v1229
  %1607 = vmatpush.msra.mxu0 %v1223
  %1608 = vmatpush.msra.mxu0 %v1217
  %1609 = vmatpush.msra.mxu0 %v1211
  %1610 = vmatpush.msra.mxu0 %v1205
  %1611 = vmatpush.msra.mxu0 %v1199
  %1612 = vmatpush.msra.mxu0 %v1193
  %1613 = vmatpush.msra.mxu0 %v1187
  %1614 = vmatpush.msra.mxu0 %v1181
  %1615 = vmatpush.msra.mxu0 %v1175
  %1616 = vmatpush.msra.mxu0 %v1169
  %1617 = vmatmul.f32.gmra.mxu0 %v59
  %v1618 = vpop.f32.mrf.mxu0
  %v1619 = vadd.f32 %v1453, %v1618
  %1620 = vdwg.mxu0
  %1621 = vmatpush.msra.mxu0 %v1355
  %1622 = vmatpush.msra.mxu0 %v1349
  %1623 = vmatpush.msra.mxu0 %v1343
  %1624 = vmatpush.msra.mxu0 %v1337
  %1625 = vmatpush.msra.mxu0 %v1331
  %1626 = vmatpush.msra.mxu0 %v1325
  %1627 = vmatpush.msra.mxu0 %v1319
  %1628 = vmatpush.msra.mxu0 %v1313
  %1629 = vmatpush.msra.mxu0 %v1307
  %1630 = vmatpush.msra.mxu0 %v1301
  %1631 = vmatpush.msra.mxu0 %v1295
  %1632 = vmatpush.msra.mxu0 %v1289
  %1633 = vmatpush.msra.mxu0 %v1283
  %1634 = vmatpush.msra.mxu0 %v1277
  %1635 = vmatpush.msra.mxu0 %v1271
  %1636 = vmatpush.msra.mxu0 %v1265
  %1637 = vmatmul.f32.gmra.mxu0 %v60
  %v1638 = vpop.f32.mrf.mxu0
  %v1639 = vadd.f32 %v1619, %v1638
  %1640 = vdwg.mxu0
  %1641 = vmatpush.msra.mxu0 0.0
  %1642 = vmatpush.msra.mxu0 %v1470
  %1643 = vmatpush.msra.mxu0 %v1439
  %1644 = vmatpush.msra.mxu0 %v1433
  %1645 = vmatpush.msra.mxu0 %v1427
  %1646 = vmatpush.msra.mxu0 %v1421
  %1647 = vmatpush.msra.mxu0 %v1415
  %1648 = vmatpush.msra.mxu0 %v1409
  %1649 = vmatpush.msra.mxu0 %v1403
  %1650 = vmatpush.msra.mxu0 %v1397
  %1651 = vmatpush.msra.mxu0 %v1391
  %1652 = vmatpush.msra.mxu0 %v1385
  %1653 = vmatpush.msra.mxu0 %v1379
  %1654 = vmatpush.msra.mxu0 %v1373
  %1655 = vmatpush.msra.mxu0 %v1367
  %1656 = vmatpush.msra.mxu0 %v1361
  %1657 = vmatmul.f32.gmra.mxu0 %v213
  %v1658 = vpop.f32.mrf.mxu0
  %v1659 = vadd.f32 %v1639, %v1658
  %1660 = vdwg.mxu0
  %1661 = vmatpush.msra.mxu0 %v1260
  %1662 = vmatpush.msra.mxu0 %v1254
  %1663 = vmatpush.msra.mxu0 %v1248
  %1664 = vmatpush.msra.mxu0 %v1242
  %1665 = vmatpush.msra.mxu0 %v1236
  %1666 = vmatpush.msra.mxu0 %v1230
  %1667 = vmatpush.msra.mxu0 %v1224
  %1668 = vmatpush.msra.mxu0 %v1218
  %1669 = vmatpush.msra.mxu0 %v1212
  %1670 = vmatpush.msra.mxu0 %v1206
  %1671 = vmatpush.msra.mxu0 %v1200
  %1672 = vmatpush.msra.mxu0 %v1194
  %1673 = vmatpush.msra.mxu0 %v1188
  %1674 = vmatpush.msra.mxu0 %v1182
  %1675 = vmatpush.msra.mxu0 %v1176
  %1676 = vmatpush.msra.mxu0 %v1170
  %1677 = vmatmul.f32.gmra.mxu0 %v59
  %v1678 = vpop.f32.mrf.mxu0
  %v1679 = vadd.f32 %v1454, %v1678
  %1680 = vdwg.mxu0
  %1681 = vmatpush.msra.mxu0 %v1356
  %1682 = vmatpush.msra.mxu0 %v1350
  %1683 = vmatpush.msra.mxu0 %v1344
  %1684 = vmatpush.msra.mxu0 %v1338
  %1685 = vmatpush.msra.mxu0 %v1332
  %1686 = vmatpush.msra.mxu0 %v1326
  %1687 = vmatpush.msra.mxu0 %v1320
  %1688 = vmatpush.msra.mxu0 %v1314
  %1689 = vmatpush.msra.mxu0 %v1308
  %1690 = vmatpush.msra.mxu0 %v1302
  %1691 = vmatpush.msra.mxu0 %v1296
  %1692 = vmatpush.msra.mxu0 %v1290
  %1693 = vmatpush.msra.mxu0 %v1284
  %1694 = vmatpush.msra.mxu0 %v1278
  %1695 = vmatpush.msra.mxu0 %v1272
  %1696 = vmatpush.msra.mxu0 %v1266
  %1697 = vmatmul.f32.gmra.mxu0 %v60
  %v1698 = vpop.f32.mrf.mxu0
  %v1699 = vadd.f32 %v1679, %v1698
  %1700 = vdwg.mxu0
  %1701 = vmatpush.msra.mxu0 0.0
  %1702 = vmatpush.msra.mxu0 %v1473
  %1703 = vmatpush.msra.mxu0 %v1440
  %1704 = vmatpush.msra.mxu0 %v1434
  %1705 = vmatpush.msra.mxu0 %v1428
  %1706 = vmatpush.msra.mxu0 %v1422
  %1707 = vmatpush.msra.mxu0 %v1416
  %1708 = vmatpush.msra.mxu0 %v1410
  %1709 = vmatpush.msra.mxu0 %v1404
  %1710 = vmatpush.msra.mxu0 %v1398
  %1711 = vmatpush.msra.mxu0 %v1392
  %1712 = vmatpush.msra.mxu0 %v1386
  %1713 = vmatpush.msra.mxu0 %v1380
  %1714 = vmatpush.msra.mxu0 %v1374
  %1715 = vmatpush.msra.mxu0 %v1368
  %1716 = vmatpush.msra.mxu0 %v1362
  %1717 = vmatmul.f32.gmra.mxu0 %v213
  %v1718 = vpop.f32.mrf.mxu0
  %v1719 = vadd.f32 %v1699, %v1718
  %1720 = vdwg.mxu0
  %1721 = vmatpush.msra.mxu0 %v1261
  %1722 = vmatpush.msra.mxu0 %v1255
  %1723 = vmatpush.msra.mxu0 %v1249
  %1724 = vmatpush.msra.mxu0 %v1243
  %1725 = vmatpush.msra.mxu0 %v1237
  %1726 = vmatpush.msra.mxu0 %v1231
  %1727 = vmatpush.msra.mxu0 %v1225
  %1728 = vmatpush.msra.mxu0 %v1219
  %1729 = vmatpush.msra.mxu0 %v1213
  %1730 = vmatpush.msra.mxu0 %v1207
  %1731 = vmatpush.msra.mxu0 %v1201
  %1732 = vmatpush.msra.mxu0 %v1195
  %1733 = vmatpush.msra.mxu0 %v1189
  %1734 = vmatpush.msra.mxu0 %v1183
  %1735 = vmatpush.msra.mxu0 %v1177
  %1736 = vmatpush.msra.mxu0 %v1171
  %1737 = vmatmul.f32.gmra.mxu0 %v59
  %v1738 = vpop.f32.mrf.mxu0
  %v1739 = vadd.f32 %v1455, %v1738
  %1740 = vdwg.mxu0
  %1741 = vmatpush.msra.mxu0 %v1357
  %1742 = vmatpush.msra.mxu0 %v1351
  %1743 = vmatpush.msra.mxu0 %v1345
  %1744 = vmatpush.msra.mxu0 %v1339
  %1745 = vmatpush.msra.mxu0 %v1333
  %1746 = vmatpush.msra.mxu0 %v1327
  %1747 = vmatpush.msra.mxu0 %v1321
  %1748 = vmatpush.msra.mxu0 %v1315
  %1749 = vmatpush.msra.mxu0 %v1309
  %1750 = vmatpush.msra.mxu0 %v1303
  %1751 = vmatpush.msra.mxu0 %v1297
  %1752 = vmatpush.msra.mxu0 %v1291
  %1753 = vmatpush.msra.mxu0 %v1285
  %1754 = vmatpush.msra.mxu0 %v1279
  %1755 = vmatpush.msra.mxu0 %v1273
  %1756 = vmatpush.msra.mxu0 %v1267
  %1757 = vmatmul.f32.gmra.mxu0 %v60
  %v1758 = vpop.f32.mrf.mxu0
  %v1759 = vadd.f32 %v1739, %v1758
  %1760 = vdwg.mxu0
  %1761 = vmatpush.msra.mxu0 0.0
  %1762 = vmatpush.msra.mxu0 %v1476
  %1763 = vmatpush.msra.mxu0 %v1441
  %1764 = vmatpush.msra.mxu0 %v1435
  %1765 = vmatpush.msra.mxu0 %v1429
  %1766 = vmatpush.msra.mxu0 %v1423
  %1767 = vmatpush.msra.mxu0 %v1417
  %1768 = vmatpush.msra.mxu0 %v1411
  %1769 = vmatpush.msra.mxu0 %v1405
  %1770 = vmatpush.msra.mxu0 %v1399
  %1771 = vmatpush.msra.mxu0 %v1393
  %1772 = vmatpush.msra.mxu0 %v1387
  %1773 = vmatpush.msra.mxu0 %v1381
  %1774 = vmatpush.msra.mxu0 %v1375
  %1775 = vmatpush.msra.mxu0 %v1369
  %1776 = vmatpush.msra.mxu0 %v1363
  %1777 = vmatmul.f32.gmra.mxu0 %v213
  %v1778 = vpop.f32.mrf.mxu0
  %v1779 = vadd.f32 %v1759, %v1778
  %1780 = vdwg.mxu0
  %1781 = vmatpush.msra.mxu0 %v1262
  %1782 = vmatpush.msra.mxu0 %v1256
  %1783 = vmatpush.msra.mxu0 %v1250
  %1784 = vmatpush.msra.mxu0 %v1244
  %1785 = vmatpush.msra.mxu0 %v1238
  %1786 = vmatpush.msra.mxu0 %v1232
  %1787 = vmatpush.msra.mxu0 %v1226
  %1788 = vmatpush.msra.mxu0 %v1220
  %1789 = vmatpush.msra.mxu0 %v1214
  %1790 = vmatpush.msra.mxu0 %v1208
  %1791 = vmatpush.msra.mxu0 %v1202
  %1792 = vmatpush.msra.mxu0 %v1196
  %1793 = vmatpush.msra.mxu0 %v1190
  %1794 = vmatpush.msra.mxu0 %v1184
  %1795 = vmatpush.msra.mxu0 %v1178
  %1796 = vmatpush.msra.mxu0 %v1172
  %1797 = vmatmul.f32.gmra.mxu0 %v59
  %v1798 = vpop.f32.mrf.mxu0
  %v1799 = vadd.f32 %v1456, %v1798
  %1800 = vdwg.mxu0
  %1801 = vmatpush.msra.mxu0 %v1358
  %1802 = vmatpush.msra.mxu0 %v1352
  %1803 = vmatpush.msra.mxu0 %v1346
  %1804 = vmatpush.msra.mxu0 %v1340
  %1805 = vmatpush.msra.mxu0 %v1334
  %1806 = vmatpush.msra.mxu0 %v1328
  %1807 = vmatpush.msra.mxu0 %v1322
  %1808 = vmatpush.msra.mxu0 %v1316
  %1809 = vmatpush.msra.mxu0 %v1310
  %1810 = vmatpush.msra.mxu0 %v1304
  %1811 = vmatpush.msra.mxu0 %v1298
  %1812 = vmatpush.msra.mxu0 %v1292
  %1813 = vmatpush.msra.mxu0 %v1286
  %1814 = vmatpush.msra.mxu0 %v1280
  %1815 = vmatpush.msra.mxu0 %v1274
  %1816 = vmatpush.msra.mxu0 %v1268
  %1817 = vmatmul.f32.gmra.mxu0 %v60
  %v1818 = vpop.f32.mrf.mxu0
  %v1819 = vadd.f32 %v1799, %v1818
  %1820 = vdwg.mxu0
  %1821 = vmatpush.msra.mxu0 0.0
  %1822 = vmatpush.msra.mxu0 %v1479
  %1823 = vmatpush.msra.mxu0 %v1442
  %1824 = vmatpush.msra.mxu0 %v1436
  %1825 = vmatpush.msra.mxu0 %v1430
  %1826 = vmatpush.msra.mxu0 %v1424
  %1827 = vmatpush.msra.mxu0 %v1418
  %1828 = vmatpush.msra.mxu0 %v1412
  %1829 = vmatpush.msra.mxu0 %v1406
  %1830 = vmatpush.msra.mxu0 %v1400
  %1831 = vmatpush.msra.mxu0 %v1394
  %1832 = vmatpush.msra.mxu0 %v1388
  %1833 = vmatpush.msra.mxu0 %v1382
  %1834 = vmatpush.msra.mxu0 %v1376
  %1835 = vmatpush.msra.mxu0 %v1370
  %1836 = vmatpush.msra.mxu0 %v1364
  %1837 = vmatmul.f32.gmra.mxu0 %v213
  %v1838 = vpop.f32.mrf.mxu0
  %v1839 = vadd.f32 %v1819, %v1838
  %1840 = vdwg.mxu0
  %v1841 = vld [vmem:[%s9] sm:$0xff]
  %v1842 = vld [vmem:[%s9 + $0x8] sm:$0xff]
  %v1843 = vld [vmem:[%s9 + $0x10] sm:$0xff]
  %v1844 = vld [vmem:[%s9 + $0x18] sm:$0xff]
  %v1845 = vld [vmem:[%s9 + $0x20] sm:$0xff]
  %v1846 = vld [vmem:[%s9 + $0x28] sm:$0xff]
  %v1847 = vld [vmem:[%s9 + $0x30] sm:$0xff]
  %v1848 = vld [vmem:[%s9 + $0x38] sm:$0xff]
  %v1849 = vld [vmem:[%s9 + $0x40] sm:$0xff]
  %v1850 = vld [vmem:[%s9 + $0x48] sm:$0xff]
  %v1851 = vld [vmem:[%s9 + $0x50] sm:$0xff]
  %v1852 = vld [vmem:[%s9 + $0x58] sm:$0xff]
  %v1853 = vld [vmem:[%s9 + $0x60] sm:$0xff]
  %v1854 = vld [vmem:[%s9 + $0x68] sm:$0xff]
  %v1855 = vld [vmem:[%s9 + $0x70] sm:$0xff]
  %v1856 = vld [vmem:[%s9 + $0x78] sm:$0xff]
  %v1857 = vld [vmem:[%s9 + $0x80] sm:$0xff]
  %v1858 = vld [vmem:[%s9 + $0x88] sm:$0xff]
  %v1859 = vld [vmem:[%s9 + $0x90] sm:$0xff]
  %v1860 = vld [vmem:[%s9 + $0x98] sm:$0xff]
  %v1861 = vld [vmem:[%s9 + $0xa0] sm:$0xff]
  %v1862 = vld [vmem:[%s9 + $0xa8] sm:$0xff]
  %v1863 = vld [vmem:[%s9 + $0xb0] sm:$0xff]
  %v1864 = vld [vmem:[%s9 + $0xb8] sm:$0xff]
  %v1865 = vld [vmem:[%s9 + $0xc0] sm:$0xff]
  %v1866 = vld [vmem:[%s9 + $0xc8] sm:$0xff]
  %v1867 = vld [vmem:[%s9 + $0xd0] sm:$0xff]
  %v1868 = vld [vmem:[%s9 + $0xd8] sm:$0xff]
  %v1869 = vld [vmem:[%s9 + $0xe0] sm:$0xff]
  %v1870 = vld [vmem:[%s9 + $0xe8] sm:$0xff]
  %v1871 = vld [vmem:[%s9 + $0xf0] sm:$0xff]
  %v1872 = vld [vmem:[%s9 + $0xf8] sm:$0xff]
  %v1873 = vld [vmem:[%s9 + $0x100] sm:$0xff]
  %v1874 = vld [vmem:[%s9 + $0x108] sm:$0xff]
  %v1875 = vld [vmem:[%s9 + $0x110] sm:$0xff]
  %v1876 = vld [vmem:[%s9 + $0x118] sm:$0xff]
  %v1877 = vld [vmem:[%s9 + $0x120] sm:$0xff]
  %v1878 = vld [vmem:[%s9 + $0x128] sm:$0xff]
  %v1879 = vld [vmem:[%s9 + $0x130] sm:$0xff]
  %v1880 = vld [vmem:[%s9 + $0x138] sm:$0xff]
  %v1881 = vld [vmem:[%s9 + $0x140] sm:$0xff]
  %v1882 = vld [vmem:[%s9 + $0x148] sm:$0xff]
  %v1883 = vld [vmem:[%s9 + $0x150] sm:$0xff]
  %v1884 = vld [vmem:[%s9 + $0x158] sm:$0xff]
  %v1885 = vld [vmem:[%s9 + $0x160] sm:$0xff]
  %v1886 = vld [vmem:[%s9 + $0x168] sm:$0xff]
  %v1887 = vld [vmem:[%s9 + $0x170] sm:$0xff]
  %v1888 = vld [vmem:[%s9 + $0x178] sm:$0xff]
  %v1889 = vld [vmem:[%s9 + $0x180] sm:$0xff]
  %v1890 = vld [vmem:[%s9 + $0x188] sm:$0xff]
  %v1891 = vld [vmem:[%s9 + $0x190] sm:$0xff]
  %v1892 = vld [vmem:[%s9 + $0x198] sm:$0xff]
  %v1893 = vld [vmem:[%s9 + $0x1a0] sm:$0xff]
  %v1894 = vld [vmem:[%s9 + $0x1a8] sm:$0xff]
  %v1895 = vld [vmem:[%s9 + $0x1b0] sm:$0xff]
  %v1896 = vld [vmem:[%s9 + $0x1b8] sm:$0xff]
  %v1897 = vld [vmem:[%s9 + $0x1c0] sm:$0xff]
  %v1898 = vld [vmem:[%s9 + $0x1c8] sm:$0xff]
  %v1899 = vld [vmem:[%s9 + $0x1d0] sm:$0xff]
  %v1900 = vld [vmem:[%s9 + $0x1d8] sm:$0xff]
  %v1901 = vld [vmem:[%s9 + $0x1e0] sm:$0xff]
  %v1902 = vld [vmem:[%s9 + $0x1e8] sm:$0xff]
  %v1903 = vld [vmem:[%s9 + $0x1f0] sm:$0xff]
  %v1904 = vld [vmem:[%s9 + $0x1f8] sm:$0xff]
  %v1905 = vld [vmem:[%s9 + $0x200] sm:$0xff]
  %v1906 = vld [vmem:[%s9 + $0x208] sm:$0xff]
  %v1907 = vld [vmem:[%s9 + $0x210] sm:$0xff]
  %v1908 = vld [vmem:[%s9 + $0x218] sm:$0xff]
  %v1909 = vld [vmem:[%s9 + $0x220] sm:$0xff]
  %v1910 = vld [vmem:[%s9 + $0x228] sm:$0xff]
  %v1911 = vld [vmem:[%s9 + $0x230] sm:$0xff]
  %v1912 = vld [vmem:[%s9 + $0x238] sm:$0xff]
  %v1913 = vld [vmem:[%s9 + $0x240] sm:$0xff]
  %v1914 = vld [vmem:[%s9 + $0x248] sm:$0xff]
  %v1915 = vld [vmem:[%s9 + $0x250] sm:$0xff]
  %v1916 = vld [vmem:[%s9 + $0x258] sm:$0xff]
  %v1917 = vld [vmem:[%s9 + $0x260] sm:$0xff]
  %v1918 = vld [vmem:[%s9 + $0x268] sm:$0xff]
  %v1919 = vld [vmem:[%s9 + $0x270] sm:$0xff]
  %v1920 = vld [vmem:[%s9 + $0x278] sm:$0xff]
  %v1921 = vld [vmem:[%s9 + $0x280] sm:$0xff]
  %v1922 = vld [vmem:[%s9 + $0x288] sm:$0xff]
  %v1923 = vld [vmem:[%s9 + $0x290] sm:$0xff]
  %v1924 = vld [vmem:[%s9 + $0x298] sm:$0xff]
  %v1925 = vld [vmem:[%s9 + $0x2a0] sm:$0xff]
  %v1926 = vld [vmem:[%s9 + $0x2a8] sm:$0xff]
  %v1927 = vld [vmem:[%s9 + $0x2b0] sm:$0xff]
  %v1928 = vld [vmem:[%s9 + $0x2b8] sm:$0xff]
  %v1929 = vld [vmem:[%s9 + $0x2c0] sm:$0xff]
  %v1930 = vld [vmem:[%s9 + $0x2c8] sm:$0xff]
  %v1931 = vld [vmem:[%s9 + $0x2d0] sm:$0xff]
  %v1932 = vld [vmem:[%s9 + $0x2d8] sm:$0xff]
  %v1933 = vld [vmem:[%s9 + $0x2e0] sm:$0xff]
  %v1934 = vld [vmem:[%s9 + $0x2e8] sm:$0xff]
  %v1935 = vld [vmem:[%s9 + $0x2f0] sm:$0xff]
  %v1936 = vld [vmem:[%s9 + $0x2f8] sm:$0xff]
  %v1937 = vld [vmem:[%s9 + $0x300] sm:$0xff]
  %v1938 = vld [vmem:[%s9 + $0x308] sm:$0xff]
  %v1939 = vld [vmem:[%s9 + $0x310] sm:$0xff]
  %v1940 = vld [vmem:[%s9 + $0x318] sm:$0xff]
  %v1941 = vld [vmem:[%s9 + $0x320] sm:$0xff]
  %v1942 = vld [vmem:[%s9 + $0x328] sm:$0xff]
  %v1943 = vld [vmem:[%s9 + $0x330] sm:$0xff]
  %v1944 = vld [vmem:[%s9 + $0x338] sm:$0xff]
  %v1945 = vld [vmem:[%s9 + $0x340] sm:$0xff]
  %v1946 = vld [vmem:[%s9 + $0x348] sm:$0xff]
  %v1947 = vld [vmem:[%s9 + $0x350] sm:$0xff]
  %v1948 = vld [vmem:[%s9 + $0x358] sm:$0xff]
  %v1949 = vld [vmem:[%s9 + $0x360] sm:$0xff]
  %v1950 = vld [vmem:[%s9 + $0x368] sm:$0xff]
  %v1951 = vld [vmem:[%s9 + $0x370] sm:$0xff]
  %v1952 = vld [vmem:[%s9 + $0x378] sm:$0xff]
  %v1953 = vld [vmem:[%s9 + $0x380] sm:$0xff]
  %v1954 = vld [vmem:[%s9 + $0x388] sm:$0xff]
  %v1955 = vld [vmem:[%s9 + $0x390] sm:$0xff]
  %v1956 = vld [vmem:[%s9 + $0x398] sm:$0xff]
  %v1957 = vld [vmem:[%s9 + $0x3a0] sm:$0xff]
  %v1958 = vld [vmem:[%s9 + $0x3a8] sm:$0xff]
  %v1959 = vld [vmem:[%s9 + $0x3b0] sm:$0xff]
  %v1960 = vld [vmem:[%s9 + $0x3b8] sm:$0xff]
  %v1961 = vld [vmem:[%s9 + $0x3c0] sm:$0xff]
  %v1962 = vld [vmem:[%s9 + $0x3c8] sm:$0xff]
  %v1963 = vld [vmem:[%s9 + $0x3d0] sm:$0xff]
  %v1964 = vld [vmem:[%s9 + $0x3d8] sm:$0xff]
  %v1965 = vld [vmem:[%s9 + $0x3e0] sm:$0xff]
  %v1966 = vld [vmem:[%s9 + $0x3e8] sm:$0xff]
  %v1967 = vld [vmem:[%s9 + $0x3f0] sm:$0xff]
  %v1968 = vld [vmem:[%s9 + $0x3f8] sm:$0xff]
  %v1969 = vld [vmem:[%s9 + $0x400] sm:$0xff]
  %v1970 = vld [vmem:[%s9 + $0x408] sm:$0xff]
  %v1971 = vld [vmem:[%s9 + $0x410] sm:$0xff]
  %v1972 = vld [vmem:[%s9 + $0x418] sm:$0xff]
  %v1973 = vld [vmem:[%s9 + $0x420] sm:$0xff]
  %v1974 = vld [vmem:[%s9 + $0x428] sm:$0xff]
  %v1975 = vld [vmem:[%s9 + $0x430] sm:$0xff]
  %v1976 = vld [vmem:[%s9 + $0x438] sm:$0xff]
  %v1977 = vld [vmem:[%s9 + $0x440] sm:$0xff]
  %v1978 = vld [vmem:[%s9 + $0x448] sm:$0xff]
  %v1979 = vld [vmem:[%s9 + $0x450] sm:$0xff]
  %v1980 = vld [vmem:[%s9 + $0x458] sm:$0xff]
  %v1981 = vld [vmem:[%s9 + $0x460] sm:$0xff]
  %v1982 = vld [vmem:[%s9 + $0x468] sm:$0xff]
  %v1983 = vld [vmem:[%s9 + $0x470] sm:$0xff]
  %v1984 = vld [vmem:[%s9 + $0x478] sm:$0xff]
  %v1985 = vld [vmem:[%s9 + $0x480] sm:$0xff]
  %v1986 = vld [vmem:[%s9 + $0x488] sm:$0xff]
  %v1987 = vld [vmem:[%s9 + $0x490] sm:$0xff]
  %v1988 = vld [vmem:[%s9 + $0x498] sm:$0xff]
  %v1989 = vld [vmem:[%s9 + $0x4a0] sm:$0xff]
  %v1990 = vld [vmem:[%s9 + $0x4a8] sm:$0xff]
  %v1991 = vld [vmem:[%s9 + $0x4b0] sm:$0xff]
  %v1992 = vld [vmem:[%s9 + $0x4b8] sm:$0xff]
  %v1993 = vld [vmem:[%s9 + $0x4c0] sm:$0xff]
  %v1994 = vld [vmem:[%s9 + $0x4c8] sm:$0xff]
  %v1995 = vld [vmem:[%s9 + $0x4d0] sm:$0xff]
  %v1996 = vld [vmem:[%s9 + $0x4d8] sm:$0xff]
  %v1997 = vld [vmem:[%s9 + $0x4e0] sm:$0xff]
  %v1998 = vld [vmem:[%s9 + $0x4e8] sm:$0xff]
  %v1999 = vld [vmem:[%s9 + $0x4f0] sm:$0xff]
  %v2000 = vld [vmem:[%s9 + $0x4f8] sm:$0xff]
  %v2001 = vld [vmem:[%s9 + $0x500] sm:$0xff]
  %v2002 = vld [vmem:[%s9 + $0x508] sm:$0xff]
  %v2003 = vld [vmem:[%s9 + $0x510] sm:$0xff]
  %v2004 = vld [vmem:[%s9 + $0x518] sm:$0xff]
  %v2005 = vld [vmem:[%s9 + $0x520] sm:$0xff]
  %v2006 = vld [vmem:[%s9 + $0x528] sm:$0xff]
  %v2007 = vld [vmem:[%s9 + $0x530] sm:$0xff]
  %v2008 = vld [vmem:[%s9 + $0x538] sm:$0xff]
  %v2009 = vld [vmem:[%s9 + $0x540] sm:$0xff]
  %v2010 = vld [vmem:[%s9 + $0x548] sm:$0xff]
  %v2011 = vld [vmem:[%s9 + $0x550] sm:$0xff]
  %v2012 = vld [vmem:[%s9 + $0x558] sm:$0xff]
  %v2013 = vld [vmem:[%s9 + $0x560] sm:$0xff]
  %v2014 = vld [vmem:[%s9 + $0x568] sm:$0xff]
  %v2015 = vld [vmem:[%s9 + $0x570] sm:$0xff]
  %v2016 = vld [vmem:[%s9 + $0x578] sm:$0xff]
  %v2017 = vld [vmem:[%s9 + $0x580] sm:$0xff]
  %v2018 = vld [vmem:[%s9 + $0x588] sm:$0xff]
  %v2019 = vld [vmem:[%s9 + $0x590] sm:$0xff]
  %v2020 = vld [vmem:[%s9 + $0x598] sm:$0xff]
  %v2021 = vld [vmem:[%s9 + $0x5a0] sm:$0xff]
  %v2022 = vld [vmem:[%s9 + $0x5a8] sm:$0xff]
  %v2023 = vld [vmem:[%s9 + $0x5b0] sm:$0xff]
  %v2024 = vld [vmem:[%s9 + $0x5b8] sm:$0xff]
  %v2025 = vld [vmem:[%s9 + $0x5c0] sm:$0xff]
  %v2026 = vld [vmem:[%s9 + $0x5c8] sm:$0xff]
  %v2027 = vld [vmem:[%s9 + $0x5d0] sm:$0xff]
  %v2028 = vld [vmem:[%s9 + $0x5d8] sm:$0xff]
  %v2029 = vld [vmem:[%s9 + $0x5e0] sm:$0xff]
  %v2030 = vld [vmem:[%s9 + $0x5e8] sm:$0xff]
  %v2031 = vld [vmem:[%s9 + $0x5f0] sm:$0xff]
  %v2032 = vld [vmem:[%s9 + $0x5f8] sm:$0xff]
  %v2033 = vld [vmem:[%s9 + $0x600] sm:$0xff]
  %v2034 = vld [vmem:[%s9 + $0x608] sm:$0xff]
  %v2035 = vld [vmem:[%s9 + $0x610] sm:$0xff]
  %v2036 = vld [vmem:[%s9 + $0x618] sm:$0xff]
  %v2037 = vld [vmem:[%s9 + $0x620] sm:$0xff]
  %v2038 = vld [vmem:[%s9 + $0x628] sm:$0xff]
  %v2039 = vld [vmem:[%s9 + $0x630] sm:$0xff]
  %v2040 = vld [vmem:[%s9 + $0x638] sm:$0xff]
  %v2041 = vld [vmem:[%s9 + $0x640] sm:$0xff]
  %v2042 = vld [vmem:[%s9 + $0x648] sm:$0xff]
  %v2043 = vld [vmem:[%s9 + $0x650] sm:$0xff]
  %v2044 = vld [vmem:[%s9 + $0x658] sm:$0xff]
  %v2045 = vld [vmem:[%s9 + $0x660] sm:$0xff]
  %v2046 = vld [vmem:[%s9 + $0x668] sm:$0xff]
  %v2047 = vld [vmem:[%s9 + $0x670] sm:$0xff]
  %v2048 = vld [vmem:[%s9 + $0x678] sm:$0xff]
  %v2049 = vld [vmem:[%s9 + $0x680] sm:$0xff]
  %v2050 = vld [vmem:[%s9 + $0x688] sm:$0xff]
  %v2051 = vld [vmem:[%s9 + $0x690] sm:$0xff]
  %v2052 = vld [vmem:[%s9 + $0x698] sm:$0xff]
  %v2053 = vld [vmem:[%s9 + $0x6a0] sm:$0xff]
  %v2054 = vld [vmem:[%s9 + $0x6a8] sm:$0xff]
  %v2055 = vld [vmem:[%s9 + $0x6b0] sm:$0xff]
  %v2056 = vld [vmem:[%s9 + $0x6b8] sm:$0xff]
  %v2057 = vld [vmem:[%s9 + $0x6c0] sm:$0xff]
  %v2058 = vld [vmem:[%s9 + $0x6c8] sm:$0xff]
  %v2059 = vld [vmem:[%s9 + $0x6d0] sm:$0xff]
  %v2060 = vld [vmem:[%s9 + $0x6d8] sm:$0xff]
  %v2061 = vld [vmem:[%s9 + $0x6e0] sm:$0xff]
  %v2062 = vld [vmem:[%s9 + $0x6e8] sm:$0xff]
  %v2063 = vld [vmem:[%s9 + $0x6f0] sm:$0xff]
  %v2064 = vld [vmem:[%s9 + $0x6f8] sm:$0xff]
  %v2065 = vld [vmem:[%s9 + $0x700] sm:$0xff]
  %v2066 = vld [vmem:[%s9 + $0x708] sm:$0xff]
  %v2067 = vld [vmem:[%s9 + $0x710] sm:$0xff]
  %v2068 = vld [vmem:[%s9 + $0x718] sm:$0xff]
  %v2069 = vld [vmem:[%s9 + $0x720] sm:$0xff]
  %v2070 = vld [vmem:[%s9 + $0x728] sm:$0xff]
  %v2071 = vld [vmem:[%s9 + $0x730] sm:$0xff]
  %v2072 = vld [vmem:[%s9 + $0x738] sm:$0xff]
  %v2073 = vld [vmem:[%s9 + $0x740] sm:$0xff]
  %v2074 = vld [vmem:[%s9 + $0x748] sm:$0xff]
  %v2075 = vld [vmem:[%s9 + $0x750] sm:$0xff]
  %v2076 = vld [vmem:[%s9 + $0x758] sm:$0xff]
  %v2077 = vld [vmem:[%s9 + $0x760] sm:$0xff]
  %v2078 = vld [vmem:[%s9 + $0x768] sm:$0xff]
  %v2079 = vld [vmem:[%s9 + $0x770] sm:$0xff]
  %v2080 = vld [vmem:[%s9 + $0x778] sm:$0xff]
  %v2081 = vld [vmem:[%s9 + $0x780] sm:$0xff]
  %v2082 = vld [vmem:[%s9 + $0x788] sm:$0xff]
  %v2083 = vld [vmem:[%s9 + $0x790] sm:$0xff]
  %v2084 = vld [vmem:[%s9 + $0x798] sm:$0xff]
  %v2085 = vld [vmem:[%s9 + $0x7a0] sm:$0xff]
  %v2086 = vld [vmem:[%s9 + $0x7a8] sm:$0xff]
  %v2087 = vld [vmem:[%s9 + $0x7b0] sm:$0xff]
  %v2088 = vld [vmem:[%s9 + $0x7b8] sm:$0xff]
  %v2089 = vld [vmem:[%s9 + $0x7c0] sm:$0xff]
  %v2090 = vld [vmem:[%s9 + $0x7c8] sm:$0xff]
  %v2091 = vld [vmem:[%s9 + $0x7d0] sm:$0xff]
  %v2092 = vld [vmem:[%s9 + $0x7d8] sm:$0xff]
  %v2093 = vld [vmem:[%s9 + $0x7e0] sm:$0xff]
  %v2094 = vld [vmem:[%s9 + $0x7e8] sm:$0xff]
  %v2095 = vld [vmem:[%s9 + $0x7f0] sm:$0xff]
  %v2096 = vld [vmem:[%s9 + $0x7f8] sm:$0xff]
  %v2097 = vld [vmem:[%s9 + $0x800] sm:$0xff]
  %v2098 = vld [vmem:[%s9 + $0x808] sm:$0xff]
  %v2099 = vld [vmem:[%s9 + $0x810] sm:$0xff]
  %v2100 = vld [vmem:[%s9 + $0x818] sm:$0xff]
  %v2101 = vld [vmem:[%s9 + $0x820] sm:$0xff]
  %v2102 = vld [vmem:[%s9 + $0x828] sm:$0xff]
  %v2103 = vld [vmem:[%s9 + $0x830] sm:$0xff]
  %v2104 = vld [vmem:[%s9 + $0x838] sm:$0xff]
  %v2105 = vld [vmem:[%s9 + $0x840] sm:$0xff]
  %v2106 = vld [vmem:[%s9 + $0x848] sm:$0xff]
  %v2107 = vld [vmem:[%s9 + $0x850] sm:$0xff]
  %v2108 = vld [vmem:[%s9 + $0x858] sm:$0xff]
  %v2109 = vld [vmem:[%s9 + $0x860] sm:$0xff]
  %v2110 = vld [vmem:[%s9 + $0x868] sm:$0xff]
  %v2111 = vld [vmem:[%s9 + $0x870] sm:$0xff]
  %v2112 = vld [vmem:[%s9 + $0x878] sm:$0xff]
  %v2113 = vld [vmem:[%s9 + $0x880] sm:$0xff]
  %v2114 = vld [vmem:[%s9 + $0x888] sm:$0xff]
  %v2115 = vld [vmem:[%s9 + $0x890] sm:$0xff]
  %v2116 = vld [vmem:[%s9 + $0x898] sm:$0xff]
  %v2117 = vld [vmem:[%s9 + $0x8a0] sm:$0xff]
  %v2118 = vld [vmem:[%s9 + $0x8a8] sm:$0xff]
  %v2119 = vld [vmem:[%s9 + $0x8b0] sm:$0xff]
  %v2120 = vld [vmem:[%s9 + $0x8b8] sm:$0x3f]
  %v2121 = vld [vmem:[%s9 + $0x8c0] sm:$0x3f]
  %v2122 = vld [vmem:[%s9 + $0x8c8] sm:$0x3f]
  %v2123 = vld [vmem:[%s10] sm:$0x7]
  %v2125 = vperm.slane %v2123, 0
  %v2126 = vperm.slane %v2123, 1
  %v2127 = vperm.slane %v2123, 2
  %vm2131 = vcmask 900096
  %v2133 = vsel %vm2131, %v1839, 0
  %vm2135 = vcmask 1045504
  %v2137 = vsel %vm2135, %v2120, 0
  %v2140 = vsel %vm2135, %v2121, 0
  %v2143 = vsel %vm2135, %v2122, 0
  %2145 = vmatpush.msra.mxu0 %v1886
  %2146 = vmatpush.msra.mxu0 %v1883
  %2147 = vmatpush.msra.mxu0 %v1880
  %2148 = vmatpush.msra.mxu0 %v1877
  %2149 = vmatpush.msra.mxu0 %v1874
  %2150 = vmatpush.msra.mxu0 %v1871
  %2151 = vmatpush.msra.mxu0 %v1868
  %2152 = vmatpush.msra.mxu0 %v1865
  %2153 = vmatpush.msra.mxu0 %v1862
  %2154 = vmatpush.msra.mxu0 %v1859
  %2155 = vmatpush.msra.mxu0 %v1856
  %2156 = vmatpush.msra.mxu0 %v1853
  %2157 = vmatpush.msra.mxu0 %v1850
  %2158 = vmatpush.msra.mxu0 %v1847
  %2159 = vmatpush.msra.mxu0 %v1844
  %2160 = vmatpush.msra.mxu0 %v1841
  %2161 = vmatmul.f32.gmra.mxu0 %v1539
  %v2162 = vpop.f32.mrf.mxu0
  %v2163 = vadd.f32 %v2125, %v2162
  %2164 = vdwg.mxu0
  %2165 = vmatpush.msra.mxu0 %v1934
  %2166 = vmatpush.msra.mxu0 %v1931
  %2167 = vmatpush.msra.mxu0 %v1928
  %2168 = vmatpush.msra.mxu0 %v1925
  %2169 = vmatpush.msra.mxu0 %v1922
  %2170 = vmatpush.msra.mxu0 %v1919
  %2171 = vmatpush.msra.mxu0 %v1916
  %2172 = vmatpush.msra.mxu0 %v1913
  %2173 = vmatpush.msra.mxu0 %v1910
  %2174 = vmatpush.msra.mxu0 %v1907
  %2175 = vmatpush.msra.mxu0 %v1904
  %2176 = vmatpush.msra.mxu0 %v1901
  %2177 = vmatpush.msra.mxu0 %v1898
  %2178 = vmatpush.msra.mxu0 %v1895
  %2179 = vmatpush.msra.mxu0 %v1892
  %2180 = vmatpush.msra.mxu0 %v1889
  %2181 = vmatmul.f32.gmra.mxu0 %v1599
  %v2182 = vpop.f32.mrf.mxu0
  %v2183 = vadd.f32 %v2163, %v2182
  %2184 = vdwg.mxu0
  %2185 = vmatpush.msra.mxu0 %v1982
  %2186 = vmatpush.msra.mxu0 %v1979
  %2187 = vmatpush.msra.mxu0 %v1976
  %2188 = vmatpush.msra.mxu0 %v1973
  %2189 = vmatpush.msra.mxu0 %v1970
  %2190 = vmatpush.msra.mxu0 %v1967
  %2191 = vmatpush.msra.mxu0 %v1964
  %2192 = vmatpush.msra.mxu0 %v1961
  %2193 = vmatpush.msra.mxu0 %v1958
  %2194 = vmatpush.msra.mxu0 %v1955
  %2195 = vmatpush.msra.mxu0 %v1952
  %2196 = vmatpush.msra.mxu0 %v1949
  %2197 = vmatpush.msra.mxu0 %v1946
  %2198 = vmatpush.msra.mxu0 %v1943
  %2199 = vmatpush.msra.mxu0 %v1940
  %2200 = vmatpush.msra.mxu0 %v1937
  %2201 = vmatmul.f32.gmra.mxu0 %v1659
  %v2202 = vpop.f32.mrf.mxu0
  %v2203 = vadd.f32 %v2183, %v2202
  %2204 = vdwg.mxu0
  %2205 = vmatpush.msra.mxu0 %v2030
  %2206 = vmatpush.msra.mxu0 %v2027
  %2207 = vmatpush.msra.mxu0 %v2024
  %2208 = vmatpush.msra.mxu0 %v2021
  %2209 = vmatpush.msra.mxu0 %v2018
  %2210 = vmatpush.msra.mxu0 %v2015
  %2211 = vmatpush.msra.mxu0 %v2012
  %2212 = vmatpush.msra.mxu0 %v2009
  %2213 = vmatpush.msra.mxu0 %v2006
  %2214 = vmatpush.msra.mxu0 %v2003
  %2215 = vmatpush.msra.mxu0 %v2000
  %2216 = vmatpush.msra.mxu0 %v1997
  %2217 = vmatpush.msra.mxu0 %v1994
  %2218 = vmatpush.msra.mxu0 %v1991
  %2219 = vmatpush.msra.mxu0 %v1988
  %2220 = vmatpush.msra.mxu0 %v1985
  %2221 = vmatmul.f32.gmra.mxu0 %v1719
  %v2222 = vpop.f32.mrf.mxu0
  %v2223 = vadd.f32 %v2203, %v2222
  %2224 = vdwg.mxu0
  %2225 = vmatpush.msra.mxu0 %v2078
  %2226 = vmatpush.msra.mxu0 %v2075
  %2227 = vmatpush.msra.mxu0 %v2072
  %2228 = vmatpush.msra.mxu0 %v2069
  %2229 = vmatpush.msra.mxu0 %v2066
  %2230 = vmatpush.msra.mxu0 %v2063
  %2231 = vmatpush.msra.mxu0 %v2060
  %2232 = vmatpush.msra.mxu0 %v2057
  %2233 = vmatpush.msra.mxu0 %v2054
  %2234 = vmatpush.msra.mxu0 %v2051
  %2235 = vmatpush.msra.mxu0 %v2048
  %2236 = vmatpush.msra.mxu0 %v2045
  %2237 = vmatpush.msra.mxu0 %v2042
  %2238 = vmatpush.msra.mxu0 %v2039
  %2239 = vmatpush.msra.mxu0 %v2036
  %2240 = vmatpush.msra.mxu0 %v2033
  %2241 = vmatmul.f32.gmra.mxu0 %v1779
  %v2242 = vpop.f32.mrf.mxu0
  %v2243 = vadd.f32 %v2223, %v2242
  %2244 = vdwg.mxu0
  %2245 = vmatpush.msra.mxu0 0.0
  %2246 = vmatpush.msra.mxu0 0.0
  %2247 = vmatpush.msra.mxu0 %v2137
  %2248 = vmatpush.msra.mxu0 %v2117
  %2249 = vmatpush.msra.mxu0 %v2114
  %2250 = vmatpush.msra.mxu0 %v2111
  %2251 = vmatpush.msra.mxu0 %v2108
  %2252 = vmatpush.msra.mxu0 %v2105
  %2253 = vmatpush.msra.mxu0 %v2102
  %2254 = vmatpush.msra.mxu0 %v2099
  %2255 = vmatpush.msra.mxu0 %v2096
  %2256 = vmatpush.msra.mxu0 %v2093
  %2257 = vmatpush.msra.mxu0 %v2090
  %2258 = vmatpush.msra.mxu0 %v2087
  %2259 = vmatpush.msra.mxu0 %v2084
  %2260 = vmatpush.msra.mxu0 %v2081
  %2261 = vmatmul.f32.gmra.mxu0 %v2133
  %v2262 = vpop.f32.mrf.mxu0
  %v2263 = vadd.f32 %v2243, %v2262
  %2264 = vdwg.mxu0
  %2265 = vmatpush.msra.mxu0 %v1887
  %2266 = vmatpush.msra.mxu0 %v1884
  %2267 = vmatpush.msra.mxu0 %v1881
  %2268 = vmatpush.msra.mxu0 %v1878
  %2269 = vmatpush.msra.mxu0 %v1875
  %2270 = vmatpush.msra.mxu0 %v1872
  %2271 = vmatpush.msra.mxu0 %v1869
  %2272 = vmatpush.msra.mxu0 %v1866
  %2273 = vmatpush.msra.mxu0 %v1863
  %2274 = vmatpush.msra.mxu0 %v1860
  %2275 = vmatpush.msra.mxu0 %v1857
  %2276 = vmatpush.msra.mxu0 %v1854
  %2277 = vmatpush.msra.mxu0 %v1851
  %2278 = vmatpush.msra.mxu0 %v1848
  %2279 = vmatpush.msra.mxu0 %v1845
  %2280 = vmatpush.msra.mxu0 %v1842
  %2281 = vmatmul.f32.gmra.mxu0 %v1539
  %v2282 = vpop.f32.mrf.mxu0
  %v2283 = vadd.f32 %v2126, %v2282
  %2284 = vdwg.mxu0
  %2285 = vmatpush.msra.mxu0 %v1935
  %2286 = vmatpush.msra.mxu0 %v1932
  %2287 = vmatpush.msra.mxu0 %v1929
  %2288 = vmatpush.msra.mxu0 %v1926
  %2289 = vmatpush.msra.mxu0 %v1923
  %2290 = vmatpush.msra.mxu0 %v1920
  %2291 = vmatpush.msra.mxu0 %v1917
  %2292 = vmatpush.msra.mxu0 %v1914
  %2293 = vmatpush.msra.mxu0 %v1911
  %2294 = vmatpush.msra.mxu0 %v1908
  %2295 = vmatpush.msra.mxu0 %v1905
  %2296 = vmatpush.msra.mxu0 %v1902
  %2297 = vmatpush.msra.mxu0 %v1899
  %2298 = vmatpush.msra.mxu0 %v1896
  %2299 = vmatpush.msra.mxu0 %v1893
  %2300 = vmatpush.msra.mxu0 %v1890
  %2301 = vmatmul.f32.gmra.mxu0 %v1599
  %v2302 = vpop.f32.mrf.mxu0
  %v2303 = vadd.f32 %v2283, %v2302
  %2304 = vdwg.mxu0
  %2305 = vmatpush.msra.mxu0 %v1983
  %2306 = vmatpush.msra.mxu0 %v1980
  %2307 = vmatpush.msra.mxu0 %v1977
  %2308 = vmatpush.msra.mxu0 %v1974
  %2309 = vmatpush.msra.mxu0 %v1971
  %2310 = vmatpush.msra.mxu0 %v1968
  %2311 = vmatpush.msra.mxu0 %v1965
  %2312 = vmatpush.msra.mxu0 %v1962
  %2313 = vmatpush.msra.mxu0 %v1959
  %2314 = vmatpush.msra.mxu0 %v1956
  %2315 = vmatpush.msra.mxu0 %v1953
  %2316 = vmatpush.msra.mxu0 %v1950
  %2317 = vmatpush.msra.mxu0 %v1947
  %2318 = vmatpush.msra.mxu0 %v1944
  %2319 = vmatpush.msra.mxu0 %v1941
  %2320 = vmatpush.msra.mxu0 %v1938
  %2321 = vmatmul.f32.gmra.mxu0 %v1659
  %v2322 = vpop.f32.mrf.mxu0
  %v2323 = vadd.f32 %v2303, %v2322
  %2324 = vdwg.mxu0
  %2325 = vmatpush.msra.mxu0 %v2031
  %2326 = vmatpush.msra.mxu0 %v2028
  %2327 = vmatpush.msra.mxu0 %v2025
  %2328 = vmatpush.msra.mxu0 %v2022
  %2329 = vmatpush.msra.mxu0 %v2019
  %2330 = vmatpush.msra.mxu0 %v2016
  %2331 = vmatpush.msra.mxu0 %v2013
  %2332 = vmatpush.msra.mxu0 %v2010
  %2333 = vmatpush.msra.mxu0 %v2007
  %2334 = vmatpush.msra.mxu0 %v2004
  %2335 = vmatpush.msra.mxu0 %v2001
  %2336 = vmatpush.msra.mxu0 %v1998
  %2337 = vmatpush.msra.mxu0 %v1995
  %2338 = vmatpush.msra.mxu0 %v1992
  %2339 = vmatpush.msra.mxu0 %v1989
  %2340 = vmatpush.msra.mxu0 %v1986
  %2341 = vmatmul.f32.gmra.mxu0 %v1719
  %v2342 = vpop.f32.mrf.mxu0
  %v2343 = vadd.f32 %v2323, %v2342
  %2344 = vdwg.mxu0
  %2345 = vmatpush.msra.mxu0 %v2079
  %2346 = vmatpush.msra.mxu0 %v2076
  %2347 = vmatpush.msra.mxu0 %v2073
  %2348 = vmatpush.msra.mxu0 %v2070
  %2349 = vmatpush.msra.mxu0 %v2067
  %2350 = vmatpush.msra.mxu0 %v2064
  %2351 = vmatpush.msra.mxu0 %v2061
  %2352 = vmatpush.msra.mxu0 %v2058
  %2353 = vmatpush.msra.mxu0 %v2055
  %2354 = vmatpush.msra.mxu0 %v2052
  %2355 = vmatpush.msra.mxu0 %v2049
  %2356 = vmatpush.msra.mxu0 %v2046
  %2357 = vmatpush.msra.mxu0 %v2043
  %2358 = vmatpush.msra.mxu0 %v2040
  %2359 = vmatpush.msra.mxu0 %v2037
  %2360 = vmatpush.msra.mxu0 %v2034
  %2361 = vmatmul.f32.gmra.mxu0 %v1779
  %v2362 = vpop.f32.mrf.mxu0
  %v2363 = vadd.f32 %v2343, %v2362
  %2364 = vdwg.mxu0
  %2365 = vmatpush.msra.mxu0 0.0
  %2366 = vmatpush.msra.mxu0 0.0
  %2367 = vmatpush.msra.mxu0 %v2140
  %2368 = vmatpush.msra.mxu0 %v2118
  %2369 = vmatpush.msra.mxu0 %v2115
  %2370 = vmatpush.msra.mxu0 %v2112
  %2371 = vmatpush.msra.mxu0 %v2109
  %2372 = vmatpush.msra.mxu0 %v2106
  %2373 = vmatpush.msra.mxu0 %v2103
  %2374 = vmatpush.msra.mxu0 %v2100
  %2375 = vmatpush.msra.mxu0 %v2097
  %2376 = vmatpush.msra.mxu0 %v2094
  %2377 = vmatpush.msra.mxu0 %v2091
  %2378 = vmatpush.msra.mxu0 %v2088
  %2379 = vmatpush.msra.mxu0 %v2085
  %2380 = vmatpush.msra.mxu0 %v2082
  %2381 = vmatmul.f32.gmra.mxu0 %v2133
  %v2382 = vpop.f32.mrf.mxu0
  %v2383 = vadd.f32 %v2363, %v2382
  %2384 = vdwg.mxu0
  %2385 = vmatpush.msra.mxu0 %v1888
  %2386 = vmatpush.msra.mxu0 %v1885
  %2387 = vmatpush.msra.mxu0 %v1882
  %2388 = vmatpush.msra.mxu0 %v1879
  %2389 = vmatpush.msra.mxu0 %v1876
  %2390 = vmatpush.msra.mxu0 %v1873
  %2391 = vmatpush.msra.mxu0 %v1870
  %2392 = vmatpush.msra.mxu0 %v1867
  %2393 = vmatpush.msra.mxu0 %v1864
  %2394 = vmatpush.msra.mxu0 %v1861
  %2395 = vmatpush.msra.mxu0 %v1858
  %2396 = vmatpush.msra.mxu0 %v1855
  %2397 = vmatpush.msra.mxu0 %v1852
  %2398 = vmatpush.msra.mxu0 %v1849
  %2399 = vmatpush.msra.mxu0 %v1846
  %2400 = vmatpush.msra.mxu0 %v1843
  %2401 = vmatmul.f32.gmra.mxu0 %v1539
  %v2402 = vpop.f32.mrf.mxu0
  %v2403 = vadd.f32 %v2127, %v2402
  %2404 = vdwg.mxu0
  %2405 = vmatpush.msra.mxu0 %v1936
  %2406 = vmatpush.msra.mxu0 %v1933
  %2407 = vmatpush.msra.mxu0 %v1930
  %2408 = vmatpush.msra.mxu0 %v1927
  %2409 = vmatpush.msra.mxu0 %v1924
  %2410 = vmatpush.msra.mxu0 %v1921
  %2411 = vmatpush.msra.mxu0 %v1918
  %2412 = vmatpush.msra.mxu0 %v1915
  %2413 = vmatpush.msra.mxu0 %v1912
  %2414 = vmatpush.msra.mxu0 %v1909
  %2415 = vmatpush.msra.mxu0 %v1906
  %2416 = vmatpush.msra.mxu0 %v1903
  %2417 = vmatpush.msra.mxu0 %v1900
  %2418 = vmatpush.msra.mxu0 %v1897
  %2419 = vmatpush.msra.mxu0 %v1894
  %2420 = vmatpush.msra.mxu0 %v1891
  %2421 = vmatmul.f32.gmra.mxu0 %v1599
  %v2422 = vpop.f32.mrf.mxu0
  %v2423 = vadd.f32 %v2403, %v2422
  %2424 = vdwg.mxu0
  %2425 = vmatpush.msra.mxu0 %v1984
  %2426 = vmatpush.msra.mxu0 %v1981
  %2427 = vmatpush.msra.mxu0 %v1978
  %2428 = vmatpush.msra.mxu0 %v1975
  %2429 = vmatpush.msra.mxu0 %v1972
  %2430 = vmatpush.msra.mxu0 %v1969
  %2431 = vmatpush.msra.mxu0 %v1966
  %2432 = vmatpush.msra.mxu0 %v1963
  %2433 = vmatpush.msra.mxu0 %v1960
  %2434 = vmatpush.msra.mxu0 %v1957
  %2435 = vmatpush.msra.mxu0 %v1954
  %2436 = vmatpush.msra.mxu0 %v1951
  %2437 = vmatpush.msra.mxu0 %v1948
  %2438 = vmatpush.msra.mxu0 %v1945
  %2439 = vmatpush.msra.mxu0 %v1942
  %2440 = vmatpush.msra.mxu0 %v1939
  %2441 = vmatmul.f32.gmra.mxu0 %v1659
  %v2442 = vpop.f32.mrf.mxu0
  %v2443 = vadd.f32 %v2423, %v2442
  %2444 = vdwg.mxu0
  %2445 = vmatpush.msra.mxu0 %v2032
  %2446 = vmatpush.msra.mxu0 %v2029
  %2447 = vmatpush.msra.mxu0 %v2026
  %2448 = vmatpush.msra.mxu0 %v2023
  %2449 = vmatpush.msra.mxu0 %v2020
  %2450 = vmatpush.msra.mxu0 %v2017
  %2451 = vmatpush.msra.mxu0 %v2014
  %2452 = vmatpush.msra.mxu0 %v2011
  %2453 = vmatpush.msra.mxu0 %v2008
  %2454 = vmatpush.msra.mxu0 %v2005
  %2455 = vmatpush.msra.mxu0 %v2002
  %2456 = vmatpush.msra.mxu0 %v1999
  %2457 = vmatpush.msra.mxu0 %v1996
  %2458 = vmatpush.msra.mxu0 %v1993
  %2459 = vmatpush.msra.mxu0 %v1990
  %2460 = vmatpush.msra.mxu0 %v1987
  %2461 = vmatmul.f32.gmra.mxu0 %v1719
  %v2462 = vpop.f32.mrf.mxu0
  %v2463 = vadd.f32 %v2443, %v2462
  %2464 = vdwg.mxu0
  %2465 = vmatpush.msra.mxu0 %v2080
  %2466 = vmatpush.msra.mxu0 %v2077
  %2467 = vmatpush.msra.mxu0 %v2074
  %2468 = vmatpush.msra.mxu0 %v2071
  %2469 = vmatpush.msra.mxu0 %v2068
  %2470 = vmatpush.msra.mxu0 %v2065
  %2471 = vmatpush.msra.mxu0 %v2062
  %2472 = vmatpush.msra.mxu0 %v2059
  %2473 = vmatpush.msra.mxu0 %v2056
  %2474 = vmatpush.msra.mxu0 %v2053
  %2475 = vmatpush.msra.mxu0 %v2050
  %2476 = vmatpush.msra.mxu0 %v2047
  %2477 = vmatpush.msra.mxu0 %v2044
  %2478 = vmatpush.msra.mxu0 %v2041
  %2479 = vmatpush.msra.mxu0 %v2038
  %2480 = vmatpush.msra.mxu0 %v2035
  %2481 = vmatmul.f32.gmra.mxu0 %v1779
  %v2482 = vpop.f32.mrf.mxu0
  %v2483 = vadd.f32 %v2463, %v2482
  %2484 = vdwg.mxu0
  %2485 = vmatpush.msra.mxu0 0.0
  %2486 = vmatpush.msra.mxu0 0.0
  %2487 = vmatpush.msra.mxu0 %v2143
  %2488 = vmatpush.msra.mxu0 %v2119
  %2489 = vmatpush.msra.mxu0 %v2116
  %2490 = vmatpush.msra.mxu0 %v2113
  %2491 = vmatpush.msra.mxu0 %v2110
  %2492 = vmatpush.msra.mxu0 %v2107
  %2493 = vmatpush.msra.mxu0 %v2104
  %2494 = vmatpush.msra.mxu0 %v2101
  %2495 = vmatpush.msra.mxu0 %v2098
  %2496 = vmatpush.msra.mxu0 %v2095
  %2497 = vmatpush.msra.mxu0 %v2092
  %2498 = vmatpush.msra.mxu0 %v2089
  %2499 = vmatpush.msra.mxu0 %v2086
  %2500 = vmatpush.msra.mxu0 %v2083
  %2501 = vmatmul.f32.gmra.mxu0 %v2133
  %v2502 = vpop.f32.mrf.mxu0
  %v2503 = vadd.f32 %v2483, %v2502
  %2504 = vdwg.mxu0
  %v2505 = vmax.f32 %v2263, 0.0
  %v2506 = vmax.f32 %v2383, 0.0
  %v2507 = vmax.f32 %v2503, 0.0
  %v2508 = vld [vmem:[%s11] sm:$0xff]
  %v2509 = vld [vmem:[%s11 + $0x8] sm:$0xff]
  %v2510 = vld [vmem:[%s11 + $0x10] sm:$0xff]
  %v2511 = vld [vmem:[%s11 + $0x18] sm:$0xff]
  %v2512 = vld [vmem:[%s11 + $0x20] sm:$0xff]
  %v2513 = vld [vmem:[%s11 + $0x28] sm:$0xff]
  %v2514 = vld [vmem:[%s11 + $0x30] sm:$0xff]
  %v2515 = vld [vmem:[%s11 + $0x38] sm:$0xff]
  %v2516 = vld [vmem:[%s11 + $0x40] sm:$0xff]
  %v2517 = vld [vmem:[%s11 + $0x48] sm:$0xff]
  %v2518 = vld [vmem:[%s11 + $0x50] sm:$0xff]
  %v2519 = vld [vmem:[%s11 + $0x58] sm:$0xff]
  %v2520 = vld [vmem:[%s11 + $0x60] sm:$0xff]
  %v2521 = vld [vmem:[%s11 + $0x68] sm:$0xff]
  %v2522 = vld [vmem:[%s11 + $0x70] sm:$0xff]
  %v2523 = vld [vmem:[%s11 + $0x78] sm:$0xff]
  %v2524 = vld [vmem:[%s11 + $0x80] sm:$0xff]
  %v2525 = vld [vmem:[%s11 + $0x88] sm:$0xff]
  %v2526 = vld [vmem:[%s11 + $0x90] sm:$0xff]
  %v2527 = vld [vmem:[%s11 + $0x98] sm:$0xff]
  %v2528 = vld [vmem:[%s11 + $0xa0] sm:$0xff]
  %v2529 = vld [vmem:[%s11 + $0xa8] sm:$0xff]
  %v2530 = vld [vmem:[%s11 + $0xb0] sm:$0xff]
  %v2531 = vld [vmem:[%s11 + $0xb8] sm:$0xff]
  %v2532 = vld [vmem:[%s11 + $0xc0] sm:$0xff]
  %v2533 = vld [vmem:[%s11 + $0xc8] sm:$0xff]
  %v2534 = vld [vmem:[%s11 + $0xd0] sm:$0xff]
  %v2535 = vld [vmem:[%s11 + $0xd8] sm:$0xff]
  %v2536 = vld [vmem:[%s11 + $0xe0] sm:$0xff]
  %v2537 = vld [vmem:[%s11 + $0xe8] sm:$0xff]
  %v2538 = vld [vmem:[%s11 + $0xf0] sm:$0xff]
  %v2539 = vld [vmem:[%s11 + $0xf8] sm:$0xff]
  %v2540 = vld [vmem:[%s11 + $0x100] sm:$0xff]
  %v2541 = vld [vmem:[%s11 + $0x108] sm:$0xff]
  %v2542 = vld [vmem:[%s11 + $0x110] sm:$0xff]
  %v2543 = vld [vmem:[%s11 + $0x118] sm:$0xff]
  %v2544 = vld [vmem:[%s11 + $0x120] sm:$0xff]
  %v2545 = vld [vmem:[%s11 + $0x128] sm:$0xff]
  %v2546 = vld [vmem:[%s11 + $0x130] sm:$0xff]
  %v2547 = vld [vmem:[%s11 + $0x138] sm:$0xff]
  %v2548 = vld [vmem:[%s11 + $0x140] sm:$0xff]
  %v2549 = vld [vmem:[%s11 + $0x148] sm:$0xff]
  %v2550 = vld [vmem:[%s11 + $0x150] sm:$0xff]
  %v2551 = vld [vmem:[%s11 + $0x158] sm:$0xff]
  %v2552 = vld [vmem:[%s11 + $0x160] sm:$0xff]
  %v2553 = vld [vmem:[%s11 + $0x168] sm:$0xff]
  %v2554 = vld [vmem:[%s11 + $0x170] sm:$0xff]
  %v2555 = vld [vmem:[%s11 + $0x178] sm:$0xff]
  %v2556 = vld [vmem:[%s11 + $0x180] sm:$0xff]
  %v2557 = vld [vmem:[%s11 + $0x188] sm:$0xff]
  %v2558 = vld [vmem:[%s11 + $0x190] sm:$0xff]
  %v2559 = vld [vmem:[%s11 + $0x198] sm:$0xff]
  %v2560 = vld [vmem:[%s11 + $0x1a0] sm:$0xff]
  %v2561 = vld [vmem:[%s11 + $0x1a8] sm:$0xff]
  %v2562 = vld [vmem:[%s11 + $0x1b0] sm:$0xff]
  %v2563 = vld [vmem:[%s11 + $0x1b8] sm:$0xff]
  %v2564 = vld [vmem:[%s11 + $0x1c0] sm:$0xff]
  %v2565 = vld [vmem:[%s11 + $0x1c8] sm:$0xff]
  %v2566 = vld [vmem:[%s11 + $0x1d0] sm:$0xff]
  %v2567 = vld [vmem:[%s11 + $0x1d8] sm:$0xff]
  %v2568 = vld [vmem:[%s11 + $0x1e0] sm:$0xff]
  %v2569 = vld [vmem:[%s11 + $0x1e8] sm:$0xff]
  %v2570 = vld [vmem:[%s11 + $0x1f0] sm:$0xff]
  %v2571 = vld [vmem:[%s11 + $0x1f8] sm:$0xff]
  %v2572 = vld [vmem:[%s11 + $0x200] sm:$0xff]
  %v2573 = vld [vmem:[%s11 + $0x208] sm:$0xff]
  %v2574 = vld [vmem:[%s11 + $0x210] sm:$0xff]
  %v2575 = vld [vmem:[%s11 + $0x218] sm:$0xff]
  %v2576 = vld [vmem:[%s11 + $0x220] sm:$0xff]
  %v2577 = vld [vmem:[%s11 + $0x228] sm:$0xff]
  %v2578 = vld [vmem:[%s11 + $0x230] sm:$0xff]
  %v2579 = vld [vmem:[%s11 + $0x238] sm:$0xff]
  %v2580 = vld [vmem:[%s11 + $0x240] sm:$0xff]
  %v2581 = vld [vmem:[%s11 + $0x248] sm:$0xff]
  %v2582 = vld [vmem:[%s11 + $0x250] sm:$0xff]
  %v2583 = vld [vmem:[%s11 + $0x258] sm:$0xff]
  %v2584 = vld [vmem:[%s11 + $0x260] sm:$0xff]
  %v2585 = vld [vmem:[%s11 + $0x268] sm:$0xff]
  %v2586 = vld [vmem:[%s11 + $0x270] sm:$0xff]
  %v2587 = vld [vmem:[%s11 + $0x278] sm:$0xff]
  %v2588 = vld [vmem:[%s11 + $0x280] sm:$0xff]
  %v2589 = vld [vmem:[%s11 + $0x288] sm:$0xff]
  %v2590 = vld [vmem:[%s11 + $0x290] sm:$0xff]
  %v2591 = vld [vmem:[%s11 + $0x298] sm:$0xff]
  %v2592 = vld [vmem:[%s11 + $0x2a0] sm:$0xff]
  %v2593 = vld [vmem:[%s11 + $0x2a8] sm:$0xff]
  %v2594 = vld [vmem:[%s11 + $0x2b0] sm:$0xff]
  %v2595 = vld [vmem:[%s11 + $0x2b8] sm:$0xff]
  %v2596 = vld [vmem:[%s11 + $0x2c0] sm:$0xff]
  %v2597 = vld [vmem:[%s11 + $0x2c8] sm:$0xff]
  %v2598 = vld [vmem:[%s11 + $0x2d0] sm:$0xff]
  %v2599 = vld [vmem:[%s11 + $0x2d8] sm:$0xff]
  %v2600 = vld [vmem:[%s11 + $0x2e0] sm:$0x7f]
  %v2601 = vld [vmem:[%s11 + $0x2e8] sm:$0x7f]
  %v2602 = vld [vmem:[%s12] sm:$0x3]
  %v2604 = vperm.slane %v2602, 0
  %v2605 = vperm.slane %v2602, 1
  %v2609 = vsel %vm211, %v2507, 0
  %v2612 = vsel %vm215, %v2600, 0
  %v2615 = vsel %vm215, %v2601, 0
  %2617 = vmatpush.msra.mxu0 %v2538
  %2618 = vmatpush.msra.mxu0 %v2536
  %2619 = vmatpush.msra.mxu0 %v2534
  %2620 = vmatpush.msra.mxu0 %v2532
  %2621 = vmatpush.msra.mxu0 %v2530
  %2622 = vmatpush.msra.mxu0 %v2528
  %2623 = vmatpush.msra.mxu0 %v2526
  %2624 = vmatpush.msra.mxu0 %v2524
  %2625 = vmatpush.msra.mxu0 %v2522
  %2626 = vmatpush.msra.mxu0 %v2520
  %2627 = vmatpush.msra.mxu0 %v2518
  %2628 = vmatpush.msra.mxu0 %v2516
  %2629 = vmatpush.msra.mxu0 %v2514
  %2630 = vmatpush.msra.mxu0 %v2512
  %2631 = vmatpush.msra.mxu0 %v2510
  %2632 = vmatpush.msra.mxu0 %v2508
  %2633 = vmatmul.f32.gmra.mxu0 %v2505
  %v2634 = vpop.f32.mrf.mxu0
  %v2635 = vadd.f32 %v2604, %v2634
  %2636 = vdwg.mxu0
  %2637 = vmatpush.msra.mxu0 %v2570
  %2638 = vmatpush.msra.mxu0 %v2568
  %2639 = vmatpush.msra.mxu0 %v2566
  %2640 = vmatpush.msra.mxu0 %v2564
  %2641 = vmatpush.msra.mxu0 %v2562
  %2642 = vmatpush.msra.mxu0 %v2560
  %2643 = vmatpush.msra.mxu0 %v2558
  %2644 = vmatpush.msra.mxu0 %v2556
  %2645 = vmatpush.msra.mxu0 %v2554
  %2646 = vmatpush.msra.mxu0 %v2552
  %2647 = vmatpush.msra.mxu0 %v2550
  %2648 = vmatpush.msra.mxu0 %v2548
  %2649 = vmatpush.msra.mxu0 %v2546
  %2650 = vmatpush.msra.mxu0 %v2544
  %2651 = vmatpush.msra.mxu0 %v2542
  %2652 = vmatpush.msra.mxu0 %v2540
  %2653 = vmatmul.f32.gmra.mxu0 %v2506
  %v2654 = vpop.f32.mrf.mxu0
  %v2655 = vadd.f32 %v2635, %v2654
  %2656 = vdwg.mxu0
  %2657 = vmatpush.msra.mxu0 0.0
  %2658 = vmatpush.msra.mxu0 %v2612
  %2659 = vmatpush.msra.mxu0 %v2598
  %2660 = vmatpush.msra.mxu0 %v2596
  %2661 = vmatpush.msra.mxu0 %v2594
  %2662 = vmatpush.msra.mxu0 %v2592
  %2663 = vmatpush.msra.mxu0 %v2590
  %2664 = vmatpush.msra.mxu0 %v2588
  %2665 = vmatpush.msra.mxu0 %v2586
  %2666 = vmatpush.msra.mxu0 %v2584
  %2667 = vmatpush.msra.mxu0 %v2582
  %2668 = vmatpush.msra.mxu0 %v2580
  %2669 = vmatpush.msra.mxu0 %v2578
  %2670 = vmatpush.msra.mxu0 %v2576
  %2671 = vmatpush.msra.mxu0 %v2574
  %2672 = vmatpush.msra.mxu0 %v2572
  %2673 = vmatmul.f32.gmra.mxu0 %v2609
  %v2674 = vpop.f32.mrf.mxu0
  %v2675 = vadd.f32 %v2655, %v2674
  %2676 = vdwg.mxu0
  %2677 = vmatpush.msra.mxu0 %v2539
  %2678 = vmatpush.msra.mxu0 %v2537
  %2679 = vmatpush.msra.mxu0 %v2535
  %2680 = vmatpush.msra.mxu0 %v2533
  %2681 = vmatpush.msra.mxu0 %v2531
  %2682 = vmatpush.msra.mxu0 %v2529
  %2683 = vmatpush.msra.mxu0 %v2527
  %2684 = vmatpush.msra.mxu0 %v2525
  %2685 = vmatpush.msra.mxu0 %v2523
  %2686 = vmatpush.msra.mxu0 %v2521
  %2687 = vmatpush.msra.mxu0 %v2519
  %2688 = vmatpush.msra.mxu0 %v2517
  %2689 = vmatpush.msra.mxu0 %v2515
  %2690 = vmatpush.msra.mxu0 %v2513
  %2691 = vmatpush.msra.mxu0 %v2511
  %2692 = vmatpush.msra.mxu0 %v2509
  %2693 = vmatmul.f32.gmra.mxu0 %v2505
  %v2694 = vpop.f32.mrf.mxu0
  %v2695 = vadd.f32 %v2605, %v2694
  %2696 = vdwg.mxu0
  %2697 = vmatpush.msra.mxu0 %v2571
  %2698 = vmatpush.msra.mxu0 %v2569
  %2699 = vmatpush.msra.mxu0 %v2567
  %2700 = vmatpush.msra.mxu0 %v2565
  %2701 = vmatpush.msra.mxu0 %v2563
  %2702 = vmatpush.msra.mxu0 %v2561
  %2703 = vmatpush.msra.mxu0 %v2559
  %2704 = vmatpush.msra.mxu0 %v2557
  %2705 = vmatpush.msra.mxu0 %v2555
  %2706 = vmatpush.msra.mxu0 %v2553
  %2707 = vmatpush.msra.mxu0 %v2551
  %2708 = vmatpush.msra.mxu0 %v2549
  %2709 = vmatpush.msra.mxu0 %v2547
  %2710 = vmatpush.msra.mxu0 %v2545
  %2711 = vmatpush.msra.mxu0 %v2543
  %2712 = vmatpush.msra.mxu0 %v2541
  %2713 = vmatmul.f32.gmra.mxu0 %v2506
  %v2714 = vpop.f32.mrf.mxu0
  %v2715 = vadd.f32 %v2695, %v2714
  %2716 = vdwg.mxu0
  %2717 = vmatpush.msra.mxu0 0.0
  %2718 = vmatpush.msra.mxu0 %v2615
  %2719 = vmatpush.msra.mxu0 %v2599
  %2720 = vmatpush.msra.mxu0 %v2597
  %2721 = vmatpush.msra.mxu0 %v2595
  %2722 = vmatpush.msra.mxu0 %v2593
  %2723 = vmatpush.msra.mxu0 %v2591
  %2724 = vmatpush.msra.mxu0 %v2589
  %2725 = vmatpush.msra.mxu0 %v2587
  %2726 = vmatpush.msra.mxu0 %v2585
  %2727 = vmatpush.msra.mxu0 %v2583
  %2728 = vmatpush.msra.mxu0 %v2581
  %2729 = vmatpush.msra.mxu0 %v2579
  %2730 = vmatpush.msra.mxu0 %v2577
  %2731 = vmatpush.msra.mxu0 %v2575
  %2732 = vmatpush.msra.mxu0 %v2573
  %2733 = vmatmul.f32.gmra.mxu0 %v2609
  %v2734 = vpop.f32.mrf.mxu0
  %v2735 = vadd.f32 %v2715, %v2734
  %2736 = vdwg.mxu0
  %v2737 = vmax.f32 %v2675, 0.0
  %v2738 = vmax.f32 %v2735, 0.0
  %v2739 = vld [vmem:[%s13] sm:$0xff]
  %v2740 = vld [vmem:[%s13 + $0x8] sm:$0xff]
  %v2741 = vld [vmem:[%s13 + $0x10] sm:$0xff]
  %v2742 = vld [vmem:[%s13 + $0x18] sm:$0xff]
  %v2743 = vld [vmem:[%s13 + $0x20] sm:$0xff]
  %v2744 = vld [vmem:[%s13 + $0x28] sm:$0xff]
  %v2745 = vld [vmem:[%s13 + $0x30] sm:$0xff]
  %v2746 = vld [vmem:[%s13 + $0x38] sm:$0xff]
  %v2747 = vld [vmem:[%s13 + $0x40] sm:$0xff]
  %v2748 = vld [vmem:[%s13 + $0x48] sm:$0xff]
  %v2749 = vld [vmem:[%s13 + $0x50] sm:$0xff]
  %v2750 = vld [vmem:[%s13 + $0x58] sm:$0xff]
  %v2751 = vld [vmem:[%s13 + $0x60] sm:$0xff]
  %v2752 = vld [vmem:[%s13 + $0x68] sm:$0xff]
  %v2753 = vld [vmem:[%s13 + $0x70] sm:$0xff]
  %v2754 = vld [vmem:[%s13 + $0x78] sm:$0xff]
  %v2755 = vld [vmem:[%s13 + $0x80] sm:$0xff]
  %v2756 = vld [vmem:[%s13 + $0x88] sm:$0xff]
  %v2757 = vld [vmem:[%s13 + $0x90] sm:$0xff]
  %v2758 = vld [vmem:[%s13 + $0x98] sm:$0xff]
  %v2759 = vld [vmem:[%s13 + $0xa0] sm:$0xff]
  %v2760 = vld [vmem:[%s13 + $0xa8] sm:$0xff]
  %v2761 = vld [vmem:[%s13 + $0xb0] sm:$0xff]
  %v2762 = vld [vmem:[%s13 + $0xb8] sm:$0xff]
  %v2763 = vld [vmem:[%s13 + $0xc0] sm:$0xff]
  %v2764 = vld [vmem:[%s13 + $0xc8] sm:$0xff]
  %v2765 = vld [vmem:[%s13 + $0xd0] sm:$0xff]
  %v2766 = vld [vmem:[%s13 + $0xd8] sm:$0xff]
  %v2767 = vld [vmem:[%s13 + $0xe0] sm:$0xff]
  %v2768 = vld [vmem:[%s13 + $0xe8] sm:$0xff]
  %v2769 = vld [vmem:[%s13 + $0xf0] sm:$0xff]
  %v2770 = vld [vmem:[%s13 + $0xf8] sm:$0xff]
  %v2771 = vld [vmem:[%s13 + $0x100] sm:$0xff]
  %v2772 = vld [vmem:[%s13 + $0x108] sm:$0xff]
  %v2773 = vld [vmem:[%s13 + $0x110] sm:$0xff]
  %v2774 = vld [vmem:[%s13 + $0x118] sm:$0xff]
  %v2775 = vld [vmem:[%s13 + $0x120] sm:$0xff]
  %v2776 = vld [vmem:[%s13 + $0x128] sm:$0xff]
  %v2777 = vld [vmem:[%s13 + $0x130] sm:$0xff]
  %v2778 = vld [vmem:[%s13 + $0x138] sm:$0xff]
  %v2779 = vld [vmem:[%s13 + $0x140] sm:$0xff]
  %v2780 = vld [vmem:[%s13 + $0x148] sm:$0xff]
  %v2781 = vld [vmem:[%s13 + $0x150] sm:$0xff]
  %v2782 = vld [vmem:[%s13 + $0x158] sm:$0xff]
  %v2783 = vld [vmem:[%s13 + $0x160] sm:$0xff]
  %v2784 = vld [vmem:[%s13 + $0x168] sm:$0xff]
  %v2785 = vld [vmem:[%s13 + $0x170] sm:$0xff]
  %v2786 = vld [vmem:[%s13 + $0x178] sm:$0xff]
  %v2787 = vld [vmem:[%s13 + $0x180] sm:$0xff]
  %v2788 = vld [vmem:[%s13 + $0x188] sm:$0xff]
  %v2789 = vld [vmem:[%s13 + $0x190] sm:$0xff]
  %v2790 = vld [vmem:[%s13 + $0x198] sm:$0xff]
  %v2791 = vld [vmem:[%s13 + $0x1a0] sm:$0xff]
  %v2792 = vld [vmem:[%s13 + $0x1a8] sm:$0xff]
  %v2793 = vld [vmem:[%s13 + $0x1b0] sm:$0xff]
  %v2794 = vld [vmem:[%s13 + $0x1b8] sm:$0xff]
  %v2795 = vld [vmem:[%s13 + $0x1c0] sm:$0xff]
  %v2796 = vld [vmem:[%s13 + $0x1c8] sm:$0xff]
  %v2797 = vld [vmem:[%s13 + $0x1d0] sm:$0xff]
  %v2798 = vld [vmem:[%s13 + $0x1d8] sm:$0xff]
  %v2799 = vld [vmem:[%s13 + $0x1e0] sm:$0xff]
  %v2800 = vld [vmem:[%s13 + $0x1e8] sm:$0xff]
  %v2801 = vld [vmem:[%s13 + $0x1f0] sm:$0xff]
  %v2802 = vld [vmem:[%s13 + $0x1f8] sm:$0xff]
  %v2803 = vld [vmem:[%s13 + $0x200] sm:$0xff]
  %v2804 = vld [vmem:[%s13 + $0x208] sm:$0xff]
  %v2805 = vld [vmem:[%s13 + $0x210] sm:$0xff]
  %v2806 = vld [vmem:[%s13 + $0x218] sm:$0xff]
  %v2807 = vld [vmem:[%s13 + $0x220] sm:$0xff]
  %v2808 = vld [vmem:[%s13 + $0x228] sm:$0xff]
  %v2809 = vld [vmem:[%s13 + $0x230] sm:$0xff]
  %v2810 = vld [vmem:[%s13 + $0x238] sm:$0xff]
  %v2811 = vld [vmem:[%s13 + $0x240] sm:$0xff]
  %v2812 = vld [vmem:[%s13 + $0x248] sm:$0xff]
  %v2813 = vld [vmem:[%s13 + $0x250] sm:$0xff]
  %v2814 = vld [vmem:[%s13 + $0x258] sm:$0xff]
  %v2815 = vld [vmem:[%s13 + $0x260] sm:$0xff]
  %v2816 = vld [vmem:[%s13 + $0x268] sm:$0xff]
  %v2817 = vld [vmem:[%s13 + $0x270] sm:$0xff]
  %v2818 = vld [vmem:[%s13 + $0x278] sm:$0xff]
  %v2819 = vld [vmem:[%s13 + $0x280] sm:$0xff]
  %v2820 = vld [vmem:[%s13 + $0x288] sm:$0xff]
  %v2821 = vld [vmem:[%s13 + $0x290] sm:$0xff]
  %v2822 = vld [vmem:[%s13 + $0x298] sm:$0xff]
  %v2823 = vld [vmem:[%s13 + $0x2a0] sm:$0xff]
  %v2824 = vld [vmem:[%s13 + $0x2a8] sm:$0xff]
  %v2825 = vld [vmem:[%s13 + $0x2b0] sm:$0xff]
  %v2826 = vld [vmem:[%s13 + $0x2b8] sm:$0xff]
  %v2827 = vld [vmem:[%s13 + $0x2c0] sm:$0xff]
  %v2828 = vld [vmem:[%s13 + $0x2c8] sm:$0xff]
  %v2829 = vld [vmem:[%s13 + $0x2d0] sm:$0xff]
  %v2830 = vld [vmem:[%s13 + $0x2d8] sm:$0xff]
  %v2831 = vld [vmem:[%s13 + $0x2e0] sm:$0xff]
  %v2832 = vld [vmem:[%s13 + $0x2e8] sm:$0xff]
  %v2833 = vld [vmem:[%s13 + $0x2f0] sm:$0xff]
  %v2834 = vld [vmem:[%s13 + $0x2f8] sm:$0xff]
  %v2835 = vld [vmem:[%s13 + $0x300] sm:$0xff]
  %v2836 = vld [vmem:[%s13 + $0x308] sm:$0xff]
  %v2837 = vld [vmem:[%s13 + $0x310] sm:$0xff]
  %v2838 = vld [vmem:[%s13 + $0x318] sm:$0xff]
  %v2839 = vld [vmem:[%s13 + $0x320] sm:$0xff]
  %v2840 = vld [vmem:[%s13 + $0x328] sm:$0xff]
  %v2841 = vld [vmem:[%s13 + $0x330] sm:$0xff]
  %v2842 = vld [vmem:[%s13 + $0x338] sm:$0xff]
  %v2843 = vld [vmem:[%s13 + $0x340] sm:$0xff]
  %v2844 = vld [vmem:[%s13 + $0x348] sm:$0xff]
  %v2845 = vld [vmem:[%s13 + $0x350] sm:$0xff]
  %v2846 = vld [vmem:[%s13 + $0x358] sm:$0xff]
  %v2847 = vld [vmem:[%s13 + $0x360] sm:$0xff]
  %v2848 = vld [vmem:[%s13 + $0x368] sm:$0xff]
  %v2849 = vld [vmem:[%s13 + $0x370] sm:$0xff]
  %v2850 = vld [vmem:[%s13 + $0x378] sm:$0xff]
  %v2851 = vld [vmem:[%s13 + $0x380] sm:$0xff]
  %v2852 = vld [vmem:[%s13 + $0x388] sm:$0xff]
  %v2853 = vld [vmem:[%s13 + $0x390] sm:$0xff]
  %v2854 = vld [vmem:[%s13 + $0x398] sm:$0xff]
  %v2855 = vld [vmem:[%s13 + $0x3a0] sm:$0xff]
  %v2856 = vld [vmem:[%s13 + $0x3a8] sm:$0xff]
  %v2857 = vld [vmem:[%s13 + $0x3b0] sm:$0xff]
  %v2858 = vld [vmem:[%s13 + $0x3b8] sm:$0xff]
  %v2859 = vld [vmem:[%s13 + $0x3c0] sm:$0xff]
  %v2860 = vld [vmem:[%s13 + $0x3c8] sm:$0xff]
  %v2861 = vld [vmem:[%s13 + $0x3d0] sm:$0xff]
  %v2862 = vld [vmem:[%s13 + $0x3d8] sm:$0xff]
  %v2863 = vld [vmem:[%s13 + $0x3e0] sm:$0xff]
  %v2864 = vld [vmem:[%s13 + $0x3e8] sm:$0xff]
  %v2865 = vld [vmem:[%s13 + $0x3f0] sm:$0xff]
  %v2866 = vld [vmem:[%s13 + $0x3f8] sm:$0xff]
  %v2867 = vld [vmem:[%s13 + $0x400] sm:$0xff]
  %v2868 = vld [vmem:[%s13 + $0x408] sm:$0xff]
  %v2869 = vld [vmem:[%s13 + $0x410] sm:$0xff]
  %v2870 = vld [vmem:[%s13 + $0x418] sm:$0xff]
  %v2871 = vld [vmem:[%s13 + $0x420] sm:$0xff]
  %v2872 = vld [vmem:[%s13 + $0x428] sm:$0xff]
  %v2873 = vld [vmem:[%s13 + $0x430] sm:$0xff]
  %v2874 = vld [vmem:[%s13 + $0x438] sm:$0xff]
  %v2875 = vld [vmem:[%s13 + $0x440] sm:$0xff]
  %v2876 = vld [vmem:[%s13 + $0x448] sm:$0xff]
  %v2877 = vld [vmem:[%s13 + $0x450] sm:$0xff]
  %v2878 = vld [vmem:[%s13 + $0x458] sm:$0xff]
  %v2879 = vld [vmem:[%s13 + $0x460] sm:$0xff]
  %v2880 = vld [vmem:[%s13 + $0x468] sm:$0xff]
  %v2881 = vld [vmem:[%s13 + $0x470] sm:$0xff]
  %v2882 = vld [vmem:[%s13 + $0x478] sm:$0xff]
  %v2883 = vld [vmem:[%s13 + $0x480] sm:$0xff]
  %v2884 = vld [vmem:[%s13 + $0x488] sm:$0xff]
  %v2885 = vld [vmem:[%s13 + $0x490] sm:$0xff]
  %v2886 = vld [vmem:[%s13 + $0x498] sm:$0xff]
  %v2887 = vld [vmem:[%s13 + $0x4a0] sm:$0xff]
  %v2888 = vld [vmem:[%s13 + $0x4a8] sm:$0xff]
  %v2889 = vld [vmem:[%s13 + $0x4b0] sm:$0xff]
  %v2890 = vld [vmem:[%s13 + $0x4b8] sm:$0xff]
  %v2891 = vld [vmem:[%s13 + $0x4c0] sm:$0xff]
  %v2892 = vld [vmem:[%s13 + $0x4c8] sm:$0xff]
  %v2893 = vld [vmem:[%s13 + $0x4d0] sm:$0xff]
  %v2894 = vld [vmem:[%s13 + $0x4d8] sm:$0xff]
  %v2895 = vld [vmem:[%s13 + $0x4e0] sm:$0xff]
  %v2896 = vld [vmem:[%s13 + $0x4e8] sm:$0xff]
  %v2897 = vld [vmem:[%s13 + $0x4f0] sm:$0xff]
  %v2898 = vld [vmem:[%s13 + $0x4f8] sm:$0xff]
  %v2899 = vld [vmem:[%s13 + $0x500] sm:$0xff]
  %v2900 = vld [vmem:[%s13 + $0x508] sm:$0xff]
  %v2901 = vld [vmem:[%s13 + $0x510] sm:$0xff]
  %v2902 = vld [vmem:[%s13 + $0x518] sm:$0xff]
  %v2903 = vld [vmem:[%s13 + $0x520] sm:$0xff]
  %v2904 = vld [vmem:[%s13 + $0x528] sm:$0xff]
  %v2905 = vld [vmem:[%s13 + $0x530] sm:$0xff]
  %v2906 = vld [vmem:[%s13 + $0x538] sm:$0xff]
  %v2907 = vld [vmem:[%s13 + $0x540] sm:$0xff]
  %v2908 = vld [vmem:[%s13 + $0x548] sm:$0xff]
  %v2909 = vld [vmem:[%s13 + $0x550] sm:$0xff]
  %v2910 = vld [vmem:[%s13 + $0x558] sm:$0xff]
  %v2911 = vld [vmem:[%s13 + $0x560] sm:$0xff]
  %v2912 = vld [vmem:[%s13 + $0x568] sm:$0xff]
  %v2913 = vld [vmem:[%s13 + $0x570] sm:$0xff]
  %v2914 = vld [vmem:[%s13 + $0x578] sm:$0xff]
  %v2915 = vld [vmem:[%s13 + $0x580] sm:$0xff]
  %v2916 = vld [vmem:[%s13 + $0x588] sm:$0xff]
  %v2917 = vld [vmem:[%s13 + $0x590] sm:$0xff]
  %v2918 = vld [vmem:[%s13 + $0x598] sm:$0xff]
  %v2919 = vld [vmem:[%s13 + $0x5a0] sm:$0xff]
  %v2920 = vld [vmem:[%s13 + $0x5a8] sm:$0xff]
  %v2921 = vld [vmem:[%s13 + $0x5b0] sm:$0xff]
  %v2922 = vld [vmem:[%s13 + $0x5b8] sm:$0xff]
  %v2923 = vld [vmem:[%s13 + $0x5c0] sm:$0x7f]
  %v2924 = vld [vmem:[%s13 + $0x5c8] sm:$0x7f]
  %v2925 = vld [vmem:[%s13 + $0x5d0] sm:$0x7f]
  %v2926 = vld [vmem:[%s13 + $0x5d8] sm:$0x7f]
  %v2927 = vld [vmem:[%s14] sm:$0xff]
  %v2928 = vld [vmem:[%s14 + $0x8] sm:$0xff]
  %v2929 = vld [vmem:[%s14 + $0x10] sm:$0xff]
  %v2930 = vld [vmem:[%s14 + $0x18] sm:$0xff]
  %v2931 = vld [vmem:[%s14 + $0x20] sm:$0xff]
  %v2932 = vld [vmem:[%s14 + $0x28] sm:$0xff]
  %v2933 = vld [vmem:[%s14 + $0x30] sm:$0xff]
  %v2934 = vld [vmem:[%s14 + $0x38] sm:$0xff]
  %v2935 = vld [vmem:[%s14 + $0x40] sm:$0xff]
  %v2936 = vld [vmem:[%s14 + $0x48] sm:$0xff]
  %v2937 = vld [vmem:[%s14 + $0x50] sm:$0xff]
  %v2938 = vld [vmem:[%s14 + $0x58] sm:$0xff]
  %v2939 = vld [vmem:[%s14 + $0x60] sm:$0xff]
  %v2940 = vld [vmem:[%s14 + $0x68] sm:$0xff]
  %v2941 = vld [vmem:[%s14 + $0x70] sm:$0xff]
  %v2942 = vld [vmem:[%s14 + $0x78] sm:$0xff]
  %v2943 = vld [vmem:[%s14 + $0x80] sm:$0xff]
  %v2944 = vld [vmem:[%s14 + $0x88] sm:$0xff]
  %v2945 = vld [vmem:[%s14 + $0x90] sm:$0xff]
  %v2946 = vld [vmem:[%s14 + $0x98] sm:$0xff]
  %v2947 = vld [vmem:[%s14 + $0xa0] sm:$0xff]
  %v2948 = vld [vmem:[%s14 + $0xa8] sm:$0xff]
  %v2949 = vld [vmem:[%s14 + $0xb0] sm:$0xff]
  %v2950 = vld [vmem:[%s14 + $0xb8] sm:$0xff]
  %v2951 = vld [vmem:[%s14 + $0xc0] sm:$0xff]
  %v2952 = vld [vmem:[%s14 + $0xc8] sm:$0xff]
  %v2953 = vld [vmem:[%s14 + $0xd0] sm:$0xff]
  %v2954 = vld [vmem:[%s14 + $0xd8] sm:$0xff]
  %v2955 = vld [vmem:[%s14 + $0xe0] sm:$0xff]
  %v2956 = vld [vmem:[%s14 + $0xe8] sm:$0xff]
  %v2957 = vld [vmem:[%s14 + $0xf0] sm:$0xff]
  %v2958 = vld [vmem:[%s14 + $0xf8] sm:$0xff]
  %v2959 = vld [vmem:[%s14 + $0x100] sm:$0xff]
  %v2960 = vld [vmem:[%s14 + $0x108] sm:$0xff]
  %v2961 = vld [vmem:[%s14 + $0x110] sm:$0xff]
  %v2962 = vld [vmem:[%s14 + $0x118] sm:$0xff]
  %v2963 = vld [vmem:[%s14 + $0x120] sm:$0xff]
  %v2964 = vld [vmem:[%s14 + $0x128] sm:$0xff]
  %v2965 = vld [vmem:[%s14 + $0x130] sm:$0xff]
  %v2966 = vld [vmem:[%s14 + $0x138] sm:$0xff]
  %v2967 = vld [vmem:[%s14 + $0x140] sm:$0xff]
  %v2968 = vld [vmem:[%s14 + $0x148] sm:$0xff]
  %v2969 = vld [vmem:[%s14 + $0x150] sm:$0xff]
  %v2970 = vld [vmem:[%s14 + $0x158] sm:$0xff]
  %v2971 = vld [vmem:[%s14 + $0x160] sm:$0xff]
  %v2972 = vld [vmem:[%s14 + $0x168] sm:$0xff]
  %v2973 = vld [vmem:[%s14 + $0x170] sm:$0xff]
  %v2974 = vld [vmem:[%s14 + $0x178] sm:$0xff]
  %v2975 = vld [vmem:[%s14 + $0x180] sm:$0xff]
  %v2976 = vld [vmem:[%s14 + $0x188] sm:$0xff]
  %v2977 = vld [vmem:[%s14 + $0x190] sm:$0xff]
  %v2978 = vld [vmem:[%s14 + $0x198] sm:$0xff]
  %v2979 = vld [vmem:[%s14 + $0x1a0] sm:$0xff]
  %v2980 = vld [vmem:[%s14 + $0x1a8] sm:$0xff]
  %v2981 = vld [vmem:[%s14 + $0x1b0] sm:$0xff]
  %v2982 = vld [vmem:[%s14 + $0x1b8] sm:$0xff]
  %v2983 = vld [vmem:[%s14 + $0x1c0] sm:$0xff]
  %v2984 = vld [vmem:[%s14 + $0x1c8] sm:$0xff]
  %v2985 = vld [vmem:[%s14 + $0x1d0] sm:$0xff]
  %v2986 = vld [vmem:[%s14 + $0x1d8] sm:$0xff]
  %v2987 = vld [vmem:[%s14 + $0x1e0] sm:$0xff]
  %v2988 = vld [vmem:[%s14 + $0x1e8] sm:$0xff]
  %v2989 = vld [vmem:[%s14 + $0x1f0] sm:$0xff]
  %v2990 = vld [vmem:[%s14 + $0x1f8] sm:$0xff]
  %v2991 = vld [vmem:[%s14 + $0x200] sm:$0xff]
  %v2992 = vld [vmem:[%s14 + $0x208] sm:$0xff]
  %v2993 = vld [vmem:[%s14 + $0x210] sm:$0xff]
  %v2994 = vld [vmem:[%s14 + $0x218] sm:$0xff]
  %v2995 = vld [vmem:[%s14 + $0x220] sm:$0xff]
  %v2996 = vld [vmem:[%s14 + $0x228] sm:$0xff]
  %v2997 = vld [vmem:[%s14 + $0x230] sm:$0xff]
  %v2998 = vld [vmem:[%s14 + $0x238] sm:$0xff]
  %v2999 = vld [vmem:[%s14 + $0x240] sm:$0xff]
  %v3000 = vld [vmem:[%s14 + $0x248] sm:$0xff]
  %v3001 = vld [vmem:[%s14 + $0x250] sm:$0xff]
  %v3002 = vld [vmem:[%s14 + $0x258] sm:$0xff]
  %v3003 = vld [vmem:[%s14 + $0x260] sm:$0xff]
  %v3004 = vld [vmem:[%s14 + $0x268] sm:$0xff]
  %v3005 = vld [vmem:[%s14 + $0x270] sm:$0xff]
  %v3006 = vld [vmem:[%s14 + $0x278] sm:$0xff]
  %v3007 = vld [vmem:[%s14 + $0x280] sm:$0xff]
  %v3008 = vld [vmem:[%s14 + $0x288] sm:$0xff]
  %v3009 = vld [vmem:[%s14 + $0x290] sm:$0xff]
  %v3010 = vld [vmem:[%s14 + $0x298] sm:$0xff]
  %v3011 = vld [vmem:[%s14 + $0x2a0] sm:$0xff]
  %v3012 = vld [vmem:[%s14 + $0x2a8] sm:$0xff]
  %v3013 = vld [vmem:[%s14 + $0x2b0] sm:$0xff]
  %v3014 = vld [vmem:[%s14 + $0x2b8] sm:$0xff]
  %v3015 = vld [vmem:[%s14 + $0x2c0] sm:$0xff]
  %v3016 = vld [vmem:[%s14 + $0x2c8] sm:$0xff]
  %v3017 = vld [vmem:[%s14 + $0x2d0] sm:$0xff]
  %v3018 = vld [vmem:[%s14 + $0x2d8] sm:$0xff]
  %v3019 = vld [vmem:[%s14 + $0x2e0] sm:$0xff]
  %v3020 = vld [vmem:[%s14 + $0x2e8] sm:$0xff]
  %v3021 = vld [vmem:[%s14 + $0x2f0] sm:$0xff]
  %v3022 = vld [vmem:[%s14 + $0x2f8] sm:$0xff]
  %v3023 = vld [vmem:[%s14 + $0x300] sm:$0xff]
  %v3024 = vld [vmem:[%s14 + $0x308] sm:$0xff]
  %v3025 = vld [vmem:[%s14 + $0x310] sm:$0xff]
  %v3026 = vld [vmem:[%s14 + $0x318] sm:$0xff]
  %v3027 = vld [vmem:[%s14 + $0x320] sm:$0xff]
  %v3028 = vld [vmem:[%s14 + $0x328] sm:$0xff]
  %v3029 = vld [vmem:[%s14 + $0x330] sm:$0xff]
  %v3030 = vld [vmem:[%s14 + $0x338] sm:$0xff]
  %v3031 = vld [vmem:[%s14 + $0x340] sm:$0xff]
  %v3032 = vld [vmem:[%s14 + $0x348] sm:$0xff]
  %v3033 = vld [vmem:[%s14 + $0x350] sm:$0xff]
  %v3034 = vld [vmem:[%s14 + $0x358] sm:$0xff]
  %v3035 = vld [vmem:[%s14 + $0x360] sm:$0xff]
  %v3036 = vld [vmem:[%s14 + $0x368] sm:$0xff]
  %v3037 = vld [vmem:[%s14 + $0x370] sm:$0xff]
  %v3038 = vld [vmem:[%s14 + $0x378] sm:$0xff]
  %v3039 = vld [vmem:[%s14 + $0x380] sm:$0xff]
  %v3040 = vld [vmem:[%s14 + $0x388] sm:$0xff]
  %v3041 = vld [vmem:[%s14 + $0x390] sm:$0xff]
  %v3042 = vld [vmem:[%s14 + $0x398] sm:$0xff]
  %v3043 = vld [vmem:[%s14 + $0x3a0] sm:$0xff]
  %v3044 = vld [vmem:[%s14 + $0x3a8] sm:$0xff]
  %v3045 = vld [vmem:[%s14 + $0x3b0] sm:$0xff]
  %v3046 = vld [vmem:[%s14 + $0x3b8] sm:$0xff]
  %v3047 = vld [vmem:[%s14 + $0x3c0] sm:$0xff]
  %v3048 = vld [vmem:[%s14 + $0x3c8] sm:$0xff]
  %v3049 = vld [vmem:[%s14 + $0x3d0] sm:$0xff]
  %v3050 = vld [vmem:[%s14 + $0x3d8] sm:$0xff]
  %v3051 = vld [vmem:[%s14 + $0x3e0] sm:$0xff]
  %v3052 = vld [vmem:[%s14 + $0x3e8] sm:$0xff]
  %v3053 = vld [vmem:[%s14 + $0x3f0] sm:$0xff]
  %v3054 = vld [vmem:[%s14 + $0x3f8] sm:$0xff]
  %v3055 = vld [vmem:[%s14 + $0x400] sm:$0xff]
  %v3056 = vld [vmem:[%s14 + $0x408] sm:$0xff]
  %v3057 = vld [vmem:[%s14 + $0x410] sm:$0xff]
  %v3058 = vld [vmem:[%s14 + $0x418] sm:$0xff]
  %v3059 = vld [vmem:[%s14 + $0x420] sm:$0xff]
  %v3060 = vld [vmem:[%s14 + $0x428] sm:$0xff]
  %v3061 = vld [vmem:[%s14 + $0x430] sm:$0xff]
  %v3062 = vld [vmem:[%s14 + $0x438] sm:$0xff]
  %v3063 = vld [vmem:[%s14 + $0x440] sm:$0xff]
  %v3064 = vld [vmem:[%s14 + $0x448] sm:$0xff]
  %v3065 = vld [vmem:[%s14 + $0x450] sm:$0xff]
  %v3066 = vld [vmem:[%s14 + $0x458] sm:$0xff]
  %v3067 = vld [vmem:[%s14 + $0x460] sm:$0xff]
  %v3068 = vld [vmem:[%s14 + $0x468] sm:$0xff]
  %v3069 = vld [vmem:[%s14 + $0x470] sm:$0xff]
  %v3070 = vld [vmem:[%s14 + $0x478] sm:$0xff]
  %v3071 = vld [vmem:[%s14 + $0x480] sm:$0x3f]
  %v3072 = vld [vmem:[%s14 + $0x488] sm:$0x3f]
  %v3073 = vld [vmem:[%s14 + $0x490] sm:$0x3f]
  %v3074 = vld [vmem:[%s14 + $0x498] sm:$0x3f]
  %vm3075 = vcmask 310272
  %v3077 = vsel %vm3075, %v407, 0
  %v3080 = vsel %vm2135, %v3071, 0
  %v3083 = vsel %vm2135, %v3072, 0
  %v3086 = vsel %vm2135, %v3073, 0
  %v3089 = vsel %vm2135, %v3074, 0
  %3091 = vmatpush.msra.mxu0 %v2987
  %3092 = vmatpush.msra.mxu0 %v2983
  %3093 = vmatpush.msra.mxu0 %v2979
  %3094 = vmatpush.msra.mxu0 %v2975
  %3095 = vmatpush.msra.mxu0 %v2971
  %3096 = vmatpush.msra.mxu0 %v2967
  %3097 = vmatpush.msra.mxu0 %v2963
  %3098 = vmatpush.msra.mxu0 %v2959
  %3099 = vmatpush.msra.mxu0 %v2955
  %3100 = vmatpush.msra.mxu0 %v2951
  %3101 = vmatpush.msra.mxu0 %v2947
  %3102 = vmatpush.msra.mxu0 %v2943
  %3103 = vmatpush.msra.mxu0 %v2939
  %3104 = vmatpush.msra.mxu0 %v2935
  %3105 = vmatpush.msra.mxu0 %v2931
  %3106 = vmatpush.msra.mxu0 %v2927
  %3107 = vmatmul.f32.gmra.mxu0 %v405
  %v3108 = vpop.f32.mrf.mxu0
  %v3109 = vadd.f32 0.0, %v3108
  %3110 = vdwg.mxu0
  %3111 = vmatpush.msra.mxu0 %v3051
  %3112 = vmatpush.msra.mxu0 %v3047
  %3113 = vmatpush.msra.mxu0 %v3043
  %3114 = vmatpush.msra.mxu0 %v3039
  %3115 = vmatpush.msra.mxu0 %v3035
  %3116 = vmatpush.msra.mxu0 %v3031
  %3117 = vmatpush.msra.mxu0 %v3027
  %3118 = vmatpush.msra.mxu0 %v3023
  %3119 = vmatpush.msra.mxu0 %v3019
  %3120 = vmatpush.msra.mxu0 %v3015
  %3121 = vmatpush.msra.mxu0 %v3011
  %3122 = vmatpush.msra.mxu0 %v3007
  %3123 = vmatpush.msra.mxu0 %v3003
  %3124 = vmatpush.msra.mxu0 %v2999
  %3125 = vmatpush.msra.mxu0 %v2995
  %3126 = vmatpush.msra.mxu0 %v2991
  %3127 = vmatmul.f32.gmra.mxu0 %v406
  %v3128 = vpop.f32.mrf.mxu0
  %v3129 = vadd.f32 %v3109, %v3128
  %3130 = vdwg.mxu0
  %3131 = vmatpush.msra.mxu0 0.0
  %3132 = vmatpush.msra.mxu0 0.0
  %3133 = vmatpush.msra.mxu0 0.0
  %3134 = vmatpush.msra.mxu0 0.0
  %3135 = vmatpush.msra.mxu0 0.0
  %3136 = vmatpush.msra.mxu0 0.0
  %3137 = vmatpush.msra.mxu0 0.0
  %3138 = vmatpush.msra.mxu0 0.0
  %3139 = vmatpush.msra.mxu0 0.0
  %3140 = vmatpush.msra.mxu0 0.0
  %3141 = vmatpush.msra.mxu0 0.0
  %3142 = vmatpush.msra.mxu0 %v3080
  %3143 = vmatpush.msra.mxu0 %v3067
  %3144 = vmatpush.msra.mxu0 %v3063
  %3145 = vmatpush.msra.mxu0 %v3059
  %3146 = vmatpush.msra.mxu0 %v3055
  %3147 = vmatmul.f32.gmra.mxu0 %v3077
  %v3148 = vpop.f32.mrf.mxu0
  %v3149 = vadd.f32 %v3129, %v3148
  %3150 = vdwg.mxu0
  %3151 = vmatpush.msra.mxu0 %v2988
  %3152 = vmatpush.msra.mxu0 %v2984
  %3153 = vmatpush.msra.mxu0 %v2980
  %3154 = vmatpush.msra.mxu0 %v2976
  %3155 = vmatpush.msra.mxu0 %v2972
  %3156 = vmatpush.msra.mxu0 %v2968
  %3157 = vmatpush.msra.mxu0 %v2964
  %3158 = vmatpush.msra.mxu0 %v2960
  %3159 = vmatpush.msra.mxu0 %v2956
  %3160 = vmatpush.msra.mxu0 %v2952
  %3161 = vmatpush.msra.mxu0 %v2948
  %3162 = vmatpush.msra.mxu0 %v2944
  %3163 = vmatpush.msra.mxu0 %v2940
  %3164 = vmatpush.msra.mxu0 %v2936
  %3165 = vmatpush.msra.mxu0 %v2932
  %3166 = vmatpush.msra.mxu0 %v2928
  %3167 = vmatmul.f32.gmra.mxu0 %v405
  %v3168 = vpop.f32.mrf.mxu0
  %v3169 = vadd.f32 0.0, %v3168
  %3170 = vdwg.mxu0
  %3171 = vmatpush.msra.mxu0 %v3052
  %3172 = vmatpush.msra.mxu0 %v3048
  %3173 = vmatpush.msra.mxu0 %v3044
  %3174 = vmatpush.msra.mxu0 %v3040
  %3175 = vmatpush.msra.mxu0 %v3036
  %3176 = vmatpush.msra.mxu0 %v3032
  %3177 = vmatpush.msra.mxu0 %v3028
  %3178 = vmatpush.msra.mxu0 %v3024
  %3179 = vmatpush.msra.mxu0 %v3020
  %3180 = vmatpush.msra.mxu0 %v3016
  %3181 = vmatpush.msra.mxu0 %v3012
  %3182 = vmatpush.msra.mxu0 %v3008
  %3183 = vmatpush.msra.mxu0 %v3004
  %3184 = vmatpush.msra.mxu0 %v3000
  %3185 = vmatpush.msra.mxu0 %v2996
  %3186 = vmatpush.msra.mxu0 %v2992
  %3187 = vmatmul.f32.gmra.mxu0 %v406
  %v3188 = vpop.f32.mrf.mxu0
  %v3189 = vadd.f32 %v3169, %v3188
  %3190 = vdwg.mxu0
  %3191 = vmatpush.msra.mxu0 0.0
  %3192 = vmatpush.msra.mxu0 0.0
  %3193 = vmatpush.msra.mxu0 0.0
  %3194 = vmatpush.msra.mxu0 0.0
  %3195 = vmatpush.msra.mxu0 0.0
  %3196 = vmatpush.msra.mxu0 0.0
  %3197 = vmatpush.msra.mxu0 0.0
  %3198 = vmatpush.msra.mxu0 0.0
  %3199 = vmatpush.msra.mxu0 0.0
  %3200 = vmatpush.msra.mxu0 0.0
  %3201 = vmatpush.msra.mxu0 0.0
  %3202 = vmatpush.msra.mxu0 %v3083
  %3203 = vmatpush.msra.mxu0 %v3068
  %3204 = vmatpush.msra.mxu0 %v3064
  %3205 = vmatpush.msra.mxu0 %v3060
  %3206 = vmatpush.msra.mxu0 %v3056
  %3207 = vmatmul.f32.gmra.mxu0 %v3077
  %v3208 = vpop.f32.mrf.mxu0
  %v3209 = vadd.f32 %v3189, %v3208
  %3210 = vdwg.mxu0
  %3211 = vmatpush.msra.mxu0 %v2989
  %3212 = vmatpush.msra.mxu0 %v2985
  %3213 = vmatpush.msra.mxu0 %v2981
  %3214 = vmatpush.msra.mxu0 %v2977
  %3215 = vmatpush.msra.mxu0 %v2973
  %3216 = vmatpush.msra.mxu0 %v2969
  %3217 = vmatpush.msra.mxu0 %v2965
  %3218 = vmatpush.msra.mxu0 %v2961
  %3219 = vmatpush.msra.mxu0 %v2957
  %3220 = vmatpush.msra.mxu0 %v2953
  %3221 = vmatpush.msra.mxu0 %v2949
  %3222 = vmatpush.msra.mxu0 %v2945
  %3223 = vmatpush.msra.mxu0 %v2941
  %3224 = vmatpush.msra.mxu0 %v2937
  %3225 = vmatpush.msra.mxu0 %v2933
  %3226 = vmatpush.msra.mxu0 %v2929
  %3227 = vmatmul.f32.gmra.mxu0 %v405
  %v3228 = vpop.f32.mrf.mxu0
  %v3229 = vadd.f32 0.0, %v3228
  %3230 = vdwg.mxu0
  %3231 = vmatpush.msra.mxu0 %v3053
  %3232 = vmatpush.msra.mxu0 %v3049
  %3233 = vmatpush.msra.mxu0 %v3045
  %3234 = vmatpush.msra.mxu0 %v3041
  %3235 = vmatpush.msra.mxu0 %v3037
  %3236 = vmatpush.msra.mxu0 %v3033
  %3237 = vmatpush.msra.mxu0 %v3029
  %3238 = vmatpush.msra.mxu0 %v3025
  %3239 = vmatpush.msra.mxu0 %v3021
  %3240 = vmatpush.msra.mxu0 %v3017
  %3241 = vmatpush.msra.mxu0 %v3013
  %3242 = vmatpush.msra.mxu0 %v3009
  %3243 = vmatpush.msra.mxu0 %v3005
  %3244 = vmatpush.msra.mxu0 %v3001
  %3245 = vmatpush.msra.mxu0 %v2997
  %3246 = vmatpush.msra.mxu0 %v2993
  %3247 = vmatmul.f32.gmra.mxu0 %v406
  %v3248 = vpop.f32.mrf.mxu0
  %v3249 = vadd.f32 %v3229, %v3248
  %3250 = vdwg.mxu0
  %3251 = vmatpush.msra.mxu0 0.0
  %3252 = vmatpush.msra.mxu0 0.0
  %3253 = vmatpush.msra.mxu0 0.0
  %3254 = vmatpush.msra.mxu0 0.0
  %3255 = vmatpush.msra.mxu0 0.0
  %3256 = vmatpush.msra.mxu0 0.0
  %3257 = vmatpush.msra.mxu0 0.0
  %3258 = vmatpush.msra.mxu0 0.0
  %3259 = vmatpush.msra.mxu0 0.0
  %3260 = vmatpush.msra.mxu0 0.0
  %3261 = vmatpush.msra.mxu0 0.0
  %3262 = vmatpush.msra.mxu0 %v3086
  %3263 = vmatpush.msra.mxu0 %v3069
  %3264 = vmatpush.msra.mxu0 %v3065
  %3265 = vmatpush.msra.mxu0 %v3061
  %3266 = vmatpush.msra.mxu0 %v3057
  %3267 = vmatmul.f32.gmra.mxu0 %v3077
  %v3268 = vpop.f32.mrf.mxu0
  %v3269 = vadd.f32 %v3249, %v3268
  %3270 = vdwg.mxu0
  %3271 = vmatpush.msra.mxu0 %v2990
  %3272 = vmatpush.msra.mxu0 %v2986
  %3273 = vmatpush.msra.mxu0 %v2982
  %3274 = vmatpush.msra.mxu0 %v2978
  %3275 = vmatpush.msra.mxu0 %v2974
  %3276 = vmatpush.msra.mxu0 %v2970
  %3277 = vmatpush.msra.mxu0 %v2966
  %3278 = vmatpush.msra.mxu0 %v2962
  %3279 = vmatpush.msra.mxu0 %v2958
  %3280 = vmatpush.msra.mxu0 %v2954
  %3281 = vmatpush.msra.mxu0 %v2950
  %3282 = vmatpush.msra.mxu0 %v2946
  %3283 = vmatpush.msra.mxu0 %v2942
  %3284 = vmatpush.msra.mxu0 %v2938
  %3285 = vmatpush.msra.mxu0 %v2934
  %3286 = vmatpush.msra.mxu0 %v2930
  %3287 = vmatmul.f32.gmra.mxu0 %v405
  %v3288 = vpop.f32.mrf.mxu0
  %v3289 = vadd.f32 0.0, %v3288
  %3290 = vdwg.mxu0
  %3291 = vmatpush.msra.mxu0 %v3054
  %3292 = vmatpush.msra.mxu0 %v3050
  %3293 = vmatpush.msra.mxu0 %v3046
  %3294 = vmatpush.msra.mxu0 %v3042
  %3295 = vmatpush.msra.mxu0 %v3038
  %3296 = vmatpush.msra.mxu0 %v3034
  %3297 = vmatpush.msra.mxu0 %v3030
  %3298 = vmatpush.msra.mxu0 %v3026
  %3299 = vmatpush.msra.mxu0 %v3022
  %3300 = vmatpush.msra.mxu0 %v3018
  %3301 = vmatpush.msra.mxu0 %v3014
  %3302 = vmatpush.msra.mxu0 %v3010
  %3303 = vmatpush.msra.mxu0 %v3006
  %3304 = vmatpush.msra.mxu0 %v3002
  %3305 = vmatpush.msra.mxu0 %v2998
  %3306 = vmatpush.msra.mxu0 %v2994
  %3307 = vmatmul.f32.gmra.mxu0 %v406
  %v3308 = vpop.f32.mrf.mxu0
  %v3309 = vadd.f32 %v3289, %v3308
  %3310 = vdwg.mxu0
  %3311 = vmatpush.msra.mxu0 0.0
  %3312 = vmatpush.msra.mxu0 0.0
  %3313 = vmatpush.msra.mxu0 0.0
  %3314 = vmatpush.msra.mxu0 0.0
  %3315 = vmatpush.msra.mxu0 0.0
  %3316 = vmatpush.msra.mxu0 0.0
  %3317 = vmatpush.msra.mxu0 0.0
  %3318 = vmatpush.msra.mxu0 0.0
  %3319 = vmatpush.msra.mxu0 0.0
  %3320 = vmatpush.msra.mxu0 0.0
  %3321 = vmatpush.msra.mxu0 0.0
  %3322 = vmatpush.msra.mxu0 %v3089
  %3323 = vmatpush.msra.mxu0 %v3070
  %3324 = vmatpush.msra.mxu0 %v3066
  %3325 = vmatpush.msra.mxu0 %v3062
  %3326 = vmatpush.msra.mxu0 %v3058
  %3327 = vmatmul.f32.gmra.mxu0 %v3077
  %v3328 = vpop.f32.mrf.mxu0
  %v3329 = vadd.f32 %v3309, %v3328
  %3330 = vdwg.mxu0
  %v3332 = vsel %vm215, %v2923, 0
  %v3335 = vsel %vm215, %v2924, 0
  %v3338 = vsel %vm215, %v2925, 0
  %v3341 = vsel %vm215, %v2926, 0
  %3343 = vmatpush.msra.mxu0 %v2799
  %3344 = vmatpush.msra.mxu0 %v2795
  %3345 = vmatpush.msra.mxu0 %v2791
  %3346 = vmatpush.msra.mxu0 %v2787
  %3347 = vmatpush.msra.mxu0 %v2783
  %3348 = vmatpush.msra.mxu0 %v2779
  %3349 = vmatpush.msra.mxu0 %v2775
  %3350 = vmatpush.msra.mxu0 %v2771
  %3351 = vmatpush.msra.mxu0 %v2767
  %3352 = vmatpush.msra.mxu0 %v2763
  %3353 = vmatpush.msra.mxu0 %v2759
  %3354 = vmatpush.msra.mxu0 %v2755
  %3355 = vmatpush.msra.mxu0 %v2751
  %3356 = vmatpush.msra.mxu0 %v2747
  %3357 = vmatpush.msra.mxu0 %v2743
  %3358 = vmatpush.msra.mxu0 %v2739
  %3359 = vmatmul.f32.gmra.mxu0 %v59
  %v3360 = vpop.f32.mrf.mxu0
  %v3361 = vadd.f32 %v3149, %v3360
  %3362 = vdwg.mxu0
  %3363 = vmatpush.msra.mxu0 %v2863
  %3364 = vmatpush.msra.mxu0 %v2859
  %3365 = vmatpush.msra.mxu0 %v2855
  %3366 = vmatpush.msra.mxu0 %v2851
  %3367 = vmatpush.msra.mxu0 %v2847
  %3368 = vmatpush.msra.mxu0 %v2843
  %3369 = vmatpush.msra.mxu0 %v2839
  %3370 = vmatpush.msra.mxu0 %v2835
  %3371 = vmatpush.msra.mxu0 %v2831
  %3372 = vmatpush.msra.mxu0 %v2827
  %3373 = vmatpush.msra.mxu0 %v2823
  %3374 = vmatpush.msra.mxu0 %v2819
  %3375 = vmatpush.msra.mxu0 %v2815
  %3376 = vmatpush.msra.mxu0 %v2811
  %3377 = vmatpush.msra.mxu0 %v2807
  %3378 = vmatpush.msra.mxu0 %v2803
  %3379 = vmatmul.f32.gmra.mxu0 %v60
  %v3380 = vpop.f32.mrf.mxu0
  %v3381 = vadd.f32 %v3361, %v3380
  %3382 = vdwg.mxu0
  %3383 = vmatpush.msra.mxu0 0.0
  %3384 = vmatpush.msra.mxu0 %v3332
  %3385 = vmatpush.msra.mxu0 %v2919
  %3386 = vmatpush.msra.mxu0 %v2915
  %3387 = vmatpush.msra.mxu0 %v2911
  %3388 = vmatpush.msra.mxu0 %v2907
  %3389 = vmatpush.msra.mxu0 %v2903
  %3390 = vmatpush.msra.mxu0 %v2899
  %3391 = vmatpush.msra.mxu0 %v2895
  %3392 = vmatpush.msra.mxu0 %v2891
  %3393 = vmatpush.msra.mxu0 %v2887
  %3394 = vmatpush.msra.mxu0 %v2883
  %3395 = vmatpush.msra.mxu0 %v2879
  %3396 = vmatpush.msra.mxu0 %v2875
  %3397 = vmatpush.msra.mxu0 %v2871
  %3398 = vmatpush.msra.mxu0 %v2867
  %3399 = vmatmul.f32.gmra.mxu0 %v213
  %v3400 = vpop.f32.mrf.mxu0
  %v3401 = vadd.f32 %v3381, %v3400
  %3402 = vdwg.mxu0
  %3403 = vmatpush.msra.mxu0 %v2800
  %3404 = vmatpush.msra.mxu0 %v2796
  %3405 = vmatpush.msra.mxu0 %v2792
  %3406 = vmatpush.msra.mxu0 %v2788
  %3407 = vmatpush.msra.mxu0 %v2784
  %3408 = vmatpush.msra.mxu0 %v2780
  %3409 = vmatpush.msra.mxu0 %v2776
  %3410 = vmatpush.msra.mxu0 %v2772
  %3411 = vmatpush.msra.mxu0 %v2768
  %3412 = vmatpush.msra.mxu0 %v2764
  %3413 = vmatpush.msra.mxu0 %v2760
  %3414 = vmatpush.msra.mxu0 %v2756
  %3415 = vmatpush.msra.mxu0 %v2752
  %3416 = vmatpush.msra.mxu0 %v2748
  %3417 = vmatpush.msra.mxu0 %v2744
  %3418 = vmatpush.msra.mxu0 %v2740
  %3419 = vmatmul.f32.gmra.mxu0 %v59
  %v3420 = vpop.f32.mrf.mxu0
  %v3421 = vadd.f32 %v3209, %v3420
  %3422 = vdwg.mxu0
  %3423 = vmatpush.msra.mxu0 %v2864
  %3424 = vmatpush.msra.mxu0 %v2860
  %3425 = vmatpush.msra.mxu0 %v2856
  %3426 = vmatpush.msra.mxu0 %v2852
  %3427 = vmatpush.msra.mxu0 %v2848
  %3428 = vmatpush.msra.mxu0 %v2844
  %3429 = vmatpush.msra.mxu0 %v2840
  %3430 = vmatpush.msra.mxu0 %v2836
  %3431 = vmatpush.msra.mxu0 %v2832
  %3432 = vmatpush.msra.mxu0 %v2828
  %3433 = vmatpush.msra.mxu0 %v2824
  %3434 = vmatpush.msra.mxu0 %v2820
  %3435 = vmatpush.msra.mxu0 %v2816
  %3436 = vmatpush.msra.mxu0 %v2812
  %3437 = vmatpush.msra.mxu0 %v2808
  %3438 = vmatpush.msra.mxu0 %v2804
  %3439 = vmatmul.f32.gmra.mxu0 %v60
  %v3440 = vpop.f32.mrf.mxu0
  %v3441 = vadd.f32 %v3421, %v3440
  %3442 = vdwg.mxu0
  %3443 = vmatpush.msra.mxu0 0.0
  %3444 = vmatpush.msra.mxu0 %v3335
  %3445 = vmatpush.msra.mxu0 %v2920
  %3446 = vmatpush.msra.mxu0 %v2916
  %3447 = vmatpush.msra.mxu0 %v2912
  %3448 = vmatpush.msra.mxu0 %v2908
  %3449 = vmatpush.msra.mxu0 %v2904
  %3450 = vmatpush.msra.mxu0 %v2900
  %3451 = vmatpush.msra.mxu0 %v2896
  %3452 = vmatpush.msra.mxu0 %v2892
  %3453 = vmatpush.msra.mxu0 %v2888
  %3454 = vmatpush.msra.mxu0 %v2884
  %3455 = vmatpush.msra.mxu0 %v2880
  %3456 = vmatpush.msra.mxu0 %v2876
  %3457 = vmatpush.msra.mxu0 %v2872
  %3458 = vmatpush.msra.mxu0 %v2868
  %3459 = vmatmul.f32.gmra.mxu0 %v213
  %v3460 = vpop.f32.mrf.mxu0
  %v3461 = vadd.f32 %v3441, %v3460
  %3462 = vdwg.mxu0
  %3463 = vmatpush.msra.mxu0 %v2801
  %3464 = vmatpush.msra.mxu0 %v2797
  %3465 = vmatpush.msra.mxu0 %v2793
  %3466 = vmatpush.msra.mxu0 %v2789
  %3467 = vmatpush.msra.mxu0 %v2785
  %3468 = vmatpush.msra.mxu0 %v2781
  %3469 = vmatpush.msra.mxu0 %v2777
  %3470 = vmatpush.msra.mxu0 %v2773
  %3471 = vmatpush.msra.mxu0 %v2769
  %3472 = vmatpush.msra.mxu0 %v2765
  %3473 = vmatpush.msra.mxu0 %v2761
  %3474 = vmatpush.msra.mxu0 %v2757
  %3475 = vmatpush.msra.mxu0 %v2753
  %3476 = vmatpush.msra.mxu0 %v2749
  %3477 = vmatpush.msra.mxu0 %v2745
  %3478 = vmatpush.msra.mxu0 %v2741
  %3479 = vmatmul.f32.gmra.mxu0 %v59
  %v3480 = vpop.f32.mrf.mxu0
  %v3481 = vadd.f32 %v3269, %v3480
  %3482 = vdwg.mxu0
  %3483 = vmatpush.msra.mxu0 %v2865
  %3484 = vmatpush.msra.mxu0 %v2861
  %3485 = vmatpush.msra.mxu0 %v2857
  %3486 = vmatpush.msra.mxu0 %v2853
  %3487 = vmatpush.msra.mxu0 %v2849
  %3488 = vmatpush.msra.mxu0 %v2845
  %3489 = vmatpush.msra.mxu0 %v2841
  %3490 = vmatpush.msra.mxu0 %v2837
  %3491 = vmatpush.msra.mxu0 %v2833
  %3492 = vmatpush.msra.mxu0 %v2829
  %3493 = vmatpush.msra.mxu0 %v2825
  %3494 = vmatpush.msra.mxu0 %v2821
  %3495 = vmatpush.msra.mxu0 %v2817
  %3496 = vmatpush.msra.mxu0 %v2813
  %3497 = vmatpush.msra.mxu0 %v2809
  %3498 = vmatpush.msra.mxu0 %v2805
  %3499 = vmatmul.f32.gmra.mxu0 %v60
  %v3500 = vpop.f32.mrf.mxu0
  %v3501 = vadd.f32 %v3481, %v3500
  %3502 = vdwg.mxu0
  %3503 = vmatpush.msra.mxu0 0.0
  %3504 = vmatpush.msra.mxu0 %v3338
  %3505 = vmatpush.msra.mxu0 %v2921
  %3506 = vmatpush.msra.mxu0 %v2917
  %3507 = vmatpush.msra.mxu0 %v2913
  %3508 = vmatpush.msra.mxu0 %v2909
  %3509 = vmatpush.msra.mxu0 %v2905
  %3510 = vmatpush.msra.mxu0 %v2901
  %3511 = vmatpush.msra.mxu0 %v2897
  %3512 = vmatpush.msra.mxu0 %v2893
  %3513 = vmatpush.msra.mxu0 %v2889
  %3514 = vmatpush.msra.mxu0 %v2885
  %3515 = vmatpush.msra.mxu0 %v2881
  %3516 = vmatpush.msra.mxu0 %v2877
  %3517 = vmatpush.msra.mxu0 %v2873
  %3518 = vmatpush.msra.mxu0 %v2869
  %3519 = vmatmul.f32.gmra.mxu0 %v213
  %v3520 = vpop.f32.mrf.mxu0
  %v3521 = vadd.f32 %v3501, %v3520
  %3522 = vdwg.mxu0
  %3523 = vmatpush.msra.mxu0 %v2802
  %3524 = vmatpush.msra.mxu0 %v2798
  %3525 = vmatpush.msra.mxu0 %v2794
  %3526 = vmatpush.msra.mxu0 %v2790
  %3527 = vmatpush.msra.mxu0 %v2786
  %3528 = vmatpush.msra.mxu0 %v2782
  %3529 = vmatpush.msra.mxu0 %v2778
  %3530 = vmatpush.msra.mxu0 %v2774
  %3531 = vmatpush.msra.mxu0 %v2770
  %3532 = vmatpush.msra.mxu0 %v2766
  %3533 = vmatpush.msra.mxu0 %v2762
  %3534 = vmatpush.msra.mxu0 %v2758
  %3535 = vmatpush.msra.mxu0 %v2754
  %3536 = vmatpush.msra.mxu0 %v2750
  %3537 = vmatpush.msra.mxu0 %v2746
  %3538 = vmatpush.msra.mxu0 %v2742
  %3539 = vmatmul.f32.gmra.mxu0 %v59
  %v3540 = vpop.f32.mrf.mxu0
  %v3541 = vadd.f32 %v3329, %v3540
  %3542 = vdwg.mxu0
  %3543 = vmatpush.msra.mxu0 %v2866
  %3544 = vmatpush.msra.mxu0 %v2862
  %3545 = vmatpush.msra.mxu0 %v2858
  %3546 = vmatpush.msra.mxu0 %v2854
  %3547 = vmatpush.msra.mxu0 %v2850
  %3548 = vmatpush.msra.mxu0 %v2846
  %3549 = vmatpush.msra.mxu0 %v2842
  %3550 = vmatpush.msra.mxu0 %v2838
  %3551 = vmatpush.msra.mxu0 %v2834
  %3552 = vmatpush.msra.mxu0 %v2830
  %3553 = vmatpush.msra.mxu0 %v2826
  %3554 = vmatpush.msra.mxu0 %v2822
  %3555 = vmatpush.msra.mxu0 %v2818
  %3556 = vmatpush.msra.mxu0 %v2814
  %3557 = vmatpush.msra.mxu0 %v2810
  %3558 = vmatpush.msra.mxu0 %v2806
  %3559 = vmatmul.f32.gmra.mxu0 %v60
  %v3560 = vpop.f32.mrf.mxu0
  %v3561 = vadd.f32 %v3541, %v3560
  %3562 = vdwg.mxu0
  %3563 = vmatpush.msra.mxu0 0.0
  %3564 = vmatpush.msra.mxu0 %v3341
  %3565 = vmatpush.msra.mxu0 %v2922
  %3566 = vmatpush.msra.mxu0 %v2918
  %3567 = vmatpush.msra.mxu0 %v2914
  %3568 = vmatpush.msra.mxu0 %v2910
  %3569 = vmatpush.msra.mxu0 %v2906
  %3570 = vmatpush.msra.mxu0 %v2902
  %3571 = vmatpush.msra.mxu0 %v2898
  %3572 = vmatpush.msra.mxu0 %v2894
  %3573 = vmatpush.msra.mxu0 %v2890
  %3574 = vmatpush.msra.mxu0 %v2886
  %3575 = vmatpush.msra.mxu0 %v2882
  %3576 = vmatpush.msra.mxu0 %v2878
  %3577 = vmatpush.msra.mxu0 %v2874
  %3578 = vmatpush.msra.mxu0 %v2870
  %3579 = vmatmul.f32.gmra.mxu0 %v213
  %v3580 = vpop.f32.mrf.mxu0
  %v3581 = vadd.f32 %v3561, %v3580
  %3582 = vdwg.mxu0
  %v3583 = vld [vmem:[%s15] sm:$0xff]
  %v3584 = vld [vmem:[%s15 + $0x8] sm:$0xff]
  %v3585 = vld [vmem:[%s15 + $0x10] sm:$0xff]
  %v3586 = vld [vmem:[%s15 + $0x18] sm:$0xff]
  %v3587 = vld [vmem:[%s15 + $0x20] sm:$0xff]
  %v3588 = vld [vmem:[%s15 + $0x28] sm:$0xff]
  %v3589 = vld [vmem:[%s15 + $0x30] sm:$0xff]
  %v3590 = vld [vmem:[%s15 + $0x38] sm:$0xff]
  %v3591 = vld [vmem:[%s15 + $0x40] sm:$0xff]
  %v3592 = vld [vmem:[%s15 + $0x48] sm:$0xff]
  %v3593 = vld [vmem:[%s15 + $0x50] sm:$0xff]
  %v3594 = vld [vmem:[%s15 + $0x58] sm:$0xff]
  %v3595 = vld [vmem:[%s15 + $0x60] sm:$0xff]
  %v3596 = vld [vmem:[%s15 + $0x68] sm:$0xff]
  %v3597 = vld [vmem:[%s15 + $0x70] sm:$0xff]
  %v3598 = vld [vmem:[%s15 + $0x78] sm:$0xff]
  %v3599 = vld [vmem:[%s15 + $0x80] sm:$0xff]
  %v3600 = vld [vmem:[%s15 + $0x88] sm:$0xff]
  %v3601 = vld [vmem:[%s15 + $0x90] sm:$0xff]
  %v3602 = vld [vmem:[%s15 + $0x98] sm:$0xff]
  %v3603 = vld [vmem:[%s15 + $0xa0] sm:$0xff]
  %v3604 = vld [vmem:[%s15 + $0xa8] sm:$0xff]
  %v3605 = vld [vmem:[%s15 + $0xb0] sm:$0xff]
  %v3606 = vld [vmem:[%s15 + $0xb8] sm:$0xff]
  %v3607 = vld [vmem:[%s15 + $0xc0] sm:$0xff]
  %v3608 = vld [vmem:[%s15 + $0xc8] sm:$0xff]
  %v3609 = vld [vmem:[%s15 + $0xd0] sm:$0xff]
  %v3610 = vld [vmem:[%s15 + $0xd8] sm:$0xff]
  %v3611 = vld [vmem:[%s15 + $0xe0] sm:$0xff]
  %v3612 = vld [vmem:[%s15 + $0xe8] sm:$0xff]
  %v3613 = vld [vmem:[%s15 + $0xf0] sm:$0xff]
  %v3614 = vld [vmem:[%s15 + $0xf8] sm:$0xff]
  %v3615 = vld [vmem:[%s15 + $0x100] sm:$0xff]
  %v3616 = vld [vmem:[%s15 + $0x108] sm:$0xff]
  %v3617 = vld [vmem:[%s15 + $0x110] sm:$0xff]
  %v3618 = vld [vmem:[%s15 + $0x118] sm:$0xff]
  %v3619 = vld [vmem:[%s15 + $0x120] sm:$0xff]
  %v3620 = vld [vmem:[%s15 + $0x128] sm:$0xff]
  %v3621 = vld [vmem:[%s15 + $0x130] sm:$0xff]
  %v3622 = vld [vmem:[%s15 + $0x138] sm:$0xff]
  %v3623 = vld [vmem:[%s15 + $0x140] sm:$0xff]
  %v3624 = vld [vmem:[%s15 + $0x148] sm:$0xff]
  %v3625 = vld [vmem:[%s15 + $0x150] sm:$0xff]
  %v3626 = vld [vmem:[%s15 + $0x158] sm:$0xff]
  %v3627 = vld [vmem:[%s15 + $0x160] sm:$0xff]
  %v3628 = vld [vmem:[%s15 + $0x168] sm:$0xff]
  %v3629 = vld [vmem:[%s15 + $0x170] sm:$0xff]
  %v3630 = vld [vmem:[%s15 + $0x178] sm:$0xff]
  %v3631 = vld [vmem:[%s15 + $0x180] sm:$0xff]
  %v3632 = vld [vmem:[%s15 + $0x188] sm:$0xff]
  %v3633 = vld [vmem:[%s15 + $0x190] sm:$0xff]
  %v3634 = vld [vmem:[%s15 + $0x198] sm:$0xff]
  %v3635 = vld [vmem:[%s15 + $0x1a0] sm:$0xff]
  %v3636 = vld [vmem:[%s15 + $0x1a8] sm:$0xff]
  %v3637 = vld [vmem:[%s15 + $0x1b0] sm:$0xff]
  %v3638 = vld [vmem:[%s15 + $0x1b8] sm:$0xff]
  %v3639 = vld [vmem:[%s15 + $0x1c0] sm:$0xff]
  %v3640 = vld [vmem:[%s15 + $0x1c8] sm:$0xff]
  %v3641 = vld [vmem:[%s15 + $0x1d0] sm:$0xff]
  %v3642 = vld [vmem:[%s15 + $0x1d8] sm:$0xff]
  %v3643 = vld [vmem:[%s15 + $0x1e0] sm:$0xff]
  %v3644 = vld [vmem:[%s15 + $0x1e8] sm:$0xff]
  %v3645 = vld [vmem:[%s15 + $0x1f0] sm:$0xff]
  %v3646 = vld [vmem:[%s15 + $0x1f8] sm:$0xff]
  %v3647 = vld [vmem:[%s15 + $0x200] sm:$0xff]
  %v3648 = vld [vmem:[%s15 + $0x208] sm:$0xff]
  %v3649 = vld [vmem:[%s15 + $0x210] sm:$0xff]
  %v3650 = vld [vmem:[%s15 + $0x218] sm:$0xff]
  %v3651 = vld [vmem:[%s15 + $0x220] sm:$0xff]
  %v3652 = vld [vmem:[%s15 + $0x228] sm:$0xff]
  %v3653 = vld [vmem:[%s15 + $0x230] sm:$0xff]
  %v3654 = vld [vmem:[%s15 + $0x238] sm:$0xff]
  %v3655 = vld [vmem:[%s15 + $0x240] sm:$0xff]
  %v3656 = vld [vmem:[%s15 + $0x248] sm:$0xff]
  %v3657 = vld [vmem:[%s15 + $0x250] sm:$0xff]
  %v3658 = vld [vmem:[%s15 + $0x258] sm:$0xff]
  %v3659 = vld [vmem:[%s15 + $0x260] sm:$0xff]
  %v3660 = vld [vmem:[%s15 + $0x268] sm:$0xff]
  %v3661 = vld [vmem:[%s15 + $0x270] sm:$0xff]
  %v3662 = vld [vmem:[%s15 + $0x278] sm:$0xff]
  %v3663 = vld [vmem:[%s15 + $0x280] sm:$0xff]
  %v3664 = vld [vmem:[%s15 + $0x288] sm:$0xff]
  %v3665 = vld [vmem:[%s15 + $0x290] sm:$0xff]
  %v3666 = vld [vmem:[%s15 + $0x298] sm:$0xff]
  %vm3667 = vcmask 326656
  %v3669 = vsel %vm3667, %v1166, 0
  %3671 = vmatpush.msra.mxu0 %v3643
  %3672 = vmatpush.msra.mxu0 %v3639
  %3673 = vmatpush.msra.mxu0 %v3635
  %3674 = vmatpush.msra.mxu0 %v3631
  %3675 = vmatpush.msra.mxu0 %v3627
  %3676 = vmatpush.msra.mxu0 %v3623
  %3677 = vmatpush.msra.mxu0 %v3619
  %3678 = vmatpush.msra.mxu0 %v3615
  %3679 = vmatpush.msra.mxu0 %v3611
  %3680 = vmatpush.msra.mxu0 %v3607
  %3681 = vmatpush.msra.mxu0 %v3603
  %3682 = vmatpush.msra.mxu0 %v3599
  %3683 = vmatpush.msra.mxu0 %v3595
  %3684 = vmatpush.msra.mxu0 %v3591
  %3685 = vmatpush.msra.mxu0 %v3587
  %3686 = vmatpush.msra.mxu0 %v3583
  %3687 = vmatmul.f32.gmra.mxu0 %v1165
  %v3688 = vpop.f32.mrf.mxu0
  %v3689 = vadd.f32 0.0, %v3688
  %3690 = vdwg.mxu0
  %3691 = vmatpush.msra.mxu0 0.0
  %3692 = vmatpush.msra.mxu0 0.0
  %3693 = vmatpush.msra.mxu0 0.0
  %3694 = vmatpush.msra.mxu0 0.0
  %3695 = vmatpush.msra.mxu0 0.0
  %3696 = vmatpush.msra.mxu0 0.0
  %3697 = vmatpush.msra.mxu0 0.0
  %3698 = vmatpush.msra.mxu0 0.0
  %3699 = vmatpush.msra.mxu0 0.0
  %3700 = vmatpush.msra.mxu0 0.0
  %3701 = vmatpush.msra.mxu0 0.0
  %3702 = vmatpush.msra.mxu0 %v3663
  %3703 = vmatpush.msra.mxu0 %v3659
  %3704 = vmatpush.msra.mxu0 %v3655
  %3705 = vmatpush.msra.mxu0 %v3651
  %3706 = vmatpush.msra.mxu0 %v3647
  %3707 = vmatmul.f32.gmra.mxu0 %v3669
  %v3708 = vpop.f32.mrf.mxu0
  %v3709 = vadd.f32 %v3689, %v3708
  %3710 = vdwg.mxu0
  %3711 = vmatpush.msra.mxu0 %v3644
  %3712 = vmatpush.msra.mxu0 %v3640
  %3713 = vmatpush.msra.mxu0 %v3636
  %3714 = vmatpush.msra.mxu0 %v3632
  %3715 = vmatpush.msra.mxu0 %v3628
  %3716 = vmatpush.msra.mxu0 %v3624
  %3717 = vmatpush.msra.mxu0 %v3620
  %3718 = vmatpush.msra.mxu0 %v3616
  %3719 = vmatpush.msra.mxu0 %v3612
  %3720 = vmatpush.msra.mxu0 %v3608
  %3721 = vmatpush.msra.mxu0 %v3604
  %3722 = vmatpush.msra.mxu0 %v3600
  %3723 = vmatpush.msra.mxu0 %v3596
  %3724 = vmatpush.msra.mxu0 %v3592
  %3725 = vmatpush.msra.mxu0 %v3588
  %3726 = vmatpush.msra.mxu0 %v3584
  %3727 = vmatmul.f32.gmra.mxu0 %v1165
  %v3728 = vpop.f32.mrf.mxu0
  %v3729 = vadd.f32 0.0, %v3728
  %3730 = vdwg.mxu0
  %3731 = vmatpush.msra.mxu0 0.0
  %3732 = vmatpush.msra.mxu0 0.0
  %3733 = vmatpush.msra.mxu0 0.0
  %3734 = vmatpush.msra.mxu0 0.0
  %3735 = vmatpush.msra.mxu0 0.0
  %3736 = vmatpush.msra.mxu0 0.0
  %3737 = vmatpush.msra.mxu0 0.0
  %3738 = vmatpush.msra.mxu0 0.0
  %3739 = vmatpush.msra.mxu0 0.0
  %3740 = vmatpush.msra.mxu0 0.0
  %3741 = vmatpush.msra.mxu0 0.0
  %3742 = vmatpush.msra.mxu0 %v3664
  %3743 = vmatpush.msra.mxu0 %v3660
  %3744 = vmatpush.msra.mxu0 %v3656
  %3745 = vmatpush.msra.mxu0 %v3652
  %3746 = vmatpush.msra.mxu0 %v3648
  %3747 = vmatmul.f32.gmra.mxu0 %v3669
  %v3748 = vpop.f32.mrf.mxu0
  %v3749 = vadd.f32 %v3729, %v3748
  %3750 = vdwg.mxu0
  %3751 = vmatpush.msra.mxu0 %v3645
  %3752 = vmatpush.msra.mxu0 %v3641
  %3753 = vmatpush.msra.mxu0 %v3637
  %3754 = vmatpush.msra.mxu0 %v3633
  %3755 = vmatpush.msra.mxu0 %v3629
  %3756 = vmatpush.msra.mxu0 %v3625
  %3757 = vmatpush.msra.mxu0 %v3621
  %3758 = vmatpush.msra.mxu0 %v3617
  %3759 = vmatpush.msra.mxu0 %v3613
  %3760 = vmatpush.msra.mxu0 %v3609
  %3761 = vmatpush.msra.mxu0 %v3605
  %3762 = vmatpush.msra.mxu0 %v3601
  %3763 = vmatpush.msra.mxu0 %v3597
  %3764 = vmatpush.msra.mxu0 %v3593
  %3765 = vmatpush.msra.mxu0 %v3589
  %3766 = vmatpush.msra.mxu0 %v3585
  %3767 = vmatmul.f32.gmra.mxu0 %v1165
  %v3768 = vpop.f32.mrf.mxu0
  %v3769 = vadd.f32 0.0, %v3768
  %3770 = vdwg.mxu0
  %3771 = vmatpush.msra.mxu0 0.0
  %3772 = vmatpush.msra.mxu0 0.0
  %3773 = vmatpush.msra.mxu0 0.0
  %3774 = vmatpush.msra.mxu0 0.0
  %3775 = vmatpush.msra.mxu0 0.0
  %3776 = vmatpush.msra.mxu0 0.0
  %3777 = vmatpush.msra.mxu0 0.0
  %3778 = vmatpush.msra.mxu0 0.0
  %3779 = vmatpush.msra.mxu0 0.0
  %3780 = vmatpush.msra.mxu0 0.0
  %3781 = vmatpush.msra.mxu0 0.0
  %3782 = vmatpush.msra.mxu0 %v3665
  %3783 = vmatpush.msra.mxu0 %v3661
  %3784 = vmatpush.msra.mxu0 %v3657
  %3785 = vmatpush.msra.mxu0 %v3653
  %3786 = vmatpush.msra.mxu0 %v3649
  %3787 = vmatmul.f32.gmra.mxu0 %v3669
  %v3788 = vpop.f32.mrf.mxu0
  %v3789 = vadd.f32 %v3769, %v3788
  %3790 = vdwg.mxu0
  %3791 = vmatpush.msra.mxu0 %v3646
  %3792 = vmatpush.msra.mxu0 %v3642
  %3793 = vmatpush.msra.mxu0 %v3638
  %3794 = vmatpush.msra.mxu0 %v3634
  %3795 = vmatpush.msra.mxu0 %v3630
  %3796 = vmatpush.msra.mxu0 %v3626
  %3797 = vmatpush.msra.mxu0 %v3622
  %3798 = vmatpush.msra.mxu0 %v3618
  %3799 = vmatpush.msra.mxu0 %v3614
  %3800 = vmatpush.msra.mxu0 %v3610
  %3801 = vmatpush.msra.mxu0 %v3606
  %3802 = vmatpush.msra.mxu0 %v3602
  %3803 = vmatpush.msra.mxu0 %v3598
  %3804 = vmatpush.msra.mxu0 %v3594
  %3805 = vmatpush.msra.mxu0 %v3590
  %3806 = vmatpush.msra.mxu0 %v3586
  %3807 = vmatmul.f32.gmra.mxu0 %v1165
  %v3808 = vpop.f32.mrf.mxu0
  %v3809 = vadd.f32 0.0, %v3808
  %3810 = vdwg.mxu0
  %3811 = vmatpush.msra.mxu0 0.0
  %3812 = vmatpush.msra.mxu0 0.0
  %3813 = vmatpush.msra.mxu0 0.0
  %3814 = vmatpush.msra.mxu0 0.0
  %3815 = vmatpush.msra.mxu0 0.0
  %3816 = vmatpush.msra.mxu0 0.0
  %3817 = vmatpush.msra.mxu0 0.0
  %3818 = vmatpush.msra.mxu0 0.0
  %3819 = vmatpush.msra.mxu0 0.0
  %3820 = vmatpush.msra.mxu0 0.0
  %3821 = vmatpush.msra.mxu0 0.0
  %3822 = vmatpush.msra.mxu0 %v3666
  %3823 = vmatpush.msra.mxu0 %v3662
  %3824 = vmatpush.msra.mxu0 %v3658
  %3825 = vmatpush.msra.mxu0 %v3654
  %3826 = vmatpush.msra.mxu0 %v3650
  %3827 = vmatmul.f32.gmra.mxu0 %v3669
  %v3828 = vpop.f32.mrf.mxu0
  %v3829 = vadd.f32 %v3809, %v3828
  %3830 = vdwg.mxu0
  %v3831 = vadd.f32 %v3401, %v3709
  %v3832 = vadd.f32 %v3461, %v3749
  %v3833 = vadd.f32 %v3521, %v3789
  %v3834 = vadd.f32 %v3581, %v3829
  %v3835 = vld [vmem:[%s16] sm:$0xff]
  %v3836 = vld [vmem:[%s16 + $0x8] sm:$0xff]
  %v3837 = vld [vmem:[%s16 + $0x10] sm:$0xff]
  %v3838 = vld [vmem:[%s16 + $0x18] sm:$0xff]
  %v3839 = vld [vmem:[%s16 + $0x20] sm:$0xff]
  %v3840 = vld [vmem:[%s16 + $0x28] sm:$0xff]
  %v3841 = vld [vmem:[%s16 + $0x30] sm:$0xff]
  %v3842 = vld [vmem:[%s16 + $0x38] sm:$0xff]
  %v3843 = vld [vmem:[%s16 + $0x40] sm:$0xff]
  %v3844 = vld [vmem:[%s16 + $0x48] sm:$0xff]
  %v3845 = vld [vmem:[%s16 + $0x50] sm:$0xff]
  %v3846 = vld [vmem:[%s16 + $0x58] sm:$0xff]
  %v3847 = vld [vmem:[%s16 + $0x60] sm:$0xff]
  %v3848 = vld [vmem:[%s16 + $0x68] sm:$0xff]
  %v3849 = vld [vmem:[%s16 + $0x70] sm:$0xff]
  %v3850 = vld [vmem:[%s16 + $0x78] sm:$0xff]
  %v3851 = vld [vmem:[%s16 + $0x80] sm:$0xff]
  %v3852 = vld [vmem:[%s16 + $0x88] sm:$0xff]
  %v3853 = vld [vmem:[%s16 + $0x90] sm:$0xff]
  %v3854 = vld [vmem:[%s16 + $0x98] sm:$0xff]
  %v3855 = vld [vmem:[%s16 + $0xa0] sm:$0xff]
  %v3856 = vld [vmem:[%s16 + $0xa8] sm:$0xff]
  %v3857 = vld [vmem:[%s16 + $0xb0] sm:$0xff]
  %v3858 = vld [vmem:[%s16 + $0xb8] sm:$0xff]
  %v3859 = vld [vmem:[%s16 + $0xc0] sm:$0xff]
  %v3860 = vld [vmem:[%s16 + $0xc8] sm:$0xff]
  %v3861 = vld [vmem:[%s16 + $0xd0] sm:$0xff]
  %v3862 = vld [vmem:[%s16 + $0xd8] sm:$0xff]
  %v3863 = vld [vmem:[%s16 + $0xe0] sm:$0xff]
  %v3864 = vld [vmem:[%s16 + $0xe8] sm:$0xff]
  %v3865 = vld [vmem:[%s16 + $0xf0] sm:$0xff]
  %v3866 = vld [vmem:[%s16 + $0xf8] sm:$0xff]
  %v3867 = vld [vmem:[%s16 + $0x100] sm:$0xff]
  %v3868 = vld [vmem:[%s16 + $0x108] sm:$0xff]
  %v3869 = vld [vmem:[%s16 + $0x110] sm:$0xff]
  %v3870 = vld [vmem:[%s16 + $0x118] sm:$0xff]
  %v3871 = vld [vmem:[%s16 + $0x120] sm:$0xff]
  %v3872 = vld [vmem:[%s16 + $0x128] sm:$0xff]
  %v3873 = vld [vmem:[%s16 + $0x130] sm:$0xff]
  %v3874 = vld [vmem:[%s16 + $0x138] sm:$0xff]
  %v3875 = vld [vmem:[%s16 + $0x140] sm:$0xff]
  %v3876 = vld [vmem:[%s16 + $0x148] sm:$0xff]
  %v3877 = vld [vmem:[%s16 + $0x150] sm:$0xff]
  %v3878 = vld [vmem:[%s16 + $0x158] sm:$0xff]
  %v3879 = vld [vmem:[%s16 + $0x160] sm:$0xff]
  %v3880 = vld [vmem:[%s16 + $0x168] sm:$0xff]
  %v3881 = vld [vmem:[%s16 + $0x170] sm:$0xff]
  %v3882 = vld [vmem:[%s16 + $0x178] sm:$0xff]
  %v3883 = vld [vmem:[%s16 + $0x180] sm:$0xff]
  %v3884 = vld [vmem:[%s16 + $0x188] sm:$0xff]
  %v3885 = vld [vmem:[%s16 + $0x190] sm:$0xff]
  %v3886 = vld [vmem:[%s16 + $0x198] sm:$0xff]
  %v3887 = vld [vmem:[%s16 + $0x1a0] sm:$0xff]
  %v3888 = vld [vmem:[%s16 + $0x1a8] sm:$0xff]
  %v3889 = vld [vmem:[%s16 + $0x1b0] sm:$0xff]
  %v3890 = vld [vmem:[%s16 + $0x1b8] sm:$0xff]
  %v3891 = vld [vmem:[%s16 + $0x1c0] sm:$0xff]
  %v3892 = vld [vmem:[%s16 + $0x1c8] sm:$0xff]
  %v3893 = vld [vmem:[%s16 + $0x1d0] sm:$0xff]
  %v3894 = vld [vmem:[%s16 + $0x1d8] sm:$0xff]
  %v3895 = vld [vmem:[%s16 + $0x1e0] sm:$0xff]
  %v3896 = vld [vmem:[%s16 + $0x1e8] sm:$0xff]
  %v3897 = vld [vmem:[%s16 + $0x1f0] sm:$0xff]
  %v3898 = vld [vmem:[%s16 + $0x1f8] sm:$0xff]
  %v3899 = vld [vmem:[%s16 + $0x200] sm:$0xff]
  %v3900 = vld [vmem:[%s16 + $0x208] sm:$0xff]
  %v3901 = vld [vmem:[%s16 + $0x210] sm:$0xff]
  %v3902 = vld [vmem:[%s16 + $0x218] sm:$0xff]
  %v3903 = vld [vmem:[%s16 + $0x220] sm:$0xff]
  %v3904 = vld [vmem:[%s16 + $0x228] sm:$0xff]
  %v3905 = vld [vmem:[%s16 + $0x230] sm:$0xff]
  %v3906 = vld [vmem:[%s16 + $0x238] sm:$0xff]
  %v3907 = vld [vmem:[%s16 + $0x240] sm:$0xff]
  %v3908 = vld [vmem:[%s16 + $0x248] sm:$0xff]
  %v3909 = vld [vmem:[%s16 + $0x250] sm:$0xff]
  %v3910 = vld [vmem:[%s16 + $0x258] sm:$0xff]
  %v3911 = vld [vmem:[%s16 + $0x260] sm:$0xff]
  %v3912 = vld [vmem:[%s16 + $0x268] sm:$0xff]
  %v3913 = vld [vmem:[%s16 + $0x270] sm:$0xff]
  %v3914 = vld [vmem:[%s16 + $0x278] sm:$0xff]
  %v3915 = vld [vmem:[%s16 + $0x280] sm:$0xff]
  %v3916 = vld [vmem:[%s16 + $0x288] sm:$0xff]
  %v3917 = vld [vmem:[%s16 + $0x290] sm:$0xff]
  %v3918 = vld [vmem:[%s16 + $0x298] sm:$0xff]
  %v3919 = vld [vmem:[%s16 + $0x2a0] sm:$0xff]
  %v3920 = vld [vmem:[%s16 + $0x2a8] sm:$0xff]
  %v3921 = vld [vmem:[%s16 + $0x2b0] sm:$0xff]
  %v3922 = vld [vmem:[%s16 + $0x2b8] sm:$0xff]
  %v3923 = vld [vmem:[%s16 + $0x2c0] sm:$0xff]
  %v3924 = vld [vmem:[%s16 + $0x2c8] sm:$0xff]
  %v3925 = vld [vmem:[%s16 + $0x2d0] sm:$0xff]
  %v3926 = vld [vmem:[%s16 + $0x2d8] sm:$0xff]
  %v3927 = vld [vmem:[%s16 + $0x2e0] sm:$0xff]
  %v3928 = vld [vmem:[%s16 + $0x2e8] sm:$0xff]
  %v3929 = vld [vmem:[%s16 + $0x2f0] sm:$0xff]
  %v3930 = vld [vmem:[%s16 + $0x2f8] sm:$0xff]
  %v3931 = vld [vmem:[%s16 + $0x300] sm:$0xff]
  %v3932 = vld [vmem:[%s16 + $0x308] sm:$0xff]
  %v3933 = vld [vmem:[%s16 + $0x310] sm:$0xff]
  %v3934 = vld [vmem:[%s16 + $0x318] sm:$0xff]
  %v3935 = vld [vmem:[%s16 + $0x320] sm:$0xff]
  %v3936 = vld [vmem:[%s16 + $0x328] sm:$0xff]
  %v3937 = vld [vmem:[%s16 + $0x330] sm:$0xff]
  %v3938 = vld [vmem:[%s16 + $0x338] sm:$0xff]
  %v3939 = vld [vmem:[%s16 + $0x340] sm:$0xff]
  %v3940 = vld [vmem:[%s16 + $0x348] sm:$0xff]
  %v3941 = vld [vmem:[%s16 + $0x350] sm:$0xff]
  %v3942 = vld [vmem:[%s16 + $0x358] sm:$0xff]
  %v3943 = vld [vmem:[%s16 + $0x360] sm:$0xff]
  %v3944 = vld [vmem:[%s16 + $0x368] sm:$0xff]
  %v3945 = vld [vmem:[%s16 + $0x370] sm:$0xff]
  %v3946 = vld [vmem:[%s16 + $0x378] sm:$0xff]
  %v3947 = vld [vmem:[%s16 + $0x380] sm:$0xff]
  %v3948 = vld [vmem:[%s16 + $0x388] sm:$0xff]
  %v3949 = vld [vmem:[%s16 + $0x390] sm:$0xff]
  %v3950 = vld [vmem:[%s16 + $0x398] sm:$0xff]
  %v3951 = vld [vmem:[%s16 + $0x3a0] sm:$0xff]
  %v3952 = vld [vmem:[%s16 + $0x3a8] sm:$0xff]
  %v3953 = vld [vmem:[%s16 + $0x3b0] sm:$0xff]
  %v3954 = vld [vmem:[%s16 + $0x3b8] sm:$0xff]
  %v3955 = vld [vmem:[%s16 + $0x3c0] sm:$0xff]
  %v3956 = vld [vmem:[%s16 + $0x3c8] sm:$0xff]
  %v3957 = vld [vmem:[%s16 + $0x3d0] sm:$0xff]
  %v3958 = vld [vmem:[%s16 + $0x3d8] sm:$0xff]
  %v3959 = vld [vmem:[%s16 + $0x3e0] sm:$0xf]
  %v3960 = vld [vmem:[%s16 + $0x3e8] sm:$0xf]
  %v3961 = vld [vmem:[%s16 + $0x3f0] sm:$0xf]
  %v3962 = vld [vmem:[%s16 + $0x3f8] sm:$0xf]
  %vm3963 = vcmask 1014784
  %v3965 = vsel %vm3963, %v2738, 0
  %v3968 = vsel %vm998, %v3959, 0
  %v3971 = vsel %vm998, %v3960, 0
  %v3974 = vsel %vm998, %v3961, 0
  %v3977 = vsel %vm998, %v3962, 0
  %3979 = vmatpush.msra.mxu0 %v3895
  %3980 = vmatpush.msra.mxu0 %v3891
  %3981 = vmatpush.msra.mxu0 %v3887
  %3982 = vmatpush.msra.mxu0 %v3883
  %3983 = vmatpush.msra.mxu0 %v3879
  %3984 = vmatpush.msra.mxu0 %v3875
  %3985 = vmatpush.msra.mxu0 %v3871
  %3986 = vmatpush.msra.mxu0 %v3867
  %3987 = vmatpush.msra.mxu0 %v3863
  %3988 = vmatpush.msra.mxu0 %v3859
  %3989 = vmatpush.msra.mxu0 %v3855
  %3990 = vmatpush.msra.mxu0 %v3851
  %3991 = vmatpush.msra.mxu0 %v3847
  %3992 = vmatpush.msra.mxu0 %v3843
  %3993 = vmatpush.msra.mxu0 %v3839
  %3994 = vmatpush.msra.mxu0 %v3835
  %3995 = vmatmul.f32.gmra.mxu0 %v2737
  %v3996 = vpop.f32.mrf.mxu0
  %v3997 = vadd.f32 0.0, %v3996
  %3998 = vdwg.mxu0
  %3999 = vmatpush.msra.mxu0 %v3968
  %4000 = vmatpush.msra.mxu0 %v3955
  %4001 = vmatpush.msra.mxu0 %v3951
  %4002 = vmatpush.msra.mxu0 %v3947
  %4003 = vmatpush.msra.mxu0 %v3943
  %4004 = vmatpush.msra.mxu0 %v3939
  %4005 = vmatpush.msra.mxu0 %v3935
  %4006 = vmatpush.msra.mxu0 %v3931
  %4007 = vmatpush.msra.mxu0 %v3927
  %4008 = vmatpush.msra.mxu0 %v3923
  %4009 = vmatpush.msra.mxu0 %v3919
  %4010 = vmatpush.msra.mxu0 %v3915
  %4011 = vmatpush.msra.mxu0 %v3911
  %4012 = vmatpush.msra.mxu0 %v3907
  %4013 = vmatpush.msra.mxu0 %v3903
  %4014 = vmatpush.msra.mxu0 %v3899
  %4015 = vmatmul.f32.gmra.mxu0 %v3965
  %v4016 = vpop.f32.mrf.mxu0
  %v4017 = vadd.f32 %v3997, %v4016
  %4018 = vdwg.mxu0
  %4019 = vmatpush.msra.mxu0 %v3896
  %4020 = vmatpush.msra.mxu0 %v3892
  %4021 = vmatpush.msra.mxu0 %v3888
  %4022 = vmatpush.msra.mxu0 %v3884
  %4023 = vmatpush.msra.mxu0 %v3880
  %4024 = vmatpush.msra.mxu0 %v3876
  %4025 = vmatpush.msra.mxu0 %v3872
  %4026 = vmatpush.msra.mxu0 %v3868
  %4027 = vmatpush.msra.mxu0 %v3864
  %4028 = vmatpush.msra.mxu0 %v3860
  %4029 = vmatpush.msra.mxu0 %v3856
  %4030 = vmatpush.msra.mxu0 %v3852
  %4031 = vmatpush.msra.mxu0 %v3848
  %4032 = vmatpush.msra.mxu0 %v3844
  %4033 = vmatpush.msra.mxu0 %v3840
  %4034 = vmatpush.msra.mxu0 %v3836
  %4035 = vmatmul.f32.gmra.mxu0 %v2737
  %v4036 = vpop.f32.mrf.mxu0
  %v4037 = vadd.f32 0.0, %v4036
  %4038 = vdwg.mxu0
  %4039 = vmatpush.msra.mxu0 %v3971
  %4040 = vmatpush.msra.mxu0 %v3956
  %4041 = vmatpush.msra.mxu0 %v3952
  %4042 = vmatpush.msra.mxu0 %v3948
  %4043 = vmatpush.msra.mxu0 %v3944
  %4044 = vmatpush.msra.mxu0 %v3940
  %4045 = vmatpush.msra.mxu0 %v3936
  %4046 = vmatpush.msra.mxu0 %v3932
  %4047 = vmatpush.msra.mxu0 %v3928
  %4048 = vmatpush.msra.mxu0 %v3924
  %4049 = vmatpush.msra.mxu0 %v3920
  %4050 = vmatpush.msra.mxu0 %v3916
  %4051 = vmatpush.msra.mxu0 %v3912
  %4052 = vmatpush.msra.mxu0 %v3908
  %4053 = vmatpush.msra.mxu0 %v3904
  %4054 = vmatpush.msra.mxu0 %v3900
  %4055 = vmatmul.f32.gmra.mxu0 %v3965
  %v4056 = vpop.f32.mrf.mxu0
  %v4057 = vadd.f32 %v4037, %v4056
  %4058 = vdwg.mxu0
  %4059 = vmatpush.msra.mxu0 %v3897
  %4060 = vmatpush.msra.mxu0 %v3893
  %4061 = vmatpush.msra.mxu0 %v3889
  %4062 = vmatpush.msra.mxu0 %v3885
  %4063 = vmatpush.msra.mxu0 %v3881
  %4064 = vmatpush.msra.mxu0 %v3877
  %4065 = vmatpush.msra.mxu0 %v3873
  %4066 = vmatpush.msra.mxu0 %v3869
  %4067 = vmatpush.msra.mxu0 %v3865
  %4068 = vmatpush.msra.mxu0 %v3861
  %4069 = vmatpush.msra.mxu0 %v3857
  %4070 = vmatpush.msra.mxu0 %v3853
  %4071 = vmatpush.msra.mxu0 %v3849
  %4072 = vmatpush.msra.mxu0 %v3845
  %4073 = vmatpush.msra.mxu0 %v3841
  %4074 = vmatpush.msra.mxu0 %v3837
  %4075 = vmatmul.f32.gmra.mxu0 %v2737
  %v4076 = vpop.f32.mrf.mxu0
  %v4077 = vadd.f32 0.0, %v4076
  %4078 = vdwg.mxu0
  %4079 = vmatpush.msra.mxu0 %v3974
  %4080 = vmatpush.msra.mxu0 %v3957
  %4081 = vmatpush.msra.mxu0 %v3953
  %4082 = vmatpush.msra.mxu0 %v3949
  %4083 = vmatpush.msra.mxu0 %v3945
  %4084 = vmatpush.msra.mxu0 %v3941
  %4085 = vmatpush.msra.mxu0 %v3937
  %4086 = vmatpush.msra.mxu0 %v3933
  %4087 = vmatpush.msra.mxu0 %v3929
  %4088 = vmatpush.msra.mxu0 %v3925
  %4089 = vmatpush.msra.mxu0 %v3921
  %4090 = vmatpush.msra.mxu0 %v3917
  %4091 = vmatpush.msra.mxu0 %v3913
  %4092 = vmatpush.msra.mxu0 %v3909
  %4093 = vmatpush.msra.mxu0 %v3905
  %4094 = vmatpush.msra.mxu0 %v3901
  %4095 = vmatmul.f32.gmra.mxu0 %v3965
  %v4096 = vpop.f32.mrf.mxu0
  %v4097 = vadd.f32 %v4077, %v4096
  %4098 = vdwg.mxu0
  %4099 = vmatpush.msra.mxu0 %v3898
  %4100 = vmatpush.msra.mxu0 %v3894
  %4101 = vmatpush.msra.mxu0 %v3890
  %4102 = vmatpush.msra.mxu0 %v3886
  %4103 = vmatpush.msra.mxu0 %v3882
  %4104 = vmatpush.msra.mxu0 %v3878
  %4105 = vmatpush.msra.mxu0 %v3874
  %4106 = vmatpush.msra.mxu0 %v3870
  %4107 = vmatpush.msra.mxu0 %v3866
  %4108 = vmatpush.msra.mxu0 %v3862
  %4109 = vmatpush.msra.mxu0 %v3858
  %4110 = vmatpush.msra.mxu0 %v3854
  %4111 = vmatpush.msra.mxu0 %v3850
  %4112 = vmatpush.msra.mxu0 %v3846
  %4113 = vmatpush.msra.mxu0 %v3842
  %4114 = vmatpush.msra.mxu0 %v3838
  %4115 = vmatmul.f32.gmra.mxu0 %v2737
  %v4116 = vpop.f32.mrf.mxu0
  %v4117 = vadd.f32 0.0, %v4116
  %4118 = vdwg.mxu0
  %4119 = vmatpush.msra.mxu0 %v3977
  %4120 = vmatpush.msra.mxu0 %v3958
  %4121 = vmatpush.msra.mxu0 %v3954
  %4122 = vmatpush.msra.mxu0 %v3950
  %4123 = vmatpush.msra.mxu0 %v3946
  %4124 = vmatpush.msra.mxu0 %v3942
  %4125 = vmatpush.msra.mxu0 %v3938
  %4126 = vmatpush.msra.mxu0 %v3934
  %4127 = vmatpush.msra.mxu0 %v3930
  %4128 = vmatpush.msra.mxu0 %v3926
  %4129 = vmatpush.msra.mxu0 %v3922
  %4130 = vmatpush.msra.mxu0 %v3918
  %4131 = vmatpush.msra.mxu0 %v3914
  %4132 = vmatpush.msra.mxu0 %v3910
  %4133 = vmatpush.msra.mxu0 %v3906
  %4134 = vmatpush.msra.mxu0 %v3902
  %4135 = vmatmul.f32.gmra.mxu0 %v3965
  %v4136 = vpop.f32.mrf.mxu0
  %v4137 = vadd.f32 %v4117, %v4136
  %4138 = vdwg.mxu0
  %v4139 = vadd.f32 %v3831, %v4017
  %v4140 = vadd.f32 %v3832, %v4057
  %v4141 = vadd.f32 %v3833, %v4097
  %v4142 = vadd.f32 %v3834, %v4137
  %v4143 = vld [vmem:[%s17] sm:$0xf]
  %v4145 = vperm.slane %v4143, 0
  %v4146 = vperm.slane %v4143, 1
  %v4147 = vperm.slane %v4143, 2
  %v4148 = vperm.slane %v4143, 3
  %v4153 = vadd.f32 %v4139, %v4145
  %v4154 = vadd.f32 %v4140, %v4146
  %v4155 = vadd.f32 %v4141, %v4147
  %v4156 = vadd.f32 %v4142, %v4148
  %4157 = vst [vmem:[%s18] sm:$0xff] %v4153
  %4158 = vst [vmem:[%s18 + $0x8] sm:$0xff] %v4154
  %4159 = vst [vmem:[%s18 + $0x10] sm:$0xff] %v4155
  %4160 = vst [vmem:[%s18 + $0x18] sm:$0xff] %v4156
  // Predicated region
  $region74: #{feature_mining_forward.2} parent=0 // pred_check
    _
  $region75: #{feature_mining_forward.2} parent=0 // pred_check_branch
    %4162 = sbr.rel (0) target = $region77
  $region76: #{feature_mining_forward.2} parent=0 // pred_region
    _
  $region77: #{feature_mining_forward.2} parent=0 // pred_fallthru
    _
  // Predicated region
  $region78: #{feature_mining_forward.2} parent=0 // pred_check
    _
  $region79: #{feature_mining_forward.2} parent=0 // pred_check_branch
    %4164 = sbr.rel (0) target = $region81
  $region80: #{feature_mining_forward.2} parent=0 // pred_region
    _
  $region81: #{feature_mining_forward.2} parent=0 // pred_fallthru
    _

// kernel: feature_mining_forward.3
$region0: #{feature_mining_forward.3}
  #allocation0 [shape = 'u32[]', space=smem, size = 0x4, offset = 0x4, fixed_abs, tag = 'smem constant byte address 0x4 - core index']
  #allocation1 [shape = 'u32[72,128]{1,0:T(1,128)}', space=vmem, size = 0x9000, scoped, tag = 'internal scratch']
  #allocation2 [shape = 'f32[3,2,128]{2,1,0:T(2,128)}', space=vmem, size = 0xc00, scoped, tag = 'scratch operand']
  #allocation3 [shape = 'f32[3,2,128]{2,1,0:T(2,128)}', space=vmem, size = 0xc00, scoped, tag = 'scratch operand']
  %s0 = inlined_call_operand.vmem [shape: f32[4,2,512], index: 0, kind: input, shape index: {}]
  %s1 = inlined_call_operand.vmem [shape: f32[128,512], index: 1, kind: input, shape index: {}]
  %s2 = inlined_call_operand.vmem [shape: f32[128,512], index: 2, kind: input, shape index: {}]
  %s3 = inlined_call_operand.vmem [shape: f32[128,512], index: 3, kind: input, shape index: {}]
  %s4 = inlined_call_operand.vmem [shape: f32[1,512], index: 4, kind: input, shape index: {}]
  %s5 = inlined_call_operand.vmem [shape: f32[128,512], index: 5, kind: input, shape index: {}]
  %s6 = inlined_call_operand.vmem [shape: f32[128,512], index: 6, kind: input, shape index: {}]
  %s7 = inlined_call_operand.vmem [shape: f32[1,512], index: 7, kind: input, shape index: {}]
  %s8 = inlined_call_operand.vmem [shape: f32[4,2,128], index: 8, kind: output, shape index: {0}]
  %s9 = inlined_call_operand.hbm [shape: f32[3,2,128], index: 9, kind: output, shape index: {1}]
  %s10 = inlined_call_operand.hbm [shape: f32[3,2,128], index: 10, kind: output, shape index: {2}]
  %11 = xla_tuple %s8, %s9, %s10
  %s12 = sld [smem:[#allocation0]]
  $region89: #{feature_mining_forward.3} parent=0
    _
  %s14 = ssub.s32 1, %s12
  %s15 = scalar_select 0, %s14, %s12
  $region1: #{feature_mining_forward.3} parent=0
    #allocation4 [shape = 'u8[3072]{0}', space=vmem, size = 0xc00, scoped, tag = 'output window, operand 1, single buffered']
    #allocation5 [shape = 's32[2]{0}', space=sflag, size = 0x8, scoped, tag = 'scoped memory for feature_mining_forward.3']
    #allocation6 [shape = 'u8[3072]{0}', space=vmem, size = 0xc00, scoped, tag = 'output window, operand 2, single buffered']
    #allocation7 [shape = 's32[1]{0}', space=sflag, size = 0x4, scoped, tag = 'scoped memory for feature_mining_forward.3']
    %16 = vsyncpa [#allocation5], 0
    %17 = vsyncpa [#allocation7], 0
    loop: start=0, step=1, limit=6
    $region2: #{feature_mining_forward.3} parent=1 // loop_pre_header
      _
    $region3: #{feature_mining_forward.3} parent=1 // loop_header
      %s19 = sphi 0, %s23
      %p20 = scmp.ge.s32.totalorder %s19, 6
      %s29 = sphi 0, %s31
      %s32 = sphi 0, %s29
      %s33 = sphi 0, %s32
      %s49 = sphi 0, %s33
      %s53 = sphi 0, %s53
      %s55 = sphi 0, %s53
      %s56 = sphi 0, %s55
      %s70 = sphi 0, %s56
      %s74 = sphi 0, %s74
      %s76 = sphi 0, %s74
      %s77 = sphi 0, %s76
      %s91 = sphi 0, %s77
      %s95 = sphi 0, %s95
      %s97 = sphi 0, %s95
      %s98 = sphi 0, %s97
      %s112 = sphi 0, %s98
      %s116 = sphi 0, %s116
      %s118 = sphi 0, %s116
      %s119 = sphi 0, %s118
      %s133 = sphi 0, %s119
      %s137 = sphi 0, %s137
      %s139 = sphi 0, %s137
      %s140 = sphi 0, %s139
      %s154 = sphi 0, %s140
      %s158 = sphi 0, %s158
      %s160 = sphi 0, %s158
      %s161 = sphi 0, %s160
      %s175 = sphi 0, %s161
      %s179 = sphi 0, %s179
      %s181 = sphi 0, %s179
      %s182 = sphi 0, %s181
      %s196 = sphi 0, %s182
      %s202 = sphi 0, %s204
      %s205 = sphi 0, %s202
      %s206 = sphi 0, %s205
      %s222 = sphi 0, %s206
      %s226 = sphi 0, %s226
      %s228 = sphi 0, %s226
      %s229 = sphi 0, %s228
      %s243 = sphi 0, %s229
      %s247 = sphi 0, %s247
      %s249 = sphi 0, %s247
      %s250 = sphi 0, %s249
      %s264 = sphi 0, %s250
    $region4: #{feature_mining_forward.3} parent=1 // loop_header_branch
      %22 = sbr.rel (%p20) target = $region8
    $region5: #{feature_mining_forward.3} parent=1 // loop_body
      %s24 = ssub.s32 %s19, 1
      %s25 = ssub.s32 %s19, 2
      %s26 = sadd.s32 %s19, 1
      %s27 = ssub.s32 %s19, %s26
      %p28 = scmp.eq.s32.totalorder %s27, 0
      %s30 = sadd.s32 %s29, 1
      %s31 = scalar_select %p28, %s29, %s30
      %p34 = pneg %p28
      %p35 = scmp.eq.s32.totalorder %s19, 3
      %p36 = por %p34, %p35
      %p37 = scmp.ne.s32.totalorder %s29, %s32
      %p38 = scmp.eq.s32.totalorder %s19, 0
      %p39 = por %p37, %p38
      %p40 = scmp.ne.s32.totalorder %s29, %s32
      %p41 = scmp.eq.s32.totalorder %s24, 3
      %p42 = por %p40, %p41
      %p43 = scmp.ne.s32.totalorder %s32, %s33
      %p44 = scmp.eq.s32.totalorder %s24, 0
      %p45 = por %p43, %p44
      %p46 = scmp.ne.s32.totalorder %s32, %s33
      %p47 = scmp.eq.s32.totalorder %s25, 3
      %p48 = por %p46, %p47
      %p50 = scmp.ne.s32.totalorder %s33, %s49
      %p51 = scmp.eq.s32.totalorder %s25, 0
      %p52 = por %p50, %p51
      %s54 = sadd.s32 %s53, 1
      %p57 = scmp.eq.s32.totalorder %s19, 3
      %p58 = scmp.ne.s32.totalorder %s53, %s55
      %p59 = scmp.eq.s32.totalorder %s19, 0
      %p60 = por %p58, %p59
      %p61 = scmp.ne.s32.totalorder %s53, %s55
      %p62 = scmp.eq.s32.totalorder %s24, 3
      %p63 = por %p61, %p62
      %p64 = scmp.ne.s32.totalorder %s55, %s56
      %p65 = scmp.eq.s32.totalorder %s24, 0
      %p66 = por %p64, %p65
      %p67 = scmp.ne.s32.totalorder %s55, %s56
      %p68 = scmp.eq.s32.totalorder %s25, 3
      %p69 = por %p67, %p68
      %p71 = scmp.ne.s32.totalorder %s56, %s70
      %p72 = scmp.eq.s32.totalorder %s25, 0
      %p73 = por %p71, %p72
      %s75 = sadd.s32 %s74, 1
      %p78 = scmp.eq.s32.totalorder %s19, 3
      %p79 = scmp.ne.s32.totalorder %s74, %s76
      %p80 = scmp.eq.s32.totalorder %s19, 0
      %p81 = por %p79, %p80
      %p82 = scmp.ne.s32.totalorder %s74, %s76
      %p83 = scmp.eq.s32.totalorder %s24, 3
      %p84 = por %p82, %p83
      %p85 = scmp.ne.s32.totalorder %s76, %s77
      %p86 = scmp.eq.s32.totalorder %s24, 0
      %p87 = por %p85, %p86
      %p88 = scmp.ne.s32.totalorder %s76, %s77
      %p89 = scmp.eq.s32.totalorder %s25, 3
      %p90 = por %p88, %p89
      %p92 = scmp.ne.s32.totalorder %s77, %s91
      %p93 = scmp.eq.s32.totalorder %s25, 0
      %p94 = por %p92, %p93
      %s96 = sadd.s32 %s95, 1
      %p99 = scmp.eq.s32.totalorder %s19, 3
      %p100 = scmp.ne.s32.totalorder %s95, %s97
      %p101 = scmp.eq.s32.totalorder %s19, 0
      %p102 = por %p100, %p101
      %p103 = scmp.ne.s32.totalorder %s95, %s97
      %p104 = scmp.eq.s32.totalorder %s24, 3
      %p105 = por %p103, %p104
      %p106 = scmp.ne.s32.totalorder %s97, %s98
      %p107 = scmp.eq.s32.totalorder %s24, 0
      %p108 = por %p106, %p107
      %p109 = scmp.ne.s32.totalorder %s97, %s98
      %p110 = scmp.eq.s32.totalorder %s25, 3
      %p111 = por %p109, %p110
      %p113 = scmp.ne.s32.totalorder %s98, %s112
      %p114 = scmp.eq.s32.totalorder %s25, 0
      %p115 = por %p113, %p114
      %s117 = sadd.s32 %s116, 1
      %p120 = scmp.eq.s32.totalorder %s19, 3
      %p121 = scmp.ne.s32.totalorder %s116, %s118
      %p122 = scmp.eq.s32.totalorder %s19, 0
      %p123 = por %p121, %p122
      %p124 = scmp.ne.s32.totalorder %s116, %s118
      %p125 = scmp.eq.s32.totalorder %s24, 3
      %p126 = por %p124, %p125
      %p127 = scmp.ne.s32.totalorder %s118, %s119
      %p128 = scmp.eq.s32.totalorder %s24, 0
      %p129 = por %p127, %p128
      %p130 = scmp.ne.s32.totalorder %s118, %s119
      %p131 = scmp.eq.s32.totalorder %s25, 3
      %p132 = por %p130, %p131
      %p134 = scmp.ne.s32.totalorder %s119, %s133
      %p135 = scmp.eq.s32.totalorder %s25, 0
      %p136 = por %p134, %p135
      %s138 = sadd.s32 %s137, 1
      %p141 = scmp.eq.s32.totalorder %s19, 3
      %p142 = scmp.ne.s32.totalorder %s137, %s139
      %p143 = scmp.eq.s32.totalorder %s19, 0
      %p144 = por %p142, %p143
      %p145 = scmp.ne.s32.totalorder %s137, %s139
      %p146 = scmp.eq.s32.totalorder %s24, 3
      %p147 = por %p145, %p146
      %p148 = scmp.ne.s32.totalorder %s139, %s140
      %p149 = scmp.eq.s32.totalorder %s24, 0
      %p150 = por %p148, %p149
      %p151 = scmp.ne.s32.totalorder %s139, %s140
      %p152 = scmp.eq.s32.totalorder %s25, 3
      %p153 = por %p151, %p152
      %p155 = scmp.ne.s32.totalorder %s140, %s154
      %p156 = scmp.eq.s32.totalorder %s25, 0
      %p157 = por %p155, %p156
      %s159 = sadd.s32 %s158, 1
      %p162 = scmp.eq.s32.totalorder %s19, 3
      %p163 = scmp.ne.s32.totalorder %s158, %s160
      %p164 = scmp.eq.s32.totalorder %s19, 0
      %p165 = por %p163, %p164
      %p166 = scmp.ne.s32.totalorder %s158, %s160
      %p167 = scmp.eq.s32.totalorder %s24, 3
      %p168 = por %p166, %p167
      %p169 = scmp.ne.s32.totalorder %s160, %s161
      %p170 = scmp.eq.s32.totalorder %s24, 0
      %p171 = por %p169, %p170
      %p172 = scmp.ne.s32.totalorder %s160, %s161
      %p173 = scmp.eq.s32.totalorder %s25, 3
      %p174 = por %p172, %p173
      %p176 = scmp.ne.s32.totalorder %s161, %s175
      %p177 = scmp.eq.s32.totalorder %s25, 0
      %p178 = por %p176, %p177
      %s180 = sadd.s32 %s179, 1
      %p183 = scmp.eq.s32.totalorder %s19, 3
      %p184 = scmp.ne.s32.totalorder %s179, %s181
      %p185 = scmp.eq.s32.totalorder %s19, 0
      %p186 = por %p184, %p185
      %p187 = scmp.ne.s32.totalorder %s179, %s181
      %p188 = scmp.eq.s32.totalorder %s24, 3
      %p189 = por %p187, %p188
      %p190 = scmp.ne.s32.totalorder %s181, %s182
      %p191 = scmp.eq.s32.totalorder %s24, 0
      %p192 = por %p190, %p191
      %p193 = scmp.ne.s32.totalorder %s181, %s182
      %p194 = scmp.eq.s32.totalorder %s25, 3
      %p195 = por %p193, %p194
      %p197 = scmp.ne.s32.totalorder %s182, %s196
      %p198 = scmp.eq.s32.totalorder %s25, 0
      %p199 = por %p197, %p198
      %s200 = ssub.s32 %s19, %s26
      %p201 = scmp.eq.s32.totalorder %s200, 0
      %s203 = sadd.s32 %s202, 1
      %s204 = scalar_select %p201, %s202, %s203
      %p207 = pneg %p201
      %p208 = scmp.eq.s32.totalorder %s19, 3
      %p209 = por %p207, %p208
      %p210 = scmp.ne.s32.totalorder %s202, %s205
      %p211 = scmp.eq.s32.totalorder %s19, 0
      %p212 = por %p210, %p211
      %p213 = scmp.ne.s32.totalorder %s202, %s205
      %p214 = scmp.eq.s32.totalorder %s24, 3
      %p215 = por %p213, %p214
      %p216 = scmp.ne.s32.totalorder %s205, %s206
      %p217 = scmp.eq.s32.totalorder %s24, 0
      %p218 = por %p216, %p217
      %p219 = scmp.ne.s32.totalorder %s205, %s206
      %p220 = scmp.eq.s32.totalorder %s25, 3
      %p221 = por %p219, %p220
      %p223 = scmp.ne.s32.totalorder %s206, %s222
      %p224 = scmp.eq.s32.totalorder %s25, 0
      %p225 = por %p223, %p224
      %s227 = sadd.s32 %s226, 1
      %p230 = scmp.eq.s32.totalorder %s19, 3
      %p231 = scmp.ne.s32.totalorder %s226, %s228
      %p232 = scmp.eq.s32.totalorder %s19, 0
      %p233 = por %p231, %p232
      %p234 = scmp.ne.s32.totalorder %s226, %s228
      %p235 = scmp.eq.s32.totalorder %s24, 3
      %p236 = por %p234, %p235
      %p237 = scmp.ne.s32.totalorder %s228, %s229
      %p238 = scmp.eq.s32.totalorder %s24, 0
      %p239 = por %p237, %p238
      %p240 = scmp.ne.s32.totalorder %s228, %s229
      %p241 = scmp.eq.s32.totalorder %s25, 3
      %p242 = por %p240, %p241
      %p244 = scmp.ne.s32.totalorder %s229, %s243
      %p245 = scmp.eq.s32.totalorder %s25, 0
      %p246 = por %p244, %p245
      %s248 = sadd.s32 %s247, 1
      %p251 = scmp.eq.s32.totalorder %s19, 3
      %p252 = scmp.ne.s32.totalorder %s247, %s249
      %p253 = scmp.eq.s32.totalorder %s19, 0
      %p254 = por %p252, %p253
      %p255 = scmp.ne.s32.totalorder %s247, %s249
      %p256 = scmp.eq.s32.totalorder %s24, 3
      %p257 = por %p255, %p256
      %p258 = scmp.ne.s32.totalorder %s249, %s250
      %p259 = scmp.eq.s32.totalorder %s24, 0
      %p260 = por %p258, %p259
      %p261 = scmp.ne.s32.totalorder %s249, %s250
      %p262 = scmp.eq.s32.totalorder %s25, 3
      %p263 = por %p261, %p262
      %p265 = scmp.ne.s32.totalorder %s250, %s264
      %p266 = scmp.eq.s32.totalorder %s25, 0
      %p267 = por %p265, %p266
      %p268 = scmp.le.s32.totalorder 1, %s19
      %p269 = scmp.lt.s32.totalorder %s19, 5
      %p270 = pnand %p268, %p269
      %p271 = pneg %p270
      // Predicated region
      $region9: #{feature_mining_forward.3} parent=5 // pred_check
        _
      $region10: #{feature_mining_forward.3} parent=5 // pred_check_branch
        %273 = sbr.rel (%p270) target = $region12
      $region11: #{feature_mining_forward.3} parent=5 // pred_region
        %s274 = ssub.s32 %s19, 1
        // Predicated region
        $region13: #{feature_mining_forward.3} parent=11 // pred_check
          %p275 = pneg %p66
        $region14: #{feature_mining_forward.3} parent=11 // pred_check_branch
          %277 = sbr.rel (%p275) target = $region16
        $region15: #{feature_mining_forward.3} parent=11 // pred_region
          _
        $region16: #{feature_mining_forward.3} parent=11 // pred_fallthru
          _
        // Predicated region
        $region17: #{feature_mining_forward.3} parent=11 // pred_check
          %p278 = pneg %p87
        $region18: #{feature_mining_forward.3} parent=11 // pred_check_branch
          %280 = sbr.rel (%p278) target = $region20
        $region19: #{feature_mining_forward.3} parent=11 // pred_region
          _
        $region20: #{feature_mining_forward.3} parent=11 // pred_fallthru
          _
        // Predicated region
        $region21: #{feature_mining_forward.3} parent=11 // pred_check
          %p281 = pneg %p108
        $region22: #{feature_mining_forward.3} parent=11 // pred_check_branch
          %283 = sbr.rel (%p281) target = $region24
        $region23: #{feature_mining_forward.3} parent=11 // pred_region
          _
        $region24: #{feature_mining_forward.3} parent=11 // pred_fallthru
          _
        // Predicated region
        $region25: #{feature_mining_forward.3} parent=11 // pred_check
          %p284 = pneg %p129
        $region26: #{feature_mining_forward.3} parent=11 // pred_check_branch
          %286 = sbr.rel (%p284) target = $region28
        $region27: #{feature_mining_forward.3} parent=11 // pred_region
          _
        $region28: #{feature_mining_forward.3} parent=11 // pred_fallthru
          _
        // Predicated region
        $region29: #{feature_mining_forward.3} parent=11 // pred_check
          %p287 = pneg %p150
        $region30: #{feature_mining_forward.3} parent=11 // pred_check_branch
          %289 = sbr.rel (%p287) target = $region32
        $region31: #{feature_mining_forward.3} parent=11 // pred_region
          _
        $region32: #{feature_mining_forward.3} parent=11 // pred_fallthru
          _
        // Predicated region
        $region33: #{feature_mining_forward.3} parent=11 // pred_check
          %p290 = pneg %p171
        $region34: #{feature_mining_forward.3} parent=11 // pred_check_branch
          %292 = sbr.rel (%p290) target = $region36
        $region35: #{feature_mining_forward.3} parent=11 // pred_region
          _
        $region36: #{feature_mining_forward.3} parent=11 // pred_fallthru
          _
        // Predicated region
        $region37: #{feature_mining_forward.3} parent=11 // pred_check
          %p293 = pneg %p192
        $region38: #{feature_mining_forward.3} parent=11 // pred_check_branch
          %295 = sbr.rel (%p293) target = $region40
        $region39: #{feature_mining_forward.3} parent=11 // pred_region
          _
        $region40: #{feature_mining_forward.3} parent=11 // pred_fallthru
          _
      $region12: #{feature_mining_forward.3} parent=5 // pred_fallthru
        _
      %p296 = scmp.lt.s32.totalorder %s19, 4
      // Predicated region
      $region41: #{feature_mining_forward.3} parent=5 // pred_check
        %p297 = pneg %p296
      $region42: #{feature_mining_forward.3} parent=5 // pred_check_branch
        %299 = sbr.rel (%p297) target = $region44
      $region43: #{feature_mining_forward.3} parent=5 // pred_region
        // Predicated region
        $region45: #{feature_mining_forward.3} parent=43 // pred_check
          %p300 = pneg %p39
        $region46: #{feature_mining_forward.3} parent=43 // pred_check_branch
          %302 = sbr.rel (%p300) target = $region48
        $region47: #{feature_mining_forward.3} parent=43 // pred_region
          %p303 = scmp.lt.s32.totalorder %s19, 3
          %s304 = scalar_select %p303, %s19, 3
          %s305 = smul.addr %s304, 4
          %s306 = smul.addr %s305, 2
          %s307 = scalar_lea.vmem %s0, %s306
        $region48: #{feature_mining_forward.3} parent=43 // pred_fallthru
          _
      $region44: #{feature_mining_forward.3} parent=5 // pred_fallthru
        _
      %p308 = scmp.le.s32.totalorder 1, %s19
      %p309 = scmp.lt.s32.totalorder %s19, 5
      %p310 = pnand %p308, %p309
      %p311 = pneg %p310
      // Predicated region
      $region49: #{feature_mining_forward.3} parent=5 // pred_check
        _
      $region50: #{feature_mining_forward.3} parent=5 // pred_check_branch
        %313 = sbr.rel (%p310) target = $region52
      $region51: #{feature_mining_forward.3} parent=5 // pred_region
        %s314 = ssub.s32 %s19, 1
        %p315 = scmp.lt.s32.totalorder %s24, 3
        %s316 = scalar_select %p315, %s24, 3
        %s317 = smul.addr %s316, 4
        %s318 = smul.addr %s317, 2
        %s319 = scalar_lea.vmem %s0, %s318
        %p320 = pneg %p45
        %p321 = pneg %p42
        %p322 = pneg %p66
        %p323 = pneg %p63
        %p324 = pneg %p87
        %p325 = pneg %p84
        %p326 = pneg %p108
        %p327 = pneg %p105
        %p328 = pneg %p129
        %p329 = pneg %p126
        %p330 = pneg %p150
        %p331 = pneg %p147
        %p332 = pneg %p171
        %p333 = pneg %p168
        %p334 = pneg %p192
        %p335 = pneg %p189
        %p336 = pneg %p218
        %p337 = pneg %p215
        %p338 = scmp.lt.s32.totalorder %s24, 3
        %s339 = scalar_select %p338, %s24, 3
        %s340 = smul.addr %s339, 2
        %s341 = scalar_lea.vmem %s8, %s340
        %p342 = pneg %p239
        %p343 = pneg %p236
        %p344 = pneg %p260
        %p345 = pneg %p257
        %p346 = scmp.lt.s32.totalorder %s24, 3
        %s347 = scalar_select %p346, %s24, 3
        %s348 = smul.addr %s347, 4
        %s349 = smul.addr %s348, 2
        %s350 = scalar_lea.vmem %s0, %s349
        %p351 = scmp.lt.s32.totalorder %s24, 3
        %s352 = scalar_select %p351, %s24, 3
        %s353 = smul.addr %s352, 2
        %s354 = scalar_lea.vmem %s8, %s353
        %p355 = scmp.eq.s32.totalorder %s24, 0
        // Predicated region
        $region53: #{feature_mining_forward.3} parent=51 // pred_check
          %p356 = pneg %p355
        $region54: #{feature_mining_forward.3} parent=51 // pred_check_branch
          %358 = sbr.rel (%p356) target = $region56
        $region55: #{feature_mining_forward.3} parent=51 // pred_region
          %359 = vst [vmem:[#allocation2] sm:$0x3] 0.0
          %360 = vst [vmem:[#allocation2 + $0x2] sm:$0x3] 0.0
          %361 = vst [vmem:[#allocation2 + $0x4] sm:$0x3] 0.0
          %362 = vst [vmem:[#allocation3] sm:$0x3] 0.0
          %363 = vst [vmem:[#allocation3 + $0x2] sm:$0x3] 0.0
          %364 = vst [vmem:[#allocation3 + $0x4] sm:$0x3] 0.0
        $region56: #{feature_mining_forward.3} parent=51 // pred_fallthru
          _
        %v365 = vld [vmem:[%s350] sm:$0xff]
        %v366 = vld [vmem:[#allocation2] sm:$0x3]
        %v367 = vld [vmem:[%s1] sm:$0xff]
        %v368 = vld [vmem:[%s1 + $0x8] sm:$0xff]
        %v369 = vld [vmem:[%s1 + $0x10] sm:$0xff]
        %v370 = vld [vmem:[%s1 + $0x18] sm:$0xff]
        %v371 = vld [vmem:[%s1 + $0x20] sm:$0xff]
        %v372 = vld [vmem:[%s1 + $0x28] sm:$0xff]
        %v373 = vld [vmem:[%s1 + $0x30] sm:$0xff]
        %v374 = vld [vmem:[%s1 + $0x38] sm:$0xff]
        %v375 = vld [vmem:[%s1 + $0x40] sm:$0xff]
        %v376 = vld [vmem:[%s1 + $0x48] sm:$0xff]
        %v377 = vld [vmem:[%s1 + $0x50] sm:$0xff]
        %v378 = vld [vmem:[%s1 + $0x58] sm:$0xff]
        %v379 = vld [vmem:[%s1 + $0x60] sm:$0xff]
        %v380 = vld [vmem:[%s1 + $0x68] sm:$0xff]
        %v381 = vld [vmem:[%s1 + $0x70] sm:$0xff]
        %v382 = vld [vmem:[%s1 + $0x78] sm:$0xff]
        %v383 = vld [vmem:[%s1 + $0x80] sm:$0xff]
        %v384 = vld [vmem:[%s1 + $0x88] sm:$0xff]
        %v385 = vld [vmem:[%s1 + $0x90] sm:$0xff]
        %v386 = vld [vmem:[%s1 + $0x98] sm:$0xff]
        %v387 = vld [vmem:[%s1 + $0xa0] sm:$0xff]
        %v388 = vld [vmem:[%s1 + $0xa8] sm:$0xff]
        %v389 = vld [vmem:[%s1 + $0xb0] sm:$0xff]
        %v390 = vld [vmem:[%s1 + $0xb8] sm:$0xff]
        %v391 = vld [vmem:[%s1 + $0xc0] sm:$0xff]
        %v392 = vld [vmem:[%s1 + $0xc8] sm:$0xff]
        %v393 = vld [vmem:[%s1 + $0xd0] sm:$0xff]
        %v394 = vld [vmem:[%s1 + $0xd8] sm:$0xff]
        %v395 = vld [vmem:[%s1 + $0xe0] sm:$0xff]
        %v396 = vld [vmem:[%s1 + $0xe8] sm:$0xff]
        %v397 = vld [vmem:[%s1 + $0xf0] sm:$0xff]
        %v398 = vld [vmem:[%s1 + $0xf8] sm:$0xff]
        %v399 = vld [vmem:[%s1 + $0x100] sm:$0xff]
        %v400 = vld [vmem:[%s1 + $0x108] sm:$0xff]
        %v401 = vld [vmem:[%s1 + $0x110] sm:$0xff]
        %v402 = vld [vmem:[%s1 + $0x118] sm:$0xff]
        %v403 = vld [vmem:[%s1 + $0x120] sm:$0xff]
        %v404 = vld [vmem:[%s1 + $0x128] sm:$0xff]
        %v405 = vld [vmem:[%s1 + $0x130] sm:$0xff]
        %v406 = vld [vmem:[%s1 + $0x138] sm:$0xff]
        %v407 = vld [vmem:[%s1 + $0x140] sm:$0xff]
        %v408 = vld [vmem:[%s1 + $0x148] sm:$0xff]
        %v409 = vld [vmem:[%s1 + $0x150] sm:$0xff]
        %v410 = vld [vmem:[%s1 + $0x158] sm:$0xff]
        %v411 = vld [vmem:[%s1 + $0x160] sm:$0xff]
        %v412 = vld [vmem:[%s1 + $0x168] sm:$0xff]
        %v413 = vld [vmem:[%s1 + $0x170] sm:$0xff]
        %v414 = vld [vmem:[%s1 + $0x178] sm:$0xff]
        %v415 = vld [vmem:[%s1 + $0x180] sm:$0xff]
        %v416 = vld [vmem:[%s1 + $0x188] sm:$0xff]
        %v417 = vld [vmem:[%s1 + $0x190] sm:$0xff]
        %v418 = vld [vmem:[%s1 + $0x198] sm:$0xff]
        %v419 = vld [vmem:[%s1 + $0x1a0] sm:$0xff]
        %v420 = vld [vmem:[%s1 + $0x1a8] sm:$0xff]
        %v421 = vld [vmem:[%s1 + $0x1b0] sm:$0xff]
        %v422 = vld [vmem:[%s1 + $0x1b8] sm:$0xff]
        %v423 = vld [vmem:[%s1 + $0x1c0] sm:$0xff]
        %v424 = vld [vmem:[%s1 + $0x1c8] sm:$0xff]
        %v425 = vld [vmem:[%s1 + $0x1d0] sm:$0xff]
        %v426 = vld [vmem:[%s1 + $0x1d8] sm:$0xff]
        %v427 = vld [vmem:[%s1 + $0x1e0] sm:$0xff]
        %v428 = vld [vmem:[%s1 + $0x1e8] sm:$0xff]
        %v429 = vld [vmem:[%s1 + $0x1f0] sm:$0xff]
        %v430 = vld [vmem:[%s1 + $0x1f8] sm:$0xff]
        %431 = vmatpush.msra.mxu0 %v427
        %432 = vmatpush.msra.mxu0 %v423
        %433 = vmatpush.msra.mxu0 %v419
        %434 = vmatpush.msra.mxu0 %v415
        %435 = vmatpush.msra.mxu0 %v411
        %436 = vmatpush.msra.mxu0 %v407
        %437 = vmatpush.msra.mxu0 %v403
        %438 = vmatpush.msra.mxu0 %v399
        %439 = vmatpush.msra.mxu0 %v395
        %440 = vmatpush.msra.mxu0 %v391
        %441 = vmatpush.msra.mxu0 %v387
        %442 = vmatpush.msra.mxu0 %v383
        %443 = vmatpush.msra.mxu0 %v379
        %444 = vmatpush.msra.mxu0 %v375
        %445 = vmatpush.msra.mxu0 %v371
        %446 = vmatpush.msra.mxu0 %v367
        %447 = vmatmul.f32.gmra.mxu0 %v366
        %v448 = vpop.f32.mrf.mxu0
        %v449 = vadd.f32 0.0, %v448
        %450 = vdwg.mxu0
        %451 = vmatpush.msra.mxu0 %v428
        %452 = vmatpush.msra.mxu0 %v424
        %453 = vmatpush.msra.mxu0 %v420
        %454 = vmatpush.msra.mxu0 %v416
        %455 = vmatpush.msra.mxu0 %v412
        %456 = vmatpush.msra.mxu0 %v408
        %457 = vmatpush.msra.mxu0 %v404
        %458 = vmatpush.msra.mxu0 %v400
        %459 = vmatpush.msra.mxu0 %v396
        %460 = vmatpush.msra.mxu0 %v392
        %461 = vmatpush.msra.mxu0 %v388
        %462 = vmatpush.msra.mxu0 %v384
        %463 = vmatpush.msra.mxu0 %v380
        %464 = vmatpush.msra.mxu0 %v376
        %465 = vmatpush.msra.mxu0 %v372
        %466 = vmatpush.msra.mxu0 %v368
        %467 = vmatmul.f32.gmra.mxu0 %v366
        %v468 = vpop.f32.mrf.mxu0
        %v469 = vadd.f32 0.0, %v468
        %470 = vdwg.mxu0
        %471 = vmatpush.msra.mxu0 %v429
        %472 = vmatpush.msra.mxu0 %v425
        %473 = vmatpush.msra.mxu0 %v421
        %474 = vmatpush.msra.mxu0 %v417
        %475 = vmatpush.msra.mxu0 %v413
        %476 = vmatpush.msra.mxu0 %v409
        %477 = vmatpush.msra.mxu0 %v405
        %478 = vmatpush.msra.mxu0 %v401
        %479 = vmatpush.msra.mxu0 %v397
        %480 = vmatpush.msra.mxu0 %v393
        %481 = vmatpush.msra.mxu0 %v389
        %482 = vmatpush.msra.mxu0 %v385
        %483 = vmatpush.msra.mxu0 %v381
        %484 = vmatpush.msra.mxu0 %v377
        %485 = vmatpush.msra.mxu0 %v373
        %486 = vmatpush.msra.mxu0 %v369
        %487 = vmatmul.f32.gmra.mxu0 %v366
        %v488 = vpop.f32.mrf.mxu0
        %v489 = vadd.f32 0.0, %v488
        %490 = vdwg.mxu0
        %491 = vmatpush.msra.mxu0 %v430
        %492 = vmatpush.msra.mxu0 %v426
        %493 = vmatpush.msra.mxu0 %v422
        %494 = vmatpush.msra.mxu0 %v418
        %495 = vmatpush.msra.mxu0 %v414
        %496 = vmatpush.msra.mxu0 %v410
        %497 = vmatpush.msra.mxu0 %v406
        %498 = vmatpush.msra.mxu0 %v402
        %499 = vmatpush.msra.mxu0 %v398
        %500 = vmatpush.msra.mxu0 %v394
        %501 = vmatpush.msra.mxu0 %v390
        %502 = vmatpush.msra.mxu0 %v386
        %503 = vmatpush.msra.mxu0 %v382
        %504 = vmatpush.msra.mxu0 %v378
        %505 = vmatpush.msra.mxu0 %v374
        %506 = vmatpush.msra.mxu0 %v370
        %507 = vmatmul.f32.gmra.mxu0 %v366
        %v508 = vpop.f32.mrf.mxu0
        %v509 = vadd.f32 0.0, %v508
        %510 = vdwg.mxu0
        %v515 = vrot.slane %v469, 6
        %v516 = vrot.slane %v489, 4
        %v517 = vrot.slane %v509, 2
        %vm518 = vcmask 1041408
        %v519 = vsel %vm518, %v449, %v515
        %vm520 = vcmask 1045508
        %v521 = vsel %vm520, %v516, %v517
        %vm522 = vcmask 1043456
        %v523 = vsel %vm522, %v519, %v521
        %v525 = vadd.f32 %v365, %v523
        %v526 = vld [vmem:[#allocation3] sm:$0x3]
        %v527 = vxor.u32 %v525, 2147483648
        %v528 = vmul.f32 %v527, 1.442695
        %v529 = vpow.pop %v528
        %v530 = vadd.f32 %v529, 1.0
        %v531 = vrcp.pop %v530
        %v532 = vmul.f32 %v530, %v531
        %v533 = vsub.f32 1.0, %v532
        %v534 = vmul.f32 %v531, %v533
        %v535 = vadd.f32 %v531, %v534
        %vm536 = vweird.f32 %v530
        %vm537 = vweird.f32 %v531
        %vm538 = vmor %vm536, %vm537
        %v539 = vsel %vm538, %v531, %v535
        %v540 = vand.u32 2147483647, %v530
        %vm541 = vcmp.eq.f32.partialorder %v540, 8.507059e+37
        %v542 = vand.u32 %v530, 2147483648
        %v543 = vor.u32 1.1754944e-38, %v542
        %v544 = vsel %vm541, %v543, %v539
        %v545 = vmul.f32 1.0, %v544
        %v547 = vrot.slane %v525, 2
        %v549 = vxor.u32 %v547, 2147483648
        %v550 = vmul.f32 %v549, 1.442695
        %v551 = vpow.pop %v550
        %v552 = vadd.f32 %v551, 1.0
        %v553 = vrcp.pop %v552
        %v554 = vmul.f32 %v552, %v553
        %v555 = vsub.f32 1.0, %v554
        %v556 = vmul.f32 %v553, %v555
        %v557 = vadd.f32 %v553, %v556
        %vm558 = vweird.f32 %v552
        %vm559 = vweird.f32 %v553
        %vm560 = vmor %vm558, %vm559
        %v561 = vsel %vm560, %v553, %v557
        %v562 = vand.u32 2147483647, %v552
        %vm563 = vcmp.eq.f32.partialorder %v562, 8.507059e+37
        %v564 = vand.u32 %v552, 2147483648
        %v565 = vor.u32 1.1754944e-38, %v564
        %v566 = vsel %vm563, %v565, %v561
        %v567 = vmul.f32 1.0, %v566
        %v568 = vrot.slane %v525, 4
        %v570 = vtanh.pop %v568
        %v571 = vrot.slane %v525, 6
        %v573 = vxor.u32 %v571, 2147483648
        %v574 = vmul.f32 %v573, 1.442695
        %v575 = vpow.pop %v574
        %v576 = vadd.f32 %v575, 1.0
        %v577 = vrcp.pop %v576
        %v578 = vmul.f32 %v576, %v577
        %v579 = vsub.f32 1.0, %v578
        %v580 = vmul.f32 %v577, %v579
        %v581 = vadd.f32 %v577, %v580
        %vm582 = vweird.f32 %v576
        %vm583 = vweird.f32 %v577
        %vm584 = vmor %vm582, %vm583
        %v585 = vsel %vm584, %v577, %v581
        %v586 = vand.u32 2147483647, %v576
        %vm587 = vcmp.eq.f32.partialorder %v586, 8.507059e+37
        %v588 = vand.u32 %v576, 2147483648
        %v589 = vor.u32 1.1754944e-38, %v588
        %v590 = vsel %vm587, %v589, %v585
        %v591 = vmul.f32 1.0, %v590
        %v592 = vmul.f32 %v567, %v526
        %v593 = vmul.f32 %v545, %v570
        %v594 = vadd.f32 %v592, %v593
        %v595 = vtanh.pop %v594
        %v596 = vmul.f32 %v591, %v595
        %597 = vst [vmem:[#allocation2] sm:$0x3] %v596
        %598 = vst [vmem:[#allocation3] sm:$0x3] %v594
        %v599 = vld [vmem:[%s2] sm:$0xff]
        %v600 = vld [vmem:[%s2 + $0x8] sm:$0xff]
        %v601 = vld [vmem:[%s2 + $0x10] sm:$0xff]
        %v602 = vld [vmem:[%s2 + $0x18] sm:$0xff]
        %v603 = vld [vmem:[%s2 + $0x20] sm:$0xff]
        %v604 = vld [vmem:[%s2 + $0x28] sm:$0xff]
        %v605 = vld [vmem:[%s2 + $0x30] sm:$0xff]
        %v606 = vld [vmem:[%s2 + $0x38] sm:$0xff]
        %v607 = vld [vmem:[%s2 + $0x40] sm:$0xff]
        %v608 = vld [vmem:[%s2 + $0x48] sm:$0xff]
        %v609 = vld [vmem:[%s2 + $0x50] sm:$0xff]
        %v610 = vld [vmem:[%s2 + $0x58] sm:$0xff]
        %v611 = vld [vmem:[%s2 + $0x60] sm:$0xff]
        %v612 = vld [vmem:[%s2 + $0x68] sm:$0xff]
        %v613 = vld [vmem:[%s2 + $0x70] sm:$0xff]
        %v614 = vld [vmem:[%s2 + $0x78] sm:$0xff]
        %v615 = vld [vmem:[%s2 + $0x80] sm:$0xff]
        %v616 = vld [vmem:[%s2 + $0x88] sm:$0xff]
        %v617 = vld [vmem:[%s2 + $0x90] sm:$0xff]
        %v618 = vld [vmem:[%s2 + $0x98] sm:$0xff]
        %v619 = vld [vmem:[%s2 + $0xa0] sm:$0xff]
        %v620 = vld [vmem:[%s2 + $0xa8] sm:$0xff]
        %v621 = vld [vmem:[%s2 + $0xb0] sm:$0xff]
        %v622 = vld [vmem:[%s2 + $0xb8] sm:$0xff]
        %v623 = vld [vmem:[%s2 + $0xc0] sm:$0xff]
        %v624 = vld [vmem:[%s2 + $0xc8] sm:$0xff]
        %v625 = vld [vmem:[%s2 + $0xd0] sm:$0xff]
        %v626 = vld [vmem:[%s2 + $0xd8] sm:$0xff]
        %v627 = vld [vmem:[%s2 + $0xe0] sm:$0xff]
        %v628 = vld [vmem:[%s2 + $0xe8] sm:$0xff]
        %v629 = vld [vmem:[%s2 + $0xf0] sm:$0xff]
        %v630 = vld [vmem:[%s2 + $0xf8] sm:$0xff]
        %v631 = vld [vmem:[%s2 + $0x100] sm:$0xff]
        %v632 = vld [vmem:[%s2 + $0x108] sm:$0xff]
        %v633 = vld [vmem:[%s2 + $0x110] sm:$0xff]
        %v634 = vld [vmem:[%s2 + $0x118] sm:$0xff]
        %v635 = vld [vmem:[%s2 + $0x120] sm:$0xff]
        %v636 = vld [vmem:[%s2 + $0x128] sm:$0xff]
        %v637 = vld [vmem:[%s2 + $0x130] sm:$0xff]
        %v638 = vld [vmem:[%s2 + $0x138] sm:$0xff]
        %v639 = vld [vmem:[%s2 + $0x140] sm:$0xff]
        %v640 = vld [vmem:[%s2 + $0x148] sm:$0xff]
        %v641 = vld [vmem:[%s2 + $0x150] sm:$0xff]
        %v642 = vld [vmem:[%s2 + $0x158] sm:$0xff]
        %v643 = vld [vmem:[%s2 + $0x160] sm:$0xff]
        %v644 = vld [vmem:[%s2 + $0x168] sm:$0xff]
        %v645 = vld [vmem:[%s2 + $0x170] sm:$0xff]
        %v646 = vld [vmem:[%s2 + $0x178] sm:$0xff]
        %v647 = vld [vmem:[%s2 + $0x180] sm:$0xff]
        %v648 = vld [vmem:[%s2 + $0x188] sm:$0xff]
        %v649 = vld [vmem:[%s2 + $0x190] sm:$0xff]
        %v650 = vld [vmem:[%s2 + $0x198] sm:$0xff]
        %v651 = vld [vmem:[%s2 + $0x1a0] sm:$0xff]
        %v652 = vld [vmem:[%s2 + $0x1a8] sm:$0xff]
        %v653 = vld [vmem:[%s2 + $0x1b0] sm:$0xff]
        %v654 = vld [vmem:[%s2 + $0x1b8] sm:$0xff]
        %v655 = vld [vmem:[%s2 + $0x1c0] sm:$0xff]
        %v656 = vld [vmem:[%s2 + $0x1c8] sm:$0xff]
        %v657 = vld [vmem:[%s2 + $0x1d0] sm:$0xff]
        %v658 = vld [vmem:[%s2 + $0x1d8] sm:$0xff]
        %v659 = vld [vmem:[%s2 + $0x1e0] sm:$0xff]
        %v660 = vld [vmem:[%s2 + $0x1e8] sm:$0xff]
        %v661 = vld [vmem:[%s2 + $0x1f0] sm:$0xff]
        %v662 = vld [vmem:[%s2 + $0x1f8] sm:$0xff]
        %s663 = scalar_lea.vmem [#allocation2], 2
        %v664 = vld [vmem:[%s663] sm:$0x3]
        %v665 = vld [vmem:[%s3] sm:$0xff]
        %v666 = vld [vmem:[%s3 + $0x8] sm:$0xff]
        %v667 = vld [vmem:[%s3 + $0x10] sm:$0xff]
        %v668 = vld [vmem:[%s3 + $0x18] sm:$0xff]
        %v669 = vld [vmem:[%s3 + $0x20] sm:$0xff]
        %v670 = vld [vmem:[%s3 + $0x28] sm:$0xff]
        %v671 = vld [vmem:[%s3 + $0x30] sm:$0xff]
        %v672 = vld [vmem:[%s3 + $0x38] sm:$0xff]
        %v673 = vld [vmem:[%s3 + $0x40] sm:$0xff]
        %v674 = vld [vmem:[%s3 + $0x48] sm:$0xff]
        %v675 = vld [vmem:[%s3 + $0x50] sm:$0xff]
        %v676 = vld [vmem:[%s3 + $0x58] sm:$0xff]
        %v677 = vld [vmem:[%s3 + $0x60] sm:$0xff]
        %v678 = vld [vmem:[%s3 + $0x68] sm:$0xff]
        %v679 = vld [vmem:[%s3 + $0x70] sm:$0xff]
        %v680 = vld [vmem:[%s3 + $0x78] sm:$0xff]
        %v681 = vld [vmem:[%s3 + $0x80] sm:$0xff]
        %v682 = vld [vmem:[%s3 + $0x88] sm:$0xff]
        %v683 = vld [vmem:[%s3 + $0x90] sm:$0xff]
        %v684 = vld [vmem:[%s3 + $0x98] sm:$0xff]
        %v685 = vld [vmem:[%s3 + $0xa0] sm:$0xff]
        %v686 = vld [vmem:[%s3 + $0xa8] sm:$0xff]
        %v687 = vld [vmem:[%s3 + $0xb0] sm:$0xff]
        %v688 = vld [vmem:[%s3 + $0xb8] sm:$0xff]
        %v689 = vld [vmem:[%s3 + $0xc0] sm:$0xff]
        %v690 = vld [vmem:[%s3 + $0xc8] sm:$0xff]
        %v691 = vld [vmem:[%s3 + $0xd0] sm:$0xff]
        %v692 = vld [vmem:[%s3 + $0xd8] sm:$0xff]
        %v693 = vld [vmem:[%s3 + $0xe0] sm:$0xff]
        %v694 = vld [vmem:[%s3 + $0xe8] sm:$0xff]
        %v695 = vld [vmem:[%s3 + $0xf0] sm:$0xff]
        %v696 = vld [vmem:[%s3 + $0xf8] sm:$0xff]
        %v697 = vld [vmem:[%s3 + $0x100] sm:$0xff]
        %v698 = vld [vmem:[%s3 + $0x108] sm:$0xff]
        %v699 = vld [vmem:[%s3 + $0x110] sm:$0xff]
        %v700 = vld [vmem:[%s3 + $0x118] sm:$0xff]
        %v701 = vld [vmem:[%s3 + $0x120] sm:$0xff]
        %v702 = vld [vmem:[%s3 + $0x128] sm:$0xff]
        %v703 = vld [vmem:[%s3 + $0x130] sm:$0xff]
        %v704 = vld [vmem:[%s3 + $0x138] sm:$0xff]
        %v705 = vld [vmem:[%s3 + $0x140] sm:$0xff]
        %v706 = vld [vmem:[%s3 + $0x148] sm:$0xff]
        %v707 = vld [vmem:[%s3 + $0x150] sm:$0xff]
        %v708 = vld [vmem:[%s3 + $0x158] sm:$0xff]
        %v709 = vld [vmem:[%s3 + $0x160] sm:$0xff]
        %v710 = vld [vmem:[%s3 + $0x168] sm:$0xff]
        %v711 = vld [vmem:[%s3 + $0x170] sm:$0xff]
        %v712 = vld [vmem:[%s3 + $0x178] sm:$0xff]
        %v713 = vld [vmem:[%s3 + $0x180] sm:$0xff]
        %v714 = vld [vmem:[%s3 + $0x188] sm:$0xff]
        %v715 = vld [vmem:[%s3 + $0x190] sm:$0xff]
        %v716 = vld [vmem:[%s3 + $0x198] sm:$0xff]
        %v717 = vld [vmem:[%s3 + $0x1a0] sm:$0xff]
        %v718 = vld [vmem:[%s3 + $0x1a8] sm:$0xff]
        %v719 = vld [vmem:[%s3 + $0x1b0] sm:$0xff]
        %v720 = vld [vmem:[%s3 + $0x1b8] sm:$0xff]
        %v721 = vld [vmem:[%s3 + $0x1c0] sm:$0xff]
        %v722 = vld [vmem:[%s3 + $0x1c8] sm:$0xff]
        %v723 = vld [vmem:[%s3 + $0x1d0] sm:$0xff]
        %v724 = vld [vmem:[%s3 + $0x1d8] sm:$0xff]
        %v725 = vld [vmem:[%s3 + $0x1e0] sm:$0xff]
        %v726 = vld [vmem:[%s3 + $0x1e8] sm:$0xff]
        %v727 = vld [vmem:[%s3 + $0x1f0] sm:$0xff]
        %v728 = vld [vmem:[%s3 + $0x1f8] sm:$0xff]
        %729 = vmatpush.msra.mxu0 %v725
        %730 = vmatpush.msra.mxu0 %v721
        %731 = vmatpush.msra.mxu0 %v717
        %732 = vmatpush.msra.mxu0 %v713
        %733 = vmatpush.msra.mxu0 %v709
        %734 = vmatpush.msra.mxu0 %v705
        %735 = vmatpush.msra.mxu0 %v701
        %736 = vmatpush.msra.mxu0 %v697
        %737 = vmatpush.msra.mxu0 %v693
        %738 = vmatpush.msra.mxu0 %v689
        %739 = vmatpush.msra.mxu0 %v685
        %740 = vmatpush.msra.mxu0 %v681
        %741 = vmatpush.msra.mxu0 %v677
        %742 = vmatpush.msra.mxu0 %v673
        %743 = vmatpush.msra.mxu0 %v669
        %744 = vmatpush.msra.mxu0 %v665
        %745 = vmatmul.f32.gmra.mxu0 %v664
        %v746 = vpop.f32.mrf.mxu0
        %v747 = vadd.f32 0.0, %v746
        %748 = vdwg.mxu0
        %749 = vmatpush.msra.mxu0 %v726
        %750 = vmatpush.msra.mxu0 %v722
        %751 = vmatpush.msra.mxu0 %v718
        %752 = vmatpush.msra.mxu0 %v714
        %753 = vmatpush.msra.mxu0 %v710
        %754 = vmatpush.msra.mxu0 %v706
        %755 = vmatpush.msra.mxu0 %v702
        %756 = vmatpush.msra.mxu0 %v698
        %757 = vmatpush.msra.mxu0 %v694
        %758 = vmatpush.msra.mxu0 %v690
        %759 = vmatpush.msra.mxu0 %v686
        %760 = vmatpush.msra.mxu0 %v682
        %761 = vmatpush.msra.mxu0 %v678
        %762 = vmatpush.msra.mxu0 %v674
        %763 = vmatpush.msra.mxu0 %v670
        %764 = vmatpush.msra.mxu0 %v666
        %765 = vmatmul.f32.gmra.mxu0 %v664
        %v766 = vpop.f32.mrf.mxu0
        %v767 = vadd.f32 0.0, %v766
        %768 = vdwg.mxu0
        %769 = vmatpush.msra.mxu0 %v727
        %770 = vmatpush.msra.mxu0 %v723
        %771 = vmatpush.msra.mxu0 %v719
        %772 = vmatpush.msra.mxu0 %v715
        %773 = vmatpush.msra.mxu0 %v711
        %774 = vmatpush.msra.mxu0 %v707
        %775 = vmatpush.msra.mxu0 %v703
        %776 = vmatpush.msra.mxu0 %v699
        %777 = vmatpush.msra.mxu0 %v695
        %778 = vmatpush.msra.mxu0 %v691
        %779 = vmatpush.msra.mxu0 %v687
        %780 = vmatpush.msra.mxu0 %v683
        %781 = vmatpush.msra.mxu0 %v679
        %782 = vmatpush.msra.mxu0 %v675
        %783 = vmatpush.msra.mxu0 %v671
        %784 = vmatpush.msra.mxu0 %v667
        %785 = vmatmul.f32.gmra.mxu0 %v664
        %v786 = vpop.f32.mrf.mxu0
        %v787 = vadd.f32 0.0, %v786
        %788 = vdwg.mxu0
        %789 = vmatpush.msra.mxu0 %v728
        %790 = vmatpush.msra.mxu0 %v724
        %791 = vmatpush.msra.mxu0 %v720
        %792 = vmatpush.msra.mxu0 %v716
        %793 = vmatpush.msra.mxu0 %v712
        %794 = vmatpush.msra.mxu0 %v708
        %795 = vmatpush.msra.mxu0 %v704
        %796 = vmatpush.msra.mxu0 %v700
        %797 = vmatpush.msra.mxu0 %v696
        %798 = vmatpush.msra.mxu0 %v692
        %799 = vmatpush.msra.mxu0 %v688
        %800 = vmatpush.msra.mxu0 %v684
        %801 = vmatpush.msra.mxu0 %v680
        %802 = vmatpush.msra.mxu0 %v676
        %803 = vmatpush.msra.mxu0 %v672
        %804 = vmatpush.msra.mxu0 %v668
        %805 = vmatmul.f32.gmra.mxu0 %v664
        %v806 = vpop.f32.mrf.mxu0
        %v807 = vadd.f32 0.0, %v806
        %808 = vdwg.mxu0
        %809 = vmatpush.msra.mxu0 %v659
        %810 = vmatpush.msra.mxu0 %v655
        %811 = vmatpush.msra.mxu0 %v651
        %812 = vmatpush.msra.mxu0 %v647
        %813 = vmatpush.msra.mxu0 %v643
        %814 = vmatpush.msra.mxu0 %v639
        %815 = vmatpush.msra.mxu0 %v635
        %816 = vmatpush.msra.mxu0 %v631
        %817 = vmatpush.msra.mxu0 %v627
        %818 = vmatpush.msra.mxu0 %v623
        %819 = vmatpush.msra.mxu0 %v619
        %820 = vmatpush.msra.mxu0 %v615
        %821 = vmatpush.msra.mxu0 %v611
        %822 = vmatpush.msra.mxu0 %v607
        %823 = vmatpush.msra.mxu0 %v603
        %824 = vmatpush.msra.mxu0 %v599
        %825 = vmatmul.f32.gmra.mxu0 %v596
        %v826 = vpop.f32.mrf.mxu0
        %v827 = vadd.f32 %v747, %v826
        %828 = vdwg.mxu0
        %829 = vmatpush.msra.mxu0 %v660
        %830 = vmatpush.msra.mxu0 %v656
        %831 = vmatpush.msra.mxu0 %v652
        %832 = vmatpush.msra.mxu0 %v648
        %833 = vmatpush.msra.mxu0 %v644
        %834 = vmatpush.msra.mxu0 %v640
        %835 = vmatpush.msra.mxu0 %v636
        %836 = vmatpush.msra.mxu0 %v632
        %837 = vmatpush.msra.mxu0 %v628
        %838 = vmatpush.msra.mxu0 %v624
        %839 = vmatpush.msra.mxu0 %v620
        %840 = vmatpush.msra.mxu0 %v616
        %841 = vmatpush.msra.mxu0 %v612
        %842 = vmatpush.msra.mxu0 %v608
        %843 = vmatpush.msra.mxu0 %v604
        %844 = vmatpush.msra.mxu0 %v600
        %845 = vmatmul.f32.gmra.mxu0 %v596
        %v846 = vpop.f32.mrf.mxu0
        %v847 = vadd.f32 %v767, %v846
        %848 = vdwg.mxu0
        %849 = vmatpush.msra.mxu0 %v661
        %850 = vmatpush.msra.mxu0 %v657
        %851 = vmatpush.msra.mxu0 %v653
        %852 = vmatpush.msra.mxu0 %v649
        %853 = vmatpush.msra.mxu0 %v645
        %854 = vmatpush.msra.mxu0 %v641
        %855 = vmatpush.msra.mxu0 %v637
        %856 = vmatpush.msra.mxu0 %v633
        %857 = vmatpush.msra.mxu0 %v629
        %858 = vmatpush.msra.mxu0 %v625
        %859 = vmatpush.msra.mxu0 %v621
        %860 = vmatpush.msra.mxu0 %v617
        %861 = vmatpush.msra.mxu0 %v613
        %862 = vmatpush.msra.mxu0 %v609
        %863 = vmatpush.msra.mxu0 %v605
        %864 = vmatpush.msra.mxu0 %v601
        %865 = vmatmul.f32.gmra.mxu0 %v596
        %v866 = vpop.f32.mrf.mxu0
        %v867 = vadd.f32 %v787, %v866
        %868 = vdwg.mxu0
        %869 = vmatpush.msra.mxu0 %v662
        %870 = vmatpush.msra.mxu0 %v658
        %871 = vmatpush.msra.mxu0 %v654
        %872 = vmatpush.msra.mxu0 %v650
        %873 = vmatpush.msra.mxu0 %v646
        %874 = vmatpush.msra.mxu0 %v642
        %875 = vmatpush.msra.mxu0 %v638
        %876 = vmatpush.msra.mxu0 %v634
        %877 = vmatpush.msra.mxu0 %v630
        %878 = vmatpush.msra.mxu0 %v626
        %879 = vmatpush.msra.mxu0 %v622
        %880 = vmatpush.msra.mxu0 %v618
        %881 = vmatpush.msra.mxu0 %v614
        %882 = vmatpush.msra.mxu0 %v610
        %883 = vmatpush.msra.mxu0 %v606
        %884 = vmatpush.msra.mxu0 %v602
        %885 = vmatmul.f32.gmra.mxu0 %v596
        %v886 = vpop.f32.mrf.mxu0
        %v887 = vadd.f32 %v807, %v886
        %888 = vdwg.mxu0
        %v889 = vld [vmem:[%s4] sm:$0xf]
        %v891 = vperm.slane %v889, 0
        %v892 = vperm.slane %v889, 1
        %v893 = vperm.slane %v889, 2
        %v894 = vperm.slane %v889, 3
        %v899 = vadd.f32 %v827, %v891
        %v900 = vadd.f32 %v847, %v892
        %v901 = vadd.f32 %v867, %v893
        %v902 = vadd.f32 %v887, %v894
        %s903 = scalar_lea.vmem [#allocation3], 2
        %v904 = vld [vmem:[%s903] sm:$0x3]
        %v905 = vxor.u32 %v899, 2147483648
        %v906 = vmul.f32 %v905, 1.442695
        %v907 = vpow.pop %v906
        %v908 = vadd.f32 %v907, 1.0
        %v909 = vrcp.pop %v908
        %v910 = vmul.f32 %v908, %v909
        %v911 = vsub.f32 1.0, %v910
        %v912 = vmul.f32 %v909, %v911
        %v913 = vadd.f32 %v909, %v912
        %vm914 = vweird.f32 %v908
        %vm915 = vweird.f32 %v909
        %vm916 = vmor %vm914, %vm915
        %v917 = vsel %vm916, %v909, %v913
        %v918 = vand.u32 2147483647, %v908
        %vm919 = vcmp.eq.f32.partialorder %v918, 8.507059e+37
        %v920 = vand.u32 %v908, 2147483648
        %v921 = vor.u32 1.1754944e-38, %v920
        %v922 = vsel %vm919, %v921, %v917
        %v923 = vmul.f32 1.0, %v922
        %v924 = vxor.u32 %v900, 2147483648
        %v925 = vmul.f32 %v924, 1.442695
        %v926 = vpow.pop %v925
        %v927 = vadd.f32 %v926, 1.0
        %v928 = vrcp.pop %v927
        %v929 = vmul.f32 %v927, %v928
        %v930 = vsub.f32 1.0, %v929
        %v931 = vmul.f32 %v928, %v930
        %v932 = vadd.f32 %v928, %v931
        %vm933 = vweird.f32 %v927
        %vm934 = vweird.f32 %v928
        %vm935 = vmor %vm933, %vm934
        %v936 = vsel %vm935, %v928, %v932
        %v937 = vand.u32 2147483647, %v927
        %vm938 = vcmp.eq.f32.partialorder %v937, 8.507059e+37
        %v939 = vand.u32 %v927, 2147483648
        %v940 = vor.u32 1.1754944e-38, %v939
        %v941 = vsel %vm938, %v940, %v936
        %v942 = vmul.f32 1.0, %v941
        %v943 = vtanh.pop %v901
        %v944 = vxor.u32 %v902, 2147483648
        %v945 = vmul.f32 %v944, 1.442695
        %v946 = vpow.pop %v945
        %v947 = vadd.f32 %v946, 1.0
        %v948 = vrcp.pop %v947
        %v949 = vmul.f32 %v947, %v948
        %v950 = vsub.f32 1.0, %v949
        %v951 = vmul.f32 %v948, %v950
        %v952 = vadd.f32 %v948, %v951
        %vm953 = vweird.f32 %v947
        %vm954 = vweird.f32 %v948
        %vm955 = vmor %vm953, %vm954
        %v956 = vsel %vm955, %v948, %v952
        %v957 = vand.u32 2147483647, %v947
        %vm958 = vcmp.eq.f32.partialorder %v957, 8.507059e+37
        %v959 = vand.u32 %v947, 2147483648
        %v960 = vor.u32 1.1754944e-38, %v959
        %v961 = vsel %vm958, %v960, %v956
        %v962 = vmul.f32 1.0, %v961
        %v963 = vmul.f32 %v942, %v904
        %v964 = vmul.f32 %v923, %v943
        %v965 = vadd.f32 %v963, %v964
        %v966 = vtanh.pop %v965
        %v967 = vmul.f32 %v962, %v966
        %968 = vst [vmem:[%s663] sm:$0x3] %v967
        %969 = vst [vmem:[%s903] sm:$0x3] %v965
        %v970 = vld [vmem:[%s5] sm:$0xff]
        %v971 = vld [vmem:[%s5 + $0x8] sm:$0xff]
        %v972 = vld [vmem:[%s5 + $0x10] sm:$0xff]
        %v973 = vld [vmem:[%s5 + $0x18] sm:$0xff]
        %v974 = vld [vmem:[%s5 + $0x20] sm:$0xff]
        %v975 = vld [vmem:[%s5 + $0x28] sm:$0xff]
        %v976 = vld [vmem:[%s5 + $0x30] sm:$0xff]
        %v977 = vld [vmem:[%s5 + $0x38] sm:$0xff]
        %v978 = vld [vmem:[%s5 + $0x40] sm:$0xff]
        %v979 = vld [vmem:[%s5 + $0x48] sm:$0xff]
        %v980 = vld [vmem:[%s5 + $0x50] sm:$0xff]
        %v981 = vld [vmem:[%s5 + $0x58] sm:$0xff]
        %v982 = vld [vmem:[%s5 + $0x60] sm:$0xff]
        %v983 = vld [vmem:[%s5 + $0x68] sm:$0xff]
        %v984 = vld [vmem:[%s5 + $0x70] sm:$0xff]
        %v985 = vld [vmem:[%s5 + $0x78] sm:$0xff]
        %v986 = vld [vmem:[%s5 + $0x80] sm:$0xff]
        %v987 = vld [vmem:[%s5 + $0x88] sm:$0xff]
        %v988 = vld [vmem:[%s5 + $0x90] sm:$0xff]
        %v989 = vld [vmem:[%s5 + $0x98] sm:$0xff]
        %v990 = vld [vmem:[%s5 + $0xa0] sm:$0xff]
        %v991 = vld [vmem:[%s5 + $0xa8] sm:$0xff]
        %v992 = vld [vmem:[%s5 + $0xb0] sm:$0xff]
        %v993 = vld [vmem:[%s5 + $0xb8] sm:$0xff]
        %v994 = vld [vmem:[%s5 + $0xc0] sm:$0xff]
        %v995 = vld [vmem:[%s5 + $0xc8] sm:$0xff]
        %v996 = vld [vmem:[%s5 + $0xd0] sm:$0xff]
        %v997 = vld [vmem:[%s5 + $0xd8] sm:$0xff]
        %v998 = vld [vmem:[%s5 + $0xe0] sm:$0xff]
        %v999 = vld [vmem:[%s5 + $0xe8] sm:$0xff]
        %v1000 = vld [vmem:[%s5 + $0xf0] sm:$0xff]
        %v1001 = vld [vmem:[%s5 + $0xf8] sm:$0xff]
        %v1002 = vld [vmem:[%s5 + $0x100] sm:$0xff]
        %v1003 = vld [vmem:[%s5 + $0x108] sm:$0xff]
        %v1004 = vld [vmem:[%s5 + $0x110] sm:$0xff]
        %v1005 = vld [vmem:[%s5 + $0x118] sm:$0xff]
        %v1006 = vld [vmem:[%s5 + $0x120] sm:$0xff]
        %v1007 = vld [vmem:[%s5 + $0x128] sm:$0xff]
        %v1008 = vld [vmem:[%s5 + $0x130] sm:$0xff]
        %v1009 = vld [vmem:[%s5 + $0x138] sm:$0xff]
        %v1010 = vld [vmem:[%s5 + $0x140] sm:$0xff]
        %v1011 = vld [vmem:[%s5 + $0x148] sm:$0xff]
        %v1012 = vld [vmem:[%s5 + $0x150] sm:$0xff]
        %v1013 = vld [vmem:[%s5 + $0x158] sm:$0xff]
        %v1014 = vld [vmem:[%s5 + $0x160] sm:$0xff]
        %v1015 = vld [vmem:[%s5 + $0x168] sm:$0xff]
        %v1016 = vld [vmem:[%s5 + $0x170] sm:$0xff]
        %v1017 = vld [vmem:[%s5 + $0x178] sm:$0xff]
        %v1018 = vld [vmem:[%s5 + $0x180] sm:$0xff]
        %v1019 = vld [vmem:[%s5 + $0x188] sm:$0xff]
        %v1020 = vld [vmem:[%s5 + $0x190] sm:$0xff]
        %v1021 = vld [vmem:[%s5 + $0x198] sm:$0xff]
        %v1022 = vld [vmem:[%s5 + $0x1a0] sm:$0xff]
        %v1023 = vld [vmem:[%s5 + $0x1a8] sm:$0xff]
        %v1024 = vld [vmem:[%s5 + $0x1b0] sm:$0xff]
        %v1025 = vld [vmem:[%s5 + $0x1b8] sm:$0xff]
        %v1026 = vld [vmem:[%s5 + $0x1c0] sm:$0xff]
        %v1027 = vld [vmem:[%s5 + $0x1c8] sm:$0xff]
        %v1028 = vld [vmem:[%s5 + $0x1d0] sm:$0xff]
        %v1029 = vld [vmem:[%s5 + $0x1d8] sm:$0xff]
        %v1030 = vld [vmem:[%s5 + $0x1e0] sm:$0xff]
        %v1031 = vld [vmem:[%s5 + $0x1e8] sm:$0xff]
        %v1032 = vld [vmem:[%s5 + $0x1f0] sm:$0xff]
        %v1033 = vld [vmem:[%s5 + $0x1f8] sm:$0xff]
        %s1034 = scalar_lea.vmem [#allocation2], 4
        %v1035 = vld [vmem:[%s1034] sm:$0x3]
        %v1036 = vld [vmem:[%s6] sm:$0xff]
        %v1037 = vld [vmem:[%s6 + $0x8] sm:$0xff]
        %v1038 = vld [vmem:[%s6 + $0x10] sm:$0xff]
        %v1039 = vld [vmem:[%s6 + $0x18] sm:$0xff]
        %v1040 = vld [vmem:[%s6 + $0x20] sm:$0xff]
        %v1041 = vld [vmem:[%s6 + $0x28] sm:$0xff]
        %v1042 = vld [vmem:[%s6 + $0x30] sm:$0xff]
        %v1043 = vld [vmem:[%s6 + $0x38] sm:$0xff]
        %v1044 = vld [vmem:[%s6 + $0x40] sm:$0xff]
        %v1045 = vld [vmem:[%s6 + $0x48] sm:$0xff]
        %v1046 = vld [vmem:[%s6 + $0x50] sm:$0xff]
        %v1047 = vld [vmem:[%s6 + $0x58] sm:$0xff]
        %v1048 = vld [vmem:[%s6 + $0x60] sm:$0xff]
        %v1049 = vld [vmem:[%s6 + $0x68] sm:$0xff]
        %v1050 = vld [vmem:[%s6 + $0x70] sm:$0xff]
        %v1051 = vld [vmem:[%s6 + $0x78] sm:$0xff]
        %v1052 = vld [vmem:[%s6 + $0x80] sm:$0xff]
        %v1053 = vld [vmem:[%s6 + $0x88] sm:$0xff]
        %v1054 = vld [vmem:[%s6 + $0x90] sm:$0xff]
        %v1055 = vld [vmem:[%s6 + $0x98] sm:$0xff]
        %v1056 = vld [vmem:[%s6 + $0xa0] sm:$0xff]
        %v1057 = vld [vmem:[%s6 + $0xa8] sm:$0xff]
        %v1058 = vld [vmem:[%s6 + $0xb0] sm:$0xff]
        %v1059 = vld [vmem:[%s6 + $0xb8] sm:$0xff]
        %v1060 = vld [vmem:[%s6 + $0xc0] sm:$0xff]
        %v1061 = vld [vmem:[%s6 + $0xc8] sm:$0xff]
        %v1062 = vld [vmem:[%s6 + $0xd0] sm:$0xff]
        %v1063 = vld [vmem:[%s6 + $0xd8] sm:$0xff]
        %v1064 = vld [vmem:[%s6 + $0xe0] sm:$0xff]
        %v1065 = vld [vmem:[%s6 + $0xe8] sm:$0xff]
        %v1066 = vld [vmem:[%s6 + $0xf0] sm:$0xff]
        %v1067 = vld [vmem:[%s6 + $0xf8] sm:$0xff]
        %v1068 = vld [vmem:[%s6 + $0x100] sm:$0xff]
        %v1069 = vld [vmem:[%s6 + $0x108] sm:$0xff]
        %v1070 = vld [vmem:[%s6 + $0x110] sm:$0xff]
        %v1071 = vld [vmem:[%s6 + $0x118] sm:$0xff]
        %v1072 = vld [vmem:[%s6 + $0x120] sm:$0xff]
        %v1073 = vld [vmem:[%s6 + $0x128] sm:$0xff]
        %v1074 = vld [vmem:[%s6 + $0x130] sm:$0xff]
        %v1075 = vld [vmem:[%s6 + $0x138] sm:$0xff]
        %v1076 = vld [vmem:[%s6 + $0x140] sm:$0xff]
        %v1077 = vld [vmem:[%s6 + $0x148] sm:$0xff]
        %v1078 = vld [vmem:[%s6 + $0x150] sm:$0xff]
        %v1079 = vld [vmem:[%s6 + $0x158] sm:$0xff]
        %v1080 = vld [vmem:[%s6 + $0x160] sm:$0xff]
        %v1081 = vld [vmem:[%s6 + $0x168] sm:$0xff]
        %v1082 = vld [vmem:[%s6 + $0x170] sm:$0xff]
        %v1083 = vld [vmem:[%s6 + $0x178] sm:$0xff]
        %v1084 = vld [vmem:[%s6 + $0x180] sm:$0xff]
        %v1085 = vld [vmem:[%s6 + $0x188] sm:$0xff]
        %v1086 = vld [vmem:[%s6 + $0x190] sm:$0xff]
        %v1087 = vld [vmem:[%s6 + $0x198] sm:$0xff]
        %v1088 = vld [vmem:[%s6 + $0x1a0] sm:$0xff]
        %v1089 = vld [vmem:[%s6 + $0x1a8] sm:$0xff]
        %v1090 = vld [vmem:[%s6 + $0x1b0] sm:$0xff]
        %v1091 = vld [vmem:[%s6 + $0x1b8] sm:$0xff]
        %v1092 = vld [vmem:[%s6 + $0x1c0] sm:$0xff]
        %v1093 = vld [vmem:[%s6 + $0x1c8] sm:$0xff]
        %v1094 = vld [vmem:[%s6 + $0x1d0] sm:$0xff]
        %v1095 = vld [vmem:[%s6 + $0x1d8] sm:$0xff]
        %v1096 = vld [vmem:[%s6 + $0x1e0] sm:$0xff]
        %v1097 = vld [vmem:[%s6 + $0x1e8] sm:$0xff]
        %v1098 = vld [vmem:[%s6 + $0x1f0] sm:$0xff]
        %v1099 = vld [vmem:[%s6 + $0x1f8] sm:$0xff]
        %1100 = vmatpush.msra.mxu0 %v1096
        %1101 = vmatpush.msra.mxu0 %v1092
        %1102 = vmatpush.msra.mxu0 %v1088
        %1103 = vmatpush.msra.mxu0 %v1084
        %1104 = vmatpush.msra.mxu0 %v1080
        %1105 = vmatpush.msra.mxu0 %v1076
        %1106 = vmatpush.msra.mxu0 %v1072
        %1107 = vmatpush.msra.mxu0 %v1068
        %1108 = vmatpush.msra.mxu0 %v1064
        %1109 = vmatpush.msra.mxu0 %v1060
        %1110 = vmatpush.msra.mxu0 %v1056
        %1111 = vmatpush.msra.mxu0 %v1052
        %1112 = vmatpush.msra.mxu0 %v1048
        %1113 = vmatpush.msra.mxu0 %v1044
        %1114 = vmatpush.msra.mxu0 %v1040
        %1115 = vmatpush.msra.mxu0 %v1036
        %1116 = vmatmul.f32.gmra.mxu0 %v1035
        %v1117 = vpop.f32.mrf.mxu0
        %v1118 = vadd.f32 0.0, %v1117
        %1119 = vdwg.mxu0
        %1120 = vmatpush.msra.mxu0 %v1097
        %1121 = vmatpush.msra.mxu0 %v1093
        %1122 = vmatpush.msra.mxu0 %v1089
        %1123 = vmatpush.msra.mxu0 %v1085
        %1124 = vmatpush.msra.mxu0 %v1081
        %1125 = vmatpush.msra.mxu0 %v1077
        %1126 = vmatpush.msra.mxu0 %v1073
        %1127 = vmatpush.msra.mxu0 %v1069
        %1128 = vmatpush.msra.mxu0 %v1065
        %1129 = vmatpush.msra.mxu0 %v1061
        %1130 = vmatpush.msra.mxu0 %v1057
        %1131 = vmatpush.msra.mxu0 %v1053
        %1132 = vmatpush.msra.mxu0 %v1049
        %1133 = vmatpush.msra.mxu0 %v1045
        %1134 = vmatpush.msra.mxu0 %v1041
        %1135 = vmatpush.msra.mxu0 %v1037
        %1136 = vmatmul.f32.gmra.mxu0 %v1035
        %v1137 = vpop.f32.mrf.mxu0
        %v1138 = vadd.f32 0.0, %v1137
        %1139 = vdwg.mxu0
        %1140 = vmatpush.msra.mxu0 %v1098
        %1141 = vmatpush.msra.mxu0 %v1094
        %1142 = vmatpush.msra.mxu0 %v1090
        %1143 = vmatpush.msra.mxu0 %v1086
        %1144 = vmatpush.msra.mxu0 %v1082
        %1145 = vmatpush.msra.mxu0 %v1078
        %1146 = vmatpush.msra.mxu0 %v1074
        %1147 = vmatpush.msra.mxu0 %v1070
        %1148 = vmatpush.msra.mxu0 %v1066
        %1149 = vmatpush.msra.mxu0 %v1062
        %1150 = vmatpush.msra.mxu0 %v1058
        %1151 = vmatpush.msra.mxu0 %v1054
        %1152 = vmatpush.msra.mxu0 %v1050
        %1153 = vmatpush.msra.mxu0 %v1046
        %1154 = vmatpush.msra.mxu0 %v1042
        %1155 = vmatpush.msra.mxu0 %v1038
        %1156 = vmatmul.f32.gmra.mxu0 %v1035
        %v1157 = vpop.f32.mrf.mxu0
        %v1158 = vadd.f32 0.0, %v1157
        %1159 = vdwg.mxu0
        %1160 = vmatpush.msra.mxu0 %v1099
        %1161 = vmatpush.msra.mxu0 %v1095
        %1162 = vmatpush.msra.mxu0 %v1091
        %1163 = vmatpush.msra.mxu0 %v1087
        %1164 = vmatpush.msra.mxu0 %v1083
        %1165 = vmatpush.msra.mxu0 %v1079
        %1166 = vmatpush.msra.mxu0 %v1075
        %1167 = vmatpush.msra.mxu0 %v1071
        %1168 = vmatpush.msra.mxu0 %v1067
        %1169 = vmatpush.msra.mxu0 %v1063
        %1170 = vmatpush.msra.mxu0 %v1059
        %1171 = vmatpush.msra.mxu0 %v1055
        %1172 = vmatpush.msra.mxu0 %v1051
        %1173 = vmatpush.msra.mxu0 %v1047
        %1174 = vmatpush.msra.mxu0 %v1043
        %1175 = vmatpush.msra.mxu0 %v1039
        %1176 = vmatmul.f32.gmra.mxu0 %v1035
        %v1177 = vpop.f32.mrf.mxu0
        %v1178 = vadd.f32 0.0, %v1177
        %1179 = vdwg.mxu0
        %1180 = vmatpush.msra.mxu0 %v1030
        %1181 = vmatpush.msra.mxu0 %v1026
        %1182 = vmatpush.msra.mxu0 %v1022
        %1183 = vmatpush.msra.mxu0 %v1018
        %1184 = vmatpush.msra.mxu0 %v1014
        %1185 = vmatpush.msra.mxu0 %v1010
        %1186 = vmatpush.msra.mxu0 %v1006
        %1187 = vmatpush.msra.mxu0 %v1002
        %1188 = vmatpush.msra.mxu0 %v998
        %1189 = vmatpush.msra.mxu0 %v994
        %1190 = vmatpush.msra.mxu0 %v990
        %1191 = vmatpush.msra.mxu0 %v986
        %1192 = vmatpush.msra.mxu0 %v982
        %1193 = vmatpush.msra.mxu0 %v978
        %1194 = vmatpush.msra.mxu0 %v974
        %1195 = vmatpush.msra.mxu0 %v970
        %1196 = vmatmul.f32.gmra.mxu0 %v967
        %v1197 = vpop.f32.mrf.mxu0
        %v1198 = vadd.f32 %v1118, %v1197
        %1199 = vdwg.mxu0
        %1200 = vmatpush.msra.mxu0 %v1031
        %1201 = vmatpush.msra.mxu0 %v1027
        %1202 = vmatpush.msra.mxu0 %v1023
        %1203 = vmatpush.msra.mxu0 %v1019
        %1204 = vmatpush.msra.mxu0 %v1015
        %1205 = vmatpush.msra.mxu0 %v1011
        %1206 = vmatpush.msra.mxu0 %v1007
        %1207 = vmatpush.msra.mxu0 %v1003
        %1208 = vmatpush.msra.mxu0 %v999
        %1209 = vmatpush.msra.mxu0 %v995
        %1210 = vmatpush.msra.mxu0 %v991
        %1211 = vmatpush.msra.mxu0 %v987
        %1212 = vmatpush.msra.mxu0 %v983
        %1213 = vmatpush.msra.mxu0 %v979
        %1214 = vmatpush.msra.mxu0 %v975
        %1215 = vmatpush.msra.mxu0 %v971
        %1216 = vmatmul.f32.gmra.mxu0 %v967
        %v1217 = vpop.f32.mrf.mxu0
        %v1218 = vadd.f32 %v1138, %v1217
        %1219 = vdwg.mxu0
        %1220 = vmatpush.msra.mxu0 %v1032
        %1221 = vmatpush.msra.mxu0 %v1028
        %1222 = vmatpush.msra.mxu0 %v1024
        %1223 = vmatpush.msra.mxu0 %v1020
        %1224 = vmatpush.msra.mxu0 %v1016
        %1225 = vmatpush.msra.mxu0 %v1012
        %1226 = vmatpush.msra.mxu0 %v1008
        %1227 = vmatpush.msra.mxu0 %v1004
        %1228 = vmatpush.msra.mxu0 %v1000
        %1229 = vmatpush.msra.mxu0 %v996
        %1230 = vmatpush.msra.mxu0 %v992
        %1231 = vmatpush.msra.mxu0 %v988
        %1232 = vmatpush.msra.mxu0 %v984
        %1233 = vmatpush.msra.mxu0 %v980
        %1234 = vmatpush.msra.mxu0 %v976
        %1235 = vmatpush.msra.mxu0 %v972
        %1236 = vmatmul.f32.gmra.mxu0 %v967
        %v1237 = vpop.f32.mrf.mxu0
        %v1238 = vadd.f32 %v1158, %v1237
        %1239 = vdwg.mxu0
        %1240 = vmatpush.msra.mxu0 %v1033
        %1241 = vmatpush.msra.mxu0 %v1029
        %1242 = vmatpush.msra.mxu0 %v1025
        %1243 = vmatpush.msra.mxu0 %v1021
        %1244 = vmatpush.msra.mxu0 %v1017
        %1245 = vmatpush.msra.mxu0 %v1013
        %1246 = vmatpush.msra.mxu0 %v1009
        %1247 = vmatpush.msra.mxu0 %v1005
        %1248 = vmatpush.msra.mxu0 %v1001
        %1249 = vmatpush.msra.mxu0 %v997
        %1250 = vmatpush.msra.mxu0 %v993
        %1251 = vmatpush.msra.mxu0 %v989
        %1252 = vmatpush.msra.mxu0 %v985
        %1253 = vmatpush.msra.mxu0 %v981
        %1254 = vmatpush.msra.mxu0 %v977
        %1255 = vmatpush.msra.mxu0 %v973
        %1256 = vmatmul.f32.gmra.mxu0 %v967
        %v1257 = vpop.f32.mrf.mxu0
        %v1258 = vadd.f32 %v1178, %v1257
        %1259 = vdwg.mxu0
        %v1260 = vld [vmem:[%s7] sm:$0xf]
        %v1262 = vperm.slane %v1260, 0
        %v1263 = vperm.slane %v1260, 1
        %v1264 = vperm.slane %v1260, 2
        %v1265 = vperm.slane %v1260, 3
        %v1270 = vadd.f32 %v1198, %v1262
        %v1271 = vadd.f32 %v1218, %v1263
        %v1272 = vadd.f32 %v1238, %v1264
        %v1273 = vadd.f32 %v1258, %v1265
        %s1274 = scalar_lea.vmem [#allocation3], 4
        %v1275 = vld [vmem:[%s1274] sm:$0x3]
        %v1276 = vxor.u32 %v1270, 2147483648
        %v1277 = vmul.f32 %v1276, 1.442695
        %v1278 = vpow.pop %v1277
        %v1279 = vadd.f32 %v1278, 1.0
        %v1280 = vrcp.pop %v1279
        %v1281 = vmul.f32 %v1279, %v1280
        %v1282 = vsub.f32 1.0, %v1281
        %v1283 = vmul.f32 %v1280, %v1282
        %v1284 = vadd.f32 %v1280, %v1283
        %vm1285 = vweird.f32 %v1279
        %vm1286 = vweird.f32 %v1280
        %vm1287 = vmor %vm1285, %vm1286
        %v1288 = vsel %vm1287, %v1280, %v1284
        %v1289 = vand.u32 2147483647, %v1279
        %vm1290 = vcmp.eq.f32.partialorder %v1289, 8.507059e+37
        %v1291 = vand.u32 %v1279, 2147483648
        %v1292 = vor.u32 1.1754944e-38, %v1291
        %v1293 = vsel %vm1290, %v1292, %v1288
        %v1294 = vmul.f32 1.0, %v1293
        %v1295 = vxor.u32 %v1271, 2147483648
        %v1296 = vmul.f32 %v1295, 1.442695
        %v1297 = vpow.pop %v1296
        %v1298 = vadd.f32 %v1297, 1.0
        %v1299 = vrcp.pop %v1298
        %v1300 = vmul.f32 %v1298, %v1299
        %v1301 = vsub.f32 1.0, %v1300
        %v1302 = vmul.f32 %v1299, %v1301
        %v1303 = vadd.f32 %v1299, %v1302
        %vm1304 = vweird.f32 %v1298
        %vm1305 = vweird.f32 %v1299
        %vm1306 = vmor %vm1304, %vm1305
        %v1307 = vsel %vm1306, %v1299, %v1303
        %v1308 = vand.u32 2147483647, %v1298
        %vm1309 = vcmp.eq.f32.partialorder %v1308, 8.507059e+37
        %v1310 = vand.u32 %v1298, 2147483648
        %v1311 = vor.u32 1.1754944e-38, %v1310
        %v1312 = vsel %vm1309, %v1311, %v1307
        %v1313 = vmul.f32 1.0, %v1312
        %v1314 = vtanh.pop %v1272
        %v1315 = vxor.u32 %v1273, 2147483648
        %v1316 = vmul.f32 %v1315, 1.442695
        %v1317 = vpow.pop %v1316
        %v1318 = vadd.f32 %v1317, 1.0
        %v1319 = vrcp.pop %v1318
        %v1320 = vmul.f32 %v1318, %v1319
        %v1321 = vsub.f32 1.0, %v1320
        %v1322 = vmul.f32 %v1319, %v1321
        %v1323 = vadd.f32 %v1319, %v1322
        %vm1324 = vweird.f32 %v1318
        %vm1325 = vweird.f32 %v1319
        %vm1326 = vmor %vm1324, %vm1325
        %v1327 = vsel %vm1326, %v1319, %v1323
        %v1328 = vand.u32 2147483647, %v1318
        %vm1329 = vcmp.eq.f32.partialorder %v1328, 8.507059e+37
        %v1330 = vand.u32 %v1318, 2147483648
        %v1331 = vor.u32 1.1754944e-38, %v1330
        %v1332 = vsel %vm1329, %v1331, %v1327
        %v1333 = vmul.f32 1.0, %v1332
        %v1334 = vmul.f32 %v1313, %v1275
        %v1335 = vmul.f32 %v1294, %v1314
        %v1336 = vadd.f32 %v1334, %v1335
        %v1337 = vtanh.pop %v1336
        %v1338 = vmul.f32 %v1333, %v1337
        %1339 = vst [vmem:[%s1034] sm:$0x3] %v1338
        %1340 = vst [vmem:[%s1274] sm:$0x3] %v1336
        %1341 = vst [vmem:[%s354] sm:$0x3] %v1338
        %p1342 = scmp.eq.s32.totalorder %s24, 3
        // Predicated region
        $region57: #{feature_mining_forward.3} parent=51 // pred_check
          %p1343 = pneg %p1342
        $region58: #{feature_mining_forward.3} parent=51 // pred_check_branch
          %1345 = sbr.rel (%p1343) target = $region60
        $region59: #{feature_mining_forward.3} parent=51 // pred_region
          %v1346 = vld [vmem:[#allocation2] sm:$0x3]
          %v1347 = vld [vmem:[#allocation2 + $0x2] sm:$0x3]
          %v1348 = vld [vmem:[#allocation2 + $0x4] sm:$0x3]
          %1349 = vst [vmem:[#allocation4] sm:$0x3] %v1346
          %1350 = vst [vmem:[#allocation4 + $0x2] sm:$0x3] %v1347
          %1351 = vst [vmem:[#allocation4 + $0x4] sm:$0x3] %v1348
          %v1352 = vld [vmem:[#allocation3] sm:$0x3]
          %v1353 = vld [vmem:[#allocation3 + $0x2] sm:$0x3]
          %v1354 = vld [vmem:[#allocation3 + $0x4] sm:$0x3]
          %1355 = vst [vmem:[#allocation6] sm:$0x3] %v1352
          %1356 = vst [vmem:[#allocation6 + $0x2] sm:$0x3] %v1353
          %1357 = vst [vmem:[#allocation6 + $0x4] sm:$0x3] %v1354
        $region60: #{feature_mining_forward.3} parent=51 // pred_fallthru
          _
        %p1358 = scmp.lt.s32.totalorder %s24, 3
        %s1359 = scalar_select %p1358, %s24, 3
        %s1360 = smul.addr %s1359, 2
        %s1361 = scalar_lea.vmem %s8, %s1360
        // Predicated region
        $region61: #{feature_mining_forward.3} parent=51 // pred_check
          %p1362 = pneg %p215
        $region62: #{feature_mining_forward.3} parent=51 // pred_check_branch
          %1364 = sbr.rel (%p1362) target = $region64
        $region63: #{feature_mining_forward.3} parent=51 // pred_region
          _
        $region64: #{feature_mining_forward.3} parent=51 // pred_fallthru
          _
        // Predicated region
        $region65: #{feature_mining_forward.3} parent=51 // pred_check
          %p1365 = pneg %p236
        $region66: #{feature_mining_forward.3} parent=51 // pred_check_branch
          %1367 = sbr.rel (%p1365) target = $region68
        $region67: #{feature_mining_forward.3} parent=51 // pred_region
          %1369 = vsyncadd [#allocation5], 0
          %s1370 = sshll.u32 [#allocation4], 4
          %s1371 = int_to_ptr.vmem [resolvable:$true] %s1370
          %s1372 = sshll.u32 %s9, 4
          %s1373 = int_to_ptr.hbm [resolvable:$true] %s1372
          %1378 = dma.vmem_to_hbm [thread:$0]  %s1371, 96, %s1373, [#allocation5], 32, 32, 2
        $region68: #{feature_mining_forward.3} parent=51 // pred_fallthru
          _
        // Predicated region
        $region69: #{feature_mining_forward.3} parent=51 // pred_check
          %p1379 = pneg %p257
        $region70: #{feature_mining_forward.3} parent=51 // pred_check_branch
          %1381 = sbr.rel (%p1379) target = $region72
        $region71: #{feature_mining_forward.3} parent=51 // pred_region
          %1383 = vsyncadd [#allocation7], 0
          %s1384 = sshll.u32 [#allocation6], 4
          %s1385 = int_to_ptr.vmem [resolvable:$true] %s1384
          %s1386 = sshll.u32 %s10, 4
          %s1387 = int_to_ptr.hbm [resolvable:$true] %s1386
          %1392 = dma.vmem_to_hbm [thread:$0]  %s1385, 96, %s1387, [#allocation7], 32, 32, 2
        $region72: #{feature_mining_forward.3} parent=51 // pred_fallthru
          _
        // Predicated region
        $region73: #{feature_mining_forward.3} parent=51 // pred_check
          %p1393 = pneg %p236
        $region74: #{feature_mining_forward.3} parent=51 // pred_check_branch
          %1395 = sbr.rel (%p1393) target = $region76
        $region75: #{feature_mining_forward.3} parent=51 // pred_region
          %1397 = dma.done [#allocation5], 96
        $region76: #{feature_mining_forward.3} parent=51 // pred_fallthru
          _
        // Predicated region
        $region77: #{feature_mining_forward.3} parent=51 // pred_check
          %p1398 = pneg %p257
        $region78: #{feature_mining_forward.3} parent=51 // pred_check_branch
          %1400 = sbr.rel (%p1398) target = $region80
        $region79: #{feature_mining_forward.3} parent=51 // pred_region
          %1402 = dma.done [#allocation7], 96
        $region80: #{feature_mining_forward.3} parent=51 // pred_fallthru
          _
      $region52: #{feature_mining_forward.3} parent=5 // pred_fallthru
        _
      %p1403 = scmp.le.s32.totalorder 2, %s19
      // Predicated region
      $region81: #{feature_mining_forward.3} parent=5 // pred_check
        %p1404 = pneg %p1403
      $region82: #{feature_mining_forward.3} parent=5 // pred_check_branch
        %1406 = sbr.rel (%p1404) target = $region84
      $region83: #{feature_mining_forward.3} parent=5 // pred_region
        %s1407 = ssub.s32 %s19, 2
        // Predicated region
        $region85: #{feature_mining_forward.3} parent=83 // pred_check
          %p1408 = pneg %p221
        $region86: #{feature_mining_forward.3} parent=83 // pred_check_branch
          %1410 = sbr.rel (%p1408) target = $region88
        $region87: #{feature_mining_forward.3} parent=83 // pred_region
          %p1411 = scmp.lt.s32.totalorder %s25, 3
          %s1412 = scalar_select %p1411, %s25, 3
          %s1413 = smul.addr %s1412, 2
          %s1414 = scalar_lea.vmem %s8, %s1413
        $region88: #{feature_mining_forward.3} parent=83 // pred_fallthru
          _
      $region84: #{feature_mining_forward.3} parent=5 // pred_fallthru
        _
    $region6: #{feature_mining_forward.3} parent=1 // loop_footer
      %s23 = sadd.s32 1, %s19
    $region7: #{feature_mining_forward.3} parent=1 // loop_footer_branch
      %18 = sbr.rel target = $region3
    $region8: #{feature_mining_forward.3} parent=1 // loop_exit
      _
    %1415 = vsyncpa [#allocation5], 1
    %s1416 = scalar_lea.sflag [#allocation5], 1
    %1417 = vsyncpa %s1416, 1
    %1418 = vsyncpa [#allocation7], 1

</llo_original>
